<compile_context>
chip_gen: v6e
topology: v6e:2x2x1
jax: 0.10.0
libtpu: 0.0.40
codegen_flags: <defaults>
</compile_context>

<pallas_src>
import numpy as np
import jax
import jax.numpy as jnp
from jax.experimental import pallas as pl
from jax.experimental.pallas import tpu as pltpu


# ----------------------------------------------------------------------------
# f32-accurate matmuls from bf16 MXU passes (manual "bf16_3x" / Precision.HIGH)
# ----------------------------------------------------------------------------
def _split_bf16(x):
    """x (f32) -> (hi, lo) bf16 with x ~= hi + lo (error ~1e-5 relative)."""
    hi = x.astype(jnp.bfloat16)
    lo = (x - hi.astype(jnp.float32)).astype(jnp.bfloat16)
    return hi, lo


def _mm(lhs, rhs):
    """a @ b with a, b given as (hi, lo) bf16 pairs; f32 accumulation.

    a @ b ~= a_hi@b_hi + a_hi@b_lo + a_lo@b_hi  (the lo*lo term, ~1e-5 rel,
    is dropped).  3 native bf16 MXU passes vs ~6 for an f32 HIGHEST matmul."""
    lhs_hi, lhs_lo = lhs
    rhs_hi, rhs_lo = rhs
    acc = jnp.dot(lhs_hi, rhs_hi, preferred_element_type=jnp.float32)
    acc = acc + jnp.dot(lhs_hi, rhs_lo, preferred_element_type=jnp.float32)
    acc = acc + jnp.dot(lhs_lo, rhs_hi, preferred_element_type=jnp.float32)
    return acc


def _cmm_right(ar, ai, wr, wi, ws):
    """(ar + i*ai) @ (Wr + i*Wi): Gauss 3-mult; W operands are pre-split bf16 pairs.

    ws = split(Wr + Wi) is host-precomputed."""
    sr = _split_bf16(ar)
    si = _split_bf16(ai)
    ss = _split_bf16(ar + ai)
    m1 = _mm(sr, wr)
    m2 = _mm(si, wi)
    m3 = _mm(ss, ws)
    return m1 - m2, m3 - m1 - m2


def _cmm_left(wr, wi, ws, ar, ai):
    """(Wr + i*Wi) @ (ar + i*ai): Gauss 3-mult; W operands are pre-split bf16 pairs."""
    sr = _split_bf16(ar)
    si = _split_bf16(ai)
    ss = _split_bf16(ar + ai)
    m1 = _mm(wr, sr)
    m2 = _mm(wi, si)
    m3 = _mm(ws, ss)
    return m1 - m2, m3 - m1 - m2


# ----------------------------------------------------------------------------
# Kernel
# ----------------------------------------------------------------------------
def fresnel_mag_kernel(scale_ref,            # (N_d,) SMEM scalars: -pi*lambda*z_d
                       xr_ref, xi_ref,       # (VB, Y, X) field real / imag
                       wy_ref, wx_ref,       # (6, Y, Y) / (6, X, X) bf16 DFT parts
                       f2_ref,               # (Y, X) fy^2 + fx^2 (grid-invariant)
                       out_ref,              # (VB, 1, Y, X)
                       fr_ref, fin_ref):     # VMEM cache of conj(FFT2(x)) (scaled)
    VB, Y, X = fr_ref.shape

    # Packed, pre-split DFT matrices (order: r_hi, r_lo, i_hi, i_lo, s_hi, s_lo),
    # 1/sqrt(N) normalisation folded in on the host.
    wyr = (wy_ref[0], wy_ref[1])
    wyi = (wy_ref[2], wy_ref[3])
    wys = (wy_ref[4], wy_ref[5])
    wxr = (wx_ref[0], wx_ref[1])
    wxi = (wx_ref[2], wx_ref[3])
    wxs = (wx_ref[4], wx_ref[5])

    # ---- Forward FFT: depends only on the view block, not on the distance.
    # Computed once at d == 0 and cached in VMEM scratch as conj(FFT2(x))
    # (with 1/sqrt(Ny*Nx) absorbed into the DFT matrices), so the inverse
    # transform below can reuse the *forward* DFT matrices and the final
    # conjugation is absorbed by the magnitude.
    @pl.when(pl.program_id(1) == 0)
    def _cache_fft():
        xr = xr_ref[...].reshape(VB * Y, X)
        xi = xi_ref[...].reshape(VB * Y, X)
        # X-axis DFT: all views stacked along rows -> one batched matmul.
        ar, ai = _cmm_right(xr, xi, wxr, wxi, wxs)
        # Y-axis DFT: per-view left multiply; Wy stays un-broadcast.
        for v in range(VB):
            rows = slice(v * Y, (v + 1) * Y)
            frv, fiv = _cmm_left(wyr, wyi, wys, ar[rows, :], ai[rows, :])
            fr_ref[v] = frv
            fin_ref[v] = -fiv            # store the conjugate

    # ---- Fresnel transfer function for this distance: phase = scale_d * f2,
    # with scale_d = -pi*lambda*z_d streamed as one SMEM scalar (no HBM plane).
    scale = scale_ref[pl.program_id(1)]
    phase = scale * f2_ref[...]
    hcr = jnp.cos(phase)                 # conj(H) = cos(phase) - i*sin(phase)
    hci = -jnp.sin(phase)

    fr = fr_ref[...]
    fin = fin_ref[...]
    ur = fr * hcr - fin * hci            # (VB, Y, X); (Y, X) factors broadcast
    ui = fr * hci + fin * hcr

    # ---- Inverse FFT via the conjugation identity (forward DFT matrices).
    br, bi = _cmm_right(ur.reshape(VB * Y, X), ui.reshape(VB * Y, X),
                        wxr, wxi, wxs)
    for v in range(VB):
        rows = slice(v * Y, (v + 1) * Y)
        zr, zi = _cmm_left(wyr, wyi, wys, br[rows, :], bi[rows, :])
        # magnitude == torch.sqrt(x[...,0]**2 + x[...,1]**2)
        out_ref[v, 0] = jnp.sqrt(zr * zr + zi * zi).astype(out_ref.dtype)


# ----------------------------------------------------------------------------
# Host-side helpers
# ----------------------------------------------------------------------------
def _dft_packed(n):
    """Packed forward DFT matrix for size n: (6, n, n) bf16.

    Layout: [Wr_hi, Wr_lo, Wi_hi, Wi_lo, Ws_hi, Ws_lo] with Ws = Wr + Wi and
    the 1/sqrt(n) normalisation folded in (applied twice -> 1/n total)."""
    k = np.arange(n)
    ang = -2.0 * np.pi * np.outer(k, k) / n
    norm = 1.0 / np.sqrt(float(n))
    wr = (np.cos(ang) * norm).astype(np.float32)
    wi = (np.sin(ang) * norm).astype(np.float32)
    ws = (wr + wi).astype(np.float32)
    parts = []
    for m in (wr, wi, ws):
        m32 = jnp.asarray(m)
        hi = m32.astype(jnp.bfloat16)
        lo = (m32 - hi.astype(jnp.float32)).astype(jnp.bfloat16)
        parts += [hi, lo]
    return jnp.stack(parts)              # (6, n, n) bf16


def _tpu_vmem_and_cores():
    """Best-effort per-TensorCore VMEM capacity and TensorCore count."""
    vmem = 64 * 1024 * 1024              # conservative default (v7x)
    cores = 1
    try:
        info = pltpu.get_tpu_info()
        vmem = int(getattr(info, "vmem_capacity_bytes", vmem))
    except Exception:
        pass
    try:
        kind = jax.devices()[0].device_kind.lower()
        if "v7" in kind:                 # v7x: 2 TensorCores per chip
            cores = 2
    except Exception:
        pass
    return vmem, cores


def nonlintran_forward(rec, pix_wid, energy, prop_dists, view_block=None):
    """rec: (N_views, 1, N_y, N_x, 2) float32 -> (N_views, N_dists, N_y, N_x)."""
    N_views, _, N_y, N_x, _ = rec.shape
    prop_dists = np.asarray(prop_dists, dtype=np.float64)
    N_d = int(prop_dists.shape[0])
    dt = rec.dtype

    xr = rec[:, 0, :, :, 0]
    xi = rec[:, 0, :, :, 1]

    wy_pack = _dft_packed(N_y)           # (6, Y, Y) bf16
    wx_pack = _dft_packed(N_x)           # (6, X, X) bf16

    # Fresnel phase ingredients: phase[d] = scale[d] * f2, scale[d] = -pi*lambda*z_d.
    wlength = 1.239842e-9 / energy       # [m], energy in keV
    fy = np.fft.fftfreq(N_y, d=pix_wid)
    fx = np.fft.fftfreq(N_x, d=pix_wid)
    f2 = (fy[:, None] ** 2 + fx[None, :] ** 2).astype(np.float32)       # (Y, X)
    scales = (-np.pi * wlength * prop_dists).astype(np.float32)         # (N_d,)

    vmem_cap, n_tc = _tpu_vmem_and_cores()

    # View-block sizing: account for all per-step VMEM consumers (double-
    # buffered fields + output, FFT-cache scratch, compute temporaries) plus
    # the resident constants, against the actual per-generation VMEM capacity.
    if view_block is None:
        const_bytes = 2 * (12 * (N_y * N_y + N_x * N_x) + 4 * N_y * N_x)
        per_view_bytes = 56 * N_y * N_x
        vb = max(1, (int(0.70 * vmem_cap) - const_bytes) // per_view_bytes)
        vb = int(min(vb, N_views, 32))   # 32: keep the unrolled per-view loops sane
        if n_tc >= 2 and N_views >= 2:
            # keep >= n_tc steps on the "parallel" view axis so both cores work
            vb = min(vb, -(-N_views // n_tc))
        view_block = max(1, vb)
    VB = int(view_block)

    # cdiv grid + zero padding of the view axis (zeros propagate to zeros and
    # are sliced off) instead of the old divisibility-reduction loop.
    n_vblk = -(-N_views // VB)
    V_pad = n_vblk * VB
    if V_pad != N_views:
        xr = jnp.pad(xr, ((0, V_pad - N_views), (0, 0), (0, 0)))
        xi = jnp.pad(xi, ((0, V_pad - N_views), (0, 0), (0, 0)))

    def build(single_buffer_consts):
        const_kwargs = (dict(pipeline_mode=pl.Buffered(1))
                        if single_buffer_consts else {})
        cmult = 1 if single_buffer_consts else 2
        est = (cmult * (12 * (N_y * N_y + N_x * N_x) + 4 * N_y * N_x)
               + 56 * N_y * N_x * VB)
        vmem_limit = max(int(est * 1.5), 32 * 1024 * 1024)
        vmem_limit = min(vmem_limit,
                         min(int(0.85 * vmem_cap), 100 * 1024 * 1024))

        field_spec = pl.BlockSpec((VB, N_y, N_x), lambda i, d, s: (i, 0, 0))
        wy_spec = pl.BlockSpec((6, N_y, N_y), lambda i, d, s: (0, 0, 0),
                               **const_kwargs)
        wx_spec = pl.BlockSpec((6, N_x, N_x), lambda i, d, s: (0, 0, 0),
                               **const_kwargs)
        f2_spec = pl.BlockSpec((N_y, N_x), lambda i, d, s: (0, 0),
                               **const_kwargs)
        out_spec = pl.BlockSpec((VB, 1, N_y, N_x), lambda i, d, s: (i, d, 0, 0))

        grid_spec = pltpu.PrefetchScalarGridSpec(
            num_scalar_prefetch=1,                 # scales -> SMEM
            grid=(V_pad // VB, N_d),               # d innermost (fastest varying)
            in_specs=[field_spec, field_spec, wy_spec, wx_spec, f2_spec],
            out_specs=out_spec,
            scratch_shapes=[pltpu.VMEM((VB, N_y, N_x), jnp.float32),   # Re conj(F)
                            pltpu.VMEM((VB, N_y, N_x), jnp.float32)])  # Im conj(F)

        return pl.pallas_call(
            fresnel_mag_kernel,
            out_shape=jax.ShapeDtypeStruct((V_pad, N_d, N_y, N_x), dt),
            grid_spec=grid_spec,
            compiler_params=pltpu.CompilerParams(
                # views shard across TensorCores; d carries the cached FFT so
                # it must stay "arbitrary".
                dimension_semantics=("parallel", "arbitrary"),
                vmem_limit_bytes=vmem_limit))

    args = (jnp.asarray(scales), jnp.asarray(xr), jnp.asarray(xi),
            wy_pack, wx_pack, jnp.asarray(f2))
    try:
        out = build(True)(*args)
    except Exception:
        # pipeline_mode=pl.Buffered(1) not supported by this jax/libtpu build:
        # fall back to default double buffering (costs VMEM only, same math).
        out = build(False)(*args)

    return out[:N_views] if V_pad != N_views else out


# ----------------------------------------------------------------------------
# Reference + self-test
# ----------------------------------------------------------------------------
def _reference(rec_np, pix_wid, energy, prop_dists):
    """Pure numpy (float64) reference of the same forward pass."""
    x = rec_np[:, 0, :, :, 0] + 1j * rec_np[:, 0, :, :, 1]          # (V, Y, X)
    N_y, N_x = rec_np.shape[2], rec_np.shape[3]
    wlength = 1.239842e-9 / energy
    fy = np.fft.fftfreq(N_y, d=pix_wid)
    fx = np.fft.fftfreq(N_x, d=pix_wid)
    f2 = fy[:, None] ** 2 + fx[None, :] ** 2
    z = np.asarray(prop_dists, dtype=np.float64)[:, None, None]
    H = np.exp(-1j * np.pi * wlength * z * f2)                       # (D, Y, X)
    F = np.fft.fft2(x)
    Y = F[:, None, :, :] * H[None, :, :, :]
    y = np.fft.ifft2(Y)
    return np.abs(y)


if __name__ == "__main__":
    N_views, N_y, N_x = 2, 16, 16
    pix_wid = 1.0e-6                 # [m]
    energy = 20.0                    # [keV]
    prop_dists = [0.01, 0.05, 0.1]   # [m]

    # The module initialises rec to ones((N_views,1,N_y,N_x,2)); use a
    # deterministic random field from PRNGKey(0) so the test is non-trivial.
    key = jax.random.PRNGKey(0)
    rec = jax.random.normal(key, (N_views, 1, N_y, N_x, 2), dtype=jnp.float32)

    out = nonlintran_forward(rec, pix_wid, energy, prop_dists)
    out = jax.block_until_ready(out)
    assert out.shape == (N_views, len(prop_dists), N_y, N_x)

    ref = _reference(np.asarray(rec, dtype=np.float64), pix_wid, energy, prop_dists)
    np.testing.assert_allclose(np.asarray(out), ref, rtol=2e-3, atol=2e-3)

    print("KERNEL_OK")
</pallas_src>

<mosaic_0001>
module attributes {stable_mosaic.version = 11 : i64} {
  func.func @fresnel_mag_kernel(%arg0: i32, %arg1: i32, %arg2: memref<3xf32, #tpu.memory_space<smem>>, %arg3: memref<2x16x16xf32, #tpu.memory_space<vmem>>, %arg4: memref<2x16x16xf32, #tpu.memory_space<vmem>>, %arg5: memref<6x16x16xbf16, #tpu.memory_space<vmem>>, %arg6: memref<6x16x16xbf16, #tpu.memory_space<vmem>>, %arg7: memref<16x16xf32, #tpu.memory_space<vmem>>, %arg8: memref<2x1x16x16xf32, #tpu.memory_space<vmem>>, %arg9: memref<2x16x16xf32, #tpu.memory_space<vmem>>, %arg10: memref<2x16x16xf32, #tpu.memory_space<vmem>>) attributes {dimension_semantics = [#tpu.dimension_semantics<parallel>, #tpu.dimension_semantics<arbitrary>], iteration_bounds = array<i64: 1, 3>, scalar_prefetch = 1 : i64, scratch_operands = 2 : i64, tpu.core_type = #tpu.core_type<tc>, window_params = [{transform_indices = @transform_0, window_bounds = array<i64: 2, 16, 16>}, {transform_indices = @transform_1, window_bounds = array<i64: 2, 16, 16>}, {pipeline_mode = #tpu.pipeline_mode<synchronous>, transform_indices = @transform_2, window_bounds = array<i64: 6, 16, 16>}, {pipeline_mode = #tpu.pipeline_mode<synchronous>, transform_indices = @transform_3, window_bounds = array<i64: 6, 16, 16>}, {pipeline_mode = #tpu.pipeline_mode<synchronous>, transform_indices = @transform_4, window_bounds = array<i64: 16, 16>}, {transform_indices = @transform_5, window_bounds = array<i64: 2, 1, 16, 16>}]} {
    %c0 = arith.constant 0 : index
    %c0_0 = arith.constant 0 : index
    %c0_1 = arith.constant 0 : index
    %0 = vector.load %arg5[%c0, %c0_0, %c0_1] : memref<6x16x16xbf16, #tpu.memory_space<vmem>>, vector<1x16x16xbf16>
    %1 = vector.shape_cast %0 : vector<1x16x16xbf16> to vector<16x16xbf16>
    %c1 = arith.constant 1 : index
    %c0_2 = arith.constant 0 : index
    %c0_3 = arith.constant 0 : index
    %2 = vector.load %arg5[%c1, %c0_2, %c0_3] : memref<6x16x16xbf16, #tpu.memory_space<vmem>>, vector<1x16x16xbf16>
    %3 = vector.shape_cast %2 : vector<1x16x16xbf16> to vector<16x16xbf16>
    %c2 = arith.constant 2 : index
    %c0_4 = arith.constant 0 : index
    %c0_5 = arith.constant 0 : index
    %4 = vector.load %arg5[%c2, %c0_4, %c0_5] : memref<6x16x16xbf16, #tpu.memory_space<vmem>>, vector<1x16x16xbf16>
    %5 = vector.shape_cast %4 : vector<1x16x16xbf16> to vector<16x16xbf16>
    %c3 = arith.constant 3 : index
    %c0_6 = arith.constant 0 : index
    %c0_7 = arith.constant 0 : index
    %6 = vector.load %arg5[%c3, %c0_6, %c0_7] : memref<6x16x16xbf16, #tpu.memory_space<vmem>>, vector<1x16x16xbf16>
    %7 = vector.shape_cast %6 : vector<1x16x16xbf16> to vector<16x16xbf16>
    %c4 = arith.constant 4 : index
    %c0_8 = arith.constant 0 : index
    %c0_9 = arith.constant 0 : index
    %8 = vector.load %arg5[%c4, %c0_8, %c0_9] : memref<6x16x16xbf16, #tpu.memory_space<vmem>>, vector<1x16x16xbf16>
    %9 = vector.shape_cast %8 : vector<1x16x16xbf16> to vector<16x16xbf16>
    %c5 = arith.constant 5 : index
    %c0_10 = arith.constant 0 : index
    %c0_11 = arith.constant 0 : index
    %10 = vector.load %arg5[%c5, %c0_10, %c0_11] : memref<6x16x16xbf16, #tpu.memory_space<vmem>>, vector<1x16x16xbf16>
    %11 = vector.shape_cast %10 : vector<1x16x16xbf16> to vector<16x16xbf16>
    %c0_12 = arith.constant 0 : index
    %c0_13 = arith.constant 0 : index
    %c0_14 = arith.constant 0 : index
    %12 = vector.load %arg6[%c0_12, %c0_13, %c0_14] : memref<6x16x16xbf16, #tpu.memory_space<vmem>>, vector<1x16x16xbf16>
    %13 = vector.shape_cast %12 : vector<1x16x16xbf16> to vector<16x16xbf16>
    %c1_15 = arith.constant 1 : index
    %c0_16 = arith.constant 0 : index
    %c0_17 = arith.constant 0 : index
    %14 = vector.load %arg6[%c1_15, %c0_16, %c0_17] : memref<6x16x16xbf16, #tpu.memory_space<vmem>>, vector<1x16x16xbf16>
    %15 = vector.shape_cast %14 : vector<1x16x16xbf16> to vector<16x16xbf16>
    %c2_18 = arith.constant 2 : index
    %c0_19 = arith.constant 0 : index
    %c0_20 = arith.constant 0 : index
    %16 = vector.load %arg6[%c2_18, %c0_19, %c0_20] : memref<6x16x16xbf16, #tpu.memory_space<vmem>>, vector<1x16x16xbf16>
    %17 = vector.shape_cast %16 : vector<1x16x16xbf16> to vector<16x16xbf16>
    %c3_21 = arith.constant 3 : index
    %c0_22 = arith.constant 0 : index
    %c0_23 = arith.constant 0 : index
    %18 = vector.load %arg6[%c3_21, %c0_22, %c0_23] : memref<6x16x16xbf16, #tpu.memory_space<vmem>>, vector<1x16x16xbf16>
    %19 = vector.shape_cast %18 : vector<1x16x16xbf16> to vector<16x16xbf16>
    %c4_24 = arith.constant 4 : index
    %c0_25 = arith.constant 0 : index
    %c0_26 = arith.constant 0 : index
    %20 = vector.load %arg6[%c4_24, %c0_25, %c0_26] : memref<6x16x16xbf16, #tpu.memory_space<vmem>>, vector<1x16x16xbf16>
    %21 = vector.shape_cast %20 : vector<1x16x16xbf16> to vector<16x16xbf16>
    %c5_27 = arith.constant 5 : index
    %c0_28 = arith.constant 0 : index
    %c0_29 = arith.constant 0 : index
    %22 = vector.load %arg6[%c5_27, %c0_28, %c0_29] : memref<6x16x16xbf16, #tpu.memory_space<vmem>>, vector<1x16x16xbf16>
    %23 = vector.shape_cast %22 : vector<1x16x16xbf16> to vector<16x16xbf16>
    %c0_i32 = arith.constant 0 : i32
    %24 = arith.cmpi eq, %arg1, %c0_i32 : i32
    %25 = arith.extui %24 : i1 to i32
    %c0_i32_30 = arith.constant 0 : i32
    %26 = arith.cmpi ne, %25, %c0_i32_30 : i32
    scf.if %26 {
      %c0_74 = arith.constant 0 : index
      %c0_75 = arith.constant 0 : index
      %c0_76 = arith.constant 0 : index
      %165 = vector.load %arg3[%c0_74, %c0_75, %c0_76] : memref<2x16x16xf32, #tpu.memory_space<vmem>>, vector<2x16x16xf32>
      %166 = vector.shape_cast %165 : vector<2x16x16xf32> to vector<32x16xf32>
      %c0_77 = arith.constant 0 : index
      %c0_78 = arith.constant 0 : index
      %c0_79 = arith.constant 0 : index
      %167 = vector.load %arg4[%c0_77, %c0_78, %c0_79] : memref<2x16x16xf32, #tpu.memory_space<vmem>>, vector<2x16x16xf32>
      %168 = vector.shape_cast %167 : vector<2x16x16xf32> to vector<32x16xf32>
      %169 = arith.truncf %166 : vector<32x16xf32> to vector<32x16xbf16>
      %170 = arith.extf %169 : vector<32x16xbf16> to vector<32x16xf32>
      %171 = arith.subf %166, %170 : vector<32x16xf32>
      %172 = arith.truncf %171 : vector<32x16xf32> to vector<32x16xbf16>
      %173 = arith.truncf %168 : vector<32x16xf32> to vector<32x16xbf16>
      %174 = arith.extf %173 : vector<32x16xbf16> to vector<32x16xf32>
      %175 = arith.subf %168, %174 : vector<32x16xf32>
      %176 = arith.truncf %175 : vector<32x16xf32> to vector<32x16xbf16>
      %177 = arith.addf %166, %168 : vector<32x16xf32>
      %178 = arith.truncf %177 : vector<32x16xf32> to vector<32x16xbf16>
      %179 = arith.extf %178 : vector<32x16xbf16> to vector<32x16xf32>
      %180 = arith.subf %177, %179 : vector<32x16xf32>
      %181 = arith.truncf %180 : vector<32x16xf32> to vector<32x16xbf16>
      %cst_80 = arith.constant dense<0.000000e+00> : vector<32x16xf32>
      %182 = tpu.matmul %169, %13, %cst_80 {dimension_numbers = #tpu.dot_dimension_numbers<[1], [0], [0], [1], [0, 0, 1, 1], [], []>} : vector<32x16xbf16>, vector<16x16xbf16>, vector<32x16xf32> -> vector<32x16xf32>
      %cst_81 = arith.constant dense<0.000000e+00> : vector<32x16xf32>
      %183 = tpu.matmul %169, %15, %cst_81 {dimension_numbers = #tpu.dot_dimension_numbers<[1], [0], [0], [1], [0, 0, 1, 1], [], []>} : vector<32x16xbf16>, vector<16x16xbf16>, vector<32x16xf32> -> vector<32x16xf32>
      %184 = arith.addf %182, %183 : vector<32x16xf32>
      %cst_82 = arith.constant dense<0.000000e+00> : vector<32x16xf32>
      %185 = tpu.matmul %172, %13, %cst_82 {dimension_numbers = #tpu.dot_dimension_numbers<[1], [0], [0], [1], [0, 0, 1, 1], [], []>} : vector<32x16xbf16>, vector<16x16xbf16>, vector<32x16xf32> -> vector<32x16xf32>
      %186 = arith.addf %184, %185 : vector<32x16xf32>
      %cst_83 = arith.constant dense<0.000000e+00> : vector<32x16xf32>
      %187 = tpu.matmul %173, %17, %cst_83 {dimension_numbers = #tpu.dot_dimension_numbers<[1], [0], [0], [1], [0, 0, 1, 1], [], []>} : vector<32x16xbf16>, vector<16x16xbf16>, vector<32x16xf32> -> vector<32x16xf32>
      %cst_84 = arith.constant dense<0.000000e+00> : vector<32x16xf32>
      %188 = tpu.matmul %173, %19, %cst_84 {dimension_numbers = #tpu.dot_dimension_numbers<[1], [0], [0], [1], [0, 0, 1, 1], [], []>} : vector<32x16xbf16>, vector<16x16xbf16>, vector<32x16xf32> -> vector<32x16xf32>
      %189 = arith.addf %187, %188 : vector<32x16xf32>
      %cst_85 = arith.constant dense<0.000000e+00> : vector<32x16xf32>
      %190 = tpu.matmul %176, %17, %cst_85 {dimension_numbers = #tpu.dot_dimension_numbers<[1], [0], [0], [1], [0, 0, 1, 1], [], []>} : vector<32x16xbf16>, vector<16x16xbf16>, vector<32x16xf32> -> vector<32x16xf32>
      %191 = arith.addf %189, %190 : vector<32x16xf32>
      %cst_86 = arith.constant dense<0.000000e+00> : vector<32x16xf32>
      %192 = tpu.matmul %178, %21, %cst_86 {dimension_numbers = #tpu.dot_dimension_numbers<[1], [0], [0], [1], [0, 0, 1, 1], [], []>} : vector<32x16xbf16>, vector<16x16xbf16>, vector<32x16xf32> -> vector<32x16xf32>
      %cst_87 = arith.constant dense<0.000000e+00> : vector<32x16xf32>
      %193 = tpu.matmul %178, %23, %cst_87 {dimension_numbers = #tpu.dot_dimension_numbers<[1], [0], [0], [1], [0, 0, 1, 1], [], []>} : vector<32x16xbf16>, vector<16x16xbf16>, vector<32x16xf32> -> vector<32x16xf32>
      %194 = arith.addf %192, %193 : vector<32x16xf32>
      %cst_88 = arith.constant dense<0.000000e+00> : vector<32x16xf32>
      %195 = tpu.matmul %181, %21, %cst_88 {dimension_numbers = #tpu.dot_dimension_numbers<[1], [0], [0], [1], [0, 0, 1, 1], [], []>} : vector<32x16xbf16>, vector<16x16xbf16>, vector<32x16xf32> -> vector<32x16xf32>
      %196 = arith.addf %194, %195 : vector<32x16xf32>
      %197 = arith.subf %186, %191 : vector<32x16xf32>
      %198 = arith.subf %196, %186 : vector<32x16xf32>
      %199 = arith.subf %198, %191 : vector<32x16xf32>
      %200 = vector.extract_strided_slice %197 {offsets = [0, 0], sizes = [16, 16], strides = [1, 1]} : vector<32x16xf32> to vector<16x16xf32>
      %201 = vector.extract_strided_slice %199 {offsets = [0, 0], sizes = [16, 16], strides = [1, 1]} : vector<32x16xf32> to vector<16x16xf32>
      %202 = arith.truncf %200 : vector<16x16xf32> to vector<16x16xbf16>
      %203 = arith.extf %202 : vector<16x16xbf16> to vector<16x16xf32>
      %204 = arith.subf %200, %203 : vector<16x16xf32>
      %205 = arith.truncf %204 : vector<16x16xf32> to vector<16x16xbf16>
      %206 = arith.truncf %201 : vector<16x16xf32> to vector<16x16xbf16>
      %207 = arith.extf %206 : vector<16x16xbf16> to vector<16x16xf32>
      %208 = arith.subf %201, %207 : vector<16x16xf32>
      %209 = arith.truncf %208 : vector<16x16xf32> to vector<16x16xbf16>
      %210 = arith.addf %200, %201 : vector<16x16xf32>
      %211 = arith.truncf %210 : vector<16x16xf32> to vector<16x16xbf16>
      %212 = arith.extf %211 : vector<16x16xbf16> to vector<16x16xf32>
      %213 = arith.subf %210, %212 : vector<16x16xf32>
      %214 = arith.truncf %213 : vector<16x16xf32> to vector<16x16xbf16>
      %cst_89 = arith.constant dense<0.000000e+00> : vector<16x16xf32>
      %215 = tpu.matmul %1, %202, %cst_89 {dimension_numbers = #tpu.dot_dimension_numbers<[1], [0], [0], [1], [0, 0, 1, 1], [], []>} : vector<16x16xbf16>, vector<16x16xbf16>, vector<16x16xf32> -> vector<16x16xf32>
      %cst_90 = arith.constant dense<0.000000e+00> : vector<16x16xf32>
      %216 = tpu.matmul %1, %205, %cst_90 {dimension_numbers = #tpu.dot_dimension_numbers<[1], [0], [0], [1], [0, 0, 1, 1], [], []>} : vector<16x16xbf16>, vector<16x16xbf16>, vector<16x16xf32> -> vector<16x16xf32>
      %217 = arith.addf %215, %216 : vector<16x16xf32>
      %cst_91 = arith.constant dense<0.000000e+00> : vector<16x16xf32>
      %218 = tpu.matmul %3, %202, %cst_91 {dimension_numbers = #tpu.dot_dimension_numbers<[1], [0], [0], [1], [0, 0, 1, 1], [], []>} : vector<16x16xbf16>, vector<16x16xbf16>, vector<16x16xf32> -> vector<16x16xf32>
      %219 = arith.addf %217, %218 : vector<16x16xf32>
      %cst_92 = arith.constant dense<0.000000e+00> : vector<16x16xf32>
      %220 = tpu.matmul %5, %206, %cst_92 {dimension_numbers = #tpu.dot_dimension_numbers<[1], [0], [0], [1], [0, 0, 1, 1], [], []>} : vector<16x16xbf16>, vector<16x16xbf16>, vector<16x16xf32> -> vector<16x16xf32>
      %cst_93 = arith.constant dense<0.000000e+00> : vector<16x16xf32>
      %221 = tpu.matmul %5, %209, %cst_93 {dimension_numbers = #tpu.dot_dimension_numbers<[1], [0], [0], [1], [0, 0, 1, 1], [], []>} : vector<16x16xbf16>, vector<16x16xbf16>, vector<16x16xf32> -> vector<16x16xf32>
      %222 = arith.addf %220, %221 : vector<16x16xf32>
      %cst_94 = arith.constant dense<0.000000e+00> : vector<16x16xf32>
      %223 = tpu.matmul %7, %206, %cst_94 {dimension_numbers = #tpu.dot_dimension_numbers<[1], [0], [0], [1], [0, 0, 1, 1], [], []>} : vector<16x16xbf16>, vector<16x16xbf16>, vector<16x16xf32> -> vector<16x16xf32>
      %224 = arith.addf %222, %223 : vector<16x16xf32>
      %cst_95 = arith.constant dense<0.000000e+00> : vector<16x16xf32>
      %225 = tpu.matmul %9, %211, %cst_95 {dimension_numbers = #tpu.dot_dimension_numbers<[1], [0], [0], [1], [0, 0, 1, 1], [], []>} : vector<16x16xbf16>, vector<16x16xbf16>, vector<16x16xf32> -> vector<16x16xf32>
      %cst_96 = arith.constant dense<0.000000e+00> : vector<16x16xf32>
      %226 = tpu.matmul %9, %214, %cst_96 {dimension_numbers = #tpu.dot_dimension_numbers<[1], [0], [0], [1], [0, 0, 1, 1], [], []>} : vector<16x16xbf16>, vector<16x16xbf16>, vector<16x16xf32> -> vector<16x16xf32>
      %227 = arith.addf %225, %226 : vector<16x16xf32>
      %cst_97 = arith.constant dense<0.000000e+00> : vector<16x16xf32>
      %228 = tpu.matmul %11, %211, %cst_97 {dimension_numbers = #tpu.dot_dimension_numbers<[1], [0], [0], [1], [0, 0, 1, 1], [], []>} : vector<16x16xbf16>, vector<16x16xbf16>, vector<16x16xf32> -> vector<16x16xf32>
      %229 = arith.addf %227, %228 : vector<16x16xf32>
      %230 = arith.subf %219, %224 : vector<16x16xf32>
      %231 = arith.subf %229, %219 : vector<16x16xf32>
      %232 = arith.subf %231, %224 : vector<16x16xf32>
      %c0_98 = arith.constant 0 : index
      %c0_99 = arith.constant 0 : index
      %c0_100 = arith.constant 0 : index
      %233 = vector.load %arg9[%c0_98, %c0_99, %c0_100] : memref<2x16x16xf32, #tpu.memory_space<vmem>>, vector<1x16x16xf32>
      %234 = vector.shape_cast %233 : vector<1x16x16xf32> to vector<16x16xf32>
      %235 = vector.shape_cast %230 : vector<16x16xf32> to vector<1x16x16xf32>
      tpu.vector_store %arg9[%c0_98, %c0_99, %c0_100], %235 {strides = array<i32>} : memref<2x16x16xf32, #tpu.memory_space<vmem>>, vector<1x16x16xf32>,
      %cst_101 = arith.constant 0.000000e+00 : f32
      %236 = vector.broadcast %cst_101 : f32 to vector<16x16xf32>
      %237 = arith.subf %236, %232 : vector<16x16xf32>
      %c0_102 = arith.constant 0 : index
      %c0_103 = arith.constant 0 : index
      %c0_104 = arith.constant 0 : index
      %238 = vector.load %arg10[%c0_102, %c0_103, %c0_104] : memref<2x16x16xf32, #tpu.memory_space<vmem>>, vector<1x16x16xf32>
      %239 = vector.shape_cast %238 : vector<1x16x16xf32> to vector<16x16xf32>
      %240 = vector.shape_cast %237 : vector<16x16xf32> to vector<1x16x16xf32>
      tpu.vector_store %arg10[%c0_102, %c0_103, %c0_104], %240 {strides = array<i32>} : memref<2x16x16xf32, #tpu.memory_space<vmem>>, vector<1x16x16xf32>,
      %241 = vector.extract_strided_slice %197 {offsets = [16, 0], sizes = [16, 16], strides = [1, 1]} : vector<32x16xf32> to vector<16x16xf32>
      %242 = vector.extract_strided_slice %199 {offsets = [16, 0], sizes = [16, 16], strides = [1, 1]} : vector<32x16xf32> to vector<16x16xf32>
      %243 = arith.truncf %241 : vector<16x16xf32> to vector<16x16xbf16>
      %244 = arith.extf %243 : vector<16x16xbf16> to vector<16x16xf32>
      %245 = arith.subf %241, %244 : vector<16x16xf32>
      %246 = arith.truncf %245 : vector<16x16xf32> to vector<16x16xbf16>
      %247 = arith.truncf %242 : vector<16x16xf32> to vector<16x16xbf16>
      %248 = arith.extf %247 : vector<16x16xbf16> to vector<16x16xf32>
      %249 = arith.subf %242, %248 : vector<16x16xf32>
      %250 = arith.truncf %249 : vector<16x16xf32> to vector<16x16xbf16>
      %251 = arith.addf %241, %242 : vector<16x16xf32>
      %252 = arith.truncf %251 : vector<16x16xf32> to vector<16x16xbf16>
      %253 = arith.extf %252 : vector<16x16xbf16> to vector<16x16xf32>
      %254 = arith.subf %251, %253 : vector<16x16xf32>
      %255 = arith.truncf %254 : vector<16x16xf32> to vector<16x16xbf16>
      %cst_105 = arith.constant dense<0.000000e+00> : vector<16x16xf32>
      %256 = tpu.matmul %1, %243, %cst_105 {dimension_numbers = #tpu.dot_dimension_numbers<[1], [0], [0], [1], [0, 0, 1, 1], [], []>} : vector<16x16xbf16>, vector<16x16xbf16>, vector<16x16xf32> -> vector<16x16xf32>
      %cst_106 = arith.constant dense<0.000000e+00> : vector<16x16xf32>
      %257 = tpu.matmul %1, %246, %cst_106 {dimension_numbers = #tpu.dot_dimension_numbers<[1], [0], [0], [1], [0, 0, 1, 1], [], []>} : vector<16x16xbf16>, vector<16x16xbf16>, vector<16x16xf32> -> vector<16x16xf32>
      %258 = arith.addf %256, %257 : vector<16x16xf32>
      %cst_107 = arith.constant dense<0.000000e+00> : vector<16x16xf32>
      %259 = tpu.matmul %3, %243, %cst_107 {dimension_numbers = #tpu.dot_dimension_numbers<[1], [0], [0], [1], [0, 0, 1, 1], [], []>} : vector<16x16xbf16>, vector<16x16xbf16>, vector<16x16xf32> -> vector<16x16xf32>
      %260 = arith.addf %258, %259 : vector<16x16xf32>
      %cst_108 = arith.constant dense<0.000000e+00> : vector<16x16xf32>
      %261 = tpu.matmul %5, %247, %cst_108 {dimension_numbers = #tpu.dot_dimension_numbers<[1], [0], [0], [1], [0, 0, 1, 1], [], []>} : vector<16x16xbf16>, vector<16x16xbf16>, vector<16x16xf32> -> vector<16x16xf32>
      %cst_109 = arith.constant dense<0.000000e+00> : vector<16x16xf32>
      %262 = tpu.matmul %5, %250, %cst_109 {dimension_numbers = #tpu.dot_dimension_numbers<[1], [0], [0], [1], [0, 0, 1, 1], [], []>} : vector<16x16xbf16>, vector<16x16xbf16>, vector<16x16xf32> -> vector<16x16xf32>
      %263 = arith.addf %261, %262 : vector<16x16xf32>
      %cst_110 = arith.constant dense<0.000000e+00> : vector<16x16xf32>
      %264 = tpu.matmul %7, %247, %cst_110 {dimension_numbers = #tpu.dot_dimension_numbers<[1], [0], [0], [1], [0, 0, 1, 1], [], []>} : vector<16x16xbf16>, vector<16x16xbf16>, vector<16x16xf32> -> vector<16x16xf32>
      %265 = arith.addf %263, %264 : vector<16x16xf32>
      %cst_111 = arith.constant dense<0.000000e+00> : vector<16x16xf32>
      %266 = tpu.matmul %9, %252, %cst_111 {dimension_numbers = #tpu.dot_dimension_numbers<[1], [0], [0], [1], [0, 0, 1, 1], [], []>} : vector<16x16xbf16>, vector<16x16xbf16>, vector<16x16xf32> -> vector<16x16xf32>
      %cst_112 = arith.constant dense<0.000000e+00> : vector<16x16xf32>
      %267 = tpu.matmul %9, %255, %cst_112 {dimension_numbers = #tpu.dot_dimension_numbers<[1], [0], [0], [1], [0, 0, 1, 1], [], []>} : vector<16x16xbf16>, vector<16x16xbf16>, vector<16x16xf32> -> vector<16x16xf32>
      %268 = arith.addf %266, %267 : vector<16x16xf32>
      %cst_113 = arith.constant dense<0.000000e+00> : vector<16x16xf32>
      %269 = tpu.matmul %11, %252, %cst_113 {dimension_numbers = #tpu.dot_dimension_numbers<[1], [0], [0], [1], [0, 0, 1, 1], [], []>} : vector<16x16xbf16>, vector<16x16xbf16>, vector<16x16xf32> -> vector<16x16xf32>
      %270 = arith.addf %268, %269 : vector<16x16xf32>
      %271 = arith.subf %260, %265 : vector<16x16xf32>
      %272 = arith.subf %270, %260 : vector<16x16xf32>
      %273 = arith.subf %272, %265 : vector<16x16xf32>
      %c1_114 = arith.constant 1 : index
      %c0_115 = arith.constant 0 : index
      %c0_116 = arith.constant 0 : index
      %274 = vector.load %arg9[%c1_114, %c0_115, %c0_116] : memref<2x16x16xf32, #tpu.memory_space<vmem>>, vector<1x16x16xf32>
      %275 = vector.shape_cast %274 : vector<1x16x16xf32> to vector<16x16xf32>
      %276 = vector.shape_cast %271 : vector<16x16xf32> to vector<1x16x16xf32>
      tpu.vector_store %arg9[%c1_114, %c0_115, %c0_116], %276 {strides = array<i32>} : memref<2x16x16xf32, #tpu.memory_space<vmem>>, vector<1x16x16xf32>,
      %cst_117 = arith.constant 0.000000e+00 : f32
      %277 = vector.broadcast %cst_117 : f32 to vector<16x16xf32>
      %278 = arith.subf %277, %273 : vector<16x16xf32>
      %c1_118 = arith.constant 1 : index
      %c0_119 = arith.constant 0 : index
      %c0_120 = arith.constant 0 : index
      %279 = vector.load %arg10[%c1_118, %c0_119, %c0_120] : memref<2x16x16xf32, #tpu.memory_space<vmem>>, vector<1x16x16xf32>
      %280 = vector.shape_cast %279 : vector<1x16x16xf32> to vector<16x16xf32>
      %281 = vector.shape_cast %278 : vector<16x16xf32> to vector<1x16x16xf32>
      tpu.vector_store %arg10[%c1_118, %c0_119, %c0_120], %281 {strides = array<i32>} : memref<2x16x16xf32, #tpu.memory_space<vmem>>, vector<1x16x16xf32>,
    } else {
    }
    %27 = arith.index_cast %arg1 : i32 to index
    %28 = memref.load %arg2[%27] : memref<3xf32, #tpu.memory_space<smem>>
    %c0_31 = arith.constant 0 : index
    %c0_32 = arith.constant 0 : index
    %29 = vector.load %arg7[%c0_31, %c0_32] : memref<16x16xf32, #tpu.memory_space<vmem>>, vector<16x16xf32>
    %30 = vector.broadcast %28 : f32 to vector<16x16xf32>
    %31 = arith.mulf %30, %29 : vector<16x16xf32>
    %32 = math.cos %31 : vector<16x16xf32>
    %33 = math.sin %31 : vector<16x16xf32>
    %cst = arith.constant 0.000000e+00 : f32
    %34 = vector.broadcast %cst : f32 to vector<16x16xf32>
    %35 = arith.subf %34, %33 : vector<16x16xf32>
    %c0_33 = arith.constant 0 : index
    %c0_34 = arith.constant 0 : index
    %c0_35 = arith.constant 0 : index
    %36 = vector.load %arg9[%c0_33, %c0_34, %c0_35] : memref<2x16x16xf32, #tpu.memory_space<vmem>>, vector<2x16x16xf32>
    %c0_36 = arith.constant 0 : index
    %c0_37 = arith.constant 0 : index
    %c0_38 = arith.constant 0 : index
    %37 = vector.load %arg10[%c0_36, %c0_37, %c0_38] : memref<2x16x16xf32, #tpu.memory_space<vmem>>, vector<2x16x16xf32>
    %38 = vector.shape_cast %32 : vector<16x16xf32> to vector<1x16x16xf32>
    %39 = vector.broadcast %38 : vector<1x16x16xf32> to vector<2x16x16xf32>
    %40 = arith.mulf %36, %39 : vector<2x16x16xf32>
    %41 = vector.shape_cast %35 : vector<16x16xf32> to vector<1x16x16xf32>
    %42 = vector.broadcast %41 : vector<1x16x16xf32> to vector<2x16x16xf32>
    %43 = arith.mulf %37, %42 : vector<2x16x16xf32>
    %44 = arith.subf %40, %43 : vector<2x16x16xf32>
    %45 = vector.shape_cast %35 : vector<16x16xf32> to vector<1x16x16xf32>
    %46 = vector.broadcast %45 : vector<1x16x16xf32> to vector<2x16x16xf32>
    %47 = arith.mulf %36, %46 : vector<2x16x16xf32>
    %48 = vector.shape_cast %32 : vector<16x16xf32> to vector<1x16x16xf32>
    %49 = vector.broadcast %48 : vector<1x16x16xf32> to vector<2x16x16xf32>
    %50 = arith.mulf %37, %49 : vector<2x16x16xf32>
    %51 = arith.addf %47, %50 : vector<2x16x16xf32>
    %52 = vector.shape_cast %44 : vector<2x16x16xf32> to vector<32x16xf32>
    %53 = vector.shape_cast %51 : vector<2x16x16xf32> to vector<32x16xf32>
    %54 = arith.truncf %52 : vector<32x16xf32> to vector<32x16xbf16>
    %55 = arith.extf %54 : vector<32x16xbf16> to vector<32x16xf32>
    %56 = arith.subf %52, %55 : vector<32x16xf32>
    %57 = arith.truncf %56 : vector<32x16xf32> to vector<32x16xbf16>
    %58 = arith.truncf %53 : vector<32x16xf32> to vector<32x16xbf16>
    %59 = arith.extf %58 : vector<32x16xbf16> to vector<32x16xf32>
    %60 = arith.subf %53, %59 : vector<32x16xf32>
    %61 = arith.truncf %60 : vector<32x16xf32> to vector<32x16xbf16>
    %62 = arith.addf %52, %53 : vector<32x16xf32>
    %63 = arith.truncf %62 : vector<32x16xf32> to vector<32x16xbf16>
    %64 = arith.extf %63 : vector<32x16xbf16> to vector<32x16xf32>
    %65 = arith.subf %62, %64 : vector<32x16xf32>
    %66 = arith.truncf %65 : vector<32x16xf32> to vector<32x16xbf16>
    %cst_39 = arith.constant dense<0.000000e+00> : vector<32x16xf32>
    %67 = tpu.matmul %54, %13, %cst_39 {dimension_numbers = #tpu.dot_dimension_numbers<[1], [0], [0], [1], [0, 0, 1, 1], [], []>} : vector<32x16xbf16>, vector<16x16xbf16>, vector<32x16xf32> -> vector<32x16xf32>
    %cst_40 = arith.constant dense<0.000000e+00> : vector<32x16xf32>
    %68 = tpu.matmul %54, %15, %cst_40 {dimension_numbers = #tpu.dot_dimension_numbers<[1], [0], [0], [1], [0, 0, 1, 1], [], []>} : vector<32x16xbf16>, vector<16x16xbf16>, vector<32x16xf32> -> vector<32x16xf32>
    %69 = arith.addf %67, %68 : vector<32x16xf32>
    %cst_41 = arith.constant dense<0.000000e+00> : vector<32x16xf32>
    %70 = tpu.matmul %57, %13, %cst_41 {dimension_numbers = #tpu.dot_dimension_numbers<[1], [0], [0], [1], [0, 0, 1, 1], [], []>} : vector<32x16xbf16>, vector<16x16xbf16>, vector<32x16xf32> -> vector<32x16xf32>
    %71 = arith.addf %69, %70 : vector<32x16xf32>
    %cst_42 = arith.constant dense<0.000000e+00> : vector<32x16xf32>
    %72 = tpu.matmul %58, %17, %cst_42 {dimension_numbers = #tpu.dot_dimension_numbers<[1], [0], [0], [1], [0, 0, 1, 1], [], []>} : vector<32x16xbf16>, vector<16x16xbf16>, vector<32x16xf32> -> vector<32x16xf32>
    %cst_43 = arith.constant dense<0.000000e+00> : vector<32x16xf32>
    %73 = tpu.matmul %58, %19, %cst_43 {dimension_numbers = #tpu.dot_dimension_numbers<[1], [0], [0], [1], [0, 0, 1, 1], [], []>} : vector<32x16xbf16>, vector<16x16xbf16>, vector<32x16xf32> -> vector<32x16xf32>
    %74 = arith.addf %72, %73 : vector<32x16xf32>
    %cst_44 = arith.constant dense<0.000000e+00> : vector<32x16xf32>
    %75 = tpu.matmul %61, %17, %cst_44 {dimension_numbers = #tpu.dot_dimension_numbers<[1], [0], [0], [1], [0, 0, 1, 1], [], []>} : vector<32x16xbf16>, vector<16x16xbf16>, vector<32x16xf32> -> vector<32x16xf32>
    %76 = arith.addf %74, %75 : vector<32x16xf32>
    %cst_45 = arith.constant dense<0.000000e+00> : vector<32x16xf32>
    %77 = tpu.matmul %63, %21, %cst_45 {dimension_numbers = #tpu.dot_dimension_numbers<[1], [0], [0], [1], [0, 0, 1, 1], [], []>} : vector<32x16xbf16>, vector<16x16xbf16>, vector<32x16xf32> -> vector<32x16xf32>
    %cst_46 = arith.constant dense<0.000000e+00> : vector<32x16xf32>
    %78 = tpu.matmul %63, %23, %cst_46 {dimension_numbers = #tpu.dot_dimension_numbers<[1], [0], [0], [1], [0, 0, 1, 1], [], []>} : vector<32x16xbf16>, vector<16x16xbf16>, vector<32x16xf32> -> vector<32x16xf32>
    %79 = arith.addf %77, %78 : vector<32x16xf32>
    %cst_47 = arith.constant dense<0.000000e+00> : vector<32x16xf32>
    %80 = tpu.matmul %66, %21, %cst_47 {dimension_numbers = #tpu.dot_dimension_numbers<[1], [0], [0], [1], [0, 0, 1, 1], [], []>} : vector<32x16xbf16>, vector<16x16xbf16>, vector<32x16xf32> -> vector<32x16xf32>
    %81 = arith.addf %79, %80 : vector<32x16xf32>
    %82 = arith.subf %71, %76 : vector<32x16xf32>
    %83 = arith.subf %81, %71 : vector<32x16xf32>
    %84 = arith.subf %83, %76 : vector<32x16xf32>
    %85 = vector.extract_strided_slice %82 {offsets = [0, 0], sizes = [16, 16], strides = [1, 1]} : vector<32x16xf32> to vector<16x16xf32>
    %86 = vector.extract_strided_slice %84 {offsets = [0, 0], sizes = [16, 16], strides = [1, 1]} : vector<32x16xf32> to vector<16x16xf32>
    %87 = arith.truncf %85 : vector<16x16xf32> to vector<16x16xbf16>
    %88 = arith.extf %87 : vector<16x16xbf16> to vector<16x16xf32>
    %89 = arith.subf %85, %88 : vector<16x16xf32>
    %90 = arith.truncf %89 : vector<16x16xf32> to vector<16x16xbf16>
    %91 = arith.truncf %86 : vector<16x16xf32> to vector<16x16xbf16>
    %92 = arith.extf %91 : vector<16x16xbf16> to vector<16x16xf32>
    %93 = arith.subf %86, %92 : vector<16x16xf32>
    %94 = arith.truncf %93 : vector<16x16xf32> to vector<16x16xbf16>
    %95 = arith.addf %85, %86 : vector<16x16xf32>
    %96 = arith.truncf %95 : vector<16x16xf32> to vector<16x16xbf16>
    %97 = arith.extf %96 : vector<16x16xbf16> to vector<16x16xf32>
    %98 = arith.subf %95, %97 : vector<16x16xf32>
    %99 = arith.truncf %98 : vector<16x16xf32> to vector<16x16xbf16>
    %cst_48 = arith.constant dense<0.000000e+00> : vector<16x16xf32>
    %100 = tpu.matmul %1, %87, %cst_48 {dimension_numbers = #tpu.dot_dimension_numbers<[1], [0], [0], [1], [0, 0, 1, 1], [], []>} : vector<16x16xbf16>, vector<16x16xbf16>, vector<16x16xf32> -> vector<16x16xf32>
    %cst_49 = arith.constant dense<0.000000e+00> : vector<16x16xf32>
    %101 = tpu.matmul %1, %90, %cst_49 {dimension_numbers = #tpu.dot_dimension_numbers<[1], [0], [0], [1], [0, 0, 1, 1], [], []>} : vector<16x16xbf16>, vector<16x16xbf16>, vector<16x16xf32> -> vector<16x16xf32>
    %102 = arith.addf %100, %101 : vector<16x16xf32>
    %cst_50 = arith.constant dense<0.000000e+00> : vector<16x16xf32>
    %103 = tpu.matmul %3, %87, %cst_50 {dimension_numbers = #tpu.dot_dimension_numbers<[1], [0], [0], [1], [0, 0, 1, 1], [], []>} : vector<16x16xbf16>, vector<16x16xbf16>, vector<16x16xf32> -> vector<16x16xf32>
    %104 = arith.addf %102, %103 : vector<16x16xf32>
    %cst_51 = arith.constant dense<0.000000e+00> : vector<16x16xf32>
    %105 = tpu.matmul %5, %91, %cst_51 {dimension_numbers = #tpu.dot_dimension_numbers<[1], [0], [0], [1], [0, 0, 1, 1], [], []>} : vector<16x16xbf16>, vector<16x16xbf16>, vector<16x16xf32> -> vector<16x16xf32>
    %cst_52 = arith.constant dense<0.000000e+00> : vector<16x16xf32>
    %106 = tpu.matmul %5, %94, %cst_52 {dimension_numbers = #tpu.dot_dimension_numbers<[1], [0], [0], [1], [0, 0, 1, 1], [], []>} : vector<16x16xbf16>, vector<16x16xbf16>, vector<16x16xf32> -> vector<16x16xf32>
    %107 = arith.addf %105, %106 : vector<16x16xf32>
    %cst_53 = arith.constant dense<0.000000e+00> : vector<16x16xf32>
    %108 = tpu.matmul %7, %91, %cst_53 {dimension_numbers = #tpu.dot_dimension_numbers<[1], [0], [0], [1], [0, 0, 1, 1], [], []>} : vector<16x16xbf16>, vector<16x16xbf16>, vector<16x16xf32> -> vector<16x16xf32>
    %109 = arith.addf %107, %108 : vector<16x16xf32>
    %cst_54 = arith.constant dense<0.000000e+00> : vector<16x16xf32>
    %110 = tpu.matmul %9, %96, %cst_54 {dimension_numbers = #tpu.dot_dimension_numbers<[1], [0], [0], [1], [0, 0, 1, 1], [], []>} : vector<16x16xbf16>, vector<16x16xbf16>, vector<16x16xf32> -> vector<16x16xf32>
    %cst_55 = arith.constant dense<0.000000e+00> : vector<16x16xf32>
    %111 = tpu.matmul %9, %99, %cst_55 {dimension_numbers = #tpu.dot_dimension_numbers<[1], [0], [0], [1], [0, 0, 1, 1], [], []>} : vector<16x16xbf16>, vector<16x16xbf16>, vector<16x16xf32> -> vector<16x16xf32>
    %112 = arith.addf %110, %111 : vector<16x16xf32>
    %cst_56 = arith.constant dense<0.000000e+00> : vector<16x16xf32>
    %113 = tpu.matmul %11, %96, %cst_56 {dimension_numbers = #tpu.dot_dimension_numbers<[1], [0], [0], [1], [0, 0, 1, 1], [], []>} : vector<16x16xbf16>, vector<16x16xbf16>, vector<16x16xf32> -> vector<16x16xf32>
    %114 = arith.addf %112, %113 : vector<16x16xf32>
    %115 = arith.subf %104, %109 : vector<16x16xf32>
    %116 = arith.subf %114, %104 : vector<16x16xf32>
    %117 = arith.subf %116, %109 : vector<16x16xf32>
    %118 = arith.mulf %115, %115 : vector<16x16xf32>
    %119 = arith.mulf %117, %117 : vector<16x16xf32>
    %120 = arith.addf %118, %119 : vector<16x16xf32>
    %121 = math.sqrt %120 : vector<16x16xf32>
    %c0_57 = arith.constant 0 : index
    %c0_58 = arith.constant 0 : index
    %c0_59 = arith.constant 0 : index
    %c0_60 = arith.constant 0 : index
    %122 = vector.load %arg8[%c0_57, %c0_58, %c0_59, %c0_60] : memref<2x1x16x16xf32, #tpu.memory_space<vmem>>, vector<1x1x16x16xf32>
    %123 = vector.shape_cast %122 : vector<1x1x16x16xf32> to vector<16x16xf32>
    %124 = vector.shape_cast %121 : vector<16x16xf32> to vector<1x1x16x16xf32>
    tpu.vector_store %arg8[%c0_57, %c0_58, %c0_59, %c0_60], %124 {strides = array<i32>} : memref<2x1x16x16xf32, #tpu.memory_space<vmem>>, vector<1x1x16x16xf32>,
    %125 = vector.extract_strided_slice %82 {offsets = [16, 0], sizes = [16, 16], strides = [1, 1]} : vector<32x16xf32> to vector<16x16xf32>
    %126 = vector.extract_strided_slice %84 {offsets = [16, 0], sizes = [16, 16], strides = [1, 1]} : vector<32x16xf32> to vector<16x16xf32>
    %127 = arith.truncf %125 : vector<16x16xf32> to vector<16x16xbf16>
    %128 = arith.extf %127 : vector<16x16xbf16> to vector<16x16xf32>
    %129 = arith.subf %125, %128 : vector<16x16xf32>
    %130 = arith.truncf %129 : vector<16x16xf32> to vector<16x16xbf16>
    %131 = arith.truncf %126 : vector<16x16xf32> to vector<16x16xbf16>
    %132 = arith.extf %131 : vector<16x16xbf16> to vector<16x16xf32>
    %133 = arith.subf %126, %132 : vector<16x16xf32>
    %134 = arith.truncf %133 : vector<16x16xf32> to vector<16x16xbf16>
    %135 = arith.addf %125, %126 : vector<16x16xf32>
    %136 = arith.truncf %135 : vector<16x16xf32> to vector<16x16xbf16>
    %137 = arith.extf %136 : vector<16x16xbf16> to vector<16x16xf32>
    %138 = arith.subf %135, %137 : vector<16x16xf32>
    %139 = arith.truncf %138 : vector<16x16xf32> to vector<16x16xbf16>
    %cst_61 = arith.constant dense<0.000000e+00> : vector<16x16xf32>
    %140 = tpu.matmul %1, %127, %cst_61 {dimension_numbers = #tpu.dot_dimension_numbers<[1], [0], [0], [1], [0, 0, 1, 1], [], []>} : vector<16x16xbf16>, vector<16x16xbf16>, vector<16x16xf32> -> vector<16x16xf32>
    %cst_62 = arith.constant dense<0.000000e+00> : vector<16x16xf32>
    %141 = tpu.matmul %1, %130, %cst_62 {dimension_numbers = #tpu.dot_dimension_numbers<[1], [0], [0], [1], [0, 0, 1, 1], [], []>} : vector<16x16xbf16>, vector<16x16xbf16>, vector<16x16xf32> -> vector<16x16xf32>
    %142 = arith.addf %140, %141 : vector<16x16xf32>
    %cst_63 = arith.constant dense<0.000000e+00> : vector<16x16xf32>
    %143 = tpu.matmul %3, %127, %cst_63 {dimension_numbers = #tpu.dot_dimension_numbers<[1], [0], [0], [1], [0, 0, 1, 1], [], []>} : vector<16x16xbf16>, vector<16x16xbf16>, vector<16x16xf32> -> vector<16x16xf32>
    %144 = arith.addf %142, %143 : vector<16x16xf32>
    %cst_64 = arith.constant dense<0.000000e+00> : vector<16x16xf32>
    %145 = tpu.matmul %5, %131, %cst_64 {dimension_numbers = #tpu.dot_dimension_numbers<[1], [0], [0], [1], [0, 0, 1, 1], [], []>} : vector<16x16xbf16>, vector<16x16xbf16>, vector<16x16xf32> -> vector<16x16xf32>
    %cst_65 = arith.constant dense<0.000000e+00> : vector<16x16xf32>
    %146 = tpu.matmul %5, %134, %cst_65 {dimension_numbers = #tpu.dot_dimension_numbers<[1], [0], [0], [1], [0, 0, 1, 1], [], []>} : vector<16x16xbf16>, vector<16x16xbf16>, vector<16x16xf32> -> vector<16x16xf32>
    %147 = arith.addf %145, %146 : vector<16x16xf32>
    %cst_66 = arith.constant dense<0.000000e+00> : vector<16x16xf32>
    %148 = tpu.matmul %7, %131, %cst_66 {dimension_numbers = #tpu.dot_dimension_numbers<[1], [0], [0], [1], [0, 0, 1, 1], [], []>} : vector<16x16xbf16>, vector<16x16xbf16>, vector<16x16xf32> -> vector<16x16xf32>
    %149 = arith.addf %147, %148 : vector<16x16xf32>
    %cst_67 = arith.constant dense<0.000000e+00> : vector<16x16xf32>
    %150 = tpu.matmul %9, %136, %cst_67 {dimension_numbers = #tpu.dot_dimension_numbers<[1], [0], [0], [1], [0, 0, 1, 1], [], []>} : vector<16x16xbf16>, vector<16x16xbf16>, vector<16x16xf32> -> vector<16x16xf32>
    %cst_68 = arith.constant dense<0.000000e+00> : vector<16x16xf32>
    %151 = tpu.matmul %9, %139, %cst_68 {dimension_numbers = #tpu.dot_dimension_numbers<[1], [0], [0], [1], [0, 0, 1, 1], [], []>} : vector<16x16xbf16>, vector<16x16xbf16>, vector<16x16xf32> -> vector<16x16xf32>
    %152 = arith.addf %150, %151 : vector<16x16xf32>
    %cst_69 = arith.constant dense<0.000000e+00> : vector<16x16xf32>
    %153 = tpu.matmul %11, %136, %cst_69 {dimension_numbers = #tpu.dot_dimension_numbers<[1], [0], [0], [1], [0, 0, 1, 1], [], []>} : vector<16x16xbf16>, vector<16x16xbf16>, vector<16x16xf32> -> vector<16x16xf32>
    %154 = arith.addf %152, %153 : vector<16x16xf32>
    %155 = arith.subf %144, %149 : vector<16x16xf32>
    %156 = arith.subf %154, %144 : vector<16x16xf32>
    %157 = arith.subf %156, %149 : vector<16x16xf32>
    %158 = arith.mulf %155, %155 : vector<16x16xf32>
    %159 = arith.mulf %157, %157 : vector<16x16xf32>
    %160 = arith.addf %158, %159 : vector<16x16xf32>
    %161 = math.sqrt %160 : vector<16x16xf32>
    %c1_70 = arith.constant 1 : index
    %c0_71 = arith.constant 0 : index
    %c0_72 = arith.constant 0 : index
    %c0_73 = arith.constant 0 : index
    %162 = vector.load %arg8[%c1_70, %c0_71, %c0_72, %c0_73] : memref<2x1x16x16xf32, #tpu.memory_space<vmem>>, vector<1x1x16x16xf32>
    %163 = vector.shape_cast %162 : vector<1x1x16x16xf32> to vector<16x16xf32>
    %164 = vector.shape_cast %161 : vector<16x16xf32> to vector<1x1x16x16xf32>
    tpu.vector_store %arg8[%c1_70, %c0_71, %c0_72, %c0_73], %164 {strides = array<i32>} : memref<2x1x16x16xf32, #tpu.memory_space<vmem>>, vector<1x1x16x16xf32>,
    return
  }
  func.func @transform_0(%arg0: i32, %arg1: i32, %arg2: memref<3xf32, #tpu.memory_space<smem>>) -> (i32, i32, i32) {
    %c0_i32 = arith.constant 0 : i32
    %c0_i32_0 = arith.constant 0 : i32
    %c0_i32_1 = arith.constant 0 : i32
    return %arg0, %c0_i32, %c0_i32_0 : i32, i32, i32
  }
  func.func @transform_1(%arg0: i32, %arg1: i32, %arg2: memref<3xf32, #tpu.memory_space<smem>>) -> (i32, i32, i32) {
    %c0_i32 = arith.constant 0 : i32
    %c0_i32_0 = arith.constant 0 : i32
    %c0_i32_1 = arith.constant 0 : i32
    return %arg0, %c0_i32, %c0_i32_0 : i32, i32, i32
  }
  func.func @transform_2(%arg0: i32, %arg1: i32, %arg2: memref<3xf32, #tpu.memory_space<smem>>) -> (i32, i32, i32) {
    %c0_i32 = arith.constant 0 : i32
    %c0_i32_0 = arith.constant 0 : i32
    %c0_i32_1 = arith.constant 0 : i32
    %c0_i32_2 = arith.constant 0 : i32
    return %c0_i32, %c0_i32_0, %c0_i32_1 : i32, i32, i32
  }
  func.func @transform_3(%arg0: i32, %arg1: i32, %arg2: memref<3xf32, #tpu.memory_space<smem>>) -> (i32, i32, i32) {
    %c0_i32 = arith.constant 0 : i32
    %c0_i32_0 = arith.constant 0 : i32
    %c0_i32_1 = arith.constant 0 : i32
    %c0_i32_2 = arith.constant 0 : i32
    return %c0_i32, %c0_i32_0, %c0_i32_1 : i32, i32, i32
  }
  func.func @transform_4(%arg0: i32, %arg1: i32, %arg2: memref<3xf32, #tpu.memory_space<smem>>) -> (i32, i32) {
    %c0_i32 = arith.constant 0 : i32
    %c0_i32_0 = arith.constant 0 : i32
    %c0_i32_1 = arith.constant 0 : i32
    return %c0_i32, %c0_i32_0 : i32, i32
  }
  func.func @transform_5(%arg0: i32, %arg1: i32, %arg2: memref<3xf32, #tpu.memory_space<smem>>) -> (i32, i32, i32, i32) {
    %c0_i32 = arith.constant 0 : i32
    %c0_i32_0 = arith.constant 0 : i32
    %c0_i32_1 = arith.constant 0 : i32
    return %arg0, %arg1, %c0_i32, %c0_i32_0 : i32, i32, i32, i32
  }
}

module attributes {stable_mosaic.version = 11 : i64} {
  func.func @fresnel_mag_kernel(%arg0: i32, %arg1: i32, %arg2: memref<3xf32, #tpu.memory_space<smem>>, %arg3: memref<2x16x16xf32, #tpu.memory_space<vmem>>, %arg4: memref<2x16x16xf32, #tpu.memory_space<vmem>>, %arg5: memref<6x16x16xbf16, #tpu.memory_space<vmem>>, %arg6: memref<6x16x16xbf16, #tpu.memory_space<vmem>>, %arg7: memref<16x16xf32, #tpu.memory_space<vmem>>, %arg8: memref<2x1x16x16xf32, #tpu.memory_space<vmem>>, %arg9: memref<2x16x16xf32, #tpu.memory_space<vmem>>, %arg10: memref<2x16x16xf32, #tpu.memory_space<vmem>>) attributes {dimension_semantics = [#tpu.dimension_semantics<parallel>, #tpu.dimension_semantics<arbitrary>], iteration_bounds = array<i64: 1, 3>, scalar_prefetch = 1 : i64, scratch_operands = 2 : i64, tpu.core_type = #tpu.core_type<tc>, window_params = [{transform_indices = @transform_0, window_bounds = array<i64: 2, 16, 16>}, {transform_indices = @transform_1, window_bounds = array<i64: 2, 16, 16>}, {pipeline_mode = #tpu.pipeline_mode<synchronous>, transform_indices = @transform_2, window_bounds = array<i64: 6, 16, 16>}, {pipeline_mode = #tpu.pipeline_mode<synchronous>, transform_indices = @transform_3, window_bounds = array<i64: 6, 16, 16>}, {pipeline_mode = #tpu.pipeline_mode<synchronous>, transform_indices = @transform_4, window_bounds = array<i64: 16, 16>}, {transform_indices = @transform_5, window_bounds = array<i64: 2, 1, 16, 16>}]} {
    %c0 = arith.constant 0 : index
    %c0_0 = arith.constant 0 : index
    %c0_1 = arith.constant 0 : index
    %0 = vector.load %arg5[%c0, %c0_0, %c0_1] : memref<6x16x16xbf16, #tpu.memory_space<vmem>>, vector<1x16x16xbf16>
    %1 = vector.shape_cast %0 : vector<1x16x16xbf16> to vector<16x16xbf16>
    %c1 = arith.constant 1 : index
    %c0_2 = arith.constant 0 : index
    %c0_3 = arith.constant 0 : index
    %2 = vector.load %arg5[%c1, %c0_2, %c0_3] : memref<6x16x16xbf16, #tpu.memory_space<vmem>>, vector<1x16x16xbf16>
    %3 = vector.shape_cast %2 : vector<1x16x16xbf16> to vector<16x16xbf16>
    %c2 = arith.constant 2 : index
    %c0_4 = arith.constant 0 : index
    %c0_5 = arith.constant 0 : index
    %4 = vector.load %arg5[%c2, %c0_4, %c0_5] : memref<6x16x16xbf16, #tpu.memory_space<vmem>>, vector<1x16x16xbf16>
    %5 = vector.shape_cast %4 : vector<1x16x16xbf16> to vector<16x16xbf16>
    %c3 = arith.constant 3 : index
    %c0_6 = arith.constant 0 : index
    %c0_7 = arith.constant 0 : index
    %6 = vector.load %arg5[%c3, %c0_6, %c0_7] : memref<6x16x16xbf16, #tpu.memory_space<vmem>>, vector<1x16x16xbf16>
    %7 = vector.shape_cast %6 : vector<1x16x16xbf16> to vector<16x16xbf16>
    %c4 = arith.constant 4 : index
    %c0_8 = arith.constant 0 : index
    %c0_9 = arith.constant 0 : index
    %8 = vector.load %arg5[%c4, %c0_8, %c0_9] : memref<6x16x16xbf16, #tpu.memory_space<vmem>>, vector<1x16x16xbf16>
    %9 = vector.shape_cast %8 : vector<1x16x16xbf16> to vector<16x16xbf16>
    %c5 = arith.constant 5 : index
    %c0_10 = arith.constant 0 : index
    %c0_11 = arith.constant 0 : index
    %10 = vector.load %arg5[%c5, %c0_10, %c0_11] : memref<6x16x16xbf16, #tpu.memory_space<vmem>>, vector<1x16x16xbf16>
    %11 = vector.shape_cast %10 : vector<1x16x16xbf16> to vector<16x16xbf16>
    %c0_12 = arith.constant 0 : index
    %c0_13 = arith.constant 0 : index
    %c0_14 = arith.constant 0 : index
    %12 = vector.load %arg6[%c0_12, %c0_13, %c0_14] : memref<6x16x16xbf16, #tpu.memory_space<vmem>>, vector<1x16x16xbf16>
    %13 = vector.shape_cast %12 : vector<1x16x16xbf16> to vector<16x16xbf16>
    %c1_15 = arith.constant 1 : index
    %c0_16 = arith.constant 0 : index
    %c0_17 = arith.constant 0 : index
    %14 = vector.load %arg6[%c1_15, %c0_16, %c0_17] : memref<6x16x16xbf16, #tpu.memory_space<vmem>>, vector<1x16x16xbf16>
    %15 = vector.shape_cast %14 : vector<1x16x16xbf16> to vector<16x16xbf16>
    %c2_18 = arith.constant 2 : index
    %c0_19 = arith.constant 0 : index
    %c0_20 = arith.constant 0 : index
    %16 = vector.load %arg6[%c2_18, %c0_19, %c0_20] : memref<6x16x16xbf16, #tpu.memory_space<vmem>>, vector<1x16x16xbf16>
    %17 = vector.shape_cast %16 : vector<1x16x16xbf16> to vector<16x16xbf16>
    %c3_21 = arith.constant 3 : index
    %c0_22 = arith.constant 0 : index
    %c0_23 = arith.constant 0 : index
    %18 = vector.load %arg6[%c3_21, %c0_22, %c0_23] : memref<6x16x16xbf16, #tpu.memory_space<vmem>>, vector<1x16x16xbf16>
    %19 = vector.shape_cast %18 : vector<1x16x16xbf16> to vector<16x16xbf16>
    %c4_24 = arith.constant 4 : index
    %c0_25 = arith.constant 0 : index
    %c0_26 = arith.constant 0 : index
    %20 = vector.load %arg6[%c4_24, %c0_25, %c0_26] : memref<6x16x16xbf16, #tpu.memory_space<vmem>>, vector<1x16x16xbf16>
    %21 = vector.shape_cast %20 : vector<1x16x16xbf16> to vector<16x16xbf16>
    %c5_27 = arith.constant 5 : index
    %c0_28 = arith.constant 0 : index
    %c0_29 = arith.constant 0 : index
    %22 = vector.load %arg6[%c5_27, %c0_28, %c0_29] : memref<6x16x16xbf16, #tpu.memory_space<vmem>>, vector<1x16x16xbf16>
    %23 = vector.shape_cast %22 : vector<1x16x16xbf16> to vector<16x16xbf16>
    %c0_i32 = arith.constant 0 : i32
    %24 = arith.cmpi eq, %arg1, %c0_i32 : i32
    %25 = arith.extui %24 : i1 to i32
    %c0_i32_30 = arith.constant 0 : i32
    %26 = arith.cmpi ne, %25, %c0_i32_30 : i32
    scf.if %26 {
      %c0_74 = arith.constant 0 : index
      %c0_75 = arith.constant 0 : index
      %c0_76 = arith.constant 0 : index
      %165 = vector.load %arg3[%c0_74, %c0_75, %c0_76] : memref<2x16x16xf32, #tpu.memory_space<vmem>>, vector<2x16x16xf32>
      %166 = vector.shape_cast %165 : vector<2x16x16xf32> to vector<32x16xf32>
      %c0_77 = arith.constant 0 : index
      %c0_78 = arith.constant 0 : index
      %c0_79 = arith.constant 0 : index
      %167 = vector.load %arg4[%c0_77, %c0_78, %c0_79] : memref<2x16x16xf32, #tpu.memory_space<vmem>>, vector<2x16x16xf32>
      %168 = vector.shape_cast %167 : vector<2x16x16xf32> to vector<32x16xf32>
      %169 = arith.truncf %166 : vector<32x16xf32> to vector<32x16xbf16>
      %170 = arith.extf %169 : vector<32x16xbf16> to vector<32x16xf32>
      %171 = arith.subf %166, %170 : vector<32x16xf32>
      %172 = arith.truncf %171 : vector<32x16xf32> to vector<32x16xbf16>
      %173 = arith.truncf %168 : vector<32x16xf32> to vector<32x16xbf16>
      %174 = arith.extf %173 : vector<32x16xbf16> to vector<32x16xf32>
      %175 = arith.subf %168, %174 : vector<32x16xf32>
      %176 = arith.truncf %175 : vector<32x16xf32> to vector<32x16xbf16>
      %177 = arith.addf %166, %168 : vector<32x16xf32>
      %178 = arith.truncf %177 : vector<32x16xf32> to vector<32x16xbf16>
      %179 = arith.extf %178 : vector<32x16xbf16> to vector<32x16xf32>
      %180 = arith.subf %177, %179 : vector<32x16xf32>
      %181 = arith.truncf %180 : vector<32x16xf32> to vector<32x16xbf16>
      %cst_80 = arith.constant dense<0.000000e+00> : vector<32x16xf32>
      %182 = tpu.matmul %169, %13, %cst_80 {dimension_numbers = #tpu.dot_dimension_numbers<[1], [0], [0], [1], [0, 0, 1, 1], [], []>} : vector<32x16xbf16>, vector<16x16xbf16>, vector<32x16xf32> -> vector<32x16xf32>
      %cst_81 = arith.constant dense<0.000000e+00> : vector<32x16xf32>
      %183 = tpu.matmul %169, %15, %cst_81 {dimension_numbers = #tpu.dot_dimension_numbers<[1], [0], [0], [1], [0, 0, 1, 1], [], []>} : vector<32x16xbf16>, vector<16x16xbf16>, vector<32x16xf32> -> vector<32x16xf32>
      %184 = arith.addf %182, %183 : vector<32x16xf32>
      %cst_82 = arith.constant dense<0.000000e+00> : vector<32x16xf32>
      %185 = tpu.matmul %172, %13, %cst_82 {dimension_numbers = #tpu.dot_dimension_numbers<[1], [0], [0], [1], [0, 0, 1, 1], [], []>} : vector<32x16xbf16>, vector<16x16xbf16>, vector<32x16xf32> -> vector<32x16xf32>
      %186 = arith.addf %184, %185 : vector<32x16xf32>
      %cst_83 = arith.constant dense<0.000000e+00> : vector<32x16xf32>
      %187 = tpu.matmul %173, %17, %cst_83 {dimension_numbers = #tpu.dot_dimension_numbers<[1], [0], [0], [1], [0, 0, 1, 1], [], []>} : vector<32x16xbf16>, vector<16x16xbf16>, vector<32x16xf32> -> vector<32x16xf32>
      %cst_84 = arith.constant dense<0.000000e+00> : vector<32x16xf32>
      %188 = tpu.matmul %173, %19, %cst_84 {dimension_numbers = #tpu.dot_dimension_numbers<[1], [0], [0], [1], [0, 0, 1, 1], [], []>} : vector<32x16xbf16>, vector<16x16xbf16>, vector<32x16xf32> -> vector<32x16xf32>
      %189 = arith.addf %187, %188 : vector<32x16xf32>
      %cst_85 = arith.constant dense<0.000000e+00> : vector<32x16xf32>
      %190 = tpu.matmul %176, %17, %cst_85 {dimension_numbers = #tpu.dot_dimension_numbers<[1], [0], [0], [1], [0, 0, 1, 1], [], []>} : vector<32x16xbf16>, vector<16x16xbf16>, vector<32x16xf32> -> vector<32x16xf32>
      %191 = arith.addf %189, %190 : vector<32x16xf32>
      %cst_86 = arith.constant dense<0.000000e+00> : vector<32x16xf32>
      %192 = tpu.matmul %178, %21, %cst_86 {dimension_numbers = #tpu.dot_dimension_numbers<[1], [0], [0], [1], [0, 0, 1, 1], [], []>} : vector<32x16xbf16>, vector<16x16xbf16>, vector<32x16xf32> -> vector<32x16xf32>
      %cst_87 = arith.constant dense<0.000000e+00> : vector<32x16xf32>
      %193 = tpu.matmul %178, %23, %cst_87 {dimension_numbers = #tpu.dot_dimension_numbers<[1], [0], [0], [1], [0, 0, 1, 1], [], []>} : vector<32x16xbf16>, vector<16x16xbf16>, vector<32x16xf32> -> vector<32x16xf32>
      %194 = arith.addf %192, %193 : vector<32x16xf32>
      %cst_88 = arith.constant dense<0.000000e+00> : vector<32x16xf32>
      %195 = tpu.matmul %181, %21, %cst_88 {dimension_numbers = #tpu.dot_dimension_numbers<[1], [0], [0], [1], [0, 0, 1, 1], [], []>} : vector<32x16xbf16>, vector<16x16xbf16>, vector<32x16xf32> -> vector<32x16xf32>
      %196 = arith.addf %194, %195 : vector<32x16xf32>
      %197 = arith.subf %186, %191 : vector<32x16xf32>
      %198 = arith.subf %196, %186 : vector<32x16xf32>
      %199 = arith.subf %198, %191 : vector<32x16xf32>
      %200 = vector.extract_strided_slice %197 {offsets = [0, 0], sizes = [16, 16], strides = [1, 1]} : vector<32x16xf32> to vector<16x16xf32>
      %201 = vector.extract_strided_slice %199 {offsets = [0, 0], sizes = [16, 16], strides = [1, 1]} : vector<32x16xf32> to vector<16x16xf32>
      %202 = arith.truncf %200 : vector<16x16xf32> to vector<16x16xbf16>
      %203 = arith.extf %202 : vector<16x16xbf16> to vector<16x16xf32>
      %204 = arith.subf %200, %203 : vector<16x16xf32>
      %205 = arith.truncf %204 : vector<16x16xf32> to vector<16x16xbf16>
      %206 = arith.truncf %201 : vector<16x16xf32> to vector<16x16xbf16>
      %207 = arith.extf %206 : vector<16x16xbf16> to vector<16x16xf32>
      %208 = arith.subf %201, %207 : vector<16x16xf32>
      %209 = arith.truncf %208 : vector<16x16xf32> to vector<16x16xbf16>
      %210 = arith.addf %200, %201 : vector<16x16xf32>
      %211 = arith.truncf %210 : vector<16x16xf32> to vector<16x16xbf16>
      %212 = arith.extf %211 : vector<16x16xbf16> to vector<16x16xf32>
      %213 = arith.subf %210, %212 : vector<16x16xf32>
      %214 = arith.truncf %213 : vector<16x16xf32> to vector<16x16xbf16>
      %cst_89 = arith.constant dense<0.000000e+00> : vector<16x16xf32>
      %215 = tpu.matmul %1, %202, %cst_89 {dimension_numbers = #tpu.dot_dimension_numbers<[1], [0], [0], [1], [0, 0, 1, 1], [], []>} : vector<16x16xbf16>, vector<16x16xbf16>, vector<16x16xf32> -> vector<16x16xf32>
      %cst_90 = arith.constant dense<0.000000e+00> : vector<16x16xf32>
      %216 = tpu.matmul %1, %205, %cst_90 {dimension_numbers = #tpu.dot_dimension_numbers<[1], [0], [0], [1], [0, 0, 1, 1], [], []>} : vector<16x16xbf16>, vector<16x16xbf16>, vector<16x16xf32> -> vector<16x16xf32>
      %217 = arith.addf %215, %216 : vector<16x16xf32>
      %cst_91 = arith.constant dense<0.000000e+00> : vector<16x16xf32>
      %218 = tpu.matmul %3, %202, %cst_91 {dimension_numbers = #tpu.dot_dimension_numbers<[1], [0], [0], [1], [0, 0, 1, 1], [], []>} : vector<16x16xbf16>, vector<16x16xbf16>, vector<16x16xf32> -> vector<16x16xf32>
      %219 = arith.addf %217, %218 : vector<16x16xf32>
      %cst_92 = arith.constant dense<0.000000e+00> : vector<16x16xf32>
      %220 = tpu.matmul %5, %206, %cst_92 {dimension_numbers = #tpu.dot_dimension_numbers<[1], [0], [0], [1], [0, 0, 1, 1], [], []>} : vector<16x16xbf16>, vector<16x16xbf16>, vector<16x16xf32> -> vector<16x16xf32>
      %cst_93 = arith.constant dense<0.000000e+00> : vector<16x16xf32>
      %221 = tpu.matmul %5, %209, %cst_93 {dimension_numbers = #tpu.dot_dimension_numbers<[1], [0], [0], [1], [0, 0, 1, 1], [], []>} : vector<16x16xbf16>, vector<16x16xbf16>, vector<16x16xf32> -> vector<16x16xf32>
      %222 = arith.addf %220, %221 : vector<16x16xf32>
      %cst_94 = arith.constant dense<0.000000e+00> : vector<16x16xf32>
      %223 = tpu.matmul %7, %206, %cst_94 {dimension_numbers = #tpu.dot_dimension_numbers<[1], [0], [0], [1], [0, 0, 1, 1], [], []>} : vector<16x16xbf16>, vector<16x16xbf16>, vector<16x16xf32> -> vector<16x16xf32>
      %224 = arith.addf %222, %223 : vector<16x16xf32>
      %cst_95 = arith.constant dense<0.000000e+00> : vector<16x16xf32>
      %225 = tpu.matmul %9, %211, %cst_95 {dimension_numbers = #tpu.dot_dimension_numbers<[1], [0], [0], [1], [0, 0, 1, 1], [], []>} : vector<16x16xbf16>, vector<16x16xbf16>, vector<16x16xf32> -> vector<16x16xf32>
      %cst_96 = arith.constant dense<0.000000e+00> : vector<16x16xf32>
      %226 = tpu.matmul %9, %214, %cst_96 {dimension_numbers = #tpu.dot_dimension_numbers<[1], [0], [0], [1], [0, 0, 1, 1], [], []>} : vector<16x16xbf16>, vector<16x16xbf16>, vector<16x16xf32> -> vector<16x16xf32>
      %227 = arith.addf %225, %226 : vector<16x16xf32>
      %cst_97 = arith.constant dense<0.000000e+00> : vector<16x16xf32>
      %228 = tpu.matmul %11, %211, %cst_97 {dimension_numbers = #tpu.dot_dimension_numbers<[1], [0], [0], [1], [0, 0, 1, 1], [], []>} : vector<16x16xbf16>, vector<16x16xbf16>, vector<16x16xf32> -> vector<16x16xf32>
      %229 = arith.addf %227, %228 : vector<16x16xf32>
      %230 = arith.subf %219, %224 : vector<16x16xf32>
      %231 = arith.subf %229, %219 : vector<16x16xf32>
      %232 = arith.subf %231, %224 : vector<16x16xf32>
      %c0_98 = arith.constant 0 : index
      %c0_99 = arith.constant 0 : index
      %c0_100 = arith.constant 0 : index
      %233 = vector.load %arg9[%c0_98, %c0_99, %c0_100] : memref<2x16x16xf32, #tpu.memory_space<vmem>>, vector<1x16x16xf32>
      %234 = vector.shape_cast %233 : vector<1x16x16xf32> to vector<16x16xf32>
      %235 = vector.shape_cast %230 : vector<16x16xf32> to vector<1x16x16xf32>
      tpu.vector_store %arg9[%c0_98, %c0_99, %c0_100], %235 {strides = array<i32>} : memref<2x16x16xf32, #tpu.memory_space<vmem>>, vector<1x16x16xf32>,
      %cst_101 = arith.constant 0.000000e+00 : f32
      %236 = vector.broadcast %cst_101 : f32 to vector<16x16xf32>
      %237 = arith.subf %236, %232 : vector<16x16xf32>
      %c0_102 = arith.constant 0 : index
      %c0_103 = arith.constant 0 : index
      %c0_104 = arith.constant 0 : index
      %238 = vector.load %arg10[%c0_102, %c0_103, %c0_104] : memref<2x16x16xf32, #tpu.memory_space<vmem>>, vector<1x16x16xf32>
      %239 = vector.shape_cast %238 : vector<1x16x16xf32> to vector<16x16xf32>
      %240 = vector.shape_cast %237 : vector<16x16xf32> to vector<1x16x16xf32>
      tpu.vector_store %arg10[%c0_102, %c0_103, %c0_104], %240 {strides = array<i32>} : memref<2x16x16xf32, #tpu.memory_space<vmem>>, vector<1x16x16xf32>,
      %241 = vector.extract_strided_slice %197 {offsets = [16, 0], sizes = [16, 16], strides = [1, 1]} : vector<32x16xf32> to vector<16x16xf32>
      %242 = vector.extract_strided_slice %199 {offsets = [16, 0], sizes = [16, 16], strides = [1, 1]} : vector<32x16xf32> to vector<16x16xf32>
      %243 = arith.truncf %241 : vector<16x16xf32> to vector<16x16xbf16>
      %244 = arith.extf %243 : vector<16x16xbf16> to vector<16x16xf32>
      %245 = arith.subf %241, %244 : vector<16x16xf32>
      %246 = arith.truncf %245 : vector<16x16xf32> to vector<16x16xbf16>
      %247 = arith.truncf %242 : vector<16x16xf32> to vector<16x16xbf16>
      %248 = arith.extf %247 : vector<16x16xbf16> to vector<16x16xf32>
      %249 = arith.subf %242, %248 : vector<16x16xf32>
      %250 = arith.truncf %249 : vector<16x16xf32> to vector<16x16xbf16>
      %251 = arith.addf %241, %242 : vector<16x16xf32>
      %252 = arith.truncf %251 : vector<16x16xf32> to vector<16x16xbf16>
      %253 = arith.extf %252 : vector<16x16xbf16> to vector<16x16xf32>
      %254 = arith.subf %251, %253 : vector<16x16xf32>
      %255 = arith.truncf %254 : vector<16x16xf32> to vector<16x16xbf16>
      %cst_105 = arith.constant dense<0.000000e+00> : vector<16x16xf32>
      %256 = tpu.matmul %1, %243, %cst_105 {dimension_numbers = #tpu.dot_dimension_numbers<[1], [0], [0], [1], [0, 0, 1, 1], [], []>} : vector<16x16xbf16>, vector<16x16xbf16>, vector<16x16xf32> -> vector<16x16xf32>
      %cst_106 = arith.constant dense<0.000000e+00> : vector<16x16xf32>
      %257 = tpu.matmul %1, %246, %cst_106 {dimension_numbers = #tpu.dot_dimension_numbers<[1], [0], [0], [1], [0, 0, 1, 1], [], []>} : vector<16x16xbf16>, vector<16x16xbf16>, vector<16x16xf32> -> vector<16x16xf32>
      %258 = arith.addf %256, %257 : vector<16x16xf32>
      %cst_107 = arith.constant dense<0.000000e+00> : vector<16x16xf32>
      %259 = tpu.matmul %3, %243, %cst_107 {dimension_numbers = #tpu.dot_dimension_numbers<[1], [0], [0], [1], [0, 0, 1, 1], [], []>} : vector<16x16xbf16>, vector<16x16xbf16>, vector<16x16xf32> -> vector<16x16xf32>
      %260 = arith.addf %258, %259 : vector<16x16xf32>
      %cst_108 = arith.constant dense<0.000000e+00> : vector<16x16xf32>
      %261 = tpu.matmul %5, %247, %cst_108 {dimension_numbers = #tpu.dot_dimension_numbers<[1], [0], [0], [1], [0, 0, 1, 1], [], []>} : vector<16x16xbf16>, vector<16x16xbf16>, vector<16x16xf32> -> vector<16x16xf32>
      %cst_109 = arith.constant dense<0.000000e+00> : vector<16x16xf32>
      %262 = tpu.matmul %5, %250, %cst_109 {dimension_numbers = #tpu.dot_dimension_numbers<[1], [0], [0], [1], [0, 0, 1, 1], [], []>} : vector<16x16xbf16>, vector<16x16xbf16>, vector<16x16xf32> -> vector<16x16xf32>
      %263 = arith.addf %261, %262 : vector<16x16xf32>
      %cst_110 = arith.constant dense<0.000000e+00> : vector<16x16xf32>
      %264 = tpu.matmul %7, %247, %cst_110 {dimension_numbers = #tpu.dot_dimension_numbers<[1], [0], [0], [1], [0, 0, 1, 1], [], []>} : vector<16x16xbf16>, vector<16x16xbf16>, vector<16x16xf32> -> vector<16x16xf32>
      %265 = arith.addf %263, %264 : vector<16x16xf32>
      %cst_111 = arith.constant dense<0.000000e+00> : vector<16x16xf32>
      %266 = tpu.matmul %9, %252, %cst_111 {dimension_numbers = #tpu.dot_dimension_numbers<[1], [0], [0], [1], [0, 0, 1, 1], [], []>} : vector<16x16xbf16>, vector<16x16xbf16>, vector<16x16xf32> -> vector<16x16xf32>
      %cst_112 = arith.constant dense<0.000000e+00> : vector<16x16xf32>
      %267 = tpu.matmul %9, %255, %cst_112 {dimension_numbers = #tpu.dot_dimension_numbers<[1], [0], [0], [1], [0, 0, 1, 1], [], []>} : vector<16x16xbf16>, vector<16x16xbf16>, vector<16x16xf32> -> vector<16x16xf32>
      %268 = arith.addf %266, %267 : vector<16x16xf32>
      %cst_113 = arith.constant dense<0.000000e+00> : vector<16x16xf32>
      %269 = tpu.matmul %11, %252, %cst_113 {dimension_numbers = #tpu.dot_dimension_numbers<[1], [0], [0], [1], [0, 0, 1, 1], [], []>} : vector<16x16xbf16>, vector<16x16xbf16>, vector<16x16xf32> -> vector<16x16xf32>
      %270 = arith.addf %268, %269 : vector<16x16xf32>
      %271 = arith.subf %260, %265 : vector<16x16xf32>
      %272 = arith.subf %270, %260 : vector<16x16xf32>
      %273 = arith.subf %272, %265 : vector<16x16xf32>
      %c1_114 = arith.constant 1 : index
      %c0_115 = arith.constant 0 : index
      %c0_116 = arith.constant 0 : index
      %274 = vector.load %arg9[%c1_114, %c0_115, %c0_116] : memref<2x16x16xf32, #tpu.memory_space<vmem>>, vector<1x16x16xf32>
      %275 = vector.shape_cast %274 : vector<1x16x16xf32> to vector<16x16xf32>
      %276 = vector.shape_cast %271 : vector<16x16xf32> to vector<1x16x16xf32>
      tpu.vector_store %arg9[%c1_114, %c0_115, %c0_116], %276 {strides = array<i32>} : memref<2x16x16xf32, #tpu.memory_space<vmem>>, vector<1x16x16xf32>,
      %cst_117 = arith.constant 0.000000e+00 : f32
      %277 = vector.broadcast %cst_117 : f32 to vector<16x16xf32>
      %278 = arith.subf %277, %273 : vector<16x16xf32>
      %c1_118 = arith.constant 1 : index
      %c0_119 = arith.constant 0 : index
      %c0_120 = arith.constant 0 : index
      %279 = vector.load %arg10[%c1_118, %c0_119, %c0_120] : memref<2x16x16xf32, #tpu.memory_space<vmem>>, vector<1x16x16xf32>
      %280 = vector.shape_cast %279 : vector<1x16x16xf32> to vector<16x16xf32>
      %281 = vector.shape_cast %278 : vector<16x16xf32> to vector<1x16x16xf32>
      tpu.vector_store %arg10[%c1_118, %c0_119, %c0_120], %281 {strides = array<i32>} : memref<2x16x16xf32, #tpu.memory_space<vmem>>, vector<1x16x16xf32>,
    } else {
    }
    %27 = arith.index_cast %arg1 : i32 to index
    %28 = memref.load %arg2[%27] : memref<3xf32, #tpu.memory_space<smem>>
    %c0_31 = arith.constant 0 : index
    %c0_32 = arith.constant 0 : index
    %29 = vector.load %arg7[%c0_31, %c0_32] : memref<16x16xf32, #tpu.memory_space<vmem>>, vector<16x16xf32>
    %30 = vector.broadcast %28 : f32 to vector<16x16xf32>
    %31 = arith.mulf %30, %29 : vector<16x16xf32>
    %32 = math.cos %31 : vector<16x16xf32>
    %33 = math.sin %31 : vector<16x16xf32>
    %cst = arith.constant 0.000000e+00 : f32
    %34 = vector.broadcast %cst : f32 to vector<16x16xf32>
    %35 = arith.subf %34, %33 : vector<16x16xf32>
    %c0_33 = arith.constant 0 : index
    %c0_34 = arith.constant 0 : index
    %c0_35 = arith.constant 0 : index
    %36 = vector.load %arg9[%c0_33, %c0_34, %c0_35] : memref<2x16x16xf32, #tpu.memory_space<vmem>>, vector<2x16x16xf32>
    %c0_36 = arith.constant 0 : index
    %c0_37 = arith.constant 0 : index
    %c0_38 = arith.constant 0 : index
    %37 = vector.load %arg10[%c0_36, %c0_37, %c0_38] : memref<2x16x16xf32, #tpu.memory_space<vmem>>, vector<2x16x16xf32>
    %38 = vector.shape_cast %32 : vector<16x16xf32> to vector<1x16x16xf32>
    %39 = vector.broadcast %38 : vector<1x16x16xf32> to vector<2x16x16xf32>
    %40 = arith.mulf %36, %39 : vector<2x16x16xf32>
    %41 = vector.shape_cast %35 : vector<16x16xf32> to vector<1x16x16xf32>
    %42 = vector.broadcast %41 : vector<1x16x16xf32> to vector<2x16x16xf32>
    %43 = arith.mulf %37, %42 : vector<2x16x16xf32>
    %44 = arith.subf %40, %43 : vector<2x16x16xf32>
    %45 = vector.shape_cast %35 : vector<16x16xf32> to vector<1x16x16xf32>
    %46 = vector.broadcast %45 : vector<1x16x16xf32> to vector<2x16x16xf32>
    %47 = arith.mulf %36, %46 : vector<2x16x16xf32>
    %48 = vector.shape_cast %32 : vector<16x16xf32> to vector<1x16x16xf32>
    %49 = vector.broadcast %48 : vector<1x16x16xf32> to vector<2x16x16xf32>
    %50 = arith.mulf %37, %49 : vector<2x16x16xf32>
    %51 = arith.addf %47, %50 : vector<2x16x16xf32>
    %52 = vector.shape_cast %44 : vector<2x16x16xf32> to vector<32x16xf32>
    %53 = vector.shape_cast %51 : vector<2x16x16xf32> to vector<32x16xf32>
    %54 = arith.truncf %52 : vector<32x16xf32> to vector<32x16xbf16>
    %55 = arith.extf %54 : vector<32x16xbf16> to vector<32x16xf32>
    %56 = arith.subf %52, %55 : vector<32x16xf32>
    %57 = arith.truncf %56 : vector<32x16xf32> to vector<32x16xbf16>
    %58 = arith.truncf %53 : vector<32x16xf32> to vector<32x16xbf16>
    %59 = arith.extf %58 : vector<32x16xbf16> to vector<32x16xf32>
    %60 = arith.subf %53, %59 : vector<32x16xf32>
    %61 = arith.truncf %60 : vector<32x16xf32> to vector<32x16xbf16>
    %62 = arith.addf %52, %53 : vector<32x16xf32>
    %63 = arith.truncf %62 : vector<32x16xf32> to vector<32x16xbf16>
    %64 = arith.extf %63 : vector<32x16xbf16> to vector<32x16xf32>
    %65 = arith.subf %62, %64 : vector<32x16xf32>
    %66 = arith.truncf %65 : vector<32x16xf32> to vector<32x16xbf16>
    %cst_39 = arith.constant dense<0.000000e+00> : vector<32x16xf32>
    %67 = tpu.matmul %54, %13, %cst_39 {dimension_numbers = #tpu.dot_dimension_numbers<[1], [0], [0], [1], [0, 0, 1, 1], [], []>} : vector<32x16xbf16>, vector<16x16xbf16>, vector<32x16xf32> -> vector<32x16xf32>
    %cst_40 = arith.constant dense<0.000000e+00> : vector<32x16xf32>
    %68 = tpu.matmul %54, %15, %cst_40 {dimension_numbers = #tpu.dot_dimension_numbers<[1], [0], [0], [1], [0, 0, 1, 1], [], []>} : vector<32x16xbf16>, vector<16x16xbf16>, vector<32x16xf32> -> vector<32x16xf32>
    %69 = arith.addf %67, %68 : vector<32x16xf32>
    %cst_41 = arith.constant dense<0.000000e+00> : vector<32x16xf32>
    %70 = tpu.matmul %57, %13, %cst_41 {dimension_numbers = #tpu.dot_dimension_numbers<[1], [0], [0], [1], [0, 0, 1, 1], [], []>} : vector<32x16xbf16>, vector<16x16xbf16>, vector<32x16xf32> -> vector<32x16xf32>
    %71 = arith.addf %69, %70 : vector<32x16xf32>
    %cst_42 = arith.constant dense<0.000000e+00> : vector<32x16xf32>
    %72 = tpu.matmul %58, %17, %cst_42 {dimension_numbers = #tpu.dot_dimension_numbers<[1], [0], [0], [1], [0, 0, 1, 1], [], []>} : vector<32x16xbf16>, vector<16x16xbf16>, vector<32x16xf32> -> vector<32x16xf32>
    %cst_43 = arith.constant dense<0.000000e+00> : vector<32x16xf32>
    %73 = tpu.matmul %58, %19, %cst_43 {dimension_numbers = #tpu.dot_dimension_numbers<[1], [0], [0], [1], [0, 0, 1, 1], [], []>} : vector<32x16xbf16>, vector<16x16xbf16>, vector<32x16xf32> -> vector<32x16xf32>
    %74 = arith.addf %72, %73 : vector<32x16xf32>
    %cst_44 = arith.constant dense<0.000000e+00> : vector<32x16xf32>
    %75 = tpu.matmul %61, %17, %cst_44 {dimension_numbers = #tpu.dot_dimension_numbers<[1], [0], [0], [1], [0, 0, 1, 1], [], []>} : vector<32x16xbf16>, vector<16x16xbf16>, vector<32x16xf32> -> vector<32x16xf32>
    %76 = arith.addf %74, %75 : vector<32x16xf32>
    %cst_45 = arith.constant dense<0.000000e+00> : vector<32x16xf32>
    %77 = tpu.matmul %63, %21, %cst_45 {dimension_numbers = #tpu.dot_dimension_numbers<[1], [0], [0], [1], [0, 0, 1, 1], [], []>} : vector<32x16xbf16>, vector<16x16xbf16>, vector<32x16xf32> -> vector<32x16xf32>
    %cst_46 = arith.constant dense<0.000000e+00> : vector<32x16xf32>
    %78 = tpu.matmul %63, %23, %cst_46 {dimension_numbers = #tpu.dot_dimension_numbers<[1], [0], [0], [1], [0, 0, 1, 1], [], []>} : vector<32x16xbf16>, vector<16x16xbf16>, vector<32x16xf32> -> vector<32x16xf32>
    %79 = arith.addf %77, %78 : vector<32x16xf32>
    %cst_47 = arith.constant dense<0.000000e+00> : vector<32x16xf32>
    %80 = tpu.matmul %66, %21, %cst_47 {dimension_numbers = #tpu.dot_dimension_numbers<[1], [0], [0], [1], [0, 0, 1, 1], [], []>} : vector<32x16xbf16>, vector<16x16xbf16>, vector<32x16xf32> -> vector<32x16xf32>
    %81 = arith.addf %79, %80 : vector<32x16xf32>
    %82 = arith.subf %71, %76 : vector<32x16xf32>
    %83 = arith.subf %81, %71 : vector<32x16xf32>
    %84 = arith.subf %83, %76 : vector<32x16xf32>
    %85 = vector.extract_strided_slice %82 {offsets = [0, 0], sizes = [16, 16], strides = [1, 1]} : vector<32x16xf32> to vector<16x16xf32>
    %86 = vector.extract_strided_slice %84 {offsets = [0, 0], sizes = [16, 16], strides = [1, 1]} : vector<32x16xf32> to vector<16x16xf32>
    %87 = arith.truncf %85 : vector<16x16xf32> to vector<16x16xbf16>
    %88 = arith.extf %87 : vector<16x16xbf16> to vector<16x16xf32>
    %89 = arith.subf %85, %88 : vector<16x16xf32>
    %90 = arith.truncf %89 : vector<16x16xf32> to vector<16x16xbf16>
    %91 = arith.truncf %86 : vector<16x16xf32> to vector<16x16xbf16>
    %92 = arith.extf %91 : vector<16x16xbf16> to vector<16x16xf32>
    %93 = arith.subf %86, %92 : vector<16x16xf32>
    %94 = arith.truncf %93 : vector<16x16xf32> to vector<16x16xbf16>
    %95 = arith.addf %85, %86 : vector<16x16xf32>
    %96 = arith.truncf %95 : vector<16x16xf32> to vector<16x16xbf16>
    %97 = arith.extf %96 : vector<16x16xbf16> to vector<16x16xf32>
    %98 = arith.subf %95, %97 : vector<16x16xf32>
    %99 = arith.truncf %98 : vector<16x16xf32> to vector<16x16xbf16>
    %cst_48 = arith.constant dense<0.000000e+00> : vector<16x16xf32>
    %100 = tpu.matmul %1, %87, %cst_48 {dimension_numbers = #tpu.dot_dimension_numbers<[1], [0], [0], [1], [0, 0, 1, 1], [], []>} : vector<16x16xbf16>, vector<16x16xbf16>, vector<16x16xf32> -> vector<16x16xf32>
    %cst_49 = arith.constant dense<0.000000e+00> : vector<16x16xf32>
    %101 = tpu.matmul %1, %90, %cst_49 {dimension_numbers = #tpu.dot_dimension_numbers<[1], [0], [0], [1], [0, 0, 1, 1], [], []>} : vector<16x16xbf16>, vector<16x16xbf16>, vector<16x16xf32> -> vector<16x16xf32>
    %102 = arith.addf %100, %101 : vector<16x16xf32>
    %cst_50 = arith.constant dense<0.000000e+00> : vector<16x16xf32>
    %103 = tpu.matmul %3, %87, %cst_50 {dimension_numbers = #tpu.dot_dimension_numbers<[1], [0], [0], [1], [0, 0, 1, 1], [], []>} : vector<16x16xbf16>, vector<16x16xbf16>, vector<16x16xf32> -> vector<16x16xf32>
    %104 = arith.addf %102, %103 : vector<16x16xf32>
    %cst_51 = arith.constant dense<0.000000e+00> : vector<16x16xf32>
    %105 = tpu.matmul %5, %91, %cst_51 {dimension_numbers = #tpu.dot_dimension_numbers<[1], [0], [0], [1], [0, 0, 1, 1], [], []>} : vector<16x16xbf16>, vector<16x16xbf16>, vector<16x16xf32> -> vector<16x16xf32>
    %cst_52 = arith.constant dense<0.000000e+00> : vector<16x16xf32>
    %106 = tpu.matmul %5, %94, %cst_52 {dimension_numbers = #tpu.dot_dimension_numbers<[1], [0], [0], [1], [0, 0, 1, 1], [], []>} : vector<16x16xbf16>, vector<16x16xbf16>, vector<16x16xf32> -> vector<16x16xf32>
    %107 = arith.addf %105, %106 : vector<16x16xf32>
    %cst_53 = arith.constant dense<0.000000e+00> : vector<16x16xf32>
    %108 = tpu.matmul %7, %91, %cst_53 {dimension_numbers = #tpu.dot_dimension_numbers<[1], [0], [0], [1], [0, 0, 1, 1], [], []>} : vector<16x16xbf16>, vector<16x16xbf16>, vector<16x16xf32> -> vector<16x16xf32>
    %109 = arith.addf %107, %108 : vector<16x16xf32>
    %cst_54 = arith.constant dense<0.000000e+00> : vector<16x16xf32>
    %110 = tpu.matmul %9, %96, %cst_54 {dimension_numbers = #tpu.dot_dimension_numbers<[1], [0], [0], [1], [0, 0, 1, 1], [], []>} : vector<16x16xbf16>, vector<16x16xbf16>, vector<16x16xf32> -> vector<16x16xf32>
    %cst_55 = arith.constant dense<0.000000e+00> : vector<16x16xf32>
    %111 = tpu.matmul %9, %99, %cst_55 {dimension_numbers = #tpu.dot_dimension_numbers<[1], [0], [0], [1], [0, 0, 1, 1], [], []>} : vector<16x16xbf16>, vector<16x16xbf16>, vector<16x16xf32> -> vector<16x16xf32>
    %112 = arith.addf %110, %111 : vector<16x16xf32>
    %cst_56 = arith.constant dense<0.000000e+00> : vector<16x16xf32>
    %113 = tpu.matmul %11, %96, %cst_56 {dimension_numbers = #tpu.dot_dimension_numbers<[1], [0], [0], [1], [0, 0, 1, 1], [], []>} : vector<16x16xbf16>, vector<16x16xbf16>, vector<16x16xf32> -> vector<16x16xf32>
    %114 = arith.addf %112, %113 : vector<16x16xf32>
    %115 = arith.subf %104, %109 : vector<16x16xf32>
    %116 = arith.subf %114, %104 : vector<16x16xf32>
    %117 = arith.subf %116, %109 : vector<16x16xf32>
    %118 = arith.mulf %115, %115 : vector<16x16xf32>
    %119 = arith.mulf %117, %117 : vector<16x16xf32>
    %120 = arith.addf %118, %119 : vector<16x16xf32>
    %121 = math.sqrt %120 : vector<16x16xf32>
    %c0_57 = arith.constant 0 : index
    %c0_58 = arith.constant 0 : index
    %c0_59 = arith.constant 0 : index
    %c0_60 = arith.constant 0 : index
    %122 = vector.load %arg8[%c0_57, %c0_58, %c0_59, %c0_60] : memref<2x1x16x16xf32, #tpu.memory_space<vmem>>, vector<1x1x16x16xf32>
    %123 = vector.shape_cast %122 : vector<1x1x16x16xf32> to vector<16x16xf32>
    %124 = vector.shape_cast %121 : vector<16x16xf32> to vector<1x1x16x16xf32>
    tpu.vector_store %arg8[%c0_57, %c0_58, %c0_59, %c0_60], %124 {strides = array<i32>} : memref<2x1x16x16xf32, #tpu.memory_space<vmem>>, vector<1x1x16x16xf32>,
    %125 = vector.extract_strided_slice %82 {offsets = [16, 0], sizes = [16, 16], strides = [1, 1]} : vector<32x16xf32> to vector<16x16xf32>
    %126 = vector.extract_strided_slice %84 {offsets = [16, 0], sizes = [16, 16], strides = [1, 1]} : vector<32x16xf32> to vector<16x16xf32>
    %127 = arith.truncf %125 : vector<16x16xf32> to vector<16x16xbf16>
    %128 = arith.extf %127 : vector<16x16xbf16> to vector<16x16xf32>
    %129 = arith.subf %125, %128 : vector<16x16xf32>
    %130 = arith.truncf %129 : vector<16x16xf32> to vector<16x16xbf16>
    %131 = arith.truncf %126 : vector<16x16xf32> to vector<16x16xbf16>
    %132 = arith.extf %131 : vector<16x16xbf16> to vector<16x16xf32>
    %133 = arith.subf %126, %132 : vector<16x16xf32>
    %134 = arith.truncf %133 : vector<16x16xf32> to vector<16x16xbf16>
    %135 = arith.addf %125, %126 : vector<16x16xf32>
    %136 = arith.truncf %135 : vector<16x16xf32> to vector<16x16xbf16>
    %137 = arith.extf %136 : vector<16x16xbf16> to vector<16x16xf32>
    %138 = arith.subf %135, %137 : vector<16x16xf32>
    %139 = arith.truncf %138 : vector<16x16xf32> to vector<16x16xbf16>
    %cst_61 = arith.constant dense<0.000000e+00> : vector<16x16xf32>
    %140 = tpu.matmul %1, %127, %cst_61 {dimension_numbers = #tpu.dot_dimension_numbers<[1], [0], [0], [1], [0, 0, 1, 1], [], []>} : vector<16x16xbf16>, vector<16x16xbf16>, vector<16x16xf32> -> vector<16x16xf32>
    %cst_62 = arith.constant dense<0.000000e+00> : vector<16x16xf32>
    %141 = tpu.matmul %1, %130, %cst_62 {dimension_numbers = #tpu.dot_dimension_numbers<[1], [0], [0], [1], [0, 0, 1, 1], [], []>} : vector<16x16xbf16>, vector<16x16xbf16>, vector<16x16xf32> -> vector<16x16xf32>
    %142 = arith.addf %140, %141 : vector<16x16xf32>
    %cst_63 = arith.constant dense<0.000000e+00> : vector<16x16xf32>
    %143 = tpu.matmul %3, %127, %cst_63 {dimension_numbers = #tpu.dot_dimension_numbers<[1], [0], [0], [1], [0, 0, 1, 1], [], []>} : vector<16x16xbf16>, vector<16x16xbf16>, vector<16x16xf32> -> vector<16x16xf32>
    %144 = arith.addf %142, %143 : vector<16x16xf32>
    %cst_64 = arith.constant dense<0.000000e+00> : vector<16x16xf32>
    %145 = tpu.matmul %5, %131, %cst_64 {dimension_numbers = #tpu.dot_dimension_numbers<[1], [0], [0], [1], [0, 0, 1, 1], [], []>} : vector<16x16xbf16>, vector<16x16xbf16>, vector<16x16xf32> -> vector<16x16xf32>
    %cst_65 = arith.constant dense<0.000000e+00> : vector<16x16xf32>
    %146 = tpu.matmul %5, %134, %cst_65 {dimension_numbers = #tpu.dot_dimension_numbers<[1], [0], [0], [1], [0, 0, 1, 1], [], []>} : vector<16x16xbf16>, vector<16x16xbf16>, vector<16x16xf32> -> vector<16x16xf32>
    %147 = arith.addf %145, %146 : vector<16x16xf32>
    %cst_66 = arith.constant dense<0.000000e+00> : vector<16x16xf32>
    %148 = tpu.matmul %7, %131, %cst_66 {dimension_numbers = #tpu.dot_dimension_numbers<[1], [0], [0], [1], [0, 0, 1, 1], [], []>} : vector<16x16xbf16>, vector<16x16xbf16>, vector<16x16xf32> -> vector<16x16xf32>
    %149 = arith.addf %147, %148 : vector<16x16xf32>
    %cst_67 = arith.constant dense<0.000000e+00> : vector<16x16xf32>
    %150 = tpu.matmul %9, %136, %cst_67 {dimension_numbers = #tpu.dot_dimension_numbers<[1], [0], [0], [1], [0, 0, 1, 1], [], []>} : vector<16x16xbf16>, vector<16x16xbf16>, vector<16x16xf32> -> vector<16x16xf32>
    %cst_68 = arith.constant dense<0.000000e+00> : vector<16x16xf32>
    %151 = tpu.matmul %9, %139, %cst_68 {dimension_numbers = #tpu.dot_dimension_numbers<[1], [0], [0], [1], [0, 0, 1, 1], [], []>} : vector<16x16xbf16>, vector<16x16xbf16>, vector<16x16xf32> -> vector<16x16xf32>
    %152 = arith.addf %150, %151 : vector<16x16xf32>
    %cst_69 = arith.constant dense<0.000000e+00> : vector<16x16xf32>
    %153 = tpu.matmul %11, %136, %cst_69 {dimension_numbers = #tpu.dot_dimension_numbers<[1], [0], [0], [1], [0, 0, 1, 1], [], []>} : vector<16x16xbf16>, vector<16x16xbf16>, vector<16x16xf32> -> vector<16x16xf32>
    %154 = arith.addf %152, %153 : vector<16x16xf32>
    %155 = arith.subf %144, %149 : vector<16x16xf32>
    %156 = arith.subf %154, %144 : vector<16x16xf32>
    %157 = arith.subf %156, %149 : vector<16x16xf32>
    %158 = arith.mulf %155, %155 : vector<16x16xf32>
    %159 = arith.mulf %157, %157 : vector<16x16xf32>
    %160 = arith.addf %158, %159 : vector<16x16xf32>
    %161 = math.sqrt %160 : vector<16x16xf32>
    %c1_70 = arith.constant 1 : index
    %c0_71 = arith.constant 0 : index
    %c0_72 = arith.constant 0 : index
    %c0_73 = arith.constant 0 : index
    %162 = vector.load %arg8[%c1_70, %c0_71, %c0_72, %c0_73] : memref<2x1x16x16xf32, #tpu.memory_space<vmem>>, vector<1x1x16x16xf32>
    %163 = vector.shape_cast %162 : vector<1x1x16x16xf32> to vector<16x16xf32>
    %164 = vector.shape_cast %161 : vector<16x16xf32> to vector<1x1x16x16xf32>
    tpu.vector_store %arg8[%c1_70, %c0_71, %c0_72, %c0_73], %164 {strides = array<i32>} : memref<2x1x16x16xf32, #tpu.memory_space<vmem>>, vector<1x1x16x16xf32>,
    return
  }
  func.func @transform_0(%arg0: i32, %arg1: i32, %arg2: memref<3xf32, #tpu.memory_space<smem>>) -> (i32, i32, i32) {
    %c0_i32 = arith.constant 0 : i32
    %c0_i32_0 = arith.constant 0 : i32
    %c0_i32_1 = arith.constant 0 : i32
    return %arg0, %c0_i32, %c0_i32_0 : i32, i32, i32
  }
  func.func @transform_1(%arg0: i32, %arg1: i32, %arg2: memref<3xf32, #tpu.memory_space<smem>>) -> (i32, i32, i32) {
    %c0_i32 = arith.constant 0 : i32
    %c0_i32_0 = arith.constant 0 : i32
    %c0_i32_1 = arith.constant 0 : i32
    return %arg0, %c0_i32, %c0_i32_0 : i32, i32, i32
  }
  func.func @transform_2(%arg0: i32, %arg1: i32, %arg2: memref<3xf32, #tpu.memory_space<smem>>) -> (i32, i32, i32) {
    %c0_i32 = arith.constant 0 : i32
    %c0_i32_0 = arith.constant 0 : i32
    %c0_i32_1 = arith.constant 0 : i32
    %c0_i32_2 = arith.constant 0 : i32
    return %c0_i32, %c0_i32_0, %c0_i32_1 : i32, i32, i32
  }
  func.func @transform_3(%arg0: i32, %arg1: i32, %arg2: memref<3xf32, #tpu.memory_space<smem>>) -> (i32, i32, i32) {
    %c0_i32 = arith.constant 0 : i32
    %c0_i32_0 = arith.constant 0 : i32
    %c0_i32_1 = arith.constant 0 : i32
    %c0_i32_2 = arith.constant 0 : i32
    return %c0_i32, %c0_i32_0, %c0_i32_1 : i32, i32, i32
  }
  func.func @transform_4(%arg0: i32, %arg1: i32, %arg2: memref<3xf32, #tpu.memory_space<smem>>) -> (i32, i32) {
    %c0_i32 = arith.constant 0 : i32
    %c0_i32_0 = arith.constant 0 : i32
    %c0_i32_1 = arith.constant 0 : i32
    return %c0_i32, %c0_i32_0 : i32, i32
  }
  func.func @transform_5(%arg0: i32, %arg1: i32, %arg2: memref<3xf32, #tpu.memory_space<smem>>) -> (i32, i32, i32, i32) {
    %c0_i32 = arith.constant 0 : i32
    %c0_i32_0 = arith.constant 0 : i32
    %c0_i32_1 = arith.constant 0 : i32
    return %arg0, %arg1, %c0_i32, %c0_i32_0 : i32, i32, i32, i32
  }
}

</mosaic_0001>

<llo_original>
// kernel: tpu_custom_call.1
$region0: #{tpu_custom_call.1}
  #allocation0 [shape = 'u32[]', space=smem, size = 0x4, offset = 0x4, fixed_abs, tag = 'smem constant byte address 0x4 - core index']
  #allocation1 [shape = 'u32[144,128]{1,0:T(1,128)}', space=vmem, size = 0x12000, scoped, tag = 'internal scratch']
  #allocation2 [shape = 'f32[2,16,16]{2,1,0:T(8,128)}', space=vmem, size = 0x4000, scoped, tag = 'scratch operand']
  #allocation3 [shape = 'f32[2,16,16]{2,1,0:T(8,128)}', space=vmem, size = 0x4000, scoped, tag = 'scratch operand']
  #allocation4 [shape = 's32[1]{0}', space=sflag, size = 0x4, scoped, tag = 'scoped memory for tpu_custom_call.1']
  #allocation5 [shape = 'u8[512]{0}', space=smem, size = 0x200, scoped, tag = 'prefetched SMEM operand 0']
  #allocation16 [shape = 's32[]', space=sflag, size = 0x4, offset = 0, fixed_abs, tag = 'sflag constant byte address 0x0 - dummy sync flag']
  %s0 = inlined_call_operand.hbm [shape: f32[3], index: 0, kind: input, shape index: {}]
  %s1 = inlined_call_operand.hbm [shape: f32[2,16,16], index: 1, kind: input, shape index: {}]
  %s2 = inlined_call_operand.hbm [shape: f32[2,16,16], index: 2, kind: input, shape index: {}]
  %s3 = inlined_call_operand.hbm [shape: bf16[6,16,16], index: 3, kind: input, shape index: {}]
  %s4 = inlined_call_operand.hbm [shape: bf16[6,16,16], index: 4, kind: input, shape index: {}]
  %s5 = inlined_call_operand.hbm [shape: f32[16,16], index: 5, kind: input, shape index: {}]
  %s6 = inlined_call_operand.hbm [shape: f32[2,3,16,16], index: 6, kind: output, shape index: {}]
  %s7 = sld [smem:[#allocation0]]
  $region77: #{tpu_custom_call.1} parent=0
    _
  %s9 = ssub.s32 1, %s7
  %s10 = scalar_select 0, %s9, %s7
  %12 = dma.hbm_to_smem %s0, 16, [#allocation5], [#allocation4]
  %13 = dma.done [#allocation4], 16
  %14 = sfence
  $region1: #{tpu_custom_call.1} parent=0
    #allocation6 [shape = 'u8[16384]{0}', space=vmem, size = 0x4000, scoped, tag = 'input window, operand 1, single buffered']
    #allocation7 [shape = 's32[2]{0}', space=sflag, size = 0x8, scoped, tag = 'scoped memory for tpu_custom_call.1']
    #allocation8 [shape = 's32[2]{0}', space=sflag, size = 0x8, scoped, tag = 'scoped memory for tpu_custom_call.1']
    #allocation9 [shape = 'u8[16384]{0}', space=vmem, size = 0x4000, scoped, tag = 'input window, operand 2, single buffered']
    #allocation10 [shape = 's32[1]{0}', space=sflag, size = 0x4, scoped, tag = 'scoped memory for tpu_custom_call.1']
    #allocation11 [shape = 'u8[24576]{0}', space=vmem, size = 0x6000, scoped, tag = 'input window, operand 3, single buffered']
    #allocation12 [shape = 'u8[24576]{0}', space=vmem, size = 0x6000, scoped, tag = 'input window, operand 4, single buffered']
    #allocation13 [shape = 's32[1]{0}', space=sflag, size = 0x4, scoped, tag = 'scoped memory for tpu_custom_call.1']
    #allocation14 [shape = 'u8[8192]{0}', space=vmem, size = 0x2000, scoped, tag = 'input window, operand 5, single buffered']
    #allocation15 [shape = 'u8[32768]{0}', space=vmem, size = 0x8000, scoped, tag = 'output window, operand 0']
    %15 = vsyncpa [#allocation7], 0
    %16 = vsyncpa [#allocation10], 0
    %17 = vsyncpa [#allocation13], 0
    %18 = vsyncpa [#allocation8], 0
    %s19 = scalar_lea.sflag [#allocation8], 1
    %20 = vsyncpa %s19, 0
    loop: start=0, step=1, limit=5
    $region2: #{tpu_custom_call.1} parent=1 // loop_pre_header
      _
    $region3: #{tpu_custom_call.1} parent=1 // loop_header
      %s22 = sphi 0, %s26
      %p23 = scmp.ge.s32.totalorder %s22, 5
      %s29 = sphi 0, %s41
      %s30 = sphi 0, %s37
      %s31 = sphi 0, %s29
      %s32 = sphi 0, %s30
      %s33 = sphi 0, %s31
      %s34 = sphi 0, %s32
      %s44 = sphi 0, %s46
      %s47 = sphi 0, %s44
      %s48 = sphi 0, %s47
      %s64 = sphi 0, %s48
      %s70 = sphi 0, %s72
      %s73 = sphi 0, %s70
      %s74 = sphi 0, %s73
      %s90 = sphi 0, %s74
      %s94 = sphi 0, %s94
      %s96 = sphi 0, %s94
      %s97 = sphi 0, %s96
      %s111 = sphi 0, %s97
      %s115 = sphi 0, %s115
      %s117 = sphi 0, %s115
      %s118 = sphi 0, %s117
      %s132 = sphi 0, %s118
      %s136 = sphi 0, %s136
      %s138 = sphi 0, %s136
      %s139 = sphi 0, %s138
      %s153 = sphi 0, %s139
      %s161 = sphi 0, %s163
      %s164 = sphi 0, %s161
      %s165 = sphi 0, %s164
      %s181 = sphi 0, %s165
    $region4: #{tpu_custom_call.1} parent=1 // loop_header_branch
      %25 = sbr.rel (%p23) target = $region8
    $region5: #{tpu_custom_call.1} parent=1 // loop_body
      %s27 = ssub.s32 %s22, 1
      %s28 = ssub.s32 %s22, 2
      %s35 = sadd.s32 1, %s30
      %p36 = scmp.ge.s32.totalorder %s35, 3
      %s37 = scalar_select %p36, 0, %s35
      %s38 = sadd.s32 1, %s29
      %s39 = scalar_select %p36, %s38, %s29
      %p40 = scmp.ge.s32.totalorder %s39, 1
      %s41 = scalar_select %p40, 0, %s39
      %s42 = ssub.s32 %s29, %s41
      %p43 = scmp.eq.s32.totalorder %s42, 0
      %s45 = sadd.s32 %s44, 1
      %s46 = scalar_select %p43, %s44, %s45
      %p49 = pneg %p43
      %p50 = scmp.eq.s32.totalorder %s22, 2
      %p51 = por %p49, %p50
      %p52 = scmp.ne.s32.totalorder %s44, %s47
      %p53 = scmp.eq.s32.totalorder %s22, 0
      %p54 = por %p52, %p53
      %p55 = scmp.ne.s32.totalorder %s44, %s47
      %p56 = scmp.eq.s32.totalorder %s27, 2
      %p57 = por %p55, %p56
      %p58 = scmp.ne.s32.totalorder %s47, %s48
      %p59 = scmp.eq.s32.totalorder %s27, 0
      %p60 = por %p58, %p59
      %p61 = scmp.ne.s32.totalorder %s47, %s48
      %p62 = scmp.eq.s32.totalorder %s28, 2
      %p63 = por %p61, %p62
      %p65 = scmp.ne.s32.totalorder %s48, %s64
      %p66 = scmp.eq.s32.totalorder %s28, 0
      %p67 = por %p65, %p66
      %s68 = ssub.s32 %s29, %s41
      %p69 = scmp.eq.s32.totalorder %s68, 0
      %s71 = sadd.s32 %s70, 1
      %s72 = scalar_select %p69, %s70, %s71
      %p75 = pneg %p69
      %p76 = scmp.eq.s32.totalorder %s22, 2
      %p77 = por %p75, %p76
      %p78 = scmp.ne.s32.totalorder %s70, %s73
      %p79 = scmp.eq.s32.totalorder %s22, 0
      %p80 = por %p78, %p79
      %p81 = scmp.ne.s32.totalorder %s70, %s73
      %p82 = scmp.eq.s32.totalorder %s27, 2
      %p83 = por %p81, %p82
      %p84 = scmp.ne.s32.totalorder %s73, %s74
      %p85 = scmp.eq.s32.totalorder %s27, 0
      %p86 = por %p84, %p85
      %p87 = scmp.ne.s32.totalorder %s73, %s74
      %p88 = scmp.eq.s32.totalorder %s28, 2
      %p89 = por %p87, %p88
      %p91 = scmp.ne.s32.totalorder %s74, %s90
      %p92 = scmp.eq.s32.totalorder %s28, 0
      %p93 = por %p91, %p92
      %s95 = sadd.s32 %s94, 1
      %p98 = scmp.eq.s32.totalorder %s22, 2
      %p99 = scmp.ne.s32.totalorder %s94, %s96
      %p100 = scmp.eq.s32.totalorder %s22, 0
      %p101 = por %p99, %p100
      %p102 = scmp.ne.s32.totalorder %s94, %s96
      %p103 = scmp.eq.s32.totalorder %s27, 2
      %p104 = por %p102, %p103
      %p105 = scmp.ne.s32.totalorder %s96, %s97
      %p106 = scmp.eq.s32.totalorder %s27, 0
      %p107 = por %p105, %p106
      %p108 = scmp.ne.s32.totalorder %s96, %s97
      %p109 = scmp.eq.s32.totalorder %s28, 2
      %p110 = por %p108, %p109
      %p112 = scmp.ne.s32.totalorder %s97, %s111
      %p113 = scmp.eq.s32.totalorder %s28, 0
      %p114 = por %p112, %p113
      %s116 = sadd.s32 %s115, 1
      %p119 = scmp.eq.s32.totalorder %s22, 2
      %p120 = scmp.ne.s32.totalorder %s115, %s117
      %p121 = scmp.eq.s32.totalorder %s22, 0
      %p122 = por %p120, %p121
      %p123 = scmp.ne.s32.totalorder %s115, %s117
      %p124 = scmp.eq.s32.totalorder %s27, 2
      %p125 = por %p123, %p124
      %p126 = scmp.ne.s32.totalorder %s117, %s118
      %p127 = scmp.eq.s32.totalorder %s27, 0
      %p128 = por %p126, %p127
      %p129 = scmp.ne.s32.totalorder %s117, %s118
      %p130 = scmp.eq.s32.totalorder %s28, 2
      %p131 = por %p129, %p130
      %p133 = scmp.ne.s32.totalorder %s118, %s132
      %p134 = scmp.eq.s32.totalorder %s28, 0
      %p135 = por %p133, %p134
      %s137 = sadd.s32 %s136, 1
      %p140 = scmp.eq.s32.totalorder %s22, 2
      %p141 = scmp.ne.s32.totalorder %s136, %s138
      %p142 = scmp.eq.s32.totalorder %s22, 0
      %p143 = por %p141, %p142
      %p144 = scmp.ne.s32.totalorder %s136, %s138
      %p145 = scmp.eq.s32.totalorder %s27, 2
      %p146 = por %p144, %p145
      %p147 = scmp.ne.s32.totalorder %s138, %s139
      %p148 = scmp.eq.s32.totalorder %s27, 0
      %p149 = por %p147, %p148
      %p150 = scmp.ne.s32.totalorder %s138, %s139
      %p151 = scmp.eq.s32.totalorder %s28, 2
      %p152 = por %p150, %p151
      %p154 = scmp.ne.s32.totalorder %s139, %s153
      %p155 = scmp.eq.s32.totalorder %s28, 0
      %p156 = por %p154, %p155
      %s157 = ssub.s32 %s29, %s41
      %s158 = ssub.s32 %s30, %s37
      %s159 = sor.u32 %s157, %s158
      %p160 = scmp.eq.s32.totalorder %s159, 0
      %s162 = sadd.s32 %s161, 1
      %s163 = scalar_select %p160, %s161, %s162
      %p166 = pneg %p160
      %p167 = scmp.eq.s32.totalorder %s22, 2
      %p168 = por %p166, %p167
      %p169 = scmp.ne.s32.totalorder %s161, %s164
      %p170 = scmp.eq.s32.totalorder %s22, 0
      %p171 = por %p169, %p170
      %p172 = scmp.ne.s32.totalorder %s161, %s164
      %p173 = scmp.eq.s32.totalorder %s27, 2
      %p174 = por %p172, %p173
      %p175 = scmp.ne.s32.totalorder %s164, %s165
      %p176 = scmp.eq.s32.totalorder %s27, 0
      %p177 = por %p175, %p176
      %p178 = scmp.ne.s32.totalorder %s164, %s165
      %p179 = scmp.eq.s32.totalorder %s28, 2
      %p180 = por %p178, %p179
      %p182 = scmp.ne.s32.totalorder %s165, %s181
      %p183 = scmp.eq.s32.totalorder %s28, 0
      %p184 = por %p182, %p183
      %p185 = scmp.le.s32.totalorder 1, %s22
      %p186 = scmp.lt.s32.totalorder %s22, 4
      %p187 = pnand %p185, %p186
      %p188 = pneg %p187
      // Predicated region
      $region9: #{tpu_custom_call.1} parent=5 // pred_check
        _
      $region10: #{tpu_custom_call.1} parent=5 // pred_check_branch
        %190 = sbr.rel (%p187) target = $region12
      $region11: #{tpu_custom_call.1} parent=5 // pred_region
        %s191 = ssub.s32 %s22, 1
        // Predicated region
        $region13: #{tpu_custom_call.1} parent=11 // pred_check
          %p192 = pneg %p60
        $region14: #{tpu_custom_call.1} parent=11 // pred_check_branch
          %194 = sbr.rel (%p192) target = $region16
        $region15: #{tpu_custom_call.1} parent=11 // pred_region
          %s195 = smul.u32 2, %s31
          %s197 = ssub.s32 512, 512
          %198 = vsyncadd [#allocation7], %s197
          %s199 = smul.addr %s195, 2
          %s200 = smul.addr %s199, 128
          %s201 = scalar_lea.hbm %s1, %s200
          %s202 = sshll.u32 [#allocation6], 4
          %s203 = int_to_ptr.vmem [resolvable:$true] %s202
          %208 = dma.hbm_to_vmem [thread:$0]  %s201, 512, %s203, [#allocation7], 128, 128, 8
        $region16: #{tpu_custom_call.1} parent=11 // pred_fallthru
          _
        // Predicated region
        $region17: #{tpu_custom_call.1} parent=11 // pred_check
          %p209 = pneg %p86
        $region18: #{tpu_custom_call.1} parent=11 // pred_check_branch
          %211 = sbr.rel (%p209) target = $region20
        $region19: #{tpu_custom_call.1} parent=11 // pred_region
          %s212 = smul.u32 2, %s31
          %s214 = ssub.s32 512, 512
          %215 = vsyncadd [#allocation10], %s214
          %s216 = smul.addr %s212, 2
          %s217 = smul.addr %s216, 128
          %s218 = scalar_lea.hbm %s2, %s217
          %s219 = sshll.u32 [#allocation9], 4
          %s220 = int_to_ptr.vmem [resolvable:$true] %s219
          %225 = dma.hbm_to_vmem [thread:$0]  %s218, 512, %s220, [#allocation10], 128, 128, 8
        $region20: #{tpu_custom_call.1} parent=11 // pred_fallthru
          _
        // Predicated region
        $region21: #{tpu_custom_call.1} parent=11 // pred_check
          %p226 = pneg %p107
        $region22: #{tpu_custom_call.1} parent=11 // pred_check_branch
          %228 = sbr.rel (%p226) target = $region24
        $region23: #{tpu_custom_call.1} parent=11 // pred_region
          %s230 = ssub.s32 768, 768
          %231 = vsyncadd [#allocation10], %s230
          %s232 = sshll.u32 [#allocation11], 4
          %s233 = int_to_ptr.vmem [resolvable:$true] %s232
          %238 = dma.hbm_to_vmem [thread:$0]  %s3, 768, %s233, [#allocation10], 64, 64, 4
        $region24: #{tpu_custom_call.1} parent=11 // pred_fallthru
          _
        // Predicated region
        $region25: #{tpu_custom_call.1} parent=11 // pred_check
          %p239 = pneg %p128
        $region26: #{tpu_custom_call.1} parent=11 // pred_check_branch
          %241 = sbr.rel (%p239) target = $region28
        $region27: #{tpu_custom_call.1} parent=11 // pred_region
          %s243 = ssub.s32 768, 768
          %244 = vsyncadd [#allocation13], %s243
          %s245 = sshll.u32 [#allocation12], 4
          %s246 = int_to_ptr.vmem [resolvable:$true] %s245
          %251 = dma.hbm_to_vmem [thread:$0]  %s4, 768, %s246, [#allocation13], 64, 64, 4
        $region28: #{tpu_custom_call.1} parent=11 // pred_fallthru
          _
        // Predicated region
        $region29: #{tpu_custom_call.1} parent=11 // pred_check
          %p252 = pneg %p149
        $region30: #{tpu_custom_call.1} parent=11 // pred_check_branch
          %254 = sbr.rel (%p252) target = $region32
        $region31: #{tpu_custom_call.1} parent=11 // pred_region
          %s256 = ssub.s32 256, 256
          %257 = vsyncadd [#allocation13], %s256
          %s258 = sshll.u32 [#allocation14], 4
          %s259 = int_to_ptr.vmem [resolvable:$true] %s258
          %264 = dma.hbm_to_vmem [thread:$0]  %s5, 256, %s259, [#allocation13], 128, 128, 8
        $region32: #{tpu_custom_call.1} parent=11 // pred_fallthru
          _
      $region12: #{tpu_custom_call.1} parent=5 // pred_fallthru
        _
      %p265 = scmp.lt.s32.totalorder %s22, 3
      // Predicated region
      $region33: #{tpu_custom_call.1} parent=5 // pred_check
        %p266 = pneg %p265
      $region34: #{tpu_custom_call.1} parent=5 // pred_check_branch
        %268 = sbr.rel (%p266) target = $region36
      $region35: #{tpu_custom_call.1} parent=5 // pred_region
        _
      $region36: #{tpu_custom_call.1} parent=5 // pred_fallthru
        _
      %p269 = scmp.le.s32.totalorder 1, %s22
      %p270 = scmp.lt.s32.totalorder %s22, 4
      %p271 = pnand %p269, %p270
      %p272 = pneg %p271
      // Predicated region
      $region37: #{tpu_custom_call.1} parent=5 // pred_check
        _
      $region38: #{tpu_custom_call.1} parent=5 // pred_check_branch
        %274 = sbr.rel (%p271) target = $region40
      $region39: #{tpu_custom_call.1} parent=5 // pred_region
        %s275 = ssub.s32 %s22, 1
        // Predicated region
        $region41: #{tpu_custom_call.1} parent=39 // pred_check
          %p276 = pneg %p60
        $region42: #{tpu_custom_call.1} parent=39 // pred_check_branch
          %278 = sbr.rel (%p276) target = $region44
        $region43: #{tpu_custom_call.1} parent=39 // pred_region
          %279 = dma.done [#allocation7], 512
        $region44: #{tpu_custom_call.1} parent=39 // pred_fallthru
          _
        // Predicated region
        $region45: #{tpu_custom_call.1} parent=39 // pred_check
          %p280 = pneg %p86
        $region46: #{tpu_custom_call.1} parent=39 // pred_check_branch
          %282 = sbr.rel (%p280) target = $region48
        $region47: #{tpu_custom_call.1} parent=39 // pred_region
          %283 = dma.done [#allocation10], 512
        $region48: #{tpu_custom_call.1} parent=39 // pred_fallthru
          _
        // Predicated region
        $region49: #{tpu_custom_call.1} parent=39 // pred_check
          %p284 = pneg %p107
        $region50: #{tpu_custom_call.1} parent=39 // pred_check_branch
          %286 = sbr.rel (%p284) target = $region52
        $region51: #{tpu_custom_call.1} parent=39 // pred_region
          %287 = dma.done [#allocation10], 768
        $region52: #{tpu_custom_call.1} parent=39 // pred_fallthru
          _
        // Predicated region
        $region53: #{tpu_custom_call.1} parent=39 // pred_check
          %p288 = pneg %p128
        $region54: #{tpu_custom_call.1} parent=39 // pred_check_branch
          %290 = sbr.rel (%p288) target = $region56
        $region55: #{tpu_custom_call.1} parent=39 // pred_region
          %291 = dma.done [#allocation13], 768
        $region56: #{tpu_custom_call.1} parent=39 // pred_fallthru
          _
        // Predicated region
        $region57: #{tpu_custom_call.1} parent=39 // pred_check
          %p292 = pneg %p149
        $region58: #{tpu_custom_call.1} parent=39 // pred_check_branch
          %294 = sbr.rel (%p292) target = $region60
        $region59: #{tpu_custom_call.1} parent=39 // pred_region
          %295 = dma.done [#allocation13], 256
        $region60: #{tpu_custom_call.1} parent=39 // pred_fallthru
          _
        %p296 = pneg %p60
        %p297 = pneg %p57
        %p298 = pneg %p86
        %p299 = pneg %p83
        %p300 = pneg %p107
        %p301 = pneg %p104
        %p302 = pneg %p128
        %p303 = pneg %p125
        %p304 = pneg %p149
        %p305 = pneg %p146
        %p306 = pneg %p177
        %p307 = pneg %p174
        %s308 = sand.u32 %s164, 1
        %s309 = scalar_lea.sflag [#allocation8], %s308
        %s310 = sand.u32 %s164, 1
        %s311 = smul.addr %s310, 32
        %s312 = scalar_lea.vmem [#allocation15], %s311
        %s313 = smul.u32 2, %s31
        %s314 = smul.u32 2, %s31
        %s315 = smul.u32 2, %s31
        %v317 = vld [vmem:[#allocation11] sm:$0xf]
        %v318 = vld [vmem:[#allocation11 + $0x4] sm:$0xf]
        %s319 = scalar_lea.vmem [#allocation11], 8
        %v320 = vld [vmem:[%s319] sm:$0xf]
        %v321 = vld [vmem:[%s319 + $0x4] sm:$0xf]
        %s322 = scalar_lea.vmem [#allocation11], 16
        %v323 = vld [vmem:[%s322] sm:$0xf]
        %v324 = vld [vmem:[%s322 + $0x4] sm:$0xf]
        %s325 = scalar_lea.vmem [#allocation11], 24
        %v326 = vld [vmem:[%s325] sm:$0xf]
        %v327 = vld [vmem:[%s325 + $0x4] sm:$0xf]
        %s328 = scalar_lea.vmem [#allocation11], 32
        %v329 = vld [vmem:[%s328] sm:$0xf]
        %v330 = vld [vmem:[%s328 + $0x4] sm:$0xf]
        %s331 = scalar_lea.vmem [#allocation11], 40
        %v332 = vld [vmem:[%s331] sm:$0xf]
        %v333 = vld [vmem:[%s331 + $0x4] sm:$0xf]
        %v334 = vld [vmem:[#allocation12] sm:$0xf]
        %v335 = vld [vmem:[#allocation12 + $0x4] sm:$0xf]
        %s336 = scalar_lea.vmem [#allocation12], 8
        %v337 = vld [vmem:[%s336] sm:$0xf]
        %v338 = vld [vmem:[%s336 + $0x4] sm:$0xf]
        %s339 = scalar_lea.vmem [#allocation12], 16
        %v340 = vld [vmem:[%s339] sm:$0xf]
        %v341 = vld [vmem:[%s339 + $0x4] sm:$0xf]
        %s342 = scalar_lea.vmem [#allocation12], 24
        %v343 = vld [vmem:[%s342] sm:$0xf]
        %v344 = vld [vmem:[%s342 + $0x4] sm:$0xf]
        %s345 = scalar_lea.vmem [#allocation12], 32
        %v346 = vld [vmem:[%s345] sm:$0xf]
        %v347 = vld [vmem:[%s345 + $0x4] sm:$0xf]
        %s348 = scalar_lea.vmem [#allocation12], 40
        %v349 = vld [vmem:[%s348] sm:$0xf]
        %v350 = vld [vmem:[%s348 + $0x4] sm:$0xf]
        %p351 = scmp.eq.s32.totalorder %s32, 0
        // Predicated region
        $region61: #{tpu_custom_call.1} parent=39 // pred_check
          %p352 = pneg %p351
        $region62: #{tpu_custom_call.1} parent=39 // pred_check_branch
          %354 = sbr.rel (%p352) target = $region64
        $region63: #{tpu_custom_call.1} parent=39 // pred_region
          %v355 = vld [vmem:[#allocation6] sm:$0xff]
          %v356 = vld [vmem:[#allocation6 + $0x8] sm:$0xff]
          %v357 = vld [vmem:[#allocation6 + $0x10] sm:$0xff]
          %v358 = vld [vmem:[#allocation6 + $0x18] sm:$0xff]
          %v359 = vld [vmem:[#allocation9] sm:$0xff]
          %v360 = vld [vmem:[#allocation9 + $0x8] sm:$0xff]
          %v361 = vld [vmem:[#allocation9 + $0x10] sm:$0xff]
          %v362 = vld [vmem:[#allocation9 + $0x18] sm:$0xff]
          %v363 = vpack.c.bf16 %v356, %v355
          %v364 = vpack.c.bf16 %v358, %v357
          %v365 = vunpack.c.l.bf16 %v363
          %v366 = vunpack.c.h.bf16 %v363
          %v367 = vunpack.c.l.bf16 %v364
          %v368 = vunpack.c.h.bf16 %v364
          %v369 = vsub.f32 %v355, %v365
          %v370 = vsub.f32 %v356, %v366
          %v371 = vsub.f32 %v357, %v367
          %v372 = vsub.f32 %v358, %v368
          %v373 = vpack.c.bf16 %v370, %v369
          %v374 = vpack.c.bf16 %v372, %v371
          %v375 = vpack.c.bf16 %v360, %v359
          %v376 = vpack.c.bf16 %v362, %v361
          %v377 = vunpack.c.l.bf16 %v375
          %v378 = vunpack.c.h.bf16 %v375
          %v379 = vunpack.c.l.bf16 %v376
          %v380 = vunpack.c.h.bf16 %v376
          %v381 = vsub.f32 %v359, %v377
          %v382 = vsub.f32 %v360, %v378
          %v383 = vsub.f32 %v361, %v379
          %v384 = vsub.f32 %v362, %v380
          %v385 = vpack.c.bf16 %v382, %v381
          %v386 = vpack.c.bf16 %v384, %v383
          %v387 = vadd.f32 %v355, %v359
          %v388 = vadd.f32 %v356, %v360
          %v389 = vadd.f32 %v357, %v361
          %v390 = vadd.f32 %v358, %v362
          %v391 = vpack.c.bf16 %v388, %v387
          %v392 = vpack.c.bf16 %v390, %v389
          %v393 = vunpack.c.l.bf16 %v391
          %v394 = vunpack.c.h.bf16 %v391
          %v395 = vunpack.c.l.bf16 %v392
          %v396 = vunpack.c.h.bf16 %v392
          %v397 = vsub.f32 %v387, %v393
          %v398 = vsub.f32 %v388, %v394
          %v399 = vsub.f32 %v389, %v395
          %v400 = vsub.f32 %v390, %v396
          %v401 = vpack.c.bf16 %v398, %v397
          %v402 = vpack.c.bf16 %v400, %v399
          %v405 = vunpack.c.l.b16 %v337
          %v406 = vunpack.c.l.b16 %v338
          %v407 = vpack.c.b16 %v406, %v405
          %vm409 = vcmask 130048
          %v411 = vsel %vm409, %v363, 0
          %v414 = vsel %vm409, %v364, 0
          %416 = vmatprep.subr.bf16.mxu0 0
          %417 = vmatpush1.bf16.msra.mxu0 0
          %418 = vmatprep.subr.bf16.mxu0 0
          %419 = vmatpush1.bf16.msra.mxu0 0
          %420 = vmatprep.subr.bf16.mxu0 0
          %421 = vmatpush1.bf16.msra.mxu0 0
          %422 = vmatprep.subr.bf16.mxu0 0
          %423 = vmatpush1.bf16.msra.mxu0 0
          %424 = vmatprep.subr.bf16.mxu0 0
          %425 = vmatpush1.bf16.msra.mxu0 0
          %426 = vmatprep.subr.bf16.mxu0 0
          %427 = vmatpush1.bf16.msra.mxu0 0
          %428 = vmatprep.subr.bf16.mxu0 0
          %429 = vmatpush1.bf16.msra.mxu0 0
          %430 = vmatprep.subr.bf16.mxu0 0
          %431 = vmatpush1.bf16.msra.mxu0 %v407
          %432 = vmatprep.subr.bf16.mxu0 0
          %433 = vmatpush2.bf16.msra.mxu0 0
          %434 = vmatprep.subr.bf16.mxu0 0
          %435 = vmatpush2.bf16.msra.mxu0 0
          %436 = vmatprep.subr.bf16.mxu0 0
          %437 = vmatpush2.bf16.msra.mxu0 0
          %438 = vmatprep.subr.bf16.mxu0 0
          %439 = vmatpush2.bf16.msra.mxu0 0
          %440 = vmatprep.subr.bf16.mxu0 0
          %441 = vmatpush2.bf16.msra.mxu0 0
          %442 = vmatprep.subr.bf16.mxu0 0
          %443 = vmatpush2.bf16.msra.mxu0 0
          %444 = vmatprep.subr.bf16.mxu0 0
          %445 = vmatpush2.bf16.msra.mxu0 0
          %446 = vmatprep.subr.bf16.mxu0 0
          %447 = vmatpush2.bf16.msra.mxu0 0
          %448 = vmatprep.mubr.bf16.mxu0 0
          %449 = vmatmul.mubr.bf16.gmra.mxu0 %v411
          %v450 = vpop.f32.mrf.mxu0
          %v451 = vadd.f32 0.0, %v450
          %v452 = vpop.f32.mrf.mxu0
          %v453 = vpop.f32.mrf.mxu0
          %v454 = vadd.f32 0.0, %v453
          %v455 = vpop.f32.mrf.mxu0
          %456 = vmatprep.mubr.bf16.mxu0 0
          %457 = vmatmul.mubr.bf16.gmra.mxu0 %v414
          %v458 = vpop.f32.mrf.mxu0
          %v459 = vadd.f32 0.0, %v458
          %v460 = vpop.f32.mrf.mxu0
          %v461 = vpop.f32.mrf.mxu0
          %v462 = vadd.f32 0.0, %v461
          %v463 = vpop.f32.mrf.mxu0
          %464 = vdwg.mxu0
          %v467 = vunpack.c.l.b16 %v334
          %v468 = vunpack.c.l.b16 %v335
          %v469 = vpack.c.b16 %v468, %v467
          %471 = vmatprep.subr.bf16.mxu0 0
          %472 = vmatpush1.bf16.msra.mxu0 0
          %473 = vmatprep.subr.bf16.mxu0 0
          %474 = vmatpush1.bf16.msra.mxu0 0
          %475 = vmatprep.subr.bf16.mxu0 0
          %476 = vmatpush1.bf16.msra.mxu0 0
          %477 = vmatprep.subr.bf16.mxu0 0
          %478 = vmatpush1.bf16.msra.mxu0 0
          %479 = vmatprep.subr.bf16.mxu0 0
          %480 = vmatpush1.bf16.msra.mxu0 0
          %481 = vmatprep.subr.bf16.mxu0 0
          %482 = vmatpush1.bf16.msra.mxu0 0
          %483 = vmatprep.subr.bf16.mxu0 0
          %484 = vmatpush1.bf16.msra.mxu0 0
          %485 = vmatprep.subr.bf16.mxu0 0
          %486 = vmatpush1.bf16.msra.mxu0 %v469
          %487 = vmatprep.subr.bf16.mxu0 0
          %488 = vmatpush2.bf16.msra.mxu0 0
          %489 = vmatprep.subr.bf16.mxu0 0
          %490 = vmatpush2.bf16.msra.mxu0 0
          %491 = vmatprep.subr.bf16.mxu0 0
          %492 = vmatpush2.bf16.msra.mxu0 0
          %493 = vmatprep.subr.bf16.mxu0 0
          %494 = vmatpush2.bf16.msra.mxu0 0
          %495 = vmatprep.subr.bf16.mxu0 0
          %496 = vmatpush2.bf16.msra.mxu0 0
          %497 = vmatprep.subr.bf16.mxu0 0
          %498 = vmatpush2.bf16.msra.mxu0 0
          %499 = vmatprep.subr.bf16.mxu0 0
          %500 = vmatpush2.bf16.msra.mxu0 0
          %501 = vmatprep.subr.bf16.mxu0 0
          %502 = vmatpush2.bf16.msra.mxu0 0
          %503 = vmatprep.mubr.bf16.mxu0 0
          %504 = vmatmul.mubr.bf16.gmra.mxu0 %v411
          %v505 = vpop.f32.mrf.mxu0
          %v506 = vadd.f32 %v451, %v505
          %v507 = vpop.f32.mrf.mxu0
          %v508 = vpop.f32.mrf.mxu0
          %v509 = vadd.f32 %v454, %v508
          %v510 = vpop.f32.mrf.mxu0
          %511 = vmatprep.mubr.bf16.mxu0 0
          %512 = vmatmul.mubr.bf16.gmra.mxu0 %v414
          %v513 = vpop.f32.mrf.mxu0
          %v514 = vadd.f32 %v459, %v513
          %v515 = vpop.f32.mrf.mxu0
          %v516 = vpop.f32.mrf.mxu0
          %v517 = vadd.f32 %v462, %v516
          %v518 = vpop.f32.mrf.mxu0
          %519 = vdwg.mxu0
          %v521 = vsel %vm409, %v373, 0
          %v524 = vsel %vm409, %v374, 0
          %526 = vmatprep.subr.bf16.mxu0 0
          %527 = vmatpush1.bf16.msra.mxu0 0
          %528 = vmatprep.subr.bf16.mxu0 0
          %529 = vmatpush1.bf16.msra.mxu0 0
          %530 = vmatprep.subr.bf16.mxu0 0
          %531 = vmatpush1.bf16.msra.mxu0 0
          %532 = vmatprep.subr.bf16.mxu0 0
          %533 = vmatpush1.bf16.msra.mxu0 0
          %534 = vmatprep.subr.bf16.mxu0 0
          %535 = vmatpush1.bf16.msra.mxu0 0
          %536 = vmatprep.subr.bf16.mxu0 0
          %537 = vmatpush1.bf16.msra.mxu0 0
          %538 = vmatprep.subr.bf16.mxu0 0
          %539 = vmatpush1.bf16.msra.mxu0 0
          %540 = vmatprep.subr.bf16.mxu0 0
          %541 = vmatpush1.bf16.msra.mxu0 %v469
          %542 = vmatprep.subr.bf16.mxu0 0
          %543 = vmatpush2.bf16.msra.mxu0 0
          %544 = vmatprep.subr.bf16.mxu0 0
          %545 = vmatpush2.bf16.msra.mxu0 0
          %546 = vmatprep.subr.bf16.mxu0 0
          %547 = vmatpush2.bf16.msra.mxu0 0
          %548 = vmatprep.subr.bf16.mxu0 0
          %549 = vmatpush2.bf16.msra.mxu0 0
          %550 = vmatprep.subr.bf16.mxu0 0
          %551 = vmatpush2.bf16.msra.mxu0 0
          %552 = vmatprep.subr.bf16.mxu0 0
          %553 = vmatpush2.bf16.msra.mxu0 0
          %554 = vmatprep.subr.bf16.mxu0 0
          %555 = vmatpush2.bf16.msra.mxu0 0
          %556 = vmatprep.subr.bf16.mxu0 0
          %557 = vmatpush2.bf16.msra.mxu0 0
          %558 = vmatprep.mubr.bf16.mxu0 0
          %559 = vmatmul.mubr.bf16.gmra.mxu0 %v521
          %v560 = vpop.f32.mrf.mxu0
          %v561 = vadd.f32 0.0, %v560
          %v562 = vpop.f32.mrf.mxu0
          %v563 = vpop.f32.mrf.mxu0
          %v564 = vadd.f32 0.0, %v563
          %v565 = vpop.f32.mrf.mxu0
          %566 = vmatprep.mubr.bf16.mxu0 0
          %567 = vmatmul.mubr.bf16.gmra.mxu0 %v524
          %v568 = vpop.f32.mrf.mxu0
          %v569 = vadd.f32 0.0, %v568
          %v570 = vpop.f32.mrf.mxu0
          %v571 = vpop.f32.mrf.mxu0
          %v572 = vadd.f32 0.0, %v571
          %v573 = vpop.f32.mrf.mxu0
          %574 = vdwg.mxu0
          %v575 = vadd.f32 %v506, %v561
          %v576 = vadd.f32 %v509, %v564
          %v577 = vadd.f32 %v514, %v569
          %v578 = vadd.f32 %v517, %v572
          %v581 = vunpack.c.l.b16 %v343
          %v582 = vunpack.c.l.b16 %v344
          %v583 = vpack.c.b16 %v582, %v581
          %v586 = vsel %vm409, %v375, 0
          %v589 = vsel %vm409, %v376, 0
          %591 = vmatprep.subr.bf16.mxu0 0
          %592 = vmatpush1.bf16.msra.mxu0 0
          %593 = vmatprep.subr.bf16.mxu0 0
          %594 = vmatpush1.bf16.msra.mxu0 0
          %595 = vmatprep.subr.bf16.mxu0 0
          %596 = vmatpush1.bf16.msra.mxu0 0
          %597 = vmatprep.subr.bf16.mxu0 0
          %598 = vmatpush1.bf16.msra.mxu0 0
          %599 = vmatprep.subr.bf16.mxu0 0
          %600 = vmatpush1.bf16.msra.mxu0 0
          %601 = vmatprep.subr.bf16.mxu0 0
          %602 = vmatpush1.bf16.msra.mxu0 0
          %603 = vmatprep.subr.bf16.mxu0 0
          %604 = vmatpush1.bf16.msra.mxu0 0
          %605 = vmatprep.subr.bf16.mxu0 0
          %606 = vmatpush1.bf16.msra.mxu0 %v583
          %607 = vmatprep.subr.bf16.mxu0 0
          %608 = vmatpush2.bf16.msra.mxu0 0
          %609 = vmatprep.subr.bf16.mxu0 0
          %610 = vmatpush2.bf16.msra.mxu0 0
          %611 = vmatprep.subr.bf16.mxu0 0
          %612 = vmatpush2.bf16.msra.mxu0 0
          %613 = vmatprep.subr.bf16.mxu0 0
          %614 = vmatpush2.bf16.msra.mxu0 0
          %615 = vmatprep.subr.bf16.mxu0 0
          %616 = vmatpush2.bf16.msra.mxu0 0
          %617 = vmatprep.subr.bf16.mxu0 0
          %618 = vmatpush2.bf16.msra.mxu0 0
          %619 = vmatprep.subr.bf16.mxu0 0
          %620 = vmatpush2.bf16.msra.mxu0 0
          %621 = vmatprep.subr.bf16.mxu0 0
          %622 = vmatpush2.bf16.msra.mxu0 0
          %623 = vmatprep.mubr.bf16.mxu0 0
          %624 = vmatmul.mubr.bf16.gmra.mxu0 %v586
          %v625 = vpop.f32.mrf.mxu0
          %v626 = vadd.f32 0.0, %v625
          %v627 = vpop.f32.mrf.mxu0
          %v628 = vpop.f32.mrf.mxu0
          %v629 = vadd.f32 0.0, %v628
          %v630 = vpop.f32.mrf.mxu0
          %631 = vmatprep.mubr.bf16.mxu0 0
          %632 = vmatmul.mubr.bf16.gmra.mxu0 %v589
          %v633 = vpop.f32.mrf.mxu0
          %v634 = vadd.f32 0.0, %v633
          %v635 = vpop.f32.mrf.mxu0
          %v636 = vpop.f32.mrf.mxu0
          %v637 = vadd.f32 0.0, %v636
          %v638 = vpop.f32.mrf.mxu0
          %639 = vdwg.mxu0
          %v642 = vunpack.c.l.b16 %v340
          %v643 = vunpack.c.l.b16 %v341
          %v644 = vpack.c.b16 %v643, %v642
          %646 = vmatprep.subr.bf16.mxu0 0
          %647 = vmatpush1.bf16.msra.mxu0 0
          %648 = vmatprep.subr.bf16.mxu0 0
          %649 = vmatpush1.bf16.msra.mxu0 0
          %650 = vmatprep.subr.bf16.mxu0 0
          %651 = vmatpush1.bf16.msra.mxu0 0
          %652 = vmatprep.subr.bf16.mxu0 0
          %653 = vmatpush1.bf16.msra.mxu0 0
          %654 = vmatprep.subr.bf16.mxu0 0
          %655 = vmatpush1.bf16.msra.mxu0 0
          %656 = vmatprep.subr.bf16.mxu0 0
          %657 = vmatpush1.bf16.msra.mxu0 0
          %658 = vmatprep.subr.bf16.mxu0 0
          %659 = vmatpush1.bf16.msra.mxu0 0
          %660 = vmatprep.subr.bf16.mxu0 0
          %661 = vmatpush1.bf16.msra.mxu0 %v644
          %662 = vmatprep.subr.bf16.mxu0 0
          %663 = vmatpush2.bf16.msra.mxu0 0
          %664 = vmatprep.subr.bf16.mxu0 0
          %665 = vmatpush2.bf16.msra.mxu0 0
          %666 = vmatprep.subr.bf16.mxu0 0
          %667 = vmatpush2.bf16.msra.mxu0 0
          %668 = vmatprep.subr.bf16.mxu0 0
          %669 = vmatpush2.bf16.msra.mxu0 0
          %670 = vmatprep.subr.bf16.mxu0 0
          %671 = vmatpush2.bf16.msra.mxu0 0
          %672 = vmatprep.subr.bf16.mxu0 0
          %673 = vmatpush2.bf16.msra.mxu0 0
          %674 = vmatprep.subr.bf16.mxu0 0
          %675 = vmatpush2.bf16.msra.mxu0 0
          %676 = vmatprep.subr.bf16.mxu0 0
          %677 = vmatpush2.bf16.msra.mxu0 0
          %678 = vmatprep.mubr.bf16.mxu0 0
          %679 = vmatmul.mubr.bf16.gmra.mxu0 %v586
          %v680 = vpop.f32.mrf.mxu0
          %v681 = vadd.f32 %v626, %v680
          %v682 = vpop.f32.mrf.mxu0
          %v683 = vpop.f32.mrf.mxu0
          %v684 = vadd.f32 %v629, %v683
          %v685 = vpop.f32.mrf.mxu0
          %686 = vmatprep.mubr.bf16.mxu0 0
          %687 = vmatmul.mubr.bf16.gmra.mxu0 %v589
          %v688 = vpop.f32.mrf.mxu0
          %v689 = vadd.f32 %v634, %v688
          %v690 = vpop.f32.mrf.mxu0
          %v691 = vpop.f32.mrf.mxu0
          %v692 = vadd.f32 %v637, %v691
          %v693 = vpop.f32.mrf.mxu0
          %694 = vdwg.mxu0
          %v696 = vsel %vm409, %v385, 0
          %v699 = vsel %vm409, %v386, 0
          %701 = vmatprep.subr.bf16.mxu0 0
          %702 = vmatpush1.bf16.msra.mxu0 0
          %703 = vmatprep.subr.bf16.mxu0 0
          %704 = vmatpush1.bf16.msra.mxu0 0
          %705 = vmatprep.subr.bf16.mxu0 0
          %706 = vmatpush1.bf16.msra.mxu0 0
          %707 = vmatprep.subr.bf16.mxu0 0
          %708 = vmatpush1.bf16.msra.mxu0 0
          %709 = vmatprep.subr.bf16.mxu0 0
          %710 = vmatpush1.bf16.msra.mxu0 0
          %711 = vmatprep.subr.bf16.mxu0 0
          %712 = vmatpush1.bf16.msra.mxu0 0
          %713 = vmatprep.subr.bf16.mxu0 0
          %714 = vmatpush1.bf16.msra.mxu0 0
          %715 = vmatprep.subr.bf16.mxu0 0
          %716 = vmatpush1.bf16.msra.mxu0 %v644
          %717 = vmatprep.subr.bf16.mxu0 0
          %718 = vmatpush2.bf16.msra.mxu0 0
          %719 = vmatprep.subr.bf16.mxu0 0
          %720 = vmatpush2.bf16.msra.mxu0 0
          %721 = vmatprep.subr.bf16.mxu0 0
          %722 = vmatpush2.bf16.msra.mxu0 0
          %723 = vmatprep.subr.bf16.mxu0 0
          %724 = vmatpush2.bf16.msra.mxu0 0
          %725 = vmatprep.subr.bf16.mxu0 0
          %726 = vmatpush2.bf16.msra.mxu0 0
          %727 = vmatprep.subr.bf16.mxu0 0
          %728 = vmatpush2.bf16.msra.mxu0 0
          %729 = vmatprep.subr.bf16.mxu0 0
          %730 = vmatpush2.bf16.msra.mxu0 0
          %731 = vmatprep.subr.bf16.mxu0 0
          %732 = vmatpush2.bf16.msra.mxu0 0
          %733 = vmatprep.mubr.bf16.mxu0 0
          %734 = vmatmul.mubr.bf16.gmra.mxu0 %v696
          %v735 = vpop.f32.mrf.mxu0
          %v736 = vadd.f32 0.0, %v735
          %v737 = vpop.f32.mrf.mxu0
          %v738 = vpop.f32.mrf.mxu0
          %v739 = vadd.f32 0.0, %v738
          %v740 = vpop.f32.mrf.mxu0
          %741 = vmatprep.mubr.bf16.mxu0 0
          %742 = vmatmul.mubr.bf16.gmra.mxu0 %v699
          %v743 = vpop.f32.mrf.mxu0
          %v744 = vadd.f32 0.0, %v743
          %v745 = vpop.f32.mrf.mxu0
          %v746 = vpop.f32.mrf.mxu0
          %v747 = vadd.f32 0.0, %v746
          %v748 = vpop.f32.mrf.mxu0
          %749 = vdwg.mxu0
          %v750 = vadd.f32 %v681, %v736
          %v751 = vadd.f32 %v684, %v739
          %v752 = vadd.f32 %v689, %v744
          %v753 = vadd.f32 %v692, %v747
          %v756 = vunpack.c.l.b16 %v349
          %v757 = vunpack.c.l.b16 %v350
          %v758 = vpack.c.b16 %v757, %v756
          %v761 = vsel %vm409, %v391, 0
          %v764 = vsel %vm409, %v392, 0
          %766 = vmatprep.subr.bf16.mxu0 0
          %767 = vmatpush1.bf16.msra.mxu0 0
          %768 = vmatprep.subr.bf16.mxu0 0
          %769 = vmatpush1.bf16.msra.mxu0 0
          %770 = vmatprep.subr.bf16.mxu0 0
          %771 = vmatpush1.bf16.msra.mxu0 0
          %772 = vmatprep.subr.bf16.mxu0 0
          %773 = vmatpush1.bf16.msra.mxu0 0
          %774 = vmatprep.subr.bf16.mxu0 0
          %775 = vmatpush1.bf16.msra.mxu0 0
          %776 = vmatprep.subr.bf16.mxu0 0
          %777 = vmatpush1.bf16.msra.mxu0 0
          %778 = vmatprep.subr.bf16.mxu0 0
          %779 = vmatpush1.bf16.msra.mxu0 0
          %780 = vmatprep.subr.bf16.mxu0 0
          %781 = vmatpush1.bf16.msra.mxu0 %v758
          %782 = vmatprep.subr.bf16.mxu0 0
          %783 = vmatpush2.bf16.msra.mxu0 0
          %784 = vmatprep.subr.bf16.mxu0 0
          %785 = vmatpush2.bf16.msra.mxu0 0
          %786 = vmatprep.subr.bf16.mxu0 0
          %787 = vmatpush2.bf16.msra.mxu0 0
          %788 = vmatprep.subr.bf16.mxu0 0
          %789 = vmatpush2.bf16.msra.mxu0 0
          %790 = vmatprep.subr.bf16.mxu0 0
          %791 = vmatpush2.bf16.msra.mxu0 0
          %792 = vmatprep.subr.bf16.mxu0 0
          %793 = vmatpush2.bf16.msra.mxu0 0
          %794 = vmatprep.subr.bf16.mxu0 0
          %795 = vmatpush2.bf16.msra.mxu0 0
          %796 = vmatprep.subr.bf16.mxu0 0
          %797 = vmatpush2.bf16.msra.mxu0 0
          %798 = vmatprep.mubr.bf16.mxu0 0
          %799 = vmatmul.mubr.bf16.gmra.mxu0 %v761
          %v800 = vpop.f32.mrf.mxu0
          %v801 = vadd.f32 0.0, %v800
          %v802 = vpop.f32.mrf.mxu0
          %v803 = vpop.f32.mrf.mxu0
          %v804 = vadd.f32 0.0, %v803
          %v805 = vpop.f32.mrf.mxu0
          %806 = vmatprep.mubr.bf16.mxu0 0
          %807 = vmatmul.mubr.bf16.gmra.mxu0 %v764
          %v808 = vpop.f32.mrf.mxu0
          %v809 = vadd.f32 0.0, %v808
          %v810 = vpop.f32.mrf.mxu0
          %v811 = vpop.f32.mrf.mxu0
          %v812 = vadd.f32 0.0, %v811
          %v813 = vpop.f32.mrf.mxu0
          %814 = vdwg.mxu0
          %v817 = vunpack.c.l.b16 %v346
          %v818 = vunpack.c.l.b16 %v347
          %v819 = vpack.c.b16 %v818, %v817
          %821 = vmatprep.subr.bf16.mxu0 0
          %822 = vmatpush1.bf16.msra.mxu0 0
          %823 = vmatprep.subr.bf16.mxu0 0
          %824 = vmatpush1.bf16.msra.mxu0 0
          %825 = vmatprep.subr.bf16.mxu0 0
          %826 = vmatpush1.bf16.msra.mxu0 0
          %827 = vmatprep.subr.bf16.mxu0 0
          %828 = vmatpush1.bf16.msra.mxu0 0
          %829 = vmatprep.subr.bf16.mxu0 0
          %830 = vmatpush1.bf16.msra.mxu0 0
          %831 = vmatprep.subr.bf16.mxu0 0
          %832 = vmatpush1.bf16.msra.mxu0 0
          %833 = vmatprep.subr.bf16.mxu0 0
          %834 = vmatpush1.bf16.msra.mxu0 0
          %835 = vmatprep.subr.bf16.mxu0 0
          %836 = vmatpush1.bf16.msra.mxu0 %v819
          %837 = vmatprep.subr.bf16.mxu0 0
          %838 = vmatpush2.bf16.msra.mxu0 0
          %839 = vmatprep.subr.bf16.mxu0 0
          %840 = vmatpush2.bf16.msra.mxu0 0
          %841 = vmatprep.subr.bf16.mxu0 0
          %842 = vmatpush2.bf16.msra.mxu0 0
          %843 = vmatprep.subr.bf16.mxu0 0
          %844 = vmatpush2.bf16.msra.mxu0 0
          %845 = vmatprep.subr.bf16.mxu0 0
          %846 = vmatpush2.bf16.msra.mxu0 0
          %847 = vmatprep.subr.bf16.mxu0 0
          %848 = vmatpush2.bf16.msra.mxu0 0
          %849 = vmatprep.subr.bf16.mxu0 0
          %850 = vmatpush2.bf16.msra.mxu0 0
          %851 = vmatprep.subr.bf16.mxu0 0
          %852 = vmatpush2.bf16.msra.mxu0 0
          %853 = vmatprep.mubr.bf16.mxu0 0
          %854 = vmatmul.mubr.bf16.gmra.mxu0 %v761
          %v855 = vpop.f32.mrf.mxu0
          %v856 = vadd.f32 %v801, %v855
          %v857 = vpop.f32.mrf.mxu0
          %v858 = vpop.f32.mrf.mxu0
          %v859 = vadd.f32 %v804, %v858
          %v860 = vpop.f32.mrf.mxu0
          %861 = vmatprep.mubr.bf16.mxu0 0
          %862 = vmatmul.mubr.bf16.gmra.mxu0 %v764
          %v863 = vpop.f32.mrf.mxu0
          %v864 = vadd.f32 %v809, %v863
          %v865 = vpop.f32.mrf.mxu0
          %v866 = vpop.f32.mrf.mxu0
          %v867 = vadd.f32 %v812, %v866
          %v868 = vpop.f32.mrf.mxu0
          %869 = vdwg.mxu0
          %v871 = vsel %vm409, %v401, 0
          %v874 = vsel %vm409, %v402, 0
          %876 = vmatprep.subr.bf16.mxu0 0
          %877 = vmatpush1.bf16.msra.mxu0 0
          %878 = vmatprep.subr.bf16.mxu0 0
          %879 = vmatpush1.bf16.msra.mxu0 0
          %880 = vmatprep.subr.bf16.mxu0 0
          %881 = vmatpush1.bf16.msra.mxu0 0
          %882 = vmatprep.subr.bf16.mxu0 0
          %883 = vmatpush1.bf16.msra.mxu0 0
          %884 = vmatprep.subr.bf16.mxu0 0
          %885 = vmatpush1.bf16.msra.mxu0 0
          %886 = vmatprep.subr.bf16.mxu0 0
          %887 = vmatpush1.bf16.msra.mxu0 0
          %888 = vmatprep.subr.bf16.mxu0 0
          %889 = vmatpush1.bf16.msra.mxu0 0
          %890 = vmatprep.subr.bf16.mxu0 0
          %891 = vmatpush1.bf16.msra.mxu0 %v819
          %892 = vmatprep.subr.bf16.mxu0 0
          %893 = vmatpush2.bf16.msra.mxu0 0
          %894 = vmatprep.subr.bf16.mxu0 0
          %895 = vmatpush2.bf16.msra.mxu0 0
          %896 = vmatprep.subr.bf16.mxu0 0
          %897 = vmatpush2.bf16.msra.mxu0 0
          %898 = vmatprep.subr.bf16.mxu0 0
          %899 = vmatpush2.bf16.msra.mxu0 0
          %900 = vmatprep.subr.bf16.mxu0 0
          %901 = vmatpush2.bf16.msra.mxu0 0
          %902 = vmatprep.subr.bf16.mxu0 0
          %903 = vmatpush2.bf16.msra.mxu0 0
          %904 = vmatprep.subr.bf16.mxu0 0
          %905 = vmatpush2.bf16.msra.mxu0 0
          %906 = vmatprep.subr.bf16.mxu0 0
          %907 = vmatpush2.bf16.msra.mxu0 0
          %908 = vmatprep.mubr.bf16.mxu0 0
          %909 = vmatmul.mubr.bf16.gmra.mxu0 %v871
          %v910 = vpop.f32.mrf.mxu0
          %v911 = vadd.f32 0.0, %v910
          %v912 = vpop.f32.mrf.mxu0
          %v913 = vpop.f32.mrf.mxu0
          %v914 = vadd.f32 0.0, %v913
          %v915 = vpop.f32.mrf.mxu0
          %916 = vmatprep.mubr.bf16.mxu0 0
          %917 = vmatmul.mubr.bf16.gmra.mxu0 %v874
          %v918 = vpop.f32.mrf.mxu0
          %v919 = vadd.f32 0.0, %v918
          %v920 = vpop.f32.mrf.mxu0
          %v921 = vpop.f32.mrf.mxu0
          %v922 = vadd.f32 0.0, %v921
          %v923 = vpop.f32.mrf.mxu0
          %924 = vdwg.mxu0
          %v925 = vadd.f32 %v856, %v911
          %v926 = vadd.f32 %v859, %v914
          %v927 = vadd.f32 %v864, %v919
          %v928 = vadd.f32 %v867, %v922
          %v929 = vsub.f32 %v575, %v750
          %v930 = vsub.f32 %v576, %v751
          %v931 = vsub.f32 %v577, %v752
          %v932 = vsub.f32 %v578, %v753
          %v933 = vsub.f32 %v925, %v575
          %v934 = vsub.f32 %v926, %v576
          %v935 = vsub.f32 %v927, %v577
          %v936 = vsub.f32 %v928, %v578
          %v937 = vsub.f32 %v933, %v750
          %v938 = vsub.f32 %v934, %v751
          %v939 = vsub.f32 %v935, %v752
          %v940 = vsub.f32 %v936, %v753
          %v941 = vpack.c.bf16 %v930, %v929
          %v942 = vunpack.c.l.bf16 %v941
          %v943 = vunpack.c.h.bf16 %v941
          %v944 = vsub.f32 %v929, %v942
          %v945 = vsub.f32 %v930, %v943
          %v946 = vpack.c.bf16 %v945, %v944
          %v947 = vpack.c.bf16 %v938, %v937
          %v948 = vunpack.c.l.bf16 %v947
          %v949 = vunpack.c.h.bf16 %v947
          %v950 = vsub.f32 %v937, %v948
          %v951 = vsub.f32 %v938, %v949
          %v952 = vpack.c.bf16 %v951, %v950
          %v953 = vadd.f32 %v929, %v937
          %v954 = vadd.f32 %v930, %v938
          %v955 = vpack.c.bf16 %v954, %v953
          %v956 = vunpack.c.l.bf16 %v955
          %v957 = vunpack.c.h.bf16 %v955
          %v958 = vsub.f32 %v953, %v956
          %v959 = vsub.f32 %v954, %v957
          %v960 = vpack.c.bf16 %v959, %v958
          %v963 = vunpack.c.l.b16 %v317
          %v964 = vunpack.c.l.b16 %v318
          %v965 = vpack.c.b16 %v964, %v963
          %v967 = vsel %vm409, %v965, 0
          %969 = vmatprep.subr.bf16.mxu0 0
          %970 = vmatpush1.bf16.msra.mxu0 0
          %971 = vmatprep.subr.bf16.mxu0 0
          %972 = vmatpush1.bf16.msra.mxu0 0
          %973 = vmatprep.subr.bf16.mxu0 0
          %974 = vmatpush1.bf16.msra.mxu0 0
          %975 = vmatprep.subr.bf16.mxu0 0
          %976 = vmatpush1.bf16.msra.mxu0 0
          %977 = vmatprep.subr.bf16.mxu0 0
          %978 = vmatpush1.bf16.msra.mxu0 0
          %979 = vmatprep.subr.bf16.mxu0 0
          %980 = vmatpush1.bf16.msra.mxu0 0
          %981 = vmatprep.subr.bf16.mxu0 0
          %982 = vmatpush1.bf16.msra.mxu0 0
          %983 = vmatprep.subr.bf16.mxu0 0
          %984 = vmatpush1.bf16.msra.mxu0 %v946
          %985 = vmatprep.subr.bf16.mxu0 0
          %986 = vmatpush2.bf16.msra.mxu0 0
          %987 = vmatprep.subr.bf16.mxu0 0
          %988 = vmatpush2.bf16.msra.mxu0 0
          %989 = vmatprep.subr.bf16.mxu0 0
          %990 = vmatpush2.bf16.msra.mxu0 0
          %991 = vmatprep.subr.bf16.mxu0 0
          %992 = vmatpush2.bf16.msra.mxu0 0
          %993 = vmatprep.subr.bf16.mxu0 0
          %994 = vmatpush2.bf16.msra.mxu0 0
          %995 = vmatprep.subr.bf16.mxu0 0
          %996 = vmatpush2.bf16.msra.mxu0 0
          %997 = vmatprep.subr.bf16.mxu0 0
          %998 = vmatpush2.bf16.msra.mxu0 0
          %999 = vmatprep.subr.bf16.mxu0 0
          %1000 = vmatpush2.bf16.msra.mxu0 0
          %1001 = vmatprep.mubr.bf16.mxu0 0
          %1002 = vmatmul.mubr.bf16.gmra.mxu0 %v967
          %v1003 = vpop.f32.mrf.mxu0
          %v1004 = vadd.f32 0.0, %v1003
          %v1005 = vpop.f32.mrf.mxu0
          %v1006 = vpop.f32.mrf.mxu0
          %v1007 = vadd.f32 0.0, %v1006
          %v1008 = vpop.f32.mrf.mxu0
          %1009 = vdwg.mxu0
          %1010 = vmatprep.subr.bf16.mxu0 0
          %1011 = vmatpush1.bf16.msra.mxu0 0
          %1012 = vmatprep.subr.bf16.mxu0 0
          %1013 = vmatpush1.bf16.msra.mxu0 0
          %1014 = vmatprep.subr.bf16.mxu0 0
          %1015 = vmatpush1.bf16.msra.mxu0 0
          %1016 = vmatprep.subr.bf16.mxu0 0
          %1017 = vmatpush1.bf16.msra.mxu0 0
          %1018 = vmatprep.subr.bf16.mxu0 0
          %1019 = vmatpush1.bf16.msra.mxu0 0
          %1020 = vmatprep.subr.bf16.mxu0 0
          %1021 = vmatpush1.bf16.msra.mxu0 0
          %1022 = vmatprep.subr.bf16.mxu0 0
          %1023 = vmatpush1.bf16.msra.mxu0 0
          %1024 = vmatprep.subr.bf16.mxu0 0
          %1025 = vmatpush1.bf16.msra.mxu0 %v941
          %1026 = vmatprep.subr.bf16.mxu0 0
          %1027 = vmatpush2.bf16.msra.mxu0 0
          %1028 = vmatprep.subr.bf16.mxu0 0
          %1029 = vmatpush2.bf16.msra.mxu0 0
          %1030 = vmatprep.subr.bf16.mxu0 0
          %1031 = vmatpush2.bf16.msra.mxu0 0
          %1032 = vmatprep.subr.bf16.mxu0 0
          %1033 = vmatpush2.bf16.msra.mxu0 0
          %1034 = vmatprep.subr.bf16.mxu0 0
          %1035 = vmatpush2.bf16.msra.mxu0 0
          %1036 = vmatprep.subr.bf16.mxu0 0
          %1037 = vmatpush2.bf16.msra.mxu0 0
          %1038 = vmatprep.subr.bf16.mxu0 0
          %1039 = vmatpush2.bf16.msra.mxu0 0
          %1040 = vmatprep.subr.bf16.mxu0 0
          %1041 = vmatpush2.bf16.msra.mxu0 0
          %1042 = vmatprep.mubr.bf16.mxu0 0
          %1043 = vmatmul.mubr.bf16.gmra.mxu0 %v967
          %v1044 = vpop.f32.mrf.mxu0
          %v1045 = vadd.f32 %v1004, %v1044
          %v1046 = vpop.f32.mrf.mxu0
          %v1047 = vpop.f32.mrf.mxu0
          %v1048 = vadd.f32 %v1007, %v1047
          %v1049 = vpop.f32.mrf.mxu0
          %1050 = vdwg.mxu0
          %v1053 = vunpack.c.l.b16 %v320
          %v1054 = vunpack.c.l.b16 %v321
          %v1055 = vpack.c.b16 %v1054, %v1053
          %v1057 = vsel %vm409, %v1055, 0
          %1059 = vmatprep.subr.bf16.mxu0 0
          %1060 = vmatpush1.bf16.msra.mxu0 0
          %1061 = vmatprep.subr.bf16.mxu0 0
          %1062 = vmatpush1.bf16.msra.mxu0 0
          %1063 = vmatprep.subr.bf16.mxu0 0
          %1064 = vmatpush1.bf16.msra.mxu0 0
          %1065 = vmatprep.subr.bf16.mxu0 0
          %1066 = vmatpush1.bf16.msra.mxu0 0
          %1067 = vmatprep.subr.bf16.mxu0 0
          %1068 = vmatpush1.bf16.msra.mxu0 0
          %1069 = vmatprep.subr.bf16.mxu0 0
          %1070 = vmatpush1.bf16.msra.mxu0 0
          %1071 = vmatprep.subr.bf16.mxu0 0
          %1072 = vmatpush1.bf16.msra.mxu0 0
          %1073 = vmatprep.subr.bf16.mxu0 0
          %1074 = vmatpush1.bf16.msra.mxu0 %v941
          %1075 = vmatprep.subr.bf16.mxu0 0
          %1076 = vmatpush2.bf16.msra.mxu0 0
          %1077 = vmatprep.subr.bf16.mxu0 0
          %1078 = vmatpush2.bf16.msra.mxu0 0
          %1079 = vmatprep.subr.bf16.mxu0 0
          %1080 = vmatpush2.bf16.msra.mxu0 0
          %1081 = vmatprep.subr.bf16.mxu0 0
          %1082 = vmatpush2.bf16.msra.mxu0 0
          %1083 = vmatprep.subr.bf16.mxu0 0
          %1084 = vmatpush2.bf16.msra.mxu0 0
          %1085 = vmatprep.subr.bf16.mxu0 0
          %1086 = vmatpush2.bf16.msra.mxu0 0
          %1087 = vmatprep.subr.bf16.mxu0 0
          %1088 = vmatpush2.bf16.msra.mxu0 0
          %1089 = vmatprep.subr.bf16.mxu0 0
          %1090 = vmatpush2.bf16.msra.mxu0 0
          %1091 = vmatprep.mubr.bf16.mxu0 0
          %1092 = vmatmul.mubr.bf16.gmra.mxu0 %v1057
          %v1093 = vpop.f32.mrf.mxu0
          %v1094 = vadd.f32 0.0, %v1093
          %v1095 = vpop.f32.mrf.mxu0
          %v1096 = vpop.f32.mrf.mxu0
          %v1097 = vadd.f32 0.0, %v1096
          %v1098 = vpop.f32.mrf.mxu0
          %1099 = vdwg.mxu0
          %v1100 = vadd.f32 %v1045, %v1094
          %v1101 = vadd.f32 %v1048, %v1097
          %v1104 = vunpack.c.l.b16 %v323
          %v1105 = vunpack.c.l.b16 %v324
          %v1106 = vpack.c.b16 %v1105, %v1104
          %v1108 = vsel %vm409, %v1106, 0
          %1110 = vmatprep.subr.bf16.mxu0 0
          %1111 = vmatpush1.bf16.msra.mxu0 0
          %1112 = vmatprep.subr.bf16.mxu0 0
          %1113 = vmatpush1.bf16.msra.mxu0 0
          %1114 = vmatprep.subr.bf16.mxu0 0
          %1115 = vmatpush1.bf16.msra.mxu0 0
          %1116 = vmatprep.subr.bf16.mxu0 0
          %1117 = vmatpush1.bf16.msra.mxu0 0
          %1118 = vmatprep.subr.bf16.mxu0 0
          %1119 = vmatpush1.bf16.msra.mxu0 0
          %1120 = vmatprep.subr.bf16.mxu0 0
          %1121 = vmatpush1.bf16.msra.mxu0 0
          %1122 = vmatprep.subr.bf16.mxu0 0
          %1123 = vmatpush1.bf16.msra.mxu0 0
          %1124 = vmatprep.subr.bf16.mxu0 0
          %1125 = vmatpush1.bf16.msra.mxu0 %v952
          %1126 = vmatprep.subr.bf16.mxu0 0
          %1127 = vmatpush2.bf16.msra.mxu0 0
          %1128 = vmatprep.subr.bf16.mxu0 0
          %1129 = vmatpush2.bf16.msra.mxu0 0
          %1130 = vmatprep.subr.bf16.mxu0 0
          %1131 = vmatpush2.bf16.msra.mxu0 0
          %1132 = vmatprep.subr.bf16.mxu0 0
          %1133 = vmatpush2.bf16.msra.mxu0 0
          %1134 = vmatprep.subr.bf16.mxu0 0
          %1135 = vmatpush2.bf16.msra.mxu0 0
          %1136 = vmatprep.subr.bf16.mxu0 0
          %1137 = vmatpush2.bf16.msra.mxu0 0
          %1138 = vmatprep.subr.bf16.mxu0 0
          %1139 = vmatpush2.bf16.msra.mxu0 0
          %1140 = vmatprep.subr.bf16.mxu0 0
          %1141 = vmatpush2.bf16.msra.mxu0 0
          %1142 = vmatprep.mubr.bf16.mxu0 0
          %1143 = vmatmul.mubr.bf16.gmra.mxu0 %v1108
          %v1144 = vpop.f32.mrf.mxu0
          %v1145 = vadd.f32 0.0, %v1144
          %v1146 = vpop.f32.mrf.mxu0
          %v1147 = vpop.f32.mrf.mxu0
          %v1148 = vadd.f32 0.0, %v1147
          %v1149 = vpop.f32.mrf.mxu0
          %1150 = vdwg.mxu0
          %1151 = vmatprep.subr.bf16.mxu0 0
          %1152 = vmatpush1.bf16.msra.mxu0 0
          %1153 = vmatprep.subr.bf16.mxu0 0
          %1154 = vmatpush1.bf16.msra.mxu0 0
          %1155 = vmatprep.subr.bf16.mxu0 0
          %1156 = vmatpush1.bf16.msra.mxu0 0
          %1157 = vmatprep.subr.bf16.mxu0 0
          %1158 = vmatpush1.bf16.msra.mxu0 0
          %1159 = vmatprep.subr.bf16.mxu0 0
          %1160 = vmatpush1.bf16.msra.mxu0 0
          %1161 = vmatprep.subr.bf16.mxu0 0
          %1162 = vmatpush1.bf16.msra.mxu0 0
          %1163 = vmatprep.subr.bf16.mxu0 0
          %1164 = vmatpush1.bf16.msra.mxu0 0
          %1165 = vmatprep.subr.bf16.mxu0 0
          %1166 = vmatpush1.bf16.msra.mxu0 %v947
          %1167 = vmatprep.subr.bf16.mxu0 0
          %1168 = vmatpush2.bf16.msra.mxu0 0
          %1169 = vmatprep.subr.bf16.mxu0 0
          %1170 = vmatpush2.bf16.msra.mxu0 0
          %1171 = vmatprep.subr.bf16.mxu0 0
          %1172 = vmatpush2.bf16.msra.mxu0 0
          %1173 = vmatprep.subr.bf16.mxu0 0
          %1174 = vmatpush2.bf16.msra.mxu0 0
          %1175 = vmatprep.subr.bf16.mxu0 0
          %1176 = vmatpush2.bf16.msra.mxu0 0
          %1177 = vmatprep.subr.bf16.mxu0 0
          %1178 = vmatpush2.bf16.msra.mxu0 0
          %1179 = vmatprep.subr.bf16.mxu0 0
          %1180 = vmatpush2.bf16.msra.mxu0 0
          %1181 = vmatprep.subr.bf16.mxu0 0
          %1182 = vmatpush2.bf16.msra.mxu0 0
          %1183 = vmatprep.mubr.bf16.mxu0 0
          %1184 = vmatmul.mubr.bf16.gmra.mxu0 %v1108
          %v1185 = vpop.f32.mrf.mxu0
          %v1186 = vadd.f32 %v1145, %v1185
          %v1187 = vpop.f32.mrf.mxu0
          %v1188 = vpop.f32.mrf.mxu0
          %v1189 = vadd.f32 %v1148, %v1188
          %v1190 = vpop.f32.mrf.mxu0
          %1191 = vdwg.mxu0
          %v1194 = vunpack.c.l.b16 %v326
          %v1195 = vunpack.c.l.b16 %v327
          %v1196 = vpack.c.b16 %v1195, %v1194
          %v1198 = vsel %vm409, %v1196, 0
          %1200 = vmatprep.subr.bf16.mxu0 0
          %1201 = vmatpush1.bf16.msra.mxu0 0
          %1202 = vmatprep.subr.bf16.mxu0 0
          %1203 = vmatpush1.bf16.msra.mxu0 0
          %1204 = vmatprep.subr.bf16.mxu0 0
          %1205 = vmatpush1.bf16.msra.mxu0 0
          %1206 = vmatprep.subr.bf16.mxu0 0
          %1207 = vmatpush1.bf16.msra.mxu0 0
          %1208 = vmatprep.subr.bf16.mxu0 0
          %1209 = vmatpush1.bf16.msra.mxu0 0
          %1210 = vmatprep.subr.bf16.mxu0 0
          %1211 = vmatpush1.bf16.msra.mxu0 0
          %1212 = vmatprep.subr.bf16.mxu0 0
          %1213 = vmatpush1.bf16.msra.mxu0 0
          %1214 = vmatprep.subr.bf16.mxu0 0
          %1215 = vmatpush1.bf16.msra.mxu0 %v947
          %1216 = vmatprep.subr.bf16.mxu0 0
          %1217 = vmatpush2.bf16.msra.mxu0 0
          %1218 = vmatprep.subr.bf16.mxu0 0
          %1219 = vmatpush2.bf16.msra.mxu0 0
          %1220 = vmatprep.subr.bf16.mxu0 0
          %1221 = vmatpush2.bf16.msra.mxu0 0
          %1222 = vmatprep.subr.bf16.mxu0 0
          %1223 = vmatpush2.bf16.msra.mxu0 0
          %1224 = vmatprep.subr.bf16.mxu0 0
          %1225 = vmatpush2.bf16.msra.mxu0 0
          %1226 = vmatprep.subr.bf16.mxu0 0
          %1227 = vmatpush2.bf16.msra.mxu0 0
          %1228 = vmatprep.subr.bf16.mxu0 0
          %1229 = vmatpush2.bf16.msra.mxu0 0
          %1230 = vmatprep.subr.bf16.mxu0 0
          %1231 = vmatpush2.bf16.msra.mxu0 0
          %1232 = vmatprep.mubr.bf16.mxu0 0
          %1233 = vmatmul.mubr.bf16.gmra.mxu0 %v1198
          %v1234 = vpop.f32.mrf.mxu0
          %v1235 = vadd.f32 0.0, %v1234
          %v1236 = vpop.f32.mrf.mxu0
          %v1237 = vpop.f32.mrf.mxu0
          %v1238 = vadd.f32 0.0, %v1237
          %v1239 = vpop.f32.mrf.mxu0
          %1240 = vdwg.mxu0
          %v1241 = vadd.f32 %v1186, %v1235
          %v1242 = vadd.f32 %v1189, %v1238
          %v1245 = vunpack.c.l.b16 %v329
          %v1246 = vunpack.c.l.b16 %v330
          %v1247 = vpack.c.b16 %v1246, %v1245
          %v1249 = vsel %vm409, %v1247, 0
          %1251 = vmatprep.subr.bf16.mxu0 0
          %1252 = vmatpush1.bf16.msra.mxu0 0
          %1253 = vmatprep.subr.bf16.mxu0 0
          %1254 = vmatpush1.bf16.msra.mxu0 0
          %1255 = vmatprep.subr.bf16.mxu0 0
          %1256 = vmatpush1.bf16.msra.mxu0 0
          %1257 = vmatprep.subr.bf16.mxu0 0
          %1258 = vmatpush1.bf16.msra.mxu0 0
          %1259 = vmatprep.subr.bf16.mxu0 0
          %1260 = vmatpush1.bf16.msra.mxu0 0
          %1261 = vmatprep.subr.bf16.mxu0 0
          %1262 = vmatpush1.bf16.msra.mxu0 0
          %1263 = vmatprep.subr.bf16.mxu0 0
          %1264 = vmatpush1.bf16.msra.mxu0 0
          %1265 = vmatprep.subr.bf16.mxu0 0
          %1266 = vmatpush1.bf16.msra.mxu0 %v960
          %1267 = vmatprep.subr.bf16.mxu0 0
          %1268 = vmatpush2.bf16.msra.mxu0 0
          %1269 = vmatprep.subr.bf16.mxu0 0
          %1270 = vmatpush2.bf16.msra.mxu0 0
          %1271 = vmatprep.subr.bf16.mxu0 0
          %1272 = vmatpush2.bf16.msra.mxu0 0
          %1273 = vmatprep.subr.bf16.mxu0 0
          %1274 = vmatpush2.bf16.msra.mxu0 0
          %1275 = vmatprep.subr.bf16.mxu0 0
          %1276 = vmatpush2.bf16.msra.mxu0 0
          %1277 = vmatprep.subr.bf16.mxu0 0
          %1278 = vmatpush2.bf16.msra.mxu0 0
          %1279 = vmatprep.subr.bf16.mxu0 0
          %1280 = vmatpush2.bf16.msra.mxu0 0
          %1281 = vmatprep.subr.bf16.mxu0 0
          %1282 = vmatpush2.bf16.msra.mxu0 0
          %1283 = vmatprep.mubr.bf16.mxu0 0
          %1284 = vmatmul.mubr.bf16.gmra.mxu0 %v1249
          %v1285 = vpop.f32.mrf.mxu0
          %v1286 = vadd.f32 0.0, %v1285
          %v1287 = vpop.f32.mrf.mxu0
          %v1288 = vpop.f32.mrf.mxu0
          %v1289 = vadd.f32 0.0, %v1288
          %v1290 = vpop.f32.mrf.mxu0
          %1291 = vdwg.mxu0
          %1292 = vmatprep.subr.bf16.mxu0 0
          %1293 = vmatpush1.bf16.msra.mxu0 0
          %1294 = vmatprep.subr.bf16.mxu0 0
          %1295 = vmatpush1.bf16.msra.mxu0 0
          %1296 = vmatprep.subr.bf16.mxu0 0
          %1297 = vmatpush1.bf16.msra.mxu0 0
          %1298 = vmatprep.subr.bf16.mxu0 0
          %1299 = vmatpush1.bf16.msra.mxu0 0
          %1300 = vmatprep.subr.bf16.mxu0 0
          %1301 = vmatpush1.bf16.msra.mxu0 0
          %1302 = vmatprep.subr.bf16.mxu0 0
          %1303 = vmatpush1.bf16.msra.mxu0 0
          %1304 = vmatprep.subr.bf16.mxu0 0
          %1305 = vmatpush1.bf16.msra.mxu0 0
          %1306 = vmatprep.subr.bf16.mxu0 0
          %1307 = vmatpush1.bf16.msra.mxu0 %v955
          %1308 = vmatprep.subr.bf16.mxu0 0
          %1309 = vmatpush2.bf16.msra.mxu0 0
          %1310 = vmatprep.subr.bf16.mxu0 0
          %1311 = vmatpush2.bf16.msra.mxu0 0
          %1312 = vmatprep.subr.bf16.mxu0 0
          %1313 = vmatpush2.bf16.msra.mxu0 0
          %1314 = vmatprep.subr.bf16.mxu0 0
          %1315 = vmatpush2.bf16.msra.mxu0 0
          %1316 = vmatprep.subr.bf16.mxu0 0
          %1317 = vmatpush2.bf16.msra.mxu0 0
          %1318 = vmatprep.subr.bf16.mxu0 0
          %1319 = vmatpush2.bf16.msra.mxu0 0
          %1320 = vmatprep.subr.bf16.mxu0 0
          %1321 = vmatpush2.bf16.msra.mxu0 0
          %1322 = vmatprep.subr.bf16.mxu0 0
          %1323 = vmatpush2.bf16.msra.mxu0 0
          %1324 = vmatprep.mubr.bf16.mxu0 0
          %1325 = vmatmul.mubr.bf16.gmra.mxu0 %v1249
          %v1326 = vpop.f32.mrf.mxu0
          %v1327 = vadd.f32 %v1286, %v1326
          %v1328 = vpop.f32.mrf.mxu0
          %v1329 = vpop.f32.mrf.mxu0
          %v1330 = vadd.f32 %v1289, %v1329
          %v1331 = vpop.f32.mrf.mxu0
          %1332 = vdwg.mxu0
          %v1335 = vunpack.c.l.b16 %v332
          %v1336 = vunpack.c.l.b16 %v333
          %v1337 = vpack.c.b16 %v1336, %v1335
          %v1339 = vsel %vm409, %v1337, 0
          %1341 = vmatprep.subr.bf16.mxu0 0
          %1342 = vmatpush1.bf16.msra.mxu0 0
          %1343 = vmatprep.subr.bf16.mxu0 0
          %1344 = vmatpush1.bf16.msra.mxu0 0
          %1345 = vmatprep.subr.bf16.mxu0 0
          %1346 = vmatpush1.bf16.msra.mxu0 0
          %1347 = vmatprep.subr.bf16.mxu0 0
          %1348 = vmatpush1.bf16.msra.mxu0 0
          %1349 = vmatprep.subr.bf16.mxu0 0
          %1350 = vmatpush1.bf16.msra.mxu0 0
          %1351 = vmatprep.subr.bf16.mxu0 0
          %1352 = vmatpush1.bf16.msra.mxu0 0
          %1353 = vmatprep.subr.bf16.mxu0 0
          %1354 = vmatpush1.bf16.msra.mxu0 0
          %1355 = vmatprep.subr.bf16.mxu0 0
          %1356 = vmatpush1.bf16.msra.mxu0 %v955
          %1357 = vmatprep.subr.bf16.mxu0 0
          %1358 = vmatpush2.bf16.msra.mxu0 0
          %1359 = vmatprep.subr.bf16.mxu0 0
          %1360 = vmatpush2.bf16.msra.mxu0 0
          %1361 = vmatprep.subr.bf16.mxu0 0
          %1362 = vmatpush2.bf16.msra.mxu0 0
          %1363 = vmatprep.subr.bf16.mxu0 0
          %1364 = vmatpush2.bf16.msra.mxu0 0
          %1365 = vmatprep.subr.bf16.mxu0 0
          %1366 = vmatpush2.bf16.msra.mxu0 0
          %1367 = vmatprep.subr.bf16.mxu0 0
          %1368 = vmatpush2.bf16.msra.mxu0 0
          %1369 = vmatprep.subr.bf16.mxu0 0
          %1370 = vmatpush2.bf16.msra.mxu0 0
          %1371 = vmatprep.subr.bf16.mxu0 0
          %1372 = vmatpush2.bf16.msra.mxu0 0
          %1373 = vmatprep.mubr.bf16.mxu0 0
          %1374 = vmatmul.mubr.bf16.gmra.mxu0 %v1339
          %v1375 = vpop.f32.mrf.mxu0
          %v1376 = vadd.f32 0.0, %v1375
          %v1377 = vpop.f32.mrf.mxu0
          %v1378 = vpop.f32.mrf.mxu0
          %v1379 = vadd.f32 0.0, %v1378
          %v1380 = vpop.f32.mrf.mxu0
          %1381 = vdwg.mxu0
          %v1382 = vadd.f32 %v1327, %v1376
          %v1383 = vadd.f32 %v1330, %v1379
          %v1384 = vsub.f32 %v1100, %v1241
          %v1385 = vsub.f32 %v1101, %v1242
          %v1386 = vsub.f32 %v1382, %v1100
          %v1387 = vsub.f32 %v1383, %v1101
          %v1388 = vsub.f32 %v1386, %v1241
          %v1389 = vsub.f32 %v1387, %v1242
          %1390 = vst.msk [vmem:[#allocation2] sm:$0xff] %vm409, %v1384
          %1391 = vst.msk [vmem:[#allocation2 + $0x8] sm:$0xff] %vm409, %v1385
          %v1392 = vsub.f32 0.0, %v1388
          %v1393 = vsub.f32 0.0, %v1389
          %1394 = vst.msk [vmem:[#allocation3] sm:$0xff] %vm409, %v1392
          %1395 = vst.msk [vmem:[#allocation3 + $0x8] sm:$0xff] %vm409, %v1393
          %v1396 = vpack.c.bf16 %v932, %v931
          %v1397 = vunpack.c.l.bf16 %v1396
          %v1398 = vunpack.c.h.bf16 %v1396
          %v1399 = vsub.f32 %v931, %v1397
          %v1400 = vsub.f32 %v932, %v1398
          %v1401 = vpack.c.bf16 %v1400, %v1399
          %v1402 = vpack.c.bf16 %v940, %v939
          %v1403 = vunpack.c.l.bf16 %v1402
          %v1404 = vunpack.c.h.bf16 %v1402
          %v1405 = vsub.f32 %v939, %v1403
          %v1406 = vsub.f32 %v940, %v1404
          %v1407 = vpack.c.bf16 %v1406, %v1405
          %v1408 = vadd.f32 %v931, %v939
          %v1409 = vadd.f32 %v932, %v940
          %v1410 = vpack.c.bf16 %v1409, %v1408
          %v1411 = vunpack.c.l.bf16 %v1410
          %v1412 = vunpack.c.h.bf16 %v1410
          %v1413 = vsub.f32 %v1408, %v1411
          %v1414 = vsub.f32 %v1409, %v1412
          %v1415 = vpack.c.bf16 %v1414, %v1413
          %1416 = vmatprep.subr.bf16.mxu0 0
          %1417 = vmatpush1.bf16.msra.mxu0 0
          %1418 = vmatprep.subr.bf16.mxu0 0
          %1419 = vmatpush1.bf16.msra.mxu0 0
          %1420 = vmatprep.subr.bf16.mxu0 0
          %1421 = vmatpush1.bf16.msra.mxu0 0
          %1422 = vmatprep.subr.bf16.mxu0 0
          %1423 = vmatpush1.bf16.msra.mxu0 0
          %1424 = vmatprep.subr.bf16.mxu0 0
          %1425 = vmatpush1.bf16.msra.mxu0 0
          %1426 = vmatprep.subr.bf16.mxu0 0
          %1427 = vmatpush1.bf16.msra.mxu0 0
          %1428 = vmatprep.subr.bf16.mxu0 0
          %1429 = vmatpush1.bf16.msra.mxu0 0
          %1430 = vmatprep.subr.bf16.mxu0 0
          %1431 = vmatpush1.bf16.msra.mxu0 %v1401
          %1432 = vmatprep.subr.bf16.mxu0 0
          %1433 = vmatpush2.bf16.msra.mxu0 0
          %1434 = vmatprep.subr.bf16.mxu0 0
          %1435 = vmatpush2.bf16.msra.mxu0 0
          %1436 = vmatprep.subr.bf16.mxu0 0
          %1437 = vmatpush2.bf16.msra.mxu0 0
          %1438 = vmatprep.subr.bf16.mxu0 0
          %1439 = vmatpush2.bf16.msra.mxu0 0
          %1440 = vmatprep.subr.bf16.mxu0 0
          %1441 = vmatpush2.bf16.msra.mxu0 0
          %1442 = vmatprep.subr.bf16.mxu0 0
          %1443 = vmatpush2.bf16.msra.mxu0 0
          %1444 = vmatprep.subr.bf16.mxu0 0
          %1445 = vmatpush2.bf16.msra.mxu0 0
          %1446 = vmatprep.subr.bf16.mxu0 0
          %1447 = vmatpush2.bf16.msra.mxu0 0
          %1448 = vmatprep.mubr.bf16.mxu0 0
          %1449 = vmatmul.mubr.bf16.gmra.mxu0 %v967
          %v1450 = vpop.f32.mrf.mxu0
          %v1451 = vadd.f32 0.0, %v1450
          %v1452 = vpop.f32.mrf.mxu0
          %v1453 = vpop.f32.mrf.mxu0
          %v1454 = vadd.f32 0.0, %v1453
          %v1455 = vpop.f32.mrf.mxu0
          %1456 = vdwg.mxu0
          %1457 = vmatprep.subr.bf16.mxu0 0
          %1458 = vmatpush1.bf16.msra.mxu0 0
          %1459 = vmatprep.subr.bf16.mxu0 0
          %1460 = vmatpush1.bf16.msra.mxu0 0
          %1461 = vmatprep.subr.bf16.mxu0 0
          %1462 = vmatpush1.bf16.msra.mxu0 0
          %1463 = vmatprep.subr.bf16.mxu0 0
          %1464 = vmatpush1.bf16.msra.mxu0 0
          %1465 = vmatprep.subr.bf16.mxu0 0
          %1466 = vmatpush1.bf16.msra.mxu0 0
          %1467 = vmatprep.subr.bf16.mxu0 0
          %1468 = vmatpush1.bf16.msra.mxu0 0
          %1469 = vmatprep.subr.bf16.mxu0 0
          %1470 = vmatpush1.bf16.msra.mxu0 0
          %1471 = vmatprep.subr.bf16.mxu0 0
          %1472 = vmatpush1.bf16.msra.mxu0 %v1396
          %1473 = vmatprep.subr.bf16.mxu0 0
          %1474 = vmatpush2.bf16.msra.mxu0 0
          %1475 = vmatprep.subr.bf16.mxu0 0
          %1476 = vmatpush2.bf16.msra.mxu0 0
          %1477 = vmatprep.subr.bf16.mxu0 0
          %1478 = vmatpush2.bf16.msra.mxu0 0
          %1479 = vmatprep.subr.bf16.mxu0 0
          %1480 = vmatpush2.bf16.msra.mxu0 0
          %1481 = vmatprep.subr.bf16.mxu0 0
          %1482 = vmatpush2.bf16.msra.mxu0 0
          %1483 = vmatprep.subr.bf16.mxu0 0
          %1484 = vmatpush2.bf16.msra.mxu0 0
          %1485 = vmatprep.subr.bf16.mxu0 0
          %1486 = vmatpush2.bf16.msra.mxu0 0
          %1487 = vmatprep.subr.bf16.mxu0 0
          %1488 = vmatpush2.bf16.msra.mxu0 0
          %1489 = vmatprep.mubr.bf16.mxu0 0
          %1490 = vmatmul.mubr.bf16.gmra.mxu0 %v967
          %v1491 = vpop.f32.mrf.mxu0
          %v1492 = vadd.f32 %v1451, %v1491
          %v1493 = vpop.f32.mrf.mxu0
          %v1494 = vpop.f32.mrf.mxu0
          %v1495 = vadd.f32 %v1454, %v1494
          %v1496 = vpop.f32.mrf.mxu0
          %1497 = vdwg.mxu0
          %1498 = vmatprep.subr.bf16.mxu0 0
          %1499 = vmatpush1.bf16.msra.mxu0 0
          %1500 = vmatprep.subr.bf16.mxu0 0
          %1501 = vmatpush1.bf16.msra.mxu0 0
          %1502 = vmatprep.subr.bf16.mxu0 0
          %1503 = vmatpush1.bf16.msra.mxu0 0
          %1504 = vmatprep.subr.bf16.mxu0 0
          %1505 = vmatpush1.bf16.msra.mxu0 0
          %1506 = vmatprep.subr.bf16.mxu0 0
          %1507 = vmatpush1.bf16.msra.mxu0 0
          %1508 = vmatprep.subr.bf16.mxu0 0
          %1509 = vmatpush1.bf16.msra.mxu0 0
          %1510 = vmatprep.subr.bf16.mxu0 0
          %1511 = vmatpush1.bf16.msra.mxu0 0
          %1512 = vmatprep.subr.bf16.mxu0 0
          %1513 = vmatpush1.bf16.msra.mxu0 %v1396
          %1514 = vmatprep.subr.bf16.mxu0 0
          %1515 = vmatpush2.bf16.msra.mxu0 0
          %1516 = vmatprep.subr.bf16.mxu0 0
          %1517 = vmatpush2.bf16.msra.mxu0 0
          %1518 = vmatprep.subr.bf16.mxu0 0
          %1519 = vmatpush2.bf16.msra.mxu0 0
          %1520 = vmatprep.subr.bf16.mxu0 0
          %1521 = vmatpush2.bf16.msra.mxu0 0
          %1522 = vmatprep.subr.bf16.mxu0 0
          %1523 = vmatpush2.bf16.msra.mxu0 0
          %1524 = vmatprep.subr.bf16.mxu0 0
          %1525 = vmatpush2.bf16.msra.mxu0 0
          %1526 = vmatprep.subr.bf16.mxu0 0
          %1527 = vmatpush2.bf16.msra.mxu0 0
          %1528 = vmatprep.subr.bf16.mxu0 0
          %1529 = vmatpush2.bf16.msra.mxu0 0
          %1530 = vmatprep.mubr.bf16.mxu0 0
          %1531 = vmatmul.mubr.bf16.gmra.mxu0 %v1057
          %v1532 = vpop.f32.mrf.mxu0
          %v1533 = vadd.f32 0.0, %v1532
          %v1534 = vpop.f32.mrf.mxu0
          %v1535 = vpop.f32.mrf.mxu0
          %v1536 = vadd.f32 0.0, %v1535
          %v1537 = vpop.f32.mrf.mxu0
          %1538 = vdwg.mxu0
          %v1539 = vadd.f32 %v1492, %v1533
          %v1540 = vadd.f32 %v1495, %v1536
          %1541 = vmatprep.subr.bf16.mxu0 0
          %1542 = vmatpush1.bf16.msra.mxu0 0
          %1543 = vmatprep.subr.bf16.mxu0 0
          %1544 = vmatpush1.bf16.msra.mxu0 0
          %1545 = vmatprep.subr.bf16.mxu0 0
          %1546 = vmatpush1.bf16.msra.mxu0 0
          %1547 = vmatprep.subr.bf16.mxu0 0
          %1548 = vmatpush1.bf16.msra.mxu0 0
          %1549 = vmatprep.subr.bf16.mxu0 0
          %1550 = vmatpush1.bf16.msra.mxu0 0
          %1551 = vmatprep.subr.bf16.mxu0 0
          %1552 = vmatpush1.bf16.msra.mxu0 0
          %1553 = vmatprep.subr.bf16.mxu0 0
          %1554 = vmatpush1.bf16.msra.mxu0 0
          %1555 = vmatprep.subr.bf16.mxu0 0
          %1556 = vmatpush1.bf16.msra.mxu0 %v1407
          %1557 = vmatprep.subr.bf16.mxu0 0
          %1558 = vmatpush2.bf16.msra.mxu0 0
          %1559 = vmatprep.subr.bf16.mxu0 0
          %1560 = vmatpush2.bf16.msra.mxu0 0
          %1561 = vmatprep.subr.bf16.mxu0 0
          %1562 = vmatpush2.bf16.msra.mxu0 0
          %1563 = vmatprep.subr.bf16.mxu0 0
          %1564 = vmatpush2.bf16.msra.mxu0 0
          %1565 = vmatprep.subr.bf16.mxu0 0
          %1566 = vmatpush2.bf16.msra.mxu0 0
          %1567 = vmatprep.subr.bf16.mxu0 0
          %1568 = vmatpush2.bf16.msra.mxu0 0
          %1569 = vmatprep.subr.bf16.mxu0 0
          %1570 = vmatpush2.bf16.msra.mxu0 0
          %1571 = vmatprep.subr.bf16.mxu0 0
          %1572 = vmatpush2.bf16.msra.mxu0 0
          %1573 = vmatprep.mubr.bf16.mxu0 0
          %1574 = vmatmul.mubr.bf16.gmra.mxu0 %v1108
          %v1575 = vpop.f32.mrf.mxu0
          %v1576 = vadd.f32 0.0, %v1575
          %v1577 = vpop.f32.mrf.mxu0
          %v1578 = vpop.f32.mrf.mxu0
          %v1579 = vadd.f32 0.0, %v1578
          %v1580 = vpop.f32.mrf.mxu0
          %1581 = vdwg.mxu0
          %1582 = vmatprep.subr.bf16.mxu0 0
          %1583 = vmatpush1.bf16.msra.mxu0 0
          %1584 = vmatprep.subr.bf16.mxu0 0
          %1585 = vmatpush1.bf16.msra.mxu0 0
          %1586 = vmatprep.subr.bf16.mxu0 0
          %1587 = vmatpush1.bf16.msra.mxu0 0
          %1588 = vmatprep.subr.bf16.mxu0 0
          %1589 = vmatpush1.bf16.msra.mxu0 0
          %1590 = vmatprep.subr.bf16.mxu0 0
          %1591 = vmatpush1.bf16.msra.mxu0 0
          %1592 = vmatprep.subr.bf16.mxu0 0
          %1593 = vmatpush1.bf16.msra.mxu0 0
          %1594 = vmatprep.subr.bf16.mxu0 0
          %1595 = vmatpush1.bf16.msra.mxu0 0
          %1596 = vmatprep.subr.bf16.mxu0 0
          %1597 = vmatpush1.bf16.msra.mxu0 %v1402
          %1598 = vmatprep.subr.bf16.mxu0 0
          %1599 = vmatpush2.bf16.msra.mxu0 0
          %1600 = vmatprep.subr.bf16.mxu0 0
          %1601 = vmatpush2.bf16.msra.mxu0 0
          %1602 = vmatprep.subr.bf16.mxu0 0
          %1603 = vmatpush2.bf16.msra.mxu0 0
          %1604 = vmatprep.subr.bf16.mxu0 0
          %1605 = vmatpush2.bf16.msra.mxu0 0
          %1606 = vmatprep.subr.bf16.mxu0 0
          %1607 = vmatpush2.bf16.msra.mxu0 0
          %1608 = vmatprep.subr.bf16.mxu0 0
          %1609 = vmatpush2.bf16.msra.mxu0 0
          %1610 = vmatprep.subr.bf16.mxu0 0
          %1611 = vmatpush2.bf16.msra.mxu0 0
          %1612 = vmatprep.subr.bf16.mxu0 0
          %1613 = vmatpush2.bf16.msra.mxu0 0
          %1614 = vmatprep.mubr.bf16.mxu0 0
          %1615 = vmatmul.mubr.bf16.gmra.mxu0 %v1108
          %v1616 = vpop.f32.mrf.mxu0
          %v1617 = vadd.f32 %v1576, %v1616
          %v1618 = vpop.f32.mrf.mxu0
          %v1619 = vpop.f32.mrf.mxu0
          %v1620 = vadd.f32 %v1579, %v1619
          %v1621 = vpop.f32.mrf.mxu0
          %1622 = vdwg.mxu0
          %1623 = vmatprep.subr.bf16.mxu0 0
          %1624 = vmatpush1.bf16.msra.mxu0 0
          %1625 = vmatprep.subr.bf16.mxu0 0
          %1626 = vmatpush1.bf16.msra.mxu0 0
          %1627 = vmatprep.subr.bf16.mxu0 0
          %1628 = vmatpush1.bf16.msra.mxu0 0
          %1629 = vmatprep.subr.bf16.mxu0 0
          %1630 = vmatpush1.bf16.msra.mxu0 0
          %1631 = vmatprep.subr.bf16.mxu0 0
          %1632 = vmatpush1.bf16.msra.mxu0 0
          %1633 = vmatprep.subr.bf16.mxu0 0
          %1634 = vmatpush1.bf16.msra.mxu0 0
          %1635 = vmatprep.subr.bf16.mxu0 0
          %1636 = vmatpush1.bf16.msra.mxu0 0
          %1637 = vmatprep.subr.bf16.mxu0 0
          %1638 = vmatpush1.bf16.msra.mxu0 %v1402
          %1639 = vmatprep.subr.bf16.mxu0 0
          %1640 = vmatpush2.bf16.msra.mxu0 0
          %1641 = vmatprep.subr.bf16.mxu0 0
          %1642 = vmatpush2.bf16.msra.mxu0 0
          %1643 = vmatprep.subr.bf16.mxu0 0
          %1644 = vmatpush2.bf16.msra.mxu0 0
          %1645 = vmatprep.subr.bf16.mxu0 0
          %1646 = vmatpush2.bf16.msra.mxu0 0
          %1647 = vmatprep.subr.bf16.mxu0 0
          %1648 = vmatpush2.bf16.msra.mxu0 0
          %1649 = vmatprep.subr.bf16.mxu0 0
          %1650 = vmatpush2.bf16.msra.mxu0 0
          %1651 = vmatprep.subr.bf16.mxu0 0
          %1652 = vmatpush2.bf16.msra.mxu0 0
          %1653 = vmatprep.subr.bf16.mxu0 0
          %1654 = vmatpush2.bf16.msra.mxu0 0
          %1655 = vmatprep.mubr.bf16.mxu0 0
          %1656 = vmatmul.mubr.bf16.gmra.mxu0 %v1198
          %v1657 = vpop.f32.mrf.mxu0
          %v1658 = vadd.f32 0.0, %v1657
          %v1659 = vpop.f32.mrf.mxu0
          %v1660 = vpop.f32.mrf.mxu0
          %v1661 = vadd.f32 0.0, %v1660
          %v1662 = vpop.f32.mrf.mxu0
          %1663 = vdwg.mxu0
          %v1664 = vadd.f32 %v1617, %v1658
          %v1665 = vadd.f32 %v1620, %v1661
          %1666 = vmatprep.subr.bf16.mxu0 0
          %1667 = vmatpush1.bf16.msra.mxu0 0
          %1668 = vmatprep.subr.bf16.mxu0 0
          %1669 = vmatpush1.bf16.msra.mxu0 0
          %1670 = vmatprep.subr.bf16.mxu0 0
          %1671 = vmatpush1.bf16.msra.mxu0 0
          %1672 = vmatprep.subr.bf16.mxu0 0
          %1673 = vmatpush1.bf16.msra.mxu0 0
          %1674 = vmatprep.subr.bf16.mxu0 0
          %1675 = vmatpush1.bf16.msra.mxu0 0
          %1676 = vmatprep.subr.bf16.mxu0 0
          %1677 = vmatpush1.bf16.msra.mxu0 0
          %1678 = vmatprep.subr.bf16.mxu0 0
          %1679 = vmatpush1.bf16.msra.mxu0 0
          %1680 = vmatprep.subr.bf16.mxu0 0
          %1681 = vmatpush1.bf16.msra.mxu0 %v1415
          %1682 = vmatprep.subr.bf16.mxu0 0
          %1683 = vmatpush2.bf16.msra.mxu0 0
          %1684 = vmatprep.subr.bf16.mxu0 0
          %1685 = vmatpush2.bf16.msra.mxu0 0
          %1686 = vmatprep.subr.bf16.mxu0 0
          %1687 = vmatpush2.bf16.msra.mxu0 0
          %1688 = vmatprep.subr.bf16.mxu0 0
          %1689 = vmatpush2.bf16.msra.mxu0 0
          %1690 = vmatprep.subr.bf16.mxu0 0
          %1691 = vmatpush2.bf16.msra.mxu0 0
          %1692 = vmatprep.subr.bf16.mxu0 0
          %1693 = vmatpush2.bf16.msra.mxu0 0
          %1694 = vmatprep.subr.bf16.mxu0 0
          %1695 = vmatpush2.bf16.msra.mxu0 0
          %1696 = vmatprep.subr.bf16.mxu0 0
          %1697 = vmatpush2.bf16.msra.mxu0 0
          %1698 = vmatprep.mubr.bf16.mxu0 0
          %1699 = vmatmul.mubr.bf16.gmra.mxu0 %v1249
          %v1700 = vpop.f32.mrf.mxu0
          %v1701 = vadd.f32 0.0, %v1700
          %v1702 = vpop.f32.mrf.mxu0
          %v1703 = vpop.f32.mrf.mxu0
          %v1704 = vadd.f32 0.0, %v1703
          %v1705 = vpop.f32.mrf.mxu0
          %1706 = vdwg.mxu0
          %1707 = vmatprep.subr.bf16.mxu0 0
          %1708 = vmatpush1.bf16.msra.mxu0 0
          %1709 = vmatprep.subr.bf16.mxu0 0
          %1710 = vmatpush1.bf16.msra.mxu0 0
          %1711 = vmatprep.subr.bf16.mxu0 0
          %1712 = vmatpush1.bf16.msra.mxu0 0
          %1713 = vmatprep.subr.bf16.mxu0 0
          %1714 = vmatpush1.bf16.msra.mxu0 0
          %1715 = vmatprep.subr.bf16.mxu0 0
          %1716 = vmatpush1.bf16.msra.mxu0 0
          %1717 = vmatprep.subr.bf16.mxu0 0
          %1718 = vmatpush1.bf16.msra.mxu0 0
          %1719 = vmatprep.subr.bf16.mxu0 0
          %1720 = vmatpush1.bf16.msra.mxu0 0
          %1721 = vmatprep.subr.bf16.mxu0 0
          %1722 = vmatpush1.bf16.msra.mxu0 %v1410
          %1723 = vmatprep.subr.bf16.mxu0 0
          %1724 = vmatpush2.bf16.msra.mxu0 0
          %1725 = vmatprep.subr.bf16.mxu0 0
          %1726 = vmatpush2.bf16.msra.mxu0 0
          %1727 = vmatprep.subr.bf16.mxu0 0
          %1728 = vmatpush2.bf16.msra.mxu0 0
          %1729 = vmatprep.subr.bf16.mxu0 0
          %1730 = vmatpush2.bf16.msra.mxu0 0
          %1731 = vmatprep.subr.bf16.mxu0 0
          %1732 = vmatpush2.bf16.msra.mxu0 0
          %1733 = vmatprep.subr.bf16.mxu0 0
          %1734 = vmatpush2.bf16.msra.mxu0 0
          %1735 = vmatprep.subr.bf16.mxu0 0
          %1736 = vmatpush2.bf16.msra.mxu0 0
          %1737 = vmatprep.subr.bf16.mxu0 0
          %1738 = vmatpush2.bf16.msra.mxu0 0
          %1739 = vmatprep.mubr.bf16.mxu0 0
          %1740 = vmatmul.mubr.bf16.gmra.mxu0 %v1249
          %v1741 = vpop.f32.mrf.mxu0
          %v1742 = vadd.f32 %v1701, %v1741
          %v1743 = vpop.f32.mrf.mxu0
          %v1744 = vpop.f32.mrf.mxu0
          %v1745 = vadd.f32 %v1704, %v1744
          %v1746 = vpop.f32.mrf.mxu0
          %1747 = vdwg.mxu0
          %1748 = vmatprep.subr.bf16.mxu0 0
          %1749 = vmatpush1.bf16.msra.mxu0 0
          %1750 = vmatprep.subr.bf16.mxu0 0
          %1751 = vmatpush1.bf16.msra.mxu0 0
          %1752 = vmatprep.subr.bf16.mxu0 0
          %1753 = vmatpush1.bf16.msra.mxu0 0
          %1754 = vmatprep.subr.bf16.mxu0 0
          %1755 = vmatpush1.bf16.msra.mxu0 0
          %1756 = vmatprep.subr.bf16.mxu0 0
          %1757 = vmatpush1.bf16.msra.mxu0 0
          %1758 = vmatprep.subr.bf16.mxu0 0
          %1759 = vmatpush1.bf16.msra.mxu0 0
          %1760 = vmatprep.subr.bf16.mxu0 0
          %1761 = vmatpush1.bf16.msra.mxu0 0
          %1762 = vmatprep.subr.bf16.mxu0 0
          %1763 = vmatpush1.bf16.msra.mxu0 %v1410
          %1764 = vmatprep.subr.bf16.mxu0 0
          %1765 = vmatpush2.bf16.msra.mxu0 0
          %1766 = vmatprep.subr.bf16.mxu0 0
          %1767 = vmatpush2.bf16.msra.mxu0 0
          %1768 = vmatprep.subr.bf16.mxu0 0
          %1769 = vmatpush2.bf16.msra.mxu0 0
          %1770 = vmatprep.subr.bf16.mxu0 0
          %1771 = vmatpush2.bf16.msra.mxu0 0
          %1772 = vmatprep.subr.bf16.mxu0 0
          %1773 = vmatpush2.bf16.msra.mxu0 0
          %1774 = vmatprep.subr.bf16.mxu0 0
          %1775 = vmatpush2.bf16.msra.mxu0 0
          %1776 = vmatprep.subr.bf16.mxu0 0
          %1777 = vmatpush2.bf16.msra.mxu0 0
          %1778 = vmatprep.subr.bf16.mxu0 0
          %1779 = vmatpush2.bf16.msra.mxu0 0
          %1780 = vmatprep.mubr.bf16.mxu0 0
          %1781 = vmatmul.mubr.bf16.gmra.mxu0 %v1339
          %v1782 = vpop.f32.mrf.mxu0
          %v1783 = vadd.f32 0.0, %v1782
          %v1784 = vpop.f32.mrf.mxu0
          %v1785 = vpop.f32.mrf.mxu0
          %v1786 = vadd.f32 0.0, %v1785
          %v1787 = vpop.f32.mrf.mxu0
          %1788 = vdwg.mxu0
          %v1789 = vadd.f32 %v1742, %v1783
          %v1790 = vadd.f32 %v1745, %v1786
          %v1791 = vsub.f32 %v1539, %v1664
          %v1792 = vsub.f32 %v1540, %v1665
          %v1793 = vsub.f32 %v1789, %v1539
          %v1794 = vsub.f32 %v1790, %v1540
          %v1795 = vsub.f32 %v1793, %v1664
          %v1796 = vsub.f32 %v1794, %v1665
          %s1797 = scalar_lea.vmem [#allocation2], 16
          %1798 = vst.msk [vmem:[%s1797] sm:$0xff] %vm409, %v1791
          %1799 = vst.msk [vmem:[%s1797 + $0x8] sm:$0xff] %vm409, %v1792
          %v1800 = vsub.f32 0.0, %v1795
          %v1801 = vsub.f32 0.0, %v1796
          %s1802 = scalar_lea.vmem [#allocation3], 16
          %1803 = vst.msk [vmem:[%s1802] sm:$0xff] %vm409, %v1800
          %1804 = vst.msk [vmem:[%s1802 + $0x8] sm:$0xff] %vm409, %v1801
        $region64: #{tpu_custom_call.1} parent=39 // pred_fallthru
          _
        %s1805 = sld [smem:[#allocation5 + %s32]]
        %v1806 = vld [vmem:[#allocation14] sm:$0xff]
        %v1807 = vld [vmem:[#allocation14 + $0x8] sm:$0xff]
        %v1808 = vstv %s1805
        %v1809 = vmul.f32 %v1808, %v1806
        %v1810 = vmul.f32 %v1808, %v1807
        %v1811 = vand.u32 2147483647, %v1809
        %vm1812 = vcmp.le.f32.partialorder %v1811, 0.7853982
        %vm1813 = vcmp.lt.s32.totalorder %v1809, 0
        %v1814 = vand.u32 %v1809, 2139095040
        %v1815 = vshrl.u32 %v1814, 23
        %v1816 = vsub.s32 %v1815, 127
        %v1817 = vand.u32 2147483647, %v1809
        %v1818 = vand.u32 %v1817, 8388607
        %v1819 = vor.u32 %v1818, 8388608
        %v1820 = vsub.s32 0, %v1819
        %v1821 = vadd.s32 %v1816, 1
        %vm1822 = vcmp.gt.s32.totalorder %v1821, 0
        %v1823 = vsel %vm1822, %v1821, 0
        %v1824 = vshrl.u32 %v1823, 5
        %v1825 = vand.u32 %v1823, 31
        %v1826 = vsub.s32 32, %v1825
        %v1827 = vshrl.u32 683565275, %v1826
        %v1828 = vshll.u32 683565275, %v1825
        %v1829 = vshrl.u32 2475754826, %v1826
        %v1830 = vor.u32 %v1828, %v1829
        %v1831 = vshll.u32 2475754826, %v1825
        %v1832 = vshrl.u32 2131351028, %v1826
        %v1833 = vor.u32 %v1831, %v1832
        %v1834 = vshll.u32 2131351028, %v1825
        %v1835 = vshrl.u32 2102212464, %v1826
        %v1836 = vor.u32 %v1834, %v1835
        %v1837 = vshll.u32 2102212464, %v1825
        %v1838 = vshrl.u32 920167782, %v1826
        %v1839 = vor.u32 %v1837, %v1838
        %v1840 = vshll.u32 920167782, %v1825
        %v1841 = vshrl.u32 1326507024, %v1826
        %v1842 = vor.u32 %v1840, %v1841
        %vm1843 = vcmp.lt.s32.totalorder %v1824, 1
        %vm1844 = vcmp.lt.s32.totalorder %v1824, 2
        %vm1845 = vcmp.lt.s32.totalorder %v1824, 3
        %vm1846 = vcmp.lt.s32.totalorder %v1824, 4
        %v1847 = vsel %vm1843, %v1827, %v1830
        %v1848 = vsel %vm1846, %v1836, 2102212464
        %v1849 = vsel %vm1845, %v1833, %v1848
        %v1850 = vsel %vm1844, %v1847, %v1849
        %v1851 = vsel %vm1843, %v1830, %v1833
        %v1852 = vsel %vm1846, %v1839, 920167782
        %v1853 = vsel %vm1845, %v1836, %v1852
        %v1854 = vsel %vm1844, %v1851, %v1853
        %v1855 = vsel %vm1843, %v1833, %v1836
        %v1856 = vsel %vm1846, %v1842, 1326507024
        %v1857 = vsel %vm1845, %v1839, %v1856
        %v1858 = vsel %vm1844, %v1855, %v1857
        %v1859 = vshll.u32 %v1819, 8
        %v1860 = vmul.u32.u64.compose %v1859, %v1858
        %v1861 = vextract.low.u32 %v1860
        %v1862 = vextract.high.u32 %v1860
        %v1863 = vmul.u32.u64.compose %v1859, %v1854
        %v1864 = vextract.low.u32 %v1863
        %v1865 = vextract.high.u32 %v1863
        %v1866 = vmul.u32 %v1859, %v1850
        %v1867 = vadd.s32 %v1862, %v1864
        %vm1868 = vc.u32 %v1862, %v1864
        %v1869 = vadd.s32 %v1865, 1
        %v1870 = vsel %vm1868, %v1869, %v1865
        %v1871 = vadd.s32 %v1866, %v1870
        %v1872 = vadd.s32 %v1871, 536870912
        %v1873 = vshrl.u32 %v1872, 30
        %v1874 = vshll.u32 %v1873, 30
        %v1875 = vsub.s32 %v1871, %v1874
        %vm1876 = vcmp.lt.s32.totalorder %v1875, 0
        %v1877 = vsub.s32 0, %v1875
        %v1878 = vsel %vm1876, %v1877, %v1875
        %v1879 = vclz %v1878
        %v1880 = vsub.s32 %v1879, 2
        %vm1881 = vcmp.gt.s32.totalorder 0, %v1880
        %v1882 = vsel %vm1881, 0, %v1880
        %v1883 = vsub.s32 32, %v1882
        %v1884 = vshll.u32 %v1875, %v1882
        %v1885 = vshrl.u32 %v1867, %v1883
        %v1886 = vor.u32 %v1884, %v1885
        %v1887 = vsub.s32 4294967266, %v1882
        %v1888 = vadd.s32 %v1887, 127
        %v1889 = vshll.u32 %v1888, 23
        %v1890 = vor.u32 4788187, %v1889
        %v1891 = vand.u32 2147483647, %v1890
        %v1893 = vcvt.s32.f32 %v1886
        %v1894 = vmul.f32 %v1893, %v1891
        %v1895 = vxor.u32 %v1894, 2147483648
        %v1896 = vsel %vm1813, %v1895, %v1894
        %v1897 = vsub.s32 4, %v1873
        %v1898 = vsel %vm1813, %v1897, %v1873
        %v1899 = vsel %vm1812, %v1809, %v1896
        %v1900 = vsel %vm1812, 0, %v1898
        %v1901 = vcosq.f32.pop %v1899
        %v1902 = vsinq.f32.pop %v1899
        %vm1903 = vweird.f32 %v1809
        %v1904 = vand.u32 %v1900, 3
        %vm1905 = vcmp.lt.s32.totalorder %v1904, 2
        %vm1906 = vcmp.eq.s32.totalorder %v1904, 0
        %v1907 = vxor.u32 %v1902, 2147483648
        %v1908 = vsel %vm1906, %v1901, %v1907
        %vm1909 = vcmp.eq.s32.totalorder %v1904, 2
        %v1910 = vxor.u32 %v1901, 2147483648
        %v1911 = vsel %vm1909, %v1910, %v1902
        %v1912 = vsel %vm1905, %v1908, %v1911
        %v1913 = vsel %vm1903, nan, %v1912
        %v1914 = vand.u32 2147483647, %v1810
        %vm1915 = vcmp.le.f32.partialorder %v1914, 0.7853982
        %vm1916 = vcmp.lt.s32.totalorder %v1810, 0
        %v1917 = vand.u32 %v1810, 2139095040
        %v1918 = vshrl.u32 %v1917, 23
        %v1919 = vsub.s32 %v1918, 127
        %v1920 = vand.u32 2147483647, %v1810
        %v1921 = vand.u32 %v1920, 8388607
        %v1922 = vor.u32 %v1921, 8388608
        %v1923 = vsub.s32 0, %v1922
        %v1924 = vadd.s32 %v1919, 1
        %vm1925 = vcmp.gt.s32.totalorder %v1924, 0
        %v1926 = vsel %vm1925, %v1924, 0
        %v1927 = vshrl.u32 %v1926, 5
        %v1928 = vand.u32 %v1926, 31
        %v1929 = vsub.s32 32, %v1928
        %v1930 = vshrl.u32 683565275, %v1929
        %v1931 = vshll.u32 683565275, %v1928
        %v1932 = vshrl.u32 2475754826, %v1929
        %v1933 = vor.u32 %v1931, %v1932
        %v1934 = vshll.u32 2475754826, %v1928
        %v1935 = vshrl.u32 2131351028, %v1929
        %v1936 = vor.u32 %v1934, %v1935
        %v1937 = vshll.u32 2131351028, %v1928
        %v1938 = vshrl.u32 2102212464, %v1929
        %v1939 = vor.u32 %v1937, %v1938
        %v1940 = vshll.u32 2102212464, %v1928
        %v1941 = vshrl.u32 920167782, %v1929
        %v1942 = vor.u32 %v1940, %v1941
        %v1943 = vshll.u32 920167782, %v1928
        %v1944 = vshrl.u32 1326507024, %v1929
        %v1945 = vor.u32 %v1943, %v1944
        %vm1946 = vcmp.lt.s32.totalorder %v1927, 1
        %vm1947 = vcmp.lt.s32.totalorder %v1927, 2
        %vm1948 = vcmp.lt.s32.totalorder %v1927, 3
        %vm1949 = vcmp.lt.s32.totalorder %v1927, 4
        %v1950 = vsel %vm1946, %v1930, %v1933
        %v1951 = vsel %vm1949, %v1939, 2102212464
        %v1952 = vsel %vm1948, %v1936, %v1951
        %v1953 = vsel %vm1947, %v1950, %v1952
        %v1954 = vsel %vm1946, %v1933, %v1936
        %v1955 = vsel %vm1949, %v1942, 920167782
        %v1956 = vsel %vm1948, %v1939, %v1955
        %v1957 = vsel %vm1947, %v1954, %v1956
        %v1958 = vsel %vm1946, %v1936, %v1939
        %v1959 = vsel %vm1949, %v1945, 1326507024
        %v1960 = vsel %vm1948, %v1942, %v1959
        %v1961 = vsel %vm1947, %v1958, %v1960
        %v1962 = vshll.u32 %v1922, 8
        %v1963 = vmul.u32.u64.compose %v1962, %v1961
        %v1964 = vextract.low.u32 %v1963
        %v1965 = vextract.high.u32 %v1963
        %v1966 = vmul.u32.u64.compose %v1962, %v1957
        %v1967 = vextract.low.u32 %v1966
        %v1968 = vextract.high.u32 %v1966
        %v1969 = vmul.u32 %v1962, %v1953
        %v1970 = vadd.s32 %v1965, %v1967
        %vm1971 = vc.u32 %v1965, %v1967
        %v1972 = vadd.s32 %v1968, 1
        %v1973 = vsel %vm1971, %v1972, %v1968
        %v1974 = vadd.s32 %v1969, %v1973
        %v1975 = vadd.s32 %v1974, 536870912
        %v1976 = vshrl.u32 %v1975, 30
        %v1977 = vshll.u32 %v1976, 30
        %v1978 = vsub.s32 %v1974, %v1977
        %vm1979 = vcmp.lt.s32.totalorder %v1978, 0
        %v1980 = vsub.s32 0, %v1978
        %v1981 = vsel %vm1979, %v1980, %v1978
        %v1982 = vclz %v1981
        %v1983 = vsub.s32 %v1982, 2
        %vm1984 = vcmp.gt.s32.totalorder 0, %v1983
        %v1985 = vsel %vm1984, 0, %v1983
        %v1986 = vsub.s32 32, %v1985
        %v1987 = vshll.u32 %v1978, %v1985
        %v1988 = vshrl.u32 %v1970, %v1986
        %v1989 = vor.u32 %v1987, %v1988
        %v1990 = vsub.s32 4294967266, %v1985
        %v1991 = vadd.s32 %v1990, 127
        %v1992 = vshll.u32 %v1991, 23
        %v1993 = vor.u32 4788187, %v1992
        %v1994 = vand.u32 2147483647, %v1993
        %v1996 = vcvt.s32.f32 %v1989
        %v1997 = vmul.f32 %v1996, %v1994
        %v1998 = vxor.u32 %v1997, 2147483648
        %v1999 = vsel %vm1916, %v1998, %v1997
        %v2000 = vsub.s32 4, %v1976
        %v2001 = vsel %vm1916, %v2000, %v1976
        %v2002 = vsel %vm1915, %v1810, %v1999
        %v2003 = vsel %vm1915, 0, %v2001
        %v2004 = vcosq.f32.pop %v2002
        %v2005 = vsinq.f32.pop %v2002
        %vm2006 = vweird.f32 %v1810
        %v2007 = vand.u32 %v2003, 3
        %vm2008 = vcmp.lt.s32.totalorder %v2007, 2
        %vm2009 = vcmp.eq.s32.totalorder %v2007, 0
        %v2010 = vxor.u32 %v2005, 2147483648
        %v2011 = vsel %vm2009, %v2004, %v2010
        %vm2012 = vcmp.eq.s32.totalorder %v2007, 2
        %v2013 = vxor.u32 %v2004, 2147483648
        %v2014 = vsel %vm2012, %v2013, %v2005
        %v2015 = vsel %vm2008, %v2011, %v2014
        %v2016 = vsel %vm2006, nan, %v2015
        %v2017 = vand.u32 2147483647, %v1809
        %vm2018 = vcmp.le.f32.partialorder %v2017, 0.7853982
        %vm2019 = vcmp.lt.s32.totalorder %v1809, 0
        %v2020 = vand.u32 %v1809, 2139095040
        %v2021 = vshrl.u32 %v2020, 23
        %v2022 = vsub.s32 %v2021, 127
        %v2023 = vand.u32 2147483647, %v1809
        %v2024 = vand.u32 %v2023, 8388607
        %v2025 = vor.u32 %v2024, 8388608
        %v2026 = vsub.s32 0, %v2025
        %v2027 = vadd.s32 %v2022, 1
        %vm2028 = vcmp.gt.s32.totalorder %v2027, 0
        %v2029 = vsel %vm2028, %v2027, 0
        %v2030 = vshrl.u32 %v2029, 5
        %v2031 = vand.u32 %v2029, 31
        %v2032 = vsub.s32 32, %v2031
        %v2033 = vshrl.u32 683565275, %v2032
        %v2034 = vshll.u32 683565275, %v2031
        %v2035 = vshrl.u32 2475754826, %v2032
        %v2036 = vor.u32 %v2034, %v2035
        %v2037 = vshll.u32 2475754826, %v2031
        %v2038 = vshrl.u32 2131351028, %v2032
        %v2039 = vor.u32 %v2037, %v2038
        %v2040 = vshll.u32 2131351028, %v2031
        %v2041 = vshrl.u32 2102212464, %v2032
        %v2042 = vor.u32 %v2040, %v2041
        %v2043 = vshll.u32 2102212464, %v2031
        %v2044 = vshrl.u32 920167782, %v2032
        %v2045 = vor.u32 %v2043, %v2044
        %v2046 = vshll.u32 920167782, %v2031
        %v2047 = vshrl.u32 1326507024, %v2032
        %v2048 = vor.u32 %v2046, %v2047
        %vm2049 = vcmp.lt.s32.totalorder %v2030, 1
        %vm2050 = vcmp.lt.s32.totalorder %v2030, 2
        %vm2051 = vcmp.lt.s32.totalorder %v2030, 3
        %vm2052 = vcmp.lt.s32.totalorder %v2030, 4
        %v2053 = vsel %vm2049, %v2033, %v2036
        %v2054 = vsel %vm2052, %v2042, 2102212464
        %v2055 = vsel %vm2051, %v2039, %v2054
        %v2056 = vsel %vm2050, %v2053, %v2055
        %v2057 = vsel %vm2049, %v2036, %v2039
        %v2058 = vsel %vm2052, %v2045, 920167782
        %v2059 = vsel %vm2051, %v2042, %v2058
        %v2060 = vsel %vm2050, %v2057, %v2059
        %v2061 = vsel %vm2049, %v2039, %v2042
        %v2062 = vsel %vm2052, %v2048, 1326507024
        %v2063 = vsel %vm2051, %v2045, %v2062
        %v2064 = vsel %vm2050, %v2061, %v2063
        %v2065 = vshll.u32 %v2025, 8
        %v2066 = vmul.u32.u64.compose %v2065, %v2064
        %v2067 = vextract.low.u32 %v2066
        %v2068 = vextract.high.u32 %v2066
        %v2069 = vmul.u32.u64.compose %v2065, %v2060
        %v2070 = vextract.low.u32 %v2069
        %v2071 = vextract.high.u32 %v2069
        %v2072 = vmul.u32 %v2065, %v2056
        %v2073 = vadd.s32 %v2068, %v2070
        %vm2074 = vc.u32 %v2068, %v2070
        %v2075 = vadd.s32 %v2071, 1
        %v2076 = vsel %vm2074, %v2075, %v2071
        %v2077 = vadd.s32 %v2072, %v2076
        %v2078 = vadd.s32 %v2077, 536870912
        %v2079 = vshrl.u32 %v2078, 30
        %v2080 = vshll.u32 %v2079, 30
        %v2081 = vsub.s32 %v2077, %v2080
        %vm2082 = vcmp.lt.s32.totalorder %v2081, 0
        %v2083 = vsub.s32 0, %v2081
        %v2084 = vsel %vm2082, %v2083, %v2081
        %v2085 = vclz %v2084
        %v2086 = vsub.s32 %v2085, 2
        %vm2087 = vcmp.gt.s32.totalorder 0, %v2086
        %v2088 = vsel %vm2087, 0, %v2086
        %v2089 = vsub.s32 32, %v2088
        %v2090 = vshll.u32 %v2081, %v2088
        %v2091 = vshrl.u32 %v2073, %v2089
        %v2092 = vor.u32 %v2090, %v2091
        %v2093 = vsub.s32 4294967266, %v2088
        %v2094 = vadd.s32 %v2093, 127
        %v2095 = vshll.u32 %v2094, 23
        %v2096 = vor.u32 4788187, %v2095
        %v2097 = vand.u32 2147483647, %v2096
        %v2099 = vcvt.s32.f32 %v2092
        %v2100 = vmul.f32 %v2099, %v2097
        %v2101 = vxor.u32 %v2100, 2147483648
        %v2102 = vsel %vm2019, %v2101, %v2100
        %v2103 = vsub.s32 4, %v2079
        %v2104 = vsel %vm2019, %v2103, %v2079
        %v2105 = vsel %vm2018, %v1809, %v2102
        %v2106 = vsel %vm2018, 0, %v2104
        %v2107 = vcosq.f32.pop %v2105
        %v2108 = vsinq.f32.pop %v2105
        %vm2109 = vweird.f32 %v1809
        %v2110 = vadd.s32 %v2106, 3
        %v2111 = vand.u32 %v2110, 3
        %vm2112 = vcmp.lt.s32.totalorder %v2111, 2
        %vm2113 = vcmp.eq.s32.totalorder %v2111, 0
        %v2114 = vxor.u32 %v2108, 2147483648
        %v2115 = vsel %vm2113, %v2107, %v2114
        %vm2116 = vcmp.eq.s32.totalorder %v2111, 2
        %v2117 = vxor.u32 %v2107, 2147483648
        %v2118 = vsel %vm2116, %v2117, %v2108
        %v2119 = vsel %vm2112, %v2115, %v2118
        %v2120 = vsel %vm2109, nan, %v2119
        %v2121 = vand.u32 2147483647, %v1810
        %vm2122 = vcmp.le.f32.partialorder %v2121, 0.7853982
        %vm2123 = vcmp.lt.s32.totalorder %v1810, 0
        %v2124 = vand.u32 %v1810, 2139095040
        %v2125 = vshrl.u32 %v2124, 23
        %v2126 = vsub.s32 %v2125, 127
        %v2127 = vand.u32 2147483647, %v1810
        %v2128 = vand.u32 %v2127, 8388607
        %v2129 = vor.u32 %v2128, 8388608
        %v2130 = vsub.s32 0, %v2129
        %v2131 = vadd.s32 %v2126, 1
        %vm2132 = vcmp.gt.s32.totalorder %v2131, 0
        %v2133 = vsel %vm2132, %v2131, 0
        %v2134 = vshrl.u32 %v2133, 5
        %v2135 = vand.u32 %v2133, 31
        %v2136 = vsub.s32 32, %v2135
        %v2137 = vshrl.u32 683565275, %v2136
        %v2138 = vshll.u32 683565275, %v2135
        %v2139 = vshrl.u32 2475754826, %v2136
        %v2140 = vor.u32 %v2138, %v2139
        %v2141 = vshll.u32 2475754826, %v2135
        %v2142 = vshrl.u32 2131351028, %v2136
        %v2143 = vor.u32 %v2141, %v2142
        %v2144 = vshll.u32 2131351028, %v2135
        %v2145 = vshrl.u32 2102212464, %v2136
        %v2146 = vor.u32 %v2144, %v2145
        %v2147 = vshll.u32 2102212464, %v2135
        %v2148 = vshrl.u32 920167782, %v2136
        %v2149 = vor.u32 %v2147, %v2148
        %v2150 = vshll.u32 920167782, %v2135
        %v2151 = vshrl.u32 1326507024, %v2136
        %v2152 = vor.u32 %v2150, %v2151
        %vm2153 = vcmp.lt.s32.totalorder %v2134, 1
        %vm2154 = vcmp.lt.s32.totalorder %v2134, 2
        %vm2155 = vcmp.lt.s32.totalorder %v2134, 3
        %vm2156 = vcmp.lt.s32.totalorder %v2134, 4
        %v2157 = vsel %vm2153, %v2137, %v2140
        %v2158 = vsel %vm2156, %v2146, 2102212464
        %v2159 = vsel %vm2155, %v2143, %v2158
        %v2160 = vsel %vm2154, %v2157, %v2159
        %v2161 = vsel %vm2153, %v2140, %v2143
        %v2162 = vsel %vm2156, %v2149, 920167782
        %v2163 = vsel %vm2155, %v2146, %v2162
        %v2164 = vsel %vm2154, %v2161, %v2163
        %v2165 = vsel %vm2153, %v2143, %v2146
        %v2166 = vsel %vm2156, %v2152, 1326507024
        %v2167 = vsel %vm2155, %v2149, %v2166
        %v2168 = vsel %vm2154, %v2165, %v2167
        %v2169 = vshll.u32 %v2129, 8
        %v2170 = vmul.u32.u64.compose %v2169, %v2168
        %v2171 = vextract.low.u32 %v2170
        %v2172 = vextract.high.u32 %v2170
        %v2173 = vmul.u32.u64.compose %v2169, %v2164
        %v2174 = vextract.low.u32 %v2173
        %v2175 = vextract.high.u32 %v2173
        %v2176 = vmul.u32 %v2169, %v2160
        %v2177 = vadd.s32 %v2172, %v2174
        %vm2178 = vc.u32 %v2172, %v2174
        %v2179 = vadd.s32 %v2175, 1
        %v2180 = vsel %vm2178, %v2179, %v2175
        %v2181 = vadd.s32 %v2176, %v2180
        %v2182 = vadd.s32 %v2181, 536870912
        %v2183 = vshrl.u32 %v2182, 30
        %v2184 = vshll.u32 %v2183, 30
        %v2185 = vsub.s32 %v2181, %v2184
        %vm2186 = vcmp.lt.s32.totalorder %v2185, 0
        %v2187 = vsub.s32 0, %v2185
        %v2188 = vsel %vm2186, %v2187, %v2185
        %v2189 = vclz %v2188
        %v2190 = vsub.s32 %v2189, 2
        %vm2191 = vcmp.gt.s32.totalorder 0, %v2190
        %v2192 = vsel %vm2191, 0, %v2190
        %v2193 = vsub.s32 32, %v2192
        %v2194 = vshll.u32 %v2185, %v2192
        %v2195 = vshrl.u32 %v2177, %v2193
        %v2196 = vor.u32 %v2194, %v2195
        %v2197 = vsub.s32 4294967266, %v2192
        %v2198 = vadd.s32 %v2197, 127
        %v2199 = vshll.u32 %v2198, 23
        %v2200 = vor.u32 4788187, %v2199
        %v2201 = vand.u32 2147483647, %v2200
        %v2203 = vcvt.s32.f32 %v2196
        %v2204 = vmul.f32 %v2203, %v2201
        %v2205 = vxor.u32 %v2204, 2147483648
        %v2206 = vsel %vm2123, %v2205, %v2204
        %v2207 = vsub.s32 4, %v2183
        %v2208 = vsel %vm2123, %v2207, %v2183
        %v2209 = vsel %vm2122, %v1810, %v2206
        %v2210 = vsel %vm2122, 0, %v2208
        %v2211 = vcosq.f32.pop %v2209
        %v2212 = vsinq.f32.pop %v2209
        %vm2213 = vweird.f32 %v1810
        %v2214 = vadd.s32 %v2210, 3
        %v2215 = vand.u32 %v2214, 3
        %vm2216 = vcmp.lt.s32.totalorder %v2215, 2
        %vm2217 = vcmp.eq.s32.totalorder %v2215, 0
        %v2218 = vxor.u32 %v2212, 2147483648
        %v2219 = vsel %vm2217, %v2211, %v2218
        %vm2220 = vcmp.eq.s32.totalorder %v2215, 2
        %v2221 = vxor.u32 %v2211, 2147483648
        %v2222 = vsel %vm2220, %v2221, %v2212
        %v2223 = vsel %vm2216, %v2219, %v2222
        %v2224 = vsel %vm2213, nan, %v2223
        %v2225 = vsub.f32 0.0, %v2120
        %v2226 = vsub.f32 0.0, %v2224
        %v2227 = vld [vmem:[#allocation2] sm:$0xff]
        %v2228 = vld [vmem:[#allocation2 + $0x8] sm:$0xff]
        %v2229 = vld [vmem:[#allocation2 + $0x10] sm:$0xff]
        %v2230 = vld [vmem:[#allocation2 + $0x18] sm:$0xff]
        %v2231 = vld [vmem:[#allocation3] sm:$0xff]
        %v2232 = vld [vmem:[#allocation3 + $0x8] sm:$0xff]
        %v2233 = vld [vmem:[#allocation3 + $0x10] sm:$0xff]
        %v2234 = vld [vmem:[#allocation3 + $0x18] sm:$0xff]
        %v2235 = vmul.f32 %v2227, %v1913
        %v2236 = vmul.f32 %v2228, %v2016
        %v2237 = vmul.f32 %v2229, %v1913
        %v2238 = vmul.f32 %v2230, %v2016
        %v2239 = vmul.f32 %v2231, %v2225
        %v2240 = vmul.f32 %v2232, %v2226
        %v2241 = vmul.f32 %v2233, %v2225
        %v2242 = vmul.f32 %v2234, %v2226
        %v2243 = vsub.f32 %v2235, %v2239
        %v2244 = vsub.f32 %v2236, %v2240
        %v2245 = vsub.f32 %v2237, %v2241
        %v2246 = vsub.f32 %v2238, %v2242
        %v2247 = vmul.f32 %v2227, %v2225
        %v2248 = vmul.f32 %v2228, %v2226
        %v2249 = vmul.f32 %v2229, %v2225
        %v2250 = vmul.f32 %v2230, %v2226
        %v2251 = vmul.f32 %v2231, %v1913
        %v2252 = vmul.f32 %v2232, %v2016
        %v2253 = vmul.f32 %v2233, %v1913
        %v2254 = vmul.f32 %v2234, %v2016
        %v2255 = vadd.f32 %v2247, %v2251
        %v2256 = vadd.f32 %v2248, %v2252
        %v2257 = vadd.f32 %v2249, %v2253
        %v2258 = vadd.f32 %v2250, %v2254
        %v2259 = vpack.c.bf16 %v2244, %v2243
        %v2260 = vpack.c.bf16 %v2246, %v2245
        %v2261 = vunpack.c.l.bf16 %v2259
        %v2262 = vunpack.c.h.bf16 %v2259
        %v2263 = vunpack.c.l.bf16 %v2260
        %v2264 = vunpack.c.h.bf16 %v2260
        %v2265 = vsub.f32 %v2243, %v2261
        %v2266 = vsub.f32 %v2244, %v2262
        %v2267 = vsub.f32 %v2245, %v2263
        %v2268 = vsub.f32 %v2246, %v2264
        %v2269 = vpack.c.bf16 %v2266, %v2265
        %v2270 = vpack.c.bf16 %v2268, %v2267
        %v2271 = vpack.c.bf16 %v2256, %v2255
        %v2272 = vpack.c.bf16 %v2258, %v2257
        %v2273 = vunpack.c.l.bf16 %v2271
        %v2274 = vunpack.c.h.bf16 %v2271
        %v2275 = vunpack.c.l.bf16 %v2272
        %v2276 = vunpack.c.h.bf16 %v2272
        %v2277 = vsub.f32 %v2255, %v2273
        %v2278 = vsub.f32 %v2256, %v2274
        %v2279 = vsub.f32 %v2257, %v2275
        %v2280 = vsub.f32 %v2258, %v2276
        %v2281 = vpack.c.bf16 %v2278, %v2277
        %v2282 = vpack.c.bf16 %v2280, %v2279
        %v2283 = vadd.f32 %v2243, %v2255
        %v2284 = vadd.f32 %v2244, %v2256
        %v2285 = vadd.f32 %v2245, %v2257
        %v2286 = vadd.f32 %v2246, %v2258
        %v2287 = vpack.c.bf16 %v2284, %v2283
        %v2288 = vpack.c.bf16 %v2286, %v2285
        %v2289 = vunpack.c.l.bf16 %v2287
        %v2290 = vunpack.c.h.bf16 %v2287
        %v2291 = vunpack.c.l.bf16 %v2288
        %v2292 = vunpack.c.h.bf16 %v2288
        %v2293 = vsub.f32 %v2283, %v2289
        %v2294 = vsub.f32 %v2284, %v2290
        %v2295 = vsub.f32 %v2285, %v2291
        %v2296 = vsub.f32 %v2286, %v2292
        %v2297 = vpack.c.bf16 %v2294, %v2293
        %v2298 = vpack.c.bf16 %v2296, %v2295
        %v2301 = vunpack.c.l.b16 %v337
        %v2302 = vunpack.c.l.b16 %v338
        %v2303 = vpack.c.b16 %v2302, %v2301
        %vm2305 = vcmask 130048
        %v2307 = vsel %vm2305, %v2259, 0
        %v2310 = vsel %vm2305, %v2260, 0
        %2312 = vmatprep.subr.bf16.mxu0 0
        %2313 = vmatpush1.bf16.msra.mxu0 0
        %2314 = vmatprep.subr.bf16.mxu0 0
        %2315 = vmatpush1.bf16.msra.mxu0 0
        %2316 = vmatprep.subr.bf16.mxu0 0
        %2317 = vmatpush1.bf16.msra.mxu0 0
        %2318 = vmatprep.subr.bf16.mxu0 0
        %2319 = vmatpush1.bf16.msra.mxu0 0
        %2320 = vmatprep.subr.bf16.mxu0 0
        %2321 = vmatpush1.bf16.msra.mxu0 0
        %2322 = vmatprep.subr.bf16.mxu0 0
        %2323 = vmatpush1.bf16.msra.mxu0 0
        %2324 = vmatprep.subr.bf16.mxu0 0
        %2325 = vmatpush1.bf16.msra.mxu0 0
        %2326 = vmatprep.subr.bf16.mxu0 0
        %2327 = vmatpush1.bf16.msra.mxu0 %v2303
        %2328 = vmatprep.subr.bf16.mxu0 0
        %2329 = vmatpush2.bf16.msra.mxu0 0
        %2330 = vmatprep.subr.bf16.mxu0 0
        %2331 = vmatpush2.bf16.msra.mxu0 0
        %2332 = vmatprep.subr.bf16.mxu0 0
        %2333 = vmatpush2.bf16.msra.mxu0 0
        %2334 = vmatprep.subr.bf16.mxu0 0
        %2335 = vmatpush2.bf16.msra.mxu0 0
        %2336 = vmatprep.subr.bf16.mxu0 0
        %2337 = vmatpush2.bf16.msra.mxu0 0
        %2338 = vmatprep.subr.bf16.mxu0 0
        %2339 = vmatpush2.bf16.msra.mxu0 0
        %2340 = vmatprep.subr.bf16.mxu0 0
        %2341 = vmatpush2.bf16.msra.mxu0 0
        %2342 = vmatprep.subr.bf16.mxu0 0
        %2343 = vmatpush2.bf16.msra.mxu0 0
        %2344 = vmatprep.mubr.bf16.mxu0 0
        %2345 = vmatmul.mubr.bf16.gmra.mxu0 %v2307
        %v2346 = vpop.f32.mrf.mxu0
        %v2347 = vadd.f32 0.0, %v2346
        %v2348 = vpop.f32.mrf.mxu0
        %v2349 = vpop.f32.mrf.mxu0
        %v2350 = vadd.f32 0.0, %v2349
        %v2351 = vpop.f32.mrf.mxu0
        %2352 = vmatprep.mubr.bf16.mxu0 0
        %2353 = vmatmul.mubr.bf16.gmra.mxu0 %v2310
        %v2354 = vpop.f32.mrf.mxu0
        %v2355 = vadd.f32 0.0, %v2354
        %v2356 = vpop.f32.mrf.mxu0
        %v2357 = vpop.f32.mrf.mxu0
        %v2358 = vadd.f32 0.0, %v2357
        %v2359 = vpop.f32.mrf.mxu0
        %2360 = vdwg.mxu0
        %v2363 = vunpack.c.l.b16 %v334
        %v2364 = vunpack.c.l.b16 %v335
        %v2365 = vpack.c.b16 %v2364, %v2363
        %2367 = vmatprep.subr.bf16.mxu0 0
        %2368 = vmatpush1.bf16.msra.mxu0 0
        %2369 = vmatprep.subr.bf16.mxu0 0
        %2370 = vmatpush1.bf16.msra.mxu0 0
        %2371 = vmatprep.subr.bf16.mxu0 0
        %2372 = vmatpush1.bf16.msra.mxu0 0
        %2373 = vmatprep.subr.bf16.mxu0 0
        %2374 = vmatpush1.bf16.msra.mxu0 0
        %2375 = vmatprep.subr.bf16.mxu0 0
        %2376 = vmatpush1.bf16.msra.mxu0 0
        %2377 = vmatprep.subr.bf16.mxu0 0
        %2378 = vmatpush1.bf16.msra.mxu0 0
        %2379 = vmatprep.subr.bf16.mxu0 0
        %2380 = vmatpush1.bf16.msra.mxu0 0
        %2381 = vmatprep.subr.bf16.mxu0 0
        %2382 = vmatpush1.bf16.msra.mxu0 %v2365
        %2383 = vmatprep.subr.bf16.mxu0 0
        %2384 = vmatpush2.bf16.msra.mxu0 0
        %2385 = vmatprep.subr.bf16.mxu0 0
        %2386 = vmatpush2.bf16.msra.mxu0 0
        %2387 = vmatprep.subr.bf16.mxu0 0
        %2388 = vmatpush2.bf16.msra.mxu0 0
        %2389 = vmatprep.subr.bf16.mxu0 0
        %2390 = vmatpush2.bf16.msra.mxu0 0
        %2391 = vmatprep.subr.bf16.mxu0 0
        %2392 = vmatpush2.bf16.msra.mxu0 0
        %2393 = vmatprep.subr.bf16.mxu0 0
        %2394 = vmatpush2.bf16.msra.mxu0 0
        %2395 = vmatprep.subr.bf16.mxu0 0
        %2396 = vmatpush2.bf16.msra.mxu0 0
        %2397 = vmatprep.subr.bf16.mxu0 0
        %2398 = vmatpush2.bf16.msra.mxu0 0
        %2399 = vmatprep.mubr.bf16.mxu0 0
        %2400 = vmatmul.mubr.bf16.gmra.mxu0 %v2307
        %v2401 = vpop.f32.mrf.mxu0
        %v2402 = vadd.f32 %v2347, %v2401
        %v2403 = vpop.f32.mrf.mxu0
        %v2404 = vpop.f32.mrf.mxu0
        %v2405 = vadd.f32 %v2350, %v2404
        %v2406 = vpop.f32.mrf.mxu0
        %2407 = vmatprep.mubr.bf16.mxu0 0
        %2408 = vmatmul.mubr.bf16.gmra.mxu0 %v2310
        %v2409 = vpop.f32.mrf.mxu0
        %v2410 = vadd.f32 %v2355, %v2409
        %v2411 = vpop.f32.mrf.mxu0
        %v2412 = vpop.f32.mrf.mxu0
        %v2413 = vadd.f32 %v2358, %v2412
        %v2414 = vpop.f32.mrf.mxu0
        %2415 = vdwg.mxu0
        %v2417 = vsel %vm2305, %v2269, 0
        %v2420 = vsel %vm2305, %v2270, 0
        %2422 = vmatprep.subr.bf16.mxu0 0
        %2423 = vmatpush1.bf16.msra.mxu0 0
        %2424 = vmatprep.subr.bf16.mxu0 0
        %2425 = vmatpush1.bf16.msra.mxu0 0
        %2426 = vmatprep.subr.bf16.mxu0 0
        %2427 = vmatpush1.bf16.msra.mxu0 0
        %2428 = vmatprep.subr.bf16.mxu0 0
        %2429 = vmatpush1.bf16.msra.mxu0 0
        %2430 = vmatprep.subr.bf16.mxu0 0
        %2431 = vmatpush1.bf16.msra.mxu0 0
        %2432 = vmatprep.subr.bf16.mxu0 0
        %2433 = vmatpush1.bf16.msra.mxu0 0
        %2434 = vmatprep.subr.bf16.mxu0 0
        %2435 = vmatpush1.bf16.msra.mxu0 0
        %2436 = vmatprep.subr.bf16.mxu0 0
        %2437 = vmatpush1.bf16.msra.mxu0 %v2365
        %2438 = vmatprep.subr.bf16.mxu0 0
        %2439 = vmatpush2.bf16.msra.mxu0 0
        %2440 = vmatprep.subr.bf16.mxu0 0
        %2441 = vmatpush2.bf16.msra.mxu0 0
        %2442 = vmatprep.subr.bf16.mxu0 0
        %2443 = vmatpush2.bf16.msra.mxu0 0
        %2444 = vmatprep.subr.bf16.mxu0 0
        %2445 = vmatpush2.bf16.msra.mxu0 0
        %2446 = vmatprep.subr.bf16.mxu0 0
        %2447 = vmatpush2.bf16.msra.mxu0 0
        %2448 = vmatprep.subr.bf16.mxu0 0
        %2449 = vmatpush2.bf16.msra.mxu0 0
        %2450 = vmatprep.subr.bf16.mxu0 0
        %2451 = vmatpush2.bf16.msra.mxu0 0
        %2452 = vmatprep.subr.bf16.mxu0 0
        %2453 = vmatpush2.bf16.msra.mxu0 0
        %2454 = vmatprep.mubr.bf16.mxu0 0
        %2455 = vmatmul.mubr.bf16.gmra.mxu0 %v2417
        %v2456 = vpop.f32.mrf.mxu0
        %v2457 = vadd.f32 0.0, %v2456
        %v2458 = vpop.f32.mrf.mxu0
        %v2459 = vpop.f32.mrf.mxu0
        %v2460 = vadd.f32 0.0, %v2459
        %v2461 = vpop.f32.mrf.mxu0
        %2462 = vmatprep.mubr.bf16.mxu0 0
        %2463 = vmatmul.mubr.bf16.gmra.mxu0 %v2420
        %v2464 = vpop.f32.mrf.mxu0
        %v2465 = vadd.f32 0.0, %v2464
        %v2466 = vpop.f32.mrf.mxu0
        %v2467 = vpop.f32.mrf.mxu0
        %v2468 = vadd.f32 0.0, %v2467
        %v2469 = vpop.f32.mrf.mxu0
        %2470 = vdwg.mxu0
        %v2471 = vadd.f32 %v2402, %v2457
        %v2472 = vadd.f32 %v2405, %v2460
        %v2473 = vadd.f32 %v2410, %v2465
        %v2474 = vadd.f32 %v2413, %v2468
        %v2477 = vunpack.c.l.b16 %v343
        %v2478 = vunpack.c.l.b16 %v344
        %v2479 = vpack.c.b16 %v2478, %v2477
        %v2482 = vsel %vm2305, %v2271, 0
        %v2485 = vsel %vm2305, %v2272, 0
        %2487 = vmatprep.subr.bf16.mxu0 0
        %2488 = vmatpush1.bf16.msra.mxu0 0
        %2489 = vmatprep.subr.bf16.mxu0 0
        %2490 = vmatpush1.bf16.msra.mxu0 0
        %2491 = vmatprep.subr.bf16.mxu0 0
        %2492 = vmatpush1.bf16.msra.mxu0 0
        %2493 = vmatprep.subr.bf16.mxu0 0
        %2494 = vmatpush1.bf16.msra.mxu0 0
        %2495 = vmatprep.subr.bf16.mxu0 0
        %2496 = vmatpush1.bf16.msra.mxu0 0
        %2497 = vmatprep.subr.bf16.mxu0 0
        %2498 = vmatpush1.bf16.msra.mxu0 0
        %2499 = vmatprep.subr.bf16.mxu0 0
        %2500 = vmatpush1.bf16.msra.mxu0 0
        %2501 = vmatprep.subr.bf16.mxu0 0
        %2502 = vmatpush1.bf16.msra.mxu0 %v2479
        %2503 = vmatprep.subr.bf16.mxu0 0
        %2504 = vmatpush2.bf16.msra.mxu0 0
        %2505 = vmatprep.subr.bf16.mxu0 0
        %2506 = vmatpush2.bf16.msra.mxu0 0
        %2507 = vmatprep.subr.bf16.mxu0 0
        %2508 = vmatpush2.bf16.msra.mxu0 0
        %2509 = vmatprep.subr.bf16.mxu0 0
        %2510 = vmatpush2.bf16.msra.mxu0 0
        %2511 = vmatprep.subr.bf16.mxu0 0
        %2512 = vmatpush2.bf16.msra.mxu0 0
        %2513 = vmatprep.subr.bf16.mxu0 0
        %2514 = vmatpush2.bf16.msra.mxu0 0
        %2515 = vmatprep.subr.bf16.mxu0 0
        %2516 = vmatpush2.bf16.msra.mxu0 0
        %2517 = vmatprep.subr.bf16.mxu0 0
        %2518 = vmatpush2.bf16.msra.mxu0 0
        %2519 = vmatprep.mubr.bf16.mxu0 0
        %2520 = vmatmul.mubr.bf16.gmra.mxu0 %v2482
        %v2521 = vpop.f32.mrf.mxu0
        %v2522 = vadd.f32 0.0, %v2521
        %v2523 = vpop.f32.mrf.mxu0
        %v2524 = vpop.f32.mrf.mxu0
        %v2525 = vadd.f32 0.0, %v2524
        %v2526 = vpop.f32.mrf.mxu0
        %2527 = vmatprep.mubr.bf16.mxu0 0
        %2528 = vmatmul.mubr.bf16.gmra.mxu0 %v2485
        %v2529 = vpop.f32.mrf.mxu0
        %v2530 = vadd.f32 0.0, %v2529
        %v2531 = vpop.f32.mrf.mxu0
        %v2532 = vpop.f32.mrf.mxu0
        %v2533 = vadd.f32 0.0, %v2532
        %v2534 = vpop.f32.mrf.mxu0
        %2535 = vdwg.mxu0
        %v2538 = vunpack.c.l.b16 %v340
        %v2539 = vunpack.c.l.b16 %v341
        %v2540 = vpack.c.b16 %v2539, %v2538
        %2542 = vmatprep.subr.bf16.mxu0 0
        %2543 = vmatpush1.bf16.msra.mxu0 0
        %2544 = vmatprep.subr.bf16.mxu0 0
        %2545 = vmatpush1.bf16.msra.mxu0 0
        %2546 = vmatprep.subr.bf16.mxu0 0
        %2547 = vmatpush1.bf16.msra.mxu0 0
        %2548 = vmatprep.subr.bf16.mxu0 0
        %2549 = vmatpush1.bf16.msra.mxu0 0
        %2550 = vmatprep.subr.bf16.mxu0 0
        %2551 = vmatpush1.bf16.msra.mxu0 0
        %2552 = vmatprep.subr.bf16.mxu0 0
        %2553 = vmatpush1.bf16.msra.mxu0 0
        %2554 = vmatprep.subr.bf16.mxu0 0
        %2555 = vmatpush1.bf16.msra.mxu0 0
        %2556 = vmatprep.subr.bf16.mxu0 0
        %2557 = vmatpush1.bf16.msra.mxu0 %v2540
        %2558 = vmatprep.subr.bf16.mxu0 0
        %2559 = vmatpush2.bf16.msra.mxu0 0
        %2560 = vmatprep.subr.bf16.mxu0 0
        %2561 = vmatpush2.bf16.msra.mxu0 0
        %2562 = vmatprep.subr.bf16.mxu0 0
        %2563 = vmatpush2.bf16.msra.mxu0 0
        %2564 = vmatprep.subr.bf16.mxu0 0
        %2565 = vmatpush2.bf16.msra.mxu0 0
        %2566 = vmatprep.subr.bf16.mxu0 0
        %2567 = vmatpush2.bf16.msra.mxu0 0
        %2568 = vmatprep.subr.bf16.mxu0 0
        %2569 = vmatpush2.bf16.msra.mxu0 0
        %2570 = vmatprep.subr.bf16.mxu0 0
        %2571 = vmatpush2.bf16.msra.mxu0 0
        %2572 = vmatprep.subr.bf16.mxu0 0
        %2573 = vmatpush2.bf16.msra.mxu0 0
        %2574 = vmatprep.mubr.bf16.mxu0 0
        %2575 = vmatmul.mubr.bf16.gmra.mxu0 %v2482
        %v2576 = vpop.f32.mrf.mxu0
        %v2577 = vadd.f32 %v2522, %v2576
        %v2578 = vpop.f32.mrf.mxu0
        %v2579 = vpop.f32.mrf.mxu0
        %v2580 = vadd.f32 %v2525, %v2579
        %v2581 = vpop.f32.mrf.mxu0
        %2582 = vmatprep.mubr.bf16.mxu0 0
        %2583 = vmatmul.mubr.bf16.gmra.mxu0 %v2485
        %v2584 = vpop.f32.mrf.mxu0
        %v2585 = vadd.f32 %v2530, %v2584
        %v2586 = vpop.f32.mrf.mxu0
        %v2587 = vpop.f32.mrf.mxu0
        %v2588 = vadd.f32 %v2533, %v2587
        %v2589 = vpop.f32.mrf.mxu0
        %2590 = vdwg.mxu0
        %v2592 = vsel %vm2305, %v2281, 0
        %v2595 = vsel %vm2305, %v2282, 0
        %2597 = vmatprep.subr.bf16.mxu0 0
        %2598 = vmatpush1.bf16.msra.mxu0 0
        %2599 = vmatprep.subr.bf16.mxu0 0
        %2600 = vmatpush1.bf16.msra.mxu0 0
        %2601 = vmatprep.subr.bf16.mxu0 0
        %2602 = vmatpush1.bf16.msra.mxu0 0
        %2603 = vmatprep.subr.bf16.mxu0 0
        %2604 = vmatpush1.bf16.msra.mxu0 0
        %2605 = vmatprep.subr.bf16.mxu0 0
        %2606 = vmatpush1.bf16.msra.mxu0 0
        %2607 = vmatprep.subr.bf16.mxu0 0
        %2608 = vmatpush1.bf16.msra.mxu0 0
        %2609 = vmatprep.subr.bf16.mxu0 0
        %2610 = vmatpush1.bf16.msra.mxu0 0
        %2611 = vmatprep.subr.bf16.mxu0 0
        %2612 = vmatpush1.bf16.msra.mxu0 %v2540
        %2613 = vmatprep.subr.bf16.mxu0 0
        %2614 = vmatpush2.bf16.msra.mxu0 0
        %2615 = vmatprep.subr.bf16.mxu0 0
        %2616 = vmatpush2.bf16.msra.mxu0 0
        %2617 = vmatprep.subr.bf16.mxu0 0
        %2618 = vmatpush2.bf16.msra.mxu0 0
        %2619 = vmatprep.subr.bf16.mxu0 0
        %2620 = vmatpush2.bf16.msra.mxu0 0
        %2621 = vmatprep.subr.bf16.mxu0 0
        %2622 = vmatpush2.bf16.msra.mxu0 0
        %2623 = vmatprep.subr.bf16.mxu0 0
        %2624 = vmatpush2.bf16.msra.mxu0 0
        %2625 = vmatprep.subr.bf16.mxu0 0
        %2626 = vmatpush2.bf16.msra.mxu0 0
        %2627 = vmatprep.subr.bf16.mxu0 0
        %2628 = vmatpush2.bf16.msra.mxu0 0
        %2629 = vmatprep.mubr.bf16.mxu0 0
        %2630 = vmatmul.mubr.bf16.gmra.mxu0 %v2592
        %v2631 = vpop.f32.mrf.mxu0
        %v2632 = vadd.f32 0.0, %v2631
        %v2633 = vpop.f32.mrf.mxu0
        %v2634 = vpop.f32.mrf.mxu0
        %v2635 = vadd.f32 0.0, %v2634
        %v2636 = vpop.f32.mrf.mxu0
        %2637 = vmatprep.mubr.bf16.mxu0 0
        %2638 = vmatmul.mubr.bf16.gmra.mxu0 %v2595
        %v2639 = vpop.f32.mrf.mxu0
        %v2640 = vadd.f32 0.0, %v2639
        %v2641 = vpop.f32.mrf.mxu0
        %v2642 = vpop.f32.mrf.mxu0
        %v2643 = vadd.f32 0.0, %v2642
        %v2644 = vpop.f32.mrf.mxu0
        %2645 = vdwg.mxu0
        %v2646 = vadd.f32 %v2577, %v2632
        %v2647 = vadd.f32 %v2580, %v2635
        %v2648 = vadd.f32 %v2585, %v2640
        %v2649 = vadd.f32 %v2588, %v2643
        %v2652 = vunpack.c.l.b16 %v349
        %v2653 = vunpack.c.l.b16 %v350
        %v2654 = vpack.c.b16 %v2653, %v2652
        %v2657 = vsel %vm2305, %v2287, 0
        %v2660 = vsel %vm2305, %v2288, 0
        %2662 = vmatprep.subr.bf16.mxu0 0
        %2663 = vmatpush1.bf16.msra.mxu0 0
        %2664 = vmatprep.subr.bf16.mxu0 0
        %2665 = vmatpush1.bf16.msra.mxu0 0
        %2666 = vmatprep.subr.bf16.mxu0 0
        %2667 = vmatpush1.bf16.msra.mxu0 0
        %2668 = vmatprep.subr.bf16.mxu0 0
        %2669 = vmatpush1.bf16.msra.mxu0 0
        %2670 = vmatprep.subr.bf16.mxu0 0
        %2671 = vmatpush1.bf16.msra.mxu0 0
        %2672 = vmatprep.subr.bf16.mxu0 0
        %2673 = vmatpush1.bf16.msra.mxu0 0
        %2674 = vmatprep.subr.bf16.mxu0 0
        %2675 = vmatpush1.bf16.msra.mxu0 0
        %2676 = vmatprep.subr.bf16.mxu0 0
        %2677 = vmatpush1.bf16.msra.mxu0 %v2654
        %2678 = vmatprep.subr.bf16.mxu0 0
        %2679 = vmatpush2.bf16.msra.mxu0 0
        %2680 = vmatprep.subr.bf16.mxu0 0
        %2681 = vmatpush2.bf16.msra.mxu0 0
        %2682 = vmatprep.subr.bf16.mxu0 0
        %2683 = vmatpush2.bf16.msra.mxu0 0
        %2684 = vmatprep.subr.bf16.mxu0 0
        %2685 = vmatpush2.bf16.msra.mxu0 0
        %2686 = vmatprep.subr.bf16.mxu0 0
        %2687 = vmatpush2.bf16.msra.mxu0 0
        %2688 = vmatprep.subr.bf16.mxu0 0
        %2689 = vmatpush2.bf16.msra.mxu0 0
        %2690 = vmatprep.subr.bf16.mxu0 0
        %2691 = vmatpush2.bf16.msra.mxu0 0
        %2692 = vmatprep.subr.bf16.mxu0 0
        %2693 = vmatpush2.bf16.msra.mxu0 0
        %2694 = vmatprep.mubr.bf16.mxu0 0
        %2695 = vmatmul.mubr.bf16.gmra.mxu0 %v2657
        %v2696 = vpop.f32.mrf.mxu0
        %v2697 = vadd.f32 0.0, %v2696
        %v2698 = vpop.f32.mrf.mxu0
        %v2699 = vpop.f32.mrf.mxu0
        %v2700 = vadd.f32 0.0, %v2699
        %v2701 = vpop.f32.mrf.mxu0
        %2702 = vmatprep.mubr.bf16.mxu0 0
        %2703 = vmatmul.mubr.bf16.gmra.mxu0 %v2660
        %v2704 = vpop.f32.mrf.mxu0
        %v2705 = vadd.f32 0.0, %v2704
        %v2706 = vpop.f32.mrf.mxu0
        %v2707 = vpop.f32.mrf.mxu0
        %v2708 = vadd.f32 0.0, %v2707
        %v2709 = vpop.f32.mrf.mxu0
        %2710 = vdwg.mxu0
        %v2713 = vunpack.c.l.b16 %v346
        %v2714 = vunpack.c.l.b16 %v347
        %v2715 = vpack.c.b16 %v2714, %v2713
        %2717 = vmatprep.subr.bf16.mxu0 0
        %2718 = vmatpush1.bf16.msra.mxu0 0
        %2719 = vmatprep.subr.bf16.mxu0 0
        %2720 = vmatpush1.bf16.msra.mxu0 0
        %2721 = vmatprep.subr.bf16.mxu0 0
        %2722 = vmatpush1.bf16.msra.mxu0 0
        %2723 = vmatprep.subr.bf16.mxu0 0
        %2724 = vmatpush1.bf16.msra.mxu0 0
        %2725 = vmatprep.subr.bf16.mxu0 0
        %2726 = vmatpush1.bf16.msra.mxu0 0
        %2727 = vmatprep.subr.bf16.mxu0 0
        %2728 = vmatpush1.bf16.msra.mxu0 0
        %2729 = vmatprep.subr.bf16.mxu0 0
        %2730 = vmatpush1.bf16.msra.mxu0 0
        %2731 = vmatprep.subr.bf16.mxu0 0
        %2732 = vmatpush1.bf16.msra.mxu0 %v2715
        %2733 = vmatprep.subr.bf16.mxu0 0
        %2734 = vmatpush2.bf16.msra.mxu0 0
        %2735 = vmatprep.subr.bf16.mxu0 0
        %2736 = vmatpush2.bf16.msra.mxu0 0
        %2737 = vmatprep.subr.bf16.mxu0 0
        %2738 = vmatpush2.bf16.msra.mxu0 0
        %2739 = vmatprep.subr.bf16.mxu0 0
        %2740 = vmatpush2.bf16.msra.mxu0 0
        %2741 = vmatprep.subr.bf16.mxu0 0
        %2742 = vmatpush2.bf16.msra.mxu0 0
        %2743 = vmatprep.subr.bf16.mxu0 0
        %2744 = vmatpush2.bf16.msra.mxu0 0
        %2745 = vmatprep.subr.bf16.mxu0 0
        %2746 = vmatpush2.bf16.msra.mxu0 0
        %2747 = vmatprep.subr.bf16.mxu0 0
        %2748 = vmatpush2.bf16.msra.mxu0 0
        %2749 = vmatprep.mubr.bf16.mxu0 0
        %2750 = vmatmul.mubr.bf16.gmra.mxu0 %v2657
        %v2751 = vpop.f32.mrf.mxu0
        %v2752 = vadd.f32 %v2697, %v2751
        %v2753 = vpop.f32.mrf.mxu0
        %v2754 = vpop.f32.mrf.mxu0
        %v2755 = vadd.f32 %v2700, %v2754
        %v2756 = vpop.f32.mrf.mxu0
        %2757 = vmatprep.mubr.bf16.mxu0 0
        %2758 = vmatmul.mubr.bf16.gmra.mxu0 %v2660
        %v2759 = vpop.f32.mrf.mxu0
        %v2760 = vadd.f32 %v2705, %v2759
        %v2761 = vpop.f32.mrf.mxu0
        %v2762 = vpop.f32.mrf.mxu0
        %v2763 = vadd.f32 %v2708, %v2762
        %v2764 = vpop.f32.mrf.mxu0
        %2765 = vdwg.mxu0
        %v2767 = vsel %vm2305, %v2297, 0
        %v2770 = vsel %vm2305, %v2298, 0
        %2772 = vmatprep.subr.bf16.mxu0 0
        %2773 = vmatpush1.bf16.msra.mxu0 0
        %2774 = vmatprep.subr.bf16.mxu0 0
        %2775 = vmatpush1.bf16.msra.mxu0 0
        %2776 = vmatprep.subr.bf16.mxu0 0
        %2777 = vmatpush1.bf16.msra.mxu0 0
        %2778 = vmatprep.subr.bf16.mxu0 0
        %2779 = vmatpush1.bf16.msra.mxu0 0
        %2780 = vmatprep.subr.bf16.mxu0 0
        %2781 = vmatpush1.bf16.msra.mxu0 0
        %2782 = vmatprep.subr.bf16.mxu0 0
        %2783 = vmatpush1.bf16.msra.mxu0 0
        %2784 = vmatprep.subr.bf16.mxu0 0
        %2785 = vmatpush1.bf16.msra.mxu0 0
        %2786 = vmatprep.subr.bf16.mxu0 0
        %2787 = vmatpush1.bf16.msra.mxu0 %v2715
        %2788 = vmatprep.subr.bf16.mxu0 0
        %2789 = vmatpush2.bf16.msra.mxu0 0
        %2790 = vmatprep.subr.bf16.mxu0 0
        %2791 = vmatpush2.bf16.msra.mxu0 0
        %2792 = vmatprep.subr.bf16.mxu0 0
        %2793 = vmatpush2.bf16.msra.mxu0 0
        %2794 = vmatprep.subr.bf16.mxu0 0
        %2795 = vmatpush2.bf16.msra.mxu0 0
        %2796 = vmatprep.subr.bf16.mxu0 0
        %2797 = vmatpush2.bf16.msra.mxu0 0
        %2798 = vmatprep.subr.bf16.mxu0 0
        %2799 = vmatpush2.bf16.msra.mxu0 0
        %2800 = vmatprep.subr.bf16.mxu0 0
        %2801 = vmatpush2.bf16.msra.mxu0 0
        %2802 = vmatprep.subr.bf16.mxu0 0
        %2803 = vmatpush2.bf16.msra.mxu0 0
        %2804 = vmatprep.mubr.bf16.mxu0 0
        %2805 = vmatmul.mubr.bf16.gmra.mxu0 %v2767
        %v2806 = vpop.f32.mrf.mxu0
        %v2807 = vadd.f32 0.0, %v2806
        %v2808 = vpop.f32.mrf.mxu0
        %v2809 = vpop.f32.mrf.mxu0
        %v2810 = vadd.f32 0.0, %v2809
        %v2811 = vpop.f32.mrf.mxu0
        %2812 = vmatprep.mubr.bf16.mxu0 0
        %2813 = vmatmul.mubr.bf16.gmra.mxu0 %v2770
        %v2814 = vpop.f32.mrf.mxu0
        %v2815 = vadd.f32 0.0, %v2814
        %v2816 = vpop.f32.mrf.mxu0
        %v2817 = vpop.f32.mrf.mxu0
        %v2818 = vadd.f32 0.0, %v2817
        %v2819 = vpop.f32.mrf.mxu0
        %2820 = vdwg.mxu0
        %v2821 = vadd.f32 %v2752, %v2807
        %v2822 = vadd.f32 %v2755, %v2810
        %v2823 = vadd.f32 %v2760, %v2815
        %v2824 = vadd.f32 %v2763, %v2818
        %v2825 = vsub.f32 %v2471, %v2646
        %v2826 = vsub.f32 %v2472, %v2647
        %v2827 = vsub.f32 %v2473, %v2648
        %v2828 = vsub.f32 %v2474, %v2649
        %v2829 = vsub.f32 %v2821, %v2471
        %v2830 = vsub.f32 %v2822, %v2472
        %v2831 = vsub.f32 %v2823, %v2473
        %v2832 = vsub.f32 %v2824, %v2474
        %v2833 = vsub.f32 %v2829, %v2646
        %v2834 = vsub.f32 %v2830, %v2647
        %v2835 = vsub.f32 %v2831, %v2648
        %v2836 = vsub.f32 %v2832, %v2649
        %v2837 = vpack.c.bf16 %v2826, %v2825
        %v2838 = vunpack.c.l.bf16 %v2837
        %v2839 = vunpack.c.h.bf16 %v2837
        %v2840 = vsub.f32 %v2825, %v2838
        %v2841 = vsub.f32 %v2826, %v2839
        %v2842 = vpack.c.bf16 %v2841, %v2840
        %v2843 = vpack.c.bf16 %v2834, %v2833
        %v2844 = vunpack.c.l.bf16 %v2843
        %v2845 = vunpack.c.h.bf16 %v2843
        %v2846 = vsub.f32 %v2833, %v2844
        %v2847 = vsub.f32 %v2834, %v2845
        %v2848 = vpack.c.bf16 %v2847, %v2846
        %v2849 = vadd.f32 %v2825, %v2833
        %v2850 = vadd.f32 %v2826, %v2834
        %v2851 = vpack.c.bf16 %v2850, %v2849
        %v2852 = vunpack.c.l.bf16 %v2851
        %v2853 = vunpack.c.h.bf16 %v2851
        %v2854 = vsub.f32 %v2849, %v2852
        %v2855 = vsub.f32 %v2850, %v2853
        %v2856 = vpack.c.bf16 %v2855, %v2854
        %v2859 = vunpack.c.l.b16 %v317
        %v2860 = vunpack.c.l.b16 %v318
        %v2861 = vpack.c.b16 %v2860, %v2859
        %v2863 = vsel %vm2305, %v2861, 0
        %2865 = vmatprep.subr.bf16.mxu0 0
        %2866 = vmatpush1.bf16.msra.mxu0 0
        %2867 = vmatprep.subr.bf16.mxu0 0
        %2868 = vmatpush1.bf16.msra.mxu0 0
        %2869 = vmatprep.subr.bf16.mxu0 0
        %2870 = vmatpush1.bf16.msra.mxu0 0
        %2871 = vmatprep.subr.bf16.mxu0 0
        %2872 = vmatpush1.bf16.msra.mxu0 0
        %2873 = vmatprep.subr.bf16.mxu0 0
        %2874 = vmatpush1.bf16.msra.mxu0 0
        %2875 = vmatprep.subr.bf16.mxu0 0
        %2876 = vmatpush1.bf16.msra.mxu0 0
        %2877 = vmatprep.subr.bf16.mxu0 0
        %2878 = vmatpush1.bf16.msra.mxu0 0
        %2879 = vmatprep.subr.bf16.mxu0 0
        %2880 = vmatpush1.bf16.msra.mxu0 %v2842
        %2881 = vmatprep.subr.bf16.mxu0 0
        %2882 = vmatpush2.bf16.msra.mxu0 0
        %2883 = vmatprep.subr.bf16.mxu0 0
        %2884 = vmatpush2.bf16.msra.mxu0 0
        %2885 = vmatprep.subr.bf16.mxu0 0
        %2886 = vmatpush2.bf16.msra.mxu0 0
        %2887 = vmatprep.subr.bf16.mxu0 0
        %2888 = vmatpush2.bf16.msra.mxu0 0
        %2889 = vmatprep.subr.bf16.mxu0 0
        %2890 = vmatpush2.bf16.msra.mxu0 0
        %2891 = vmatprep.subr.bf16.mxu0 0
        %2892 = vmatpush2.bf16.msra.mxu0 0
        %2893 = vmatprep.subr.bf16.mxu0 0
        %2894 = vmatpush2.bf16.msra.mxu0 0
        %2895 = vmatprep.subr.bf16.mxu0 0
        %2896 = vmatpush2.bf16.msra.mxu0 0
        %2897 = vmatprep.mubr.bf16.mxu0 0
        %2898 = vmatmul.mubr.bf16.gmra.mxu0 %v2863
        %v2899 = vpop.f32.mrf.mxu0
        %v2900 = vadd.f32 0.0, %v2899
        %v2901 = vpop.f32.mrf.mxu0
        %v2902 = vpop.f32.mrf.mxu0
        %v2903 = vadd.f32 0.0, %v2902
        %v2904 = vpop.f32.mrf.mxu0
        %2905 = vdwg.mxu0
        %2906 = vmatprep.subr.bf16.mxu0 0
        %2907 = vmatpush1.bf16.msra.mxu0 0
        %2908 = vmatprep.subr.bf16.mxu0 0
        %2909 = vmatpush1.bf16.msra.mxu0 0
        %2910 = vmatprep.subr.bf16.mxu0 0
        %2911 = vmatpush1.bf16.msra.mxu0 0
        %2912 = vmatprep.subr.bf16.mxu0 0
        %2913 = vmatpush1.bf16.msra.mxu0 0
        %2914 = vmatprep.subr.bf16.mxu0 0
        %2915 = vmatpush1.bf16.msra.mxu0 0
        %2916 = vmatprep.subr.bf16.mxu0 0
        %2917 = vmatpush1.bf16.msra.mxu0 0
        %2918 = vmatprep.subr.bf16.mxu0 0
        %2919 = vmatpush1.bf16.msra.mxu0 0
        %2920 = vmatprep.subr.bf16.mxu0 0
        %2921 = vmatpush1.bf16.msra.mxu0 %v2837
        %2922 = vmatprep.subr.bf16.mxu0 0
        %2923 = vmatpush2.bf16.msra.mxu0 0
        %2924 = vmatprep.subr.bf16.mxu0 0
        %2925 = vmatpush2.bf16.msra.mxu0 0
        %2926 = vmatprep.subr.bf16.mxu0 0
        %2927 = vmatpush2.bf16.msra.mxu0 0
        %2928 = vmatprep.subr.bf16.mxu0 0
        %2929 = vmatpush2.bf16.msra.mxu0 0
        %2930 = vmatprep.subr.bf16.mxu0 0
        %2931 = vmatpush2.bf16.msra.mxu0 0
        %2932 = vmatprep.subr.bf16.mxu0 0
        %2933 = vmatpush2.bf16.msra.mxu0 0
        %2934 = vmatprep.subr.bf16.mxu0 0
        %2935 = vmatpush2.bf16.msra.mxu0 0
        %2936 = vmatprep.subr.bf16.mxu0 0
        %2937 = vmatpush2.bf16.msra.mxu0 0
        %2938 = vmatprep.mubr.bf16.mxu0 0
        %2939 = vmatmul.mubr.bf16.gmra.mxu0 %v2863
        %v2940 = vpop.f32.mrf.mxu0
        %v2941 = vadd.f32 %v2900, %v2940
        %v2942 = vpop.f32.mrf.mxu0
        %v2943 = vpop.f32.mrf.mxu0
        %v2944 = vadd.f32 %v2903, %v2943
        %v2945 = vpop.f32.mrf.mxu0
        %2946 = vdwg.mxu0
        %v2949 = vunpack.c.l.b16 %v320
        %v2950 = vunpack.c.l.b16 %v321
        %v2951 = vpack.c.b16 %v2950, %v2949
        %v2953 = vsel %vm2305, %v2951, 0
        %2955 = vmatprep.subr.bf16.mxu0 0
        %2956 = vmatpush1.bf16.msra.mxu0 0
        %2957 = vmatprep.subr.bf16.mxu0 0
        %2958 = vmatpush1.bf16.msra.mxu0 0
        %2959 = vmatprep.subr.bf16.mxu0 0
        %2960 = vmatpush1.bf16.msra.mxu0 0
        %2961 = vmatprep.subr.bf16.mxu0 0
        %2962 = vmatpush1.bf16.msra.mxu0 0
        %2963 = vmatprep.subr.bf16.mxu0 0
        %2964 = vmatpush1.bf16.msra.mxu0 0
        %2965 = vmatprep.subr.bf16.mxu0 0
        %2966 = vmatpush1.bf16.msra.mxu0 0
        %2967 = vmatprep.subr.bf16.mxu0 0
        %2968 = vmatpush1.bf16.msra.mxu0 0
        %2969 = vmatprep.subr.bf16.mxu0 0
        %2970 = vmatpush1.bf16.msra.mxu0 %v2837
        %2971 = vmatprep.subr.bf16.mxu0 0
        %2972 = vmatpush2.bf16.msra.mxu0 0
        %2973 = vmatprep.subr.bf16.mxu0 0
        %2974 = vmatpush2.bf16.msra.mxu0 0
        %2975 = vmatprep.subr.bf16.mxu0 0
        %2976 = vmatpush2.bf16.msra.mxu0 0
        %2977 = vmatprep.subr.bf16.mxu0 0
        %2978 = vmatpush2.bf16.msra.mxu0 0
        %2979 = vmatprep.subr.bf16.mxu0 0
        %2980 = vmatpush2.bf16.msra.mxu0 0
        %2981 = vmatprep.subr.bf16.mxu0 0
        %2982 = vmatpush2.bf16.msra.mxu0 0
        %2983 = vmatprep.subr.bf16.mxu0 0
        %2984 = vmatpush2.bf16.msra.mxu0 0
        %2985 = vmatprep.subr.bf16.mxu0 0
        %2986 = vmatpush2.bf16.msra.mxu0 0
        %2987 = vmatprep.mubr.bf16.mxu0 0
        %2988 = vmatmul.mubr.bf16.gmra.mxu0 %v2953
        %v2989 = vpop.f32.mrf.mxu0
        %v2990 = vadd.f32 0.0, %v2989
        %v2991 = vpop.f32.mrf.mxu0
        %v2992 = vpop.f32.mrf.mxu0
        %v2993 = vadd.f32 0.0, %v2992
        %v2994 = vpop.f32.mrf.mxu0
        %2995 = vdwg.mxu0
        %v2996 = vadd.f32 %v2941, %v2990
        %v2997 = vadd.f32 %v2944, %v2993
        %v3000 = vunpack.c.l.b16 %v323
        %v3001 = vunpack.c.l.b16 %v324
        %v3002 = vpack.c.b16 %v3001, %v3000
        %v3004 = vsel %vm2305, %v3002, 0
        %3006 = vmatprep.subr.bf16.mxu0 0
        %3007 = vmatpush1.bf16.msra.mxu0 0
        %3008 = vmatprep.subr.bf16.mxu0 0
        %3009 = vmatpush1.bf16.msra.mxu0 0
        %3010 = vmatprep.subr.bf16.mxu0 0
        %3011 = vmatpush1.bf16.msra.mxu0 0
        %3012 = vmatprep.subr.bf16.mxu0 0
        %3013 = vmatpush1.bf16.msra.mxu0 0
        %3014 = vmatprep.subr.bf16.mxu0 0
        %3015 = vmatpush1.bf16.msra.mxu0 0
        %3016 = vmatprep.subr.bf16.mxu0 0
        %3017 = vmatpush1.bf16.msra.mxu0 0
        %3018 = vmatprep.subr.bf16.mxu0 0
        %3019 = vmatpush1.bf16.msra.mxu0 0
        %3020 = vmatprep.subr.bf16.mxu0 0
        %3021 = vmatpush1.bf16.msra.mxu0 %v2848
        %3022 = vmatprep.subr.bf16.mxu0 0
        %3023 = vmatpush2.bf16.msra.mxu0 0
        %3024 = vmatprep.subr.bf16.mxu0 0
        %3025 = vmatpush2.bf16.msra.mxu0 0
        %3026 = vmatprep.subr.bf16.mxu0 0
        %3027 = vmatpush2.bf16.msra.mxu0 0
        %3028 = vmatprep.subr.bf16.mxu0 0
        %3029 = vmatpush2.bf16.msra.mxu0 0
        %3030 = vmatprep.subr.bf16.mxu0 0
        %3031 = vmatpush2.bf16.msra.mxu0 0
        %3032 = vmatprep.subr.bf16.mxu0 0
        %3033 = vmatpush2.bf16.msra.mxu0 0
        %3034 = vmatprep.subr.bf16.mxu0 0
        %3035 = vmatpush2.bf16.msra.mxu0 0
        %3036 = vmatprep.subr.bf16.mxu0 0
        %3037 = vmatpush2.bf16.msra.mxu0 0
        %3038 = vmatprep.mubr.bf16.mxu0 0
        %3039 = vmatmul.mubr.bf16.gmra.mxu0 %v3004
        %v3040 = vpop.f32.mrf.mxu0
        %v3041 = vadd.f32 0.0, %v3040
        %v3042 = vpop.f32.mrf.mxu0
        %v3043 = vpop.f32.mrf.mxu0
        %v3044 = vadd.f32 0.0, %v3043
        %v3045 = vpop.f32.mrf.mxu0
        %3046 = vdwg.mxu0
        %3047 = vmatprep.subr.bf16.mxu0 0
        %3048 = vmatpush1.bf16.msra.mxu0 0
        %3049 = vmatprep.subr.bf16.mxu0 0
        %3050 = vmatpush1.bf16.msra.mxu0 0
        %3051 = vmatprep.subr.bf16.mxu0 0
        %3052 = vmatpush1.bf16.msra.mxu0 0
        %3053 = vmatprep.subr.bf16.mxu0 0
        %3054 = vmatpush1.bf16.msra.mxu0 0
        %3055 = vmatprep.subr.bf16.mxu0 0
        %3056 = vmatpush1.bf16.msra.mxu0 0
        %3057 = vmatprep.subr.bf16.mxu0 0
        %3058 = vmatpush1.bf16.msra.mxu0 0
        %3059 = vmatprep.subr.bf16.mxu0 0
        %3060 = vmatpush1.bf16.msra.mxu0 0
        %3061 = vmatprep.subr.bf16.mxu0 0
        %3062 = vmatpush1.bf16.msra.mxu0 %v2843
        %3063 = vmatprep.subr.bf16.mxu0 0
        %3064 = vmatpush2.bf16.msra.mxu0 0
        %3065 = vmatprep.subr.bf16.mxu0 0
        %3066 = vmatpush2.bf16.msra.mxu0 0
        %3067 = vmatprep.subr.bf16.mxu0 0
        %3068 = vmatpush2.bf16.msra.mxu0 0
        %3069 = vmatprep.subr.bf16.mxu0 0
        %3070 = vmatpush2.bf16.msra.mxu0 0
        %3071 = vmatprep.subr.bf16.mxu0 0
        %3072 = vmatpush2.bf16.msra.mxu0 0
        %3073 = vmatprep.subr.bf16.mxu0 0
        %3074 = vmatpush2.bf16.msra.mxu0 0
        %3075 = vmatprep.subr.bf16.mxu0 0
        %3076 = vmatpush2.bf16.msra.mxu0 0
        %3077 = vmatprep.subr.bf16.mxu0 0
        %3078 = vmatpush2.bf16.msra.mxu0 0
        %3079 = vmatprep.mubr.bf16.mxu0 0
        %3080 = vmatmul.mubr.bf16.gmra.mxu0 %v3004
        %v3081 = vpop.f32.mrf.mxu0
        %v3082 = vadd.f32 %v3041, %v3081
        %v3083 = vpop.f32.mrf.mxu0
        %v3084 = vpop.f32.mrf.mxu0
        %v3085 = vadd.f32 %v3044, %v3084
        %v3086 = vpop.f32.mrf.mxu0
        %3087 = vdwg.mxu0
        %v3090 = vunpack.c.l.b16 %v326
        %v3091 = vunpack.c.l.b16 %v327
        %v3092 = vpack.c.b16 %v3091, %v3090
        %v3094 = vsel %vm2305, %v3092, 0
        %3096 = vmatprep.subr.bf16.mxu0 0
        %3097 = vmatpush1.bf16.msra.mxu0 0
        %3098 = vmatprep.subr.bf16.mxu0 0
        %3099 = vmatpush1.bf16.msra.mxu0 0
        %3100 = vmatprep.subr.bf16.mxu0 0
        %3101 = vmatpush1.bf16.msra.mxu0 0
        %3102 = vmatprep.subr.bf16.mxu0 0
        %3103 = vmatpush1.bf16.msra.mxu0 0
        %3104 = vmatprep.subr.bf16.mxu0 0
        %3105 = vmatpush1.bf16.msra.mxu0 0
        %3106 = vmatprep.subr.bf16.mxu0 0
        %3107 = vmatpush1.bf16.msra.mxu0 0
        %3108 = vmatprep.subr.bf16.mxu0 0
        %3109 = vmatpush1.bf16.msra.mxu0 0
        %3110 = vmatprep.subr.bf16.mxu0 0
        %3111 = vmatpush1.bf16.msra.mxu0 %v2843
        %3112 = vmatprep.subr.bf16.mxu0 0
        %3113 = vmatpush2.bf16.msra.mxu0 0
        %3114 = vmatprep.subr.bf16.mxu0 0
        %3115 = vmatpush2.bf16.msra.mxu0 0
        %3116 = vmatprep.subr.bf16.mxu0 0
        %3117 = vmatpush2.bf16.msra.mxu0 0
        %3118 = vmatprep.subr.bf16.mxu0 0
        %3119 = vmatpush2.bf16.msra.mxu0 0
        %3120 = vmatprep.subr.bf16.mxu0 0
        %3121 = vmatpush2.bf16.msra.mxu0 0
        %3122 = vmatprep.subr.bf16.mxu0 0
        %3123 = vmatpush2.bf16.msra.mxu0 0
        %3124 = vmatprep.subr.bf16.mxu0 0
        %3125 = vmatpush2.bf16.msra.mxu0 0
        %3126 = vmatprep.subr.bf16.mxu0 0
        %3127 = vmatpush2.bf16.msra.mxu0 0
        %3128 = vmatprep.mubr.bf16.mxu0 0
        %3129 = vmatmul.mubr.bf16.gmra.mxu0 %v3094
        %v3130 = vpop.f32.mrf.mxu0
        %v3131 = vadd.f32 0.0, %v3130
        %v3132 = vpop.f32.mrf.mxu0
        %v3133 = vpop.f32.mrf.mxu0
        %v3134 = vadd.f32 0.0, %v3133
        %v3135 = vpop.f32.mrf.mxu0
        %3136 = vdwg.mxu0
        %v3137 = vadd.f32 %v3082, %v3131
        %v3138 = vadd.f32 %v3085, %v3134
        %v3141 = vunpack.c.l.b16 %v329
        %v3142 = vunpack.c.l.b16 %v330
        %v3143 = vpack.c.b16 %v3142, %v3141
        %v3145 = vsel %vm2305, %v3143, 0
        %3147 = vmatprep.subr.bf16.mxu0 0
        %3148 = vmatpush1.bf16.msra.mxu0 0
        %3149 = vmatprep.subr.bf16.mxu0 0
        %3150 = vmatpush1.bf16.msra.mxu0 0
        %3151 = vmatprep.subr.bf16.mxu0 0
        %3152 = vmatpush1.bf16.msra.mxu0 0
        %3153 = vmatprep.subr.bf16.mxu0 0
        %3154 = vmatpush1.bf16.msra.mxu0 0
        %3155 = vmatprep.subr.bf16.mxu0 0
        %3156 = vmatpush1.bf16.msra.mxu0 0
        %3157 = vmatprep.subr.bf16.mxu0 0
        %3158 = vmatpush1.bf16.msra.mxu0 0
        %3159 = vmatprep.subr.bf16.mxu0 0
        %3160 = vmatpush1.bf16.msra.mxu0 0
        %3161 = vmatprep.subr.bf16.mxu0 0
        %3162 = vmatpush1.bf16.msra.mxu0 %v2856
        %3163 = vmatprep.subr.bf16.mxu0 0
        %3164 = vmatpush2.bf16.msra.mxu0 0
        %3165 = vmatprep.subr.bf16.mxu0 0
        %3166 = vmatpush2.bf16.msra.mxu0 0
        %3167 = vmatprep.subr.bf16.mxu0 0
        %3168 = vmatpush2.bf16.msra.mxu0 0
        %3169 = vmatprep.subr.bf16.mxu0 0
        %3170 = vmatpush2.bf16.msra.mxu0 0
        %3171 = vmatprep.subr.bf16.mxu0 0
        %3172 = vmatpush2.bf16.msra.mxu0 0
        %3173 = vmatprep.subr.bf16.mxu0 0
        %3174 = vmatpush2.bf16.msra.mxu0 0
        %3175 = vmatprep.subr.bf16.mxu0 0
        %3176 = vmatpush2.bf16.msra.mxu0 0
        %3177 = vmatprep.subr.bf16.mxu0 0
        %3178 = vmatpush2.bf16.msra.mxu0 0
        %3179 = vmatprep.mubr.bf16.mxu0 0
        %3180 = vmatmul.mubr.bf16.gmra.mxu0 %v3145
        %v3181 = vpop.f32.mrf.mxu0
        %v3182 = vadd.f32 0.0, %v3181
        %v3183 = vpop.f32.mrf.mxu0
        %v3184 = vpop.f32.mrf.mxu0
        %v3185 = vadd.f32 0.0, %v3184
        %v3186 = vpop.f32.mrf.mxu0
        %3187 = vdwg.mxu0
        %3188 = vmatprep.subr.bf16.mxu0 0
        %3189 = vmatpush1.bf16.msra.mxu0 0
        %3190 = vmatprep.subr.bf16.mxu0 0
        %3191 = vmatpush1.bf16.msra.mxu0 0
        %3192 = vmatprep.subr.bf16.mxu0 0
        %3193 = vmatpush1.bf16.msra.mxu0 0
        %3194 = vmatprep.subr.bf16.mxu0 0
        %3195 = vmatpush1.bf16.msra.mxu0 0
        %3196 = vmatprep.subr.bf16.mxu0 0
        %3197 = vmatpush1.bf16.msra.mxu0 0
        %3198 = vmatprep.subr.bf16.mxu0 0
        %3199 = vmatpush1.bf16.msra.mxu0 0
        %3200 = vmatprep.subr.bf16.mxu0 0
        %3201 = vmatpush1.bf16.msra.mxu0 0
        %3202 = vmatprep.subr.bf16.mxu0 0
        %3203 = vmatpush1.bf16.msra.mxu0 %v2851
        %3204 = vmatprep.subr.bf16.mxu0 0
        %3205 = vmatpush2.bf16.msra.mxu0 0
        %3206 = vmatprep.subr.bf16.mxu0 0
        %3207 = vmatpush2.bf16.msra.mxu0 0
        %3208 = vmatprep.subr.bf16.mxu0 0
        %3209 = vmatpush2.bf16.msra.mxu0 0
        %3210 = vmatprep.subr.bf16.mxu0 0
        %3211 = vmatpush2.bf16.msra.mxu0 0
        %3212 = vmatprep.subr.bf16.mxu0 0
        %3213 = vmatpush2.bf16.msra.mxu0 0
        %3214 = vmatprep.subr.bf16.mxu0 0
        %3215 = vmatpush2.bf16.msra.mxu0 0
        %3216 = vmatprep.subr.bf16.mxu0 0
        %3217 = vmatpush2.bf16.msra.mxu0 0
        %3218 = vmatprep.subr.bf16.mxu0 0
        %3219 = vmatpush2.bf16.msra.mxu0 0
        %3220 = vmatprep.mubr.bf16.mxu0 0
        %3221 = vmatmul.mubr.bf16.gmra.mxu0 %v3145
        %v3222 = vpop.f32.mrf.mxu0
        %v3223 = vadd.f32 %v3182, %v3222
        %v3224 = vpop.f32.mrf.mxu0
        %v3225 = vpop.f32.mrf.mxu0
        %v3226 = vadd.f32 %v3185, %v3225
        %v3227 = vpop.f32.mrf.mxu0
        %3228 = vdwg.mxu0
        %v3231 = vunpack.c.l.b16 %v332
        %v3232 = vunpack.c.l.b16 %v333
        %v3233 = vpack.c.b16 %v3232, %v3231
        %v3235 = vsel %vm2305, %v3233, 0
        %3237 = vmatprep.subr.bf16.mxu0 0
        %3238 = vmatpush1.bf16.msra.mxu0 0
        %3239 = vmatprep.subr.bf16.mxu0 0
        %3240 = vmatpush1.bf16.msra.mxu0 0
        %3241 = vmatprep.subr.bf16.mxu0 0
        %3242 = vmatpush1.bf16.msra.mxu0 0
        %3243 = vmatprep.subr.bf16.mxu0 0
        %3244 = vmatpush1.bf16.msra.mxu0 0
        %3245 = vmatprep.subr.bf16.mxu0 0
        %3246 = vmatpush1.bf16.msra.mxu0 0
        %3247 = vmatprep.subr.bf16.mxu0 0
        %3248 = vmatpush1.bf16.msra.mxu0 0
        %3249 = vmatprep.subr.bf16.mxu0 0
        %3250 = vmatpush1.bf16.msra.mxu0 0
        %3251 = vmatprep.subr.bf16.mxu0 0
        %3252 = vmatpush1.bf16.msra.mxu0 %v2851
        %3253 = vmatprep.subr.bf16.mxu0 0
        %3254 = vmatpush2.bf16.msra.mxu0 0
        %3255 = vmatprep.subr.bf16.mxu0 0
        %3256 = vmatpush2.bf16.msra.mxu0 0
        %3257 = vmatprep.subr.bf16.mxu0 0
        %3258 = vmatpush2.bf16.msra.mxu0 0
        %3259 = vmatprep.subr.bf16.mxu0 0
        %3260 = vmatpush2.bf16.msra.mxu0 0
        %3261 = vmatprep.subr.bf16.mxu0 0
        %3262 = vmatpush2.bf16.msra.mxu0 0
        %3263 = vmatprep.subr.bf16.mxu0 0
        %3264 = vmatpush2.bf16.msra.mxu0 0
        %3265 = vmatprep.subr.bf16.mxu0 0
        %3266 = vmatpush2.bf16.msra.mxu0 0
        %3267 = vmatprep.subr.bf16.mxu0 0
        %3268 = vmatpush2.bf16.msra.mxu0 0
        %3269 = vmatprep.mubr.bf16.mxu0 0
        %3270 = vmatmul.mubr.bf16.gmra.mxu0 %v3235
        %v3271 = vpop.f32.mrf.mxu0
        %v3272 = vadd.f32 0.0, %v3271
        %v3273 = vpop.f32.mrf.mxu0
        %v3274 = vpop.f32.mrf.mxu0
        %v3275 = vadd.f32 0.0, %v3274
        %v3276 = vpop.f32.mrf.mxu0
        %3277 = vdwg.mxu0
        %v3278 = vadd.f32 %v3223, %v3272
        %v3279 = vadd.f32 %v3226, %v3275
        %v3280 = vsub.f32 %v2996, %v3137
        %v3281 = vsub.f32 %v2997, %v3138
        %v3282 = vsub.f32 %v3278, %v2996
        %v3283 = vsub.f32 %v3279, %v2997
        %v3284 = vsub.f32 %v3282, %v3137
        %v3285 = vsub.f32 %v3283, %v3138
        %v3286 = vmul.f32 %v3280, %v3280
        %v3287 = vmul.f32 %v3281, %v3281
        %v3288 = vmul.f32 %v3284, %v3284
        %v3289 = vmul.f32 %v3285, %v3285
        %v3290 = vadd.f32 %v3286, %v3288
        %v3291 = vadd.f32 %v3287, %v3289
        %v3292 = vrsqrt.pop %v3290
        %v3293 = vmul.f32 %v3290, %v3292
        %vm3294 = vcmp.eq.f32.partialorder %v3290, inf
        %v3295 = vsel %vm3294, %v3290, %v3293
        %vm3296 = vcmp.eq.f32.partialorder %v3290, 0.0
        %v3297 = vand.u32 %v3290, 2147483648
        %v3298 = vsel %vm3296, %v3297, %v3295
        %v3299 = vrsqrt.pop %v3291
        %v3300 = vmul.f32 %v3291, %v3299
        %vm3301 = vcmp.eq.f32.partialorder %v3291, inf
        %v3302 = vsel %vm3301, %v3291, %v3300
        %vm3303 = vcmp.eq.f32.partialorder %v3291, 0.0
        %v3304 = vand.u32 %v3291, 2147483648
        %v3305 = vsel %vm3303, %v3304, %v3302
        %3306 = vst.msk [vmem:[%s312] sm:$0xff] %vm2305, %v3298
        %3307 = vst.msk [vmem:[%s312 + $0x8] sm:$0xff] %vm2305, %v3305
        %v3308 = vpack.c.bf16 %v2828, %v2827
        %v3309 = vunpack.c.l.bf16 %v3308
        %v3310 = vunpack.c.h.bf16 %v3308
        %v3311 = vsub.f32 %v2827, %v3309
        %v3312 = vsub.f32 %v2828, %v3310
        %v3313 = vpack.c.bf16 %v3312, %v3311
        %v3314 = vpack.c.bf16 %v2836, %v2835
        %v3315 = vunpack.c.l.bf16 %v3314
        %v3316 = vunpack.c.h.bf16 %v3314
        %v3317 = vsub.f32 %v2835, %v3315
        %v3318 = vsub.f32 %v2836, %v3316
        %v3319 = vpack.c.bf16 %v3318, %v3317
        %v3320 = vadd.f32 %v2827, %v2835
        %v3321 = vadd.f32 %v2828, %v2836
        %v3322 = vpack.c.bf16 %v3321, %v3320
        %v3323 = vunpack.c.l.bf16 %v3322
        %v3324 = vunpack.c.h.bf16 %v3322
        %v3325 = vsub.f32 %v3320, %v3323
        %v3326 = vsub.f32 %v3321, %v3324
        %v3327 = vpack.c.bf16 %v3326, %v3325
        %3328 = vmatprep.subr.bf16.mxu0 0
        %3329 = vmatpush1.bf16.msra.mxu0 0
        %3330 = vmatprep.subr.bf16.mxu0 0
        %3331 = vmatpush1.bf16.msra.mxu0 0
        %3332 = vmatprep.subr.bf16.mxu0 0
        %3333 = vmatpush1.bf16.msra.mxu0 0
        %3334 = vmatprep.subr.bf16.mxu0 0
        %3335 = vmatpush1.bf16.msra.mxu0 0
        %3336 = vmatprep.subr.bf16.mxu0 0
        %3337 = vmatpush1.bf16.msra.mxu0 0
        %3338 = vmatprep.subr.bf16.mxu0 0
        %3339 = vmatpush1.bf16.msra.mxu0 0
        %3340 = vmatprep.subr.bf16.mxu0 0
        %3341 = vmatpush1.bf16.msra.mxu0 0
        %3342 = vmatprep.subr.bf16.mxu0 0
        %3343 = vmatpush1.bf16.msra.mxu0 %v3313
        %3344 = vmatprep.subr.bf16.mxu0 0
        %3345 = vmatpush2.bf16.msra.mxu0 0
        %3346 = vmatprep.subr.bf16.mxu0 0
        %3347 = vmatpush2.bf16.msra.mxu0 0
        %3348 = vmatprep.subr.bf16.mxu0 0
        %3349 = vmatpush2.bf16.msra.mxu0 0
        %3350 = vmatprep.subr.bf16.mxu0 0
        %3351 = vmatpush2.bf16.msra.mxu0 0
        %3352 = vmatprep.subr.bf16.mxu0 0
        %3353 = vmatpush2.bf16.msra.mxu0 0
        %3354 = vmatprep.subr.bf16.mxu0 0
        %3355 = vmatpush2.bf16.msra.mxu0 0
        %3356 = vmatprep.subr.bf16.mxu0 0
        %3357 = vmatpush2.bf16.msra.mxu0 0
        %3358 = vmatprep.subr.bf16.mxu0 0
        %3359 = vmatpush2.bf16.msra.mxu0 0
        %3360 = vmatprep.mubr.bf16.mxu0 0
        %3361 = vmatmul.mubr.bf16.gmra.mxu0 %v2863
        %v3362 = vpop.f32.mrf.mxu0
        %v3363 = vadd.f32 0.0, %v3362
        %v3364 = vpop.f32.mrf.mxu0
        %v3365 = vpop.f32.mrf.mxu0
        %v3366 = vadd.f32 0.0, %v3365
        %v3367 = vpop.f32.mrf.mxu0
        %3368 = vdwg.mxu0
        %3369 = vmatprep.subr.bf16.mxu0 0
        %3370 = vmatpush1.bf16.msra.mxu0 0
        %3371 = vmatprep.subr.bf16.mxu0 0
        %3372 = vmatpush1.bf16.msra.mxu0 0
        %3373 = vmatprep.subr.bf16.mxu0 0
        %3374 = vmatpush1.bf16.msra.mxu0 0
        %3375 = vmatprep.subr.bf16.mxu0 0
        %3376 = vmatpush1.bf16.msra.mxu0 0
        %3377 = vmatprep.subr.bf16.mxu0 0
        %3378 = vmatpush1.bf16.msra.mxu0 0
        %3379 = vmatprep.subr.bf16.mxu0 0
        %3380 = vmatpush1.bf16.msra.mxu0 0
        %3381 = vmatprep.subr.bf16.mxu0 0
        %3382 = vmatpush1.bf16.msra.mxu0 0
        %3383 = vmatprep.subr.bf16.mxu0 0
        %3384 = vmatpush1.bf16.msra.mxu0 %v3308
        %3385 = vmatprep.subr.bf16.mxu0 0
        %3386 = vmatpush2.bf16.msra.mxu0 0
        %3387 = vmatprep.subr.bf16.mxu0 0
        %3388 = vmatpush2.bf16.msra.mxu0 0
        %3389 = vmatprep.subr.bf16.mxu0 0
        %3390 = vmatpush2.bf16.msra.mxu0 0
        %3391 = vmatprep.subr.bf16.mxu0 0
        %3392 = vmatpush2.bf16.msra.mxu0 0
        %3393 = vmatprep.subr.bf16.mxu0 0
        %3394 = vmatpush2.bf16.msra.mxu0 0
        %3395 = vmatprep.subr.bf16.mxu0 0
        %3396 = vmatpush2.bf16.msra.mxu0 0
        %3397 = vmatprep.subr.bf16.mxu0 0
        %3398 = vmatpush2.bf16.msra.mxu0 0
        %3399 = vmatprep.subr.bf16.mxu0 0
        %3400 = vmatpush2.bf16.msra.mxu0 0
        %3401 = vmatprep.mubr.bf16.mxu0 0
        %3402 = vmatmul.mubr.bf16.gmra.mxu0 %v2863
        %v3403 = vpop.f32.mrf.mxu0
        %v3404 = vadd.f32 %v3363, %v3403
        %v3405 = vpop.f32.mrf.mxu0
        %v3406 = vpop.f32.mrf.mxu0
        %v3407 = vadd.f32 %v3366, %v3406
        %v3408 = vpop.f32.mrf.mxu0
        %3409 = vdwg.mxu0
        %3410 = vmatprep.subr.bf16.mxu0 0
        %3411 = vmatpush1.bf16.msra.mxu0 0
        %3412 = vmatprep.subr.bf16.mxu0 0
        %3413 = vmatpush1.bf16.msra.mxu0 0
        %3414 = vmatprep.subr.bf16.mxu0 0
        %3415 = vmatpush1.bf16.msra.mxu0 0
        %3416 = vmatprep.subr.bf16.mxu0 0
        %3417 = vmatpush1.bf16.msra.mxu0 0
        %3418 = vmatprep.subr.bf16.mxu0 0
        %3419 = vmatpush1.bf16.msra.mxu0 0
        %3420 = vmatprep.subr.bf16.mxu0 0
        %3421 = vmatpush1.bf16.msra.mxu0 0
        %3422 = vmatprep.subr.bf16.mxu0 0
        %3423 = vmatpush1.bf16.msra.mxu0 0
        %3424 = vmatprep.subr.bf16.mxu0 0
        %3425 = vmatpush1.bf16.msra.mxu0 %v3308
        %3426 = vmatprep.subr.bf16.mxu0 0
        %3427 = vmatpush2.bf16.msra.mxu0 0
        %3428 = vmatprep.subr.bf16.mxu0 0
        %3429 = vmatpush2.bf16.msra.mxu0 0
        %3430 = vmatprep.subr.bf16.mxu0 0
        %3431 = vmatpush2.bf16.msra.mxu0 0
        %3432 = vmatprep.subr.bf16.mxu0 0
        %3433 = vmatpush2.bf16.msra.mxu0 0
        %3434 = vmatprep.subr.bf16.mxu0 0
        %3435 = vmatpush2.bf16.msra.mxu0 0
        %3436 = vmatprep.subr.bf16.mxu0 0
        %3437 = vmatpush2.bf16.msra.mxu0 0
        %3438 = vmatprep.subr.bf16.mxu0 0
        %3439 = vmatpush2.bf16.msra.mxu0 0
        %3440 = vmatprep.subr.bf16.mxu0 0
        %3441 = vmatpush2.bf16.msra.mxu0 0
        %3442 = vmatprep.mubr.bf16.mxu0 0
        %3443 = vmatmul.mubr.bf16.gmra.mxu0 %v2953
        %v3444 = vpop.f32.mrf.mxu0
        %v3445 = vadd.f32 0.0, %v3444
        %v3446 = vpop.f32.mrf.mxu0
        %v3447 = vpop.f32.mrf.mxu0
        %v3448 = vadd.f32 0.0, %v3447
        %v3449 = vpop.f32.mrf.mxu0
        %3450 = vdwg.mxu0
        %v3451 = vadd.f32 %v3404, %v3445
        %v3452 = vadd.f32 %v3407, %v3448
        %3453 = vmatprep.subr.bf16.mxu0 0
        %3454 = vmatpush1.bf16.msra.mxu0 0
        %3455 = vmatprep.subr.bf16.mxu0 0
        %3456 = vmatpush1.bf16.msra.mxu0 0
        %3457 = vmatprep.subr.bf16.mxu0 0
        %3458 = vmatpush1.bf16.msra.mxu0 0
        %3459 = vmatprep.subr.bf16.mxu0 0
        %3460 = vmatpush1.bf16.msra.mxu0 0
        %3461 = vmatprep.subr.bf16.mxu0 0
        %3462 = vmatpush1.bf16.msra.mxu0 0
        %3463 = vmatprep.subr.bf16.mxu0 0
        %3464 = vmatpush1.bf16.msra.mxu0 0
        %3465 = vmatprep.subr.bf16.mxu0 0
        %3466 = vmatpush1.bf16.msra.mxu0 0
        %3467 = vmatprep.subr.bf16.mxu0 0
        %3468 = vmatpush1.bf16.msra.mxu0 %v3319
        %3469 = vmatprep.subr.bf16.mxu0 0
        %3470 = vmatpush2.bf16.msra.mxu0 0
        %3471 = vmatprep.subr.bf16.mxu0 0
        %3472 = vmatpush2.bf16.msra.mxu0 0
        %3473 = vmatprep.subr.bf16.mxu0 0
        %3474 = vmatpush2.bf16.msra.mxu0 0
        %3475 = vmatprep.subr.bf16.mxu0 0
        %3476 = vmatpush2.bf16.msra.mxu0 0
        %3477 = vmatprep.subr.bf16.mxu0 0
        %3478 = vmatpush2.bf16.msra.mxu0 0
        %3479 = vmatprep.subr.bf16.mxu0 0
        %3480 = vmatpush2.bf16.msra.mxu0 0
        %3481 = vmatprep.subr.bf16.mxu0 0
        %3482 = vmatpush2.bf16.msra.mxu0 0
        %3483 = vmatprep.subr.bf16.mxu0 0
        %3484 = vmatpush2.bf16.msra.mxu0 0
        %3485 = vmatprep.mubr.bf16.mxu0 0
        %3486 = vmatmul.mubr.bf16.gmra.mxu0 %v3004
        %v3487 = vpop.f32.mrf.mxu0
        %v3488 = vadd.f32 0.0, %v3487
        %v3489 = vpop.f32.mrf.mxu0
        %v3490 = vpop.f32.mrf.mxu0
        %v3491 = vadd.f32 0.0, %v3490
        %v3492 = vpop.f32.mrf.mxu0
        %3493 = vdwg.mxu0
        %3494 = vmatprep.subr.bf16.mxu0 0
        %3495 = vmatpush1.bf16.msra.mxu0 0
        %3496 = vmatprep.subr.bf16.mxu0 0
        %3497 = vmatpush1.bf16.msra.mxu0 0
        %3498 = vmatprep.subr.bf16.mxu0 0
        %3499 = vmatpush1.bf16.msra.mxu0 0
        %3500 = vmatprep.subr.bf16.mxu0 0
        %3501 = vmatpush1.bf16.msra.mxu0 0
        %3502 = vmatprep.subr.bf16.mxu0 0
        %3503 = vmatpush1.bf16.msra.mxu0 0
        %3504 = vmatprep.subr.bf16.mxu0 0
        %3505 = vmatpush1.bf16.msra.mxu0 0
        %3506 = vmatprep.subr.bf16.mxu0 0
        %3507 = vmatpush1.bf16.msra.mxu0 0
        %3508 = vmatprep.subr.bf16.mxu0 0
        %3509 = vmatpush1.bf16.msra.mxu0 %v3314
        %3510 = vmatprep.subr.bf16.mxu0 0
        %3511 = vmatpush2.bf16.msra.mxu0 0
        %3512 = vmatprep.subr.bf16.mxu0 0
        %3513 = vmatpush2.bf16.msra.mxu0 0
        %3514 = vmatprep.subr.bf16.mxu0 0
        %3515 = vmatpush2.bf16.msra.mxu0 0
        %3516 = vmatprep.subr.bf16.mxu0 0
        %3517 = vmatpush2.bf16.msra.mxu0 0
        %3518 = vmatprep.subr.bf16.mxu0 0
        %3519 = vmatpush2.bf16.msra.mxu0 0
        %3520 = vmatprep.subr.bf16.mxu0 0
        %3521 = vmatpush2.bf16.msra.mxu0 0
        %3522 = vmatprep.subr.bf16.mxu0 0
        %3523 = vmatpush2.bf16.msra.mxu0 0
        %3524 = vmatprep.subr.bf16.mxu0 0
        %3525 = vmatpush2.bf16.msra.mxu0 0
        %3526 = vmatprep.mubr.bf16.mxu0 0
        %3527 = vmatmul.mubr.bf16.gmra.mxu0 %v3004
        %v3528 = vpop.f32.mrf.mxu0
        %v3529 = vadd.f32 %v3488, %v3528
        %v3530 = vpop.f32.mrf.mxu0
        %v3531 = vpop.f32.mrf.mxu0
        %v3532 = vadd.f32 %v3491, %v3531
        %v3533 = vpop.f32.mrf.mxu0
        %3534 = vdwg.mxu0
        %3535 = vmatprep.subr.bf16.mxu0 0
        %3536 = vmatpush1.bf16.msra.mxu0 0
        %3537 = vmatprep.subr.bf16.mxu0 0
        %3538 = vmatpush1.bf16.msra.mxu0 0
        %3539 = vmatprep.subr.bf16.mxu0 0
        %3540 = vmatpush1.bf16.msra.mxu0 0
        %3541 = vmatprep.subr.bf16.mxu0 0
        %3542 = vmatpush1.bf16.msra.mxu0 0
        %3543 = vmatprep.subr.bf16.mxu0 0
        %3544 = vmatpush1.bf16.msra.mxu0 0
        %3545 = vmatprep.subr.bf16.mxu0 0
        %3546 = vmatpush1.bf16.msra.mxu0 0
        %3547 = vmatprep.subr.bf16.mxu0 0
        %3548 = vmatpush1.bf16.msra.mxu0 0
        %3549 = vmatprep.subr.bf16.mxu0 0
        %3550 = vmatpush1.bf16.msra.mxu0 %v3314
        %3551 = vmatprep.subr.bf16.mxu0 0
        %3552 = vmatpush2.bf16.msra.mxu0 0
        %3553 = vmatprep.subr.bf16.mxu0 0
        %3554 = vmatpush2.bf16.msra.mxu0 0
        %3555 = vmatprep.subr.bf16.mxu0 0
        %3556 = vmatpush2.bf16.msra.mxu0 0
        %3557 = vmatprep.subr.bf16.mxu0 0
        %3558 = vmatpush2.bf16.msra.mxu0 0
        %3559 = vmatprep.subr.bf16.mxu0 0
        %3560 = vmatpush2.bf16.msra.mxu0 0
        %3561 = vmatprep.subr.bf16.mxu0 0
        %3562 = vmatpush2.bf16.msra.mxu0 0
        %3563 = vmatprep.subr.bf16.mxu0 0
        %3564 = vmatpush2.bf16.msra.mxu0 0
        %3565 = vmatprep.subr.bf16.mxu0 0
        %3566 = vmatpush2.bf16.msra.mxu0 0
        %3567 = vmatprep.mubr.bf16.mxu0 0
        %3568 = vmatmul.mubr.bf16.gmra.mxu0 %v3094
        %v3569 = vpop.f32.mrf.mxu0
        %v3570 = vadd.f32 0.0, %v3569
        %v3571 = vpop.f32.mrf.mxu0
        %v3572 = vpop.f32.mrf.mxu0
        %v3573 = vadd.f32 0.0, %v3572
        %v3574 = vpop.f32.mrf.mxu0
        %3575 = vdwg.mxu0
        %v3576 = vadd.f32 %v3529, %v3570
        %v3577 = vadd.f32 %v3532, %v3573
        %3578 = vmatprep.subr.bf16.mxu0 0
        %3579 = vmatpush1.bf16.msra.mxu0 0
        %3580 = vmatprep.subr.bf16.mxu0 0
        %3581 = vmatpush1.bf16.msra.mxu0 0
        %3582 = vmatprep.subr.bf16.mxu0 0
        %3583 = vmatpush1.bf16.msra.mxu0 0
        %3584 = vmatprep.subr.bf16.mxu0 0
        %3585 = vmatpush1.bf16.msra.mxu0 0
        %3586 = vmatprep.subr.bf16.mxu0 0
        %3587 = vmatpush1.bf16.msra.mxu0 0
        %3588 = vmatprep.subr.bf16.mxu0 0
        %3589 = vmatpush1.bf16.msra.mxu0 0
        %3590 = vmatprep.subr.bf16.mxu0 0
        %3591 = vmatpush1.bf16.msra.mxu0 0
        %3592 = vmatprep.subr.bf16.mxu0 0
        %3593 = vmatpush1.bf16.msra.mxu0 %v3327
        %3594 = vmatprep.subr.bf16.mxu0 0
        %3595 = vmatpush2.bf16.msra.mxu0 0
        %3596 = vmatprep.subr.bf16.mxu0 0
        %3597 = vmatpush2.bf16.msra.mxu0 0
        %3598 = vmatprep.subr.bf16.mxu0 0
        %3599 = vmatpush2.bf16.msra.mxu0 0
        %3600 = vmatprep.subr.bf16.mxu0 0
        %3601 = vmatpush2.bf16.msra.mxu0 0
        %3602 = vmatprep.subr.bf16.mxu0 0
        %3603 = vmatpush2.bf16.msra.mxu0 0
        %3604 = vmatprep.subr.bf16.mxu0 0
        %3605 = vmatpush2.bf16.msra.mxu0 0
        %3606 = vmatprep.subr.bf16.mxu0 0
        %3607 = vmatpush2.bf16.msra.mxu0 0
        %3608 = vmatprep.subr.bf16.mxu0 0
        %3609 = vmatpush2.bf16.msra.mxu0 0
        %3610 = vmatprep.mubr.bf16.mxu0 0
        %3611 = vmatmul.mubr.bf16.gmra.mxu0 %v3145
        %v3612 = vpop.f32.mrf.mxu0
        %v3613 = vadd.f32 0.0, %v3612
        %v3614 = vpop.f32.mrf.mxu0
        %v3615 = vpop.f32.mrf.mxu0
        %v3616 = vadd.f32 0.0, %v3615
        %v3617 = vpop.f32.mrf.mxu0
        %3618 = vdwg.mxu0
        %3619 = vmatprep.subr.bf16.mxu0 0
        %3620 = vmatpush1.bf16.msra.mxu0 0
        %3621 = vmatprep.subr.bf16.mxu0 0
        %3622 = vmatpush1.bf16.msra.mxu0 0
        %3623 = vmatprep.subr.bf16.mxu0 0
        %3624 = vmatpush1.bf16.msra.mxu0 0
        %3625 = vmatprep.subr.bf16.mxu0 0
        %3626 = vmatpush1.bf16.msra.mxu0 0
        %3627 = vmatprep.subr.bf16.mxu0 0
        %3628 = vmatpush1.bf16.msra.mxu0 0
        %3629 = vmatprep.subr.bf16.mxu0 0
        %3630 = vmatpush1.bf16.msra.mxu0 0
        %3631 = vmatprep.subr.bf16.mxu0 0
        %3632 = vmatpush1.bf16.msra.mxu0 0
        %3633 = vmatprep.subr.bf16.mxu0 0
        %3634 = vmatpush1.bf16.msra.mxu0 %v3322
        %3635 = vmatprep.subr.bf16.mxu0 0
        %3636 = vmatpush2.bf16.msra.mxu0 0
        %3637 = vmatprep.subr.bf16.mxu0 0
        %3638 = vmatpush2.bf16.msra.mxu0 0
        %3639 = vmatprep.subr.bf16.mxu0 0
        %3640 = vmatpush2.bf16.msra.mxu0 0
        %3641 = vmatprep.subr.bf16.mxu0 0
        %3642 = vmatpush2.bf16.msra.mxu0 0
        %3643 = vmatprep.subr.bf16.mxu0 0
        %3644 = vmatpush2.bf16.msra.mxu0 0
        %3645 = vmatprep.subr.bf16.mxu0 0
        %3646 = vmatpush2.bf16.msra.mxu0 0
        %3647 = vmatprep.subr.bf16.mxu0 0
        %3648 = vmatpush2.bf16.msra.mxu0 0
        %3649 = vmatprep.subr.bf16.mxu0 0
        %3650 = vmatpush2.bf16.msra.mxu0 0
        %3651 = vmatprep.mubr.bf16.mxu0 0
        %3652 = vmatmul.mubr.bf16.gmra.mxu0 %v3145
        %v3653 = vpop.f32.mrf.mxu0
        %v3654 = vadd.f32 %v3613, %v3653
        %v3655 = vpop.f32.mrf.mxu0
        %v3656 = vpop.f32.mrf.mxu0
        %v3657 = vadd.f32 %v3616, %v3656
        %v3658 = vpop.f32.mrf.mxu0
        %3659 = vdwg.mxu0
        %3660 = vmatprep.subr.bf16.mxu0 0
        %3661 = vmatpush1.bf16.msra.mxu0 0
        %3662 = vmatprep.subr.bf16.mxu0 0
        %3663 = vmatpush1.bf16.msra.mxu0 0
        %3664 = vmatprep.subr.bf16.mxu0 0
        %3665 = vmatpush1.bf16.msra.mxu0 0
        %3666 = vmatprep.subr.bf16.mxu0 0
        %3667 = vmatpush1.bf16.msra.mxu0 0
        %3668 = vmatprep.subr.bf16.mxu0 0
        %3669 = vmatpush1.bf16.msra.mxu0 0
        %3670 = vmatprep.subr.bf16.mxu0 0
        %3671 = vmatpush1.bf16.msra.mxu0 0
        %3672 = vmatprep.subr.bf16.mxu0 0
        %3673 = vmatpush1.bf16.msra.mxu0 0
        %3674 = vmatprep.subr.bf16.mxu0 0
        %3675 = vmatpush1.bf16.msra.mxu0 %v3322
        %3676 = vmatprep.subr.bf16.mxu0 0
        %3677 = vmatpush2.bf16.msra.mxu0 0
        %3678 = vmatprep.subr.bf16.mxu0 0
        %3679 = vmatpush2.bf16.msra.mxu0 0
        %3680 = vmatprep.subr.bf16.mxu0 0
        %3681 = vmatpush2.bf16.msra.mxu0 0
        %3682 = vmatprep.subr.bf16.mxu0 0
        %3683 = vmatpush2.bf16.msra.mxu0 0
        %3684 = vmatprep.subr.bf16.mxu0 0
        %3685 = vmatpush2.bf16.msra.mxu0 0
        %3686 = vmatprep.subr.bf16.mxu0 0
        %3687 = vmatpush2.bf16.msra.mxu0 0
        %3688 = vmatprep.subr.bf16.mxu0 0
        %3689 = vmatpush2.bf16.msra.mxu0 0
        %3690 = vmatprep.subr.bf16.mxu0 0
        %3691 = vmatpush2.bf16.msra.mxu0 0
        %3692 = vmatprep.mubr.bf16.mxu0 0
        %3693 = vmatmul.mubr.bf16.gmra.mxu0 %v3235
        %v3694 = vpop.f32.mrf.mxu0
        %v3695 = vadd.f32 0.0, %v3694
        %v3696 = vpop.f32.mrf.mxu0
        %v3697 = vpop.f32.mrf.mxu0
        %v3698 = vadd.f32 0.0, %v3697
        %v3699 = vpop.f32.mrf.mxu0
        %3700 = vdwg.mxu0
        %v3701 = vadd.f32 %v3654, %v3695
        %v3702 = vadd.f32 %v3657, %v3698
        %v3703 = vsub.f32 %v3451, %v3576
        %v3704 = vsub.f32 %v3452, %v3577
        %v3705 = vsub.f32 %v3701, %v3451
        %v3706 = vsub.f32 %v3702, %v3452
        %v3707 = vsub.f32 %v3705, %v3576
        %v3708 = vsub.f32 %v3706, %v3577
        %v3709 = vmul.f32 %v3703, %v3703
        %v3710 = vmul.f32 %v3704, %v3704
        %v3711 = vmul.f32 %v3707, %v3707
        %v3712 = vmul.f32 %v3708, %v3708
        %v3713 = vadd.f32 %v3709, %v3711
        %v3714 = vadd.f32 %v3710, %v3712
        %v3715 = vrsqrt.pop %v3713
        %v3716 = vmul.f32 %v3713, %v3715
        %vm3717 = vcmp.eq.f32.partialorder %v3713, inf
        %v3718 = vsel %vm3717, %v3713, %v3716
        %vm3719 = vcmp.eq.f32.partialorder %v3713, 0.0
        %v3720 = vand.u32 %v3713, 2147483648
        %v3721 = vsel %vm3719, %v3720, %v3718
        %v3722 = vrsqrt.pop %v3714
        %v3723 = vmul.f32 %v3714, %v3722
        %vm3724 = vcmp.eq.f32.partialorder %v3714, inf
        %v3725 = vsel %vm3724, %v3714, %v3723
        %vm3726 = vcmp.eq.f32.partialorder %v3714, 0.0
        %v3727 = vand.u32 %v3714, 2147483648
        %v3728 = vsel %vm3726, %v3727, %v3725
        %s3729 = scalar_lea.vmem %s312, 16 [#allocation15]
        %3730 = vst.msk [vmem:[%s3729] sm:$0xff] %vm2305, %v3721
        %3731 = vst.msk [vmem:[%s3729 + $0x8] sm:$0xff] %vm2305, %v3728
        %s3732 = sand.u32 %s164, 1
        %s3733 = scalar_lea.sflag [#allocation8], %s3732
        %s3734 = sand.u32 %s164, 1
        %s3735 = smul.addr %s3734, 32
        %s3736 = scalar_lea.vmem [#allocation15], %s3735
        // Predicated region
        $region65: #{tpu_custom_call.1} parent=39 // pred_check
          %p3737 = pneg %p174
        $region66: #{tpu_custom_call.1} parent=39 // pred_check_branch
          %3739 = sbr.rel (%p3737) target = $region68
        $region67: #{tpu_custom_call.1} parent=39 // pred_region
          #allocation17 [shape = 'u32[6]{0}', space=smem, size = 0x18, scoped, tag = 'DMA stride descriptor']
          %s3740 = smul.u32 2, %s31
          %s3742 = ssub.s32 512, 512
          %3743 = vsyncadd %s3733, %s3742
          %s3744 = smul.addr %s32, 2
          %s3745 = smul.addr %s3740, 6
          %s3746 = sadd.s32 %s3744, %s3745
          %s3747 = smul.addr %s3746, 128
          %s3748 = scalar_lea.hbm %s6, %s3747
          %s3750 = sshll.u32 1, 14
          %s3751 = sxor.u32 4294967295, %s3750
          %s3754 = sshll.u32 7, 18
          %s3755 = sxor.u32 4294967295, %s3754
          %s3756 = sand.u32 0, %s3755
          %s3758 = sor.u32 %s3756, 0
          %s3759 = sshll.u32 %s3736, 4
          %s3760 = int_to_ptr.vmem [resolvable:$true] %s3759
          %3766 = sst [smem:[#allocation17]] 256
          %s3767 = scalar_lea.smem [#allocation17], 1
          %3768 = sst [smem:[%s3767]] 768
          %s3769 = scalar_lea.smem [#allocation17], 2
          %3770 = sst [smem:[%s3769]] 2
          %s3771 = scalar_lea.smem [#allocation17], 3
          %3772 = sst [smem:[%s3771]] 128
          %s3773 = scalar_lea.smem [#allocation17], 4
          %3774 = sst [smem:[%s3773]] 128
          %s3775 = scalar_lea.smem [#allocation17], 5
          %3776 = sst [smem:[%s3775]] 8
          %3778 = dma.general %s3760, 512, %s3748, %s3733, 131072, [#allocation17], %s3758, 0
        $region68: #{tpu_custom_call.1} parent=39 // pred_fallthru
          _
      $region40: #{tpu_custom_call.1} parent=5 // pred_fallthru
        _
      %p3779 = scmp.le.s32.totalorder 2, %s22
      // Predicated region
      $region69: #{tpu_custom_call.1} parent=5 // pred_check
        %p3780 = pneg %p3779
      $region70: #{tpu_custom_call.1} parent=5 // pred_check_branch
        %3782 = sbr.rel (%p3780) target = $region72
      $region71: #{tpu_custom_call.1} parent=5 // pred_region
        %s3783 = ssub.s32 %s22, 2
        // Predicated region
        $region73: #{tpu_custom_call.1} parent=71 // pred_check
          %p3784 = pneg %p180
        $region74: #{tpu_custom_call.1} parent=71 // pred_check_branch
          %3786 = sbr.rel (%p3784) target = $region76
        $region75: #{tpu_custom_call.1} parent=71 // pred_region
          %s3787 = sand.u32 %s165, 1
          %s3788 = scalar_lea.sflag [#allocation8], %s3787
          %s3789 = sand.u32 %s165, 1
          %s3790 = smul.addr %s3789, 32
          %s3791 = scalar_lea.vmem [#allocation15], %s3790
          %3792 = dma.done %s3788, 512
        $region76: #{tpu_custom_call.1} parent=71 // pred_fallthru
          _
      $region72: #{tpu_custom_call.1} parent=5 // pred_fallthru
        _
    $region6: #{tpu_custom_call.1} parent=1 // loop_footer
      %s26 = sadd.s32 1, %s22
    $region7: #{tpu_custom_call.1} parent=1 // loop_footer_branch
      %21 = sbr.rel target = $region3
    $region8: #{tpu_custom_call.1} parent=1 // loop_exit
      _
    %3793 = vsyncpa [#allocation7], 1
    %s3794 = scalar_lea.sflag [#allocation7], 1
    %3795 = vsyncpa %s3794, 1
    %3796 = vsyncpa [#allocation10], 1
    %3797 = vsyncpa [#allocation13], 1
    %3798 = vsyncpa [#allocation8], 1
    %s3799 = scalar_lea.sflag [#allocation8], 1
    %3800 = vsyncpa %s3799, 1

// kernel: tpu_custom_call.1
$region0: #{tpu_custom_call.1}
  #allocation0 [shape = 'u32[]', space=smem, size = 0x4, offset = 0x4, fixed_abs, tag = 'smem constant byte address 0x4 - core index']
  #allocation1 [shape = 'u32[144,128]{1,0:T(1,128)}', space=vmem, size = 0x12000, scoped, tag = 'internal scratch']
  #allocation2 [shape = 'f32[2,16,16]{2,1,0:T(8,128)}', space=vmem, size = 0x4000, scoped, tag = 'scratch operand']
  #allocation3 [shape = 'f32[2,16,16]{2,1,0:T(8,128)}', space=vmem, size = 0x4000, scoped, tag = 'scratch operand']
  #allocation4 [shape = 's32[1]{0}', space=sflag, size = 0x4, scoped, tag = 'scoped memory for tpu_custom_call.1']
  #allocation5 [shape = 'u8[512]{0}', space=smem, size = 0x200, scoped, tag = 'prefetched SMEM operand 0']
  #allocation16 [shape = 's32[]', space=sflag, size = 0x4, offset = 0, fixed_abs, tag = 'sflag constant byte address 0x0 - dummy sync flag']
  %s0 = inlined_call_operand.hbm [shape: f32[3], index: 0, kind: input, shape index: {}]
  %s1 = inlined_call_operand.hbm [shape: f32[2,16,16], index: 1, kind: input, shape index: {}]
  %s2 = inlined_call_operand.hbm [shape: f32[2,16,16], index: 2, kind: input, shape index: {}]
  %s3 = inlined_call_operand.hbm [shape: bf16[6,16,16], index: 3, kind: input, shape index: {}]
  %s4 = inlined_call_operand.hbm [shape: bf16[6,16,16], index: 4, kind: input, shape index: {}]
  %s5 = inlined_call_operand.hbm [shape: f32[16,16], index: 5, kind: input, shape index: {}]
  %s6 = inlined_call_operand.hbm [shape: f32[2,3,16,16], index: 6, kind: output, shape index: {}]
  %s7 = sld [smem:[#allocation0]]
  $region77: #{tpu_custom_call.1} parent=0
    _
  %s9 = ssub.s32 1, %s7
  %s10 = scalar_select 0, %s9, %s7
  %12 = dma.hbm_to_smem %s0, 16, [#allocation5], [#allocation4]
  %13 = dma.done [#allocation4], 16
  %14 = sfence
  $region1: #{tpu_custom_call.1} parent=0
    #allocation6 [shape = 'u8[16384]{0}', space=vmem, size = 0x4000, scoped, tag = 'input window, operand 1, single buffered']
    #allocation7 [shape = 's32[2]{0}', space=sflag, size = 0x8, scoped, tag = 'scoped memory for tpu_custom_call.1']
    #allocation8 [shape = 's32[2]{0}', space=sflag, size = 0x8, scoped, tag = 'scoped memory for tpu_custom_call.1']
    #allocation9 [shape = 'u8[16384]{0}', space=vmem, size = 0x4000, scoped, tag = 'input window, operand 2, single buffered']
    #allocation10 [shape = 's32[1]{0}', space=sflag, size = 0x4, scoped, tag = 'scoped memory for tpu_custom_call.1']
    #allocation11 [shape = 'u8[24576]{0}', space=vmem, size = 0x6000, scoped, tag = 'input window, operand 3, single buffered']
    #allocation12 [shape = 'u8[24576]{0}', space=vmem, size = 0x6000, scoped, tag = 'input window, operand 4, single buffered']
    #allocation13 [shape = 's32[1]{0}', space=sflag, size = 0x4, scoped, tag = 'scoped memory for tpu_custom_call.1']
    #allocation14 [shape = 'u8[8192]{0}', space=vmem, size = 0x2000, scoped, tag = 'input window, operand 5, single buffered']
    #allocation15 [shape = 'u8[32768]{0}', space=vmem, size = 0x8000, scoped, tag = 'output window, operand 0']
    %15 = vsyncpa [#allocation7], 0
    %16 = vsyncpa [#allocation10], 0
    %17 = vsyncpa [#allocation13], 0
    %18 = vsyncpa [#allocation8], 0
    %s19 = scalar_lea.sflag [#allocation8], 1
    %20 = vsyncpa %s19, 0
    loop: start=0, step=1, limit=5
    $region2: #{tpu_custom_call.1} parent=1 // loop_pre_header
      _
    $region3: #{tpu_custom_call.1} parent=1 // loop_header
      %s22 = sphi 0, %s26
      %p23 = scmp.ge.s32.totalorder %s22, 5
      %s29 = sphi 0, %s41
      %s30 = sphi 0, %s37
      %s31 = sphi 0, %s29
      %s32 = sphi 0, %s30
      %s33 = sphi 0, %s31
      %s34 = sphi 0, %s32
      %s44 = sphi 0, %s46
      %s47 = sphi 0, %s44
      %s48 = sphi 0, %s47
      %s64 = sphi 0, %s48
      %s70 = sphi 0, %s72
      %s73 = sphi 0, %s70
      %s74 = sphi 0, %s73
      %s90 = sphi 0, %s74
      %s94 = sphi 0, %s94
      %s96 = sphi 0, %s94
      %s97 = sphi 0, %s96
      %s111 = sphi 0, %s97
      %s115 = sphi 0, %s115
      %s117 = sphi 0, %s115
      %s118 = sphi 0, %s117
      %s132 = sphi 0, %s118
      %s136 = sphi 0, %s136
      %s138 = sphi 0, %s136
      %s139 = sphi 0, %s138
      %s153 = sphi 0, %s139
      %s161 = sphi 0, %s163
      %s164 = sphi 0, %s161
      %s165 = sphi 0, %s164
      %s181 = sphi 0, %s165
    $region4: #{tpu_custom_call.1} parent=1 // loop_header_branch
      %25 = sbr.rel (%p23) target = $region8
    $region5: #{tpu_custom_call.1} parent=1 // loop_body
      %s27 = ssub.s32 %s22, 1
      %s28 = ssub.s32 %s22, 2
      %s35 = sadd.s32 1, %s30
      %p36 = scmp.ge.s32.totalorder %s35, 3
      %s37 = scalar_select %p36, 0, %s35
      %s38 = sadd.s32 1, %s29
      %s39 = scalar_select %p36, %s38, %s29
      %p40 = scmp.ge.s32.totalorder %s39, 1
      %s41 = scalar_select %p40, 0, %s39
      %s42 = ssub.s32 %s29, %s41
      %p43 = scmp.eq.s32.totalorder %s42, 0
      %s45 = sadd.s32 %s44, 1
      %s46 = scalar_select %p43, %s44, %s45
      %p49 = pneg %p43
      %p50 = scmp.eq.s32.totalorder %s22, 2
      %p51 = por %p49, %p50
      %p52 = scmp.ne.s32.totalorder %s44, %s47
      %p53 = scmp.eq.s32.totalorder %s22, 0
      %p54 = por %p52, %p53
      %p55 = scmp.ne.s32.totalorder %s44, %s47
      %p56 = scmp.eq.s32.totalorder %s27, 2
      %p57 = por %p55, %p56
      %p58 = scmp.ne.s32.totalorder %s47, %s48
      %p59 = scmp.eq.s32.totalorder %s27, 0
      %p60 = por %p58, %p59
      %p61 = scmp.ne.s32.totalorder %s47, %s48
      %p62 = scmp.eq.s32.totalorder %s28, 2
      %p63 = por %p61, %p62
      %p65 = scmp.ne.s32.totalorder %s48, %s64
      %p66 = scmp.eq.s32.totalorder %s28, 0
      %p67 = por %p65, %p66
      %s68 = ssub.s32 %s29, %s41
      %p69 = scmp.eq.s32.totalorder %s68, 0
      %s71 = sadd.s32 %s70, 1
      %s72 = scalar_select %p69, %s70, %s71
      %p75 = pneg %p69
      %p76 = scmp.eq.s32.totalorder %s22, 2
      %p77 = por %p75, %p76
      %p78 = scmp.ne.s32.totalorder %s70, %s73
      %p79 = scmp.eq.s32.totalorder %s22, 0
      %p80 = por %p78, %p79
      %p81 = scmp.ne.s32.totalorder %s70, %s73
      %p82 = scmp.eq.s32.totalorder %s27, 2
      %p83 = por %p81, %p82
      %p84 = scmp.ne.s32.totalorder %s73, %s74
      %p85 = scmp.eq.s32.totalorder %s27, 0
      %p86 = por %p84, %p85
      %p87 = scmp.ne.s32.totalorder %s73, %s74
      %p88 = scmp.eq.s32.totalorder %s28, 2
      %p89 = por %p87, %p88
      %p91 = scmp.ne.s32.totalorder %s74, %s90
      %p92 = scmp.eq.s32.totalorder %s28, 0
      %p93 = por %p91, %p92
      %s95 = sadd.s32 %s94, 1
      %p98 = scmp.eq.s32.totalorder %s22, 2
      %p99 = scmp.ne.s32.totalorder %s94, %s96
      %p100 = scmp.eq.s32.totalorder %s22, 0
      %p101 = por %p99, %p100
      %p102 = scmp.ne.s32.totalorder %s94, %s96
      %p103 = scmp.eq.s32.totalorder %s27, 2
      %p104 = por %p102, %p103
      %p105 = scmp.ne.s32.totalorder %s96, %s97
      %p106 = scmp.eq.s32.totalorder %s27, 0
      %p107 = por %p105, %p106
      %p108 = scmp.ne.s32.totalorder %s96, %s97
      %p109 = scmp.eq.s32.totalorder %s28, 2
      %p110 = por %p108, %p109
      %p112 = scmp.ne.s32.totalorder %s97, %s111
      %p113 = scmp.eq.s32.totalorder %s28, 0
      %p114 = por %p112, %p113
      %s116 = sadd.s32 %s115, 1
      %p119 = scmp.eq.s32.totalorder %s22, 2
      %p120 = scmp.ne.s32.totalorder %s115, %s117
      %p121 = scmp.eq.s32.totalorder %s22, 0
      %p122 = por %p120, %p121
      %p123 = scmp.ne.s32.totalorder %s115, %s117
      %p124 = scmp.eq.s32.totalorder %s27, 2
      %p125 = por %p123, %p124
      %p126 = scmp.ne.s32.totalorder %s117, %s118
      %p127 = scmp.eq.s32.totalorder %s27, 0
      %p128 = por %p126, %p127
      %p129 = scmp.ne.s32.totalorder %s117, %s118
      %p130 = scmp.eq.s32.totalorder %s28, 2
      %p131 = por %p129, %p130
      %p133 = scmp.ne.s32.totalorder %s118, %s132
      %p134 = scmp.eq.s32.totalorder %s28, 0
      %p135 = por %p133, %p134
      %s137 = sadd.s32 %s136, 1
      %p140 = scmp.eq.s32.totalorder %s22, 2
      %p141 = scmp.ne.s32.totalorder %s136, %s138
      %p142 = scmp.eq.s32.totalorder %s22, 0
      %p143 = por %p141, %p142
      %p144 = scmp.ne.s32.totalorder %s136, %s138
      %p145 = scmp.eq.s32.totalorder %s27, 2
      %p146 = por %p144, %p145
      %p147 = scmp.ne.s32.totalorder %s138, %s139
      %p148 = scmp.eq.s32.totalorder %s27, 0
      %p149 = por %p147, %p148
      %p150 = scmp.ne.s32.totalorder %s138, %s139
      %p151 = scmp.eq.s32.totalorder %s28, 2
      %p152 = por %p150, %p151
      %p154 = scmp.ne.s32.totalorder %s139, %s153
      %p155 = scmp.eq.s32.totalorder %s28, 0
      %p156 = por %p154, %p155
      %s157 = ssub.s32 %s29, %s41
      %s158 = ssub.s32 %s30, %s37
      %s159 = sor.u32 %s157, %s158
      %p160 = scmp.eq.s32.totalorder %s159, 0
      %s162 = sadd.s32 %s161, 1
      %s163 = scalar_select %p160, %s161, %s162
      %p166 = pneg %p160
      %p167 = scmp.eq.s32.totalorder %s22, 2
      %p168 = por %p166, %p167
      %p169 = scmp.ne.s32.totalorder %s161, %s164
      %p170 = scmp.eq.s32.totalorder %s22, 0
      %p171 = por %p169, %p170
      %p172 = scmp.ne.s32.totalorder %s161, %s164
      %p173 = scmp.eq.s32.totalorder %s27, 2
      %p174 = por %p172, %p173
      %p175 = scmp.ne.s32.totalorder %s164, %s165
      %p176 = scmp.eq.s32.totalorder %s27, 0
      %p177 = por %p175, %p176
      %p178 = scmp.ne.s32.totalorder %s164, %s165
      %p179 = scmp.eq.s32.totalorder %s28, 2
      %p180 = por %p178, %p179
      %p182 = scmp.ne.s32.totalorder %s165, %s181
      %p183 = scmp.eq.s32.totalorder %s28, 0
      %p184 = por %p182, %p183
      %p185 = scmp.le.s32.totalorder 1, %s22
      %p186 = scmp.lt.s32.totalorder %s22, 4
      %p187 = pnand %p185, %p186
      %p188 = pneg %p187
      // Predicated region
      $region9: #{tpu_custom_call.1} parent=5 // pred_check
        _
      $region10: #{tpu_custom_call.1} parent=5 // pred_check_branch
        %190 = sbr.rel (%p187) target = $region12
      $region11: #{tpu_custom_call.1} parent=5 // pred_region
        %s191 = ssub.s32 %s22, 1
        // Predicated region
        $region13: #{tpu_custom_call.1} parent=11 // pred_check
          %p192 = pneg %p60
        $region14: #{tpu_custom_call.1} parent=11 // pred_check_branch
          %194 = sbr.rel (%p192) target = $region16
        $region15: #{tpu_custom_call.1} parent=11 // pred_region
          %s195 = smul.u32 2, %s31
          %s197 = ssub.s32 512, 512
          %198 = vsyncadd [#allocation7], %s197
          %s199 = smul.addr %s195, 2
          %s200 = smul.addr %s199, 128
          %s201 = scalar_lea.hbm %s1, %s200
          %s202 = sshll.u32 [#allocation6], 4
          %s203 = int_to_ptr.vmem [resolvable:$true] %s202
          %208 = dma.hbm_to_vmem [thread:$0]  %s201, 512, %s203, [#allocation7], 128, 128, 8
        $region16: #{tpu_custom_call.1} parent=11 // pred_fallthru
          _
        // Predicated region
        $region17: #{tpu_custom_call.1} parent=11 // pred_check
          %p209 = pneg %p86
        $region18: #{tpu_custom_call.1} parent=11 // pred_check_branch
          %211 = sbr.rel (%p209) target = $region20
        $region19: #{tpu_custom_call.1} parent=11 // pred_region
          %s212 = smul.u32 2, %s31
          %s214 = ssub.s32 512, 512
          %215 = vsyncadd [#allocation10], %s214
          %s216 = smul.addr %s212, 2
          %s217 = smul.addr %s216, 128
          %s218 = scalar_lea.hbm %s2, %s217
          %s219 = sshll.u32 [#allocation9], 4
          %s220 = int_to_ptr.vmem [resolvable:$true] %s219
          %225 = dma.hbm_to_vmem [thread:$0]  %s218, 512, %s220, [#allocation10], 128, 128, 8
        $region20: #{tpu_custom_call.1} parent=11 // pred_fallthru
          _
        // Predicated region
        $region21: #{tpu_custom_call.1} parent=11 // pred_check
          %p226 = pneg %p107
        $region22: #{tpu_custom_call.1} parent=11 // pred_check_branch
          %228 = sbr.rel (%p226) target = $region24
        $region23: #{tpu_custom_call.1} parent=11 // pred_region
          %s230 = ssub.s32 768, 768
          %231 = vsyncadd [#allocation10], %s230
          %s232 = sshll.u32 [#allocation11], 4
          %s233 = int_to_ptr.vmem [resolvable:$true] %s232
          %238 = dma.hbm_to_vmem [thread:$0]  %s3, 768, %s233, [#allocation10], 64, 64, 4
        $region24: #{tpu_custom_call.1} parent=11 // pred_fallthru
          _
        // Predicated region
        $region25: #{tpu_custom_call.1} parent=11 // pred_check
          %p239 = pneg %p128
        $region26: #{tpu_custom_call.1} parent=11 // pred_check_branch
          %241 = sbr.rel (%p239) target = $region28
        $region27: #{tpu_custom_call.1} parent=11 // pred_region
          %s243 = ssub.s32 768, 768
          %244 = vsyncadd [#allocation13], %s243
          %s245 = sshll.u32 [#allocation12], 4
          %s246 = int_to_ptr.vmem [resolvable:$true] %s245
          %251 = dma.hbm_to_vmem [thread:$0]  %s4, 768, %s246, [#allocation13], 64, 64, 4
        $region28: #{tpu_custom_call.1} parent=11 // pred_fallthru
          _
        // Predicated region
        $region29: #{tpu_custom_call.1} parent=11 // pred_check
          %p252 = pneg %p149
        $region30: #{tpu_custom_call.1} parent=11 // pred_check_branch
          %254 = sbr.rel (%p252) target = $region32
        $region31: #{tpu_custom_call.1} parent=11 // pred_region
          %s256 = ssub.s32 256, 256
          %257 = vsyncadd [#allocation13], %s256
          %s258 = sshll.u32 [#allocation14], 4
          %s259 = int_to_ptr.vmem [resolvable:$true] %s258
          %264 = dma.hbm_to_vmem [thread:$0]  %s5, 256, %s259, [#allocation13], 128, 128, 8
        $region32: #{tpu_custom_call.1} parent=11 // pred_fallthru
          _
      $region12: #{tpu_custom_call.1} parent=5 // pred_fallthru
        _
      %p265 = scmp.lt.s32.totalorder %s22, 3
      // Predicated region
      $region33: #{tpu_custom_call.1} parent=5 // pred_check
        %p266 = pneg %p265
      $region34: #{tpu_custom_call.1} parent=5 // pred_check_branch
        %268 = sbr.rel (%p266) target = $region36
      $region35: #{tpu_custom_call.1} parent=5 // pred_region
        _
      $region36: #{tpu_custom_call.1} parent=5 // pred_fallthru
        _
      %p269 = scmp.le.s32.totalorder 1, %s22
      %p270 = scmp.lt.s32.totalorder %s22, 4
      %p271 = pnand %p269, %p270
      %p272 = pneg %p271
      // Predicated region
      $region37: #{tpu_custom_call.1} parent=5 // pred_check
        _
      $region38: #{tpu_custom_call.1} parent=5 // pred_check_branch
        %274 = sbr.rel (%p271) target = $region40
      $region39: #{tpu_custom_call.1} parent=5 // pred_region
        %s275 = ssub.s32 %s22, 1
        // Predicated region
        $region41: #{tpu_custom_call.1} parent=39 // pred_check
          %p276 = pneg %p60
        $region42: #{tpu_custom_call.1} parent=39 // pred_check_branch
          %278 = sbr.rel (%p276) target = $region44
        $region43: #{tpu_custom_call.1} parent=39 // pred_region
          %279 = dma.done [#allocation7], 512
        $region44: #{tpu_custom_call.1} parent=39 // pred_fallthru
          _
        // Predicated region
        $region45: #{tpu_custom_call.1} parent=39 // pred_check
          %p280 = pneg %p86
        $region46: #{tpu_custom_call.1} parent=39 // pred_check_branch
          %282 = sbr.rel (%p280) target = $region48
        $region47: #{tpu_custom_call.1} parent=39 // pred_region
          %283 = dma.done [#allocation10], 512
        $region48: #{tpu_custom_call.1} parent=39 // pred_fallthru
          _
        // Predicated region
        $region49: #{tpu_custom_call.1} parent=39 // pred_check
          %p284 = pneg %p107
        $region50: #{tpu_custom_call.1} parent=39 // pred_check_branch
          %286 = sbr.rel (%p284) target = $region52
        $region51: #{tpu_custom_call.1} parent=39 // pred_region
          %287 = dma.done [#allocation10], 768
        $region52: #{tpu_custom_call.1} parent=39 // pred_fallthru
          _
        // Predicated region
        $region53: #{tpu_custom_call.1} parent=39 // pred_check
          %p288 = pneg %p128
        $region54: #{tpu_custom_call.1} parent=39 // pred_check_branch
          %290 = sbr.rel (%p288) target = $region56
        $region55: #{tpu_custom_call.1} parent=39 // pred_region
          %291 = dma.done [#allocation13], 768
        $region56: #{tpu_custom_call.1} parent=39 // pred_fallthru
          _
        // Predicated region
        $region57: #{tpu_custom_call.1} parent=39 // pred_check
          %p292 = pneg %p149
        $region58: #{tpu_custom_call.1} parent=39 // pred_check_branch
          %294 = sbr.rel (%p292) target = $region60
        $region59: #{tpu_custom_call.1} parent=39 // pred_region
          %295 = dma.done [#allocation13], 256
        $region60: #{tpu_custom_call.1} parent=39 // pred_fallthru
          _
        %p296 = pneg %p60
        %p297 = pneg %p57
        %p298 = pneg %p86
        %p299 = pneg %p83
        %p300 = pneg %p107
        %p301 = pneg %p104
        %p302 = pneg %p128
        %p303 = pneg %p125
        %p304 = pneg %p149
        %p305 = pneg %p146
        %p306 = pneg %p177
        %p307 = pneg %p174
        %s308 = sand.u32 %s164, 1
        %s309 = scalar_lea.sflag [#allocation8], %s308
        %s310 = sand.u32 %s164, 1
        %s311 = smul.addr %s310, 32
        %s312 = scalar_lea.vmem [#allocation15], %s311
        %s313 = smul.u32 2, %s31
        %s314 = smul.u32 2, %s31
        %s315 = smul.u32 2, %s31
        %v317 = vld [vmem:[#allocation11] sm:$0xf]
        %v318 = vld [vmem:[#allocation11 + $0x4] sm:$0xf]
        %s319 = scalar_lea.vmem [#allocation11], 8
        %v320 = vld [vmem:[%s319] sm:$0xf]
        %v321 = vld [vmem:[%s319 + $0x4] sm:$0xf]
        %s322 = scalar_lea.vmem [#allocation11], 16
        %v323 = vld [vmem:[%s322] sm:$0xf]
        %v324 = vld [vmem:[%s322 + $0x4] sm:$0xf]
        %s325 = scalar_lea.vmem [#allocation11], 24
        %v326 = vld [vmem:[%s325] sm:$0xf]
        %v327 = vld [vmem:[%s325 + $0x4] sm:$0xf]
        %s328 = scalar_lea.vmem [#allocation11], 32
        %v329 = vld [vmem:[%s328] sm:$0xf]
        %v330 = vld [vmem:[%s328 + $0x4] sm:$0xf]
        %s331 = scalar_lea.vmem [#allocation11], 40
        %v332 = vld [vmem:[%s331] sm:$0xf]
        %v333 = vld [vmem:[%s331 + $0x4] sm:$0xf]
        %v334 = vld [vmem:[#allocation12] sm:$0xf]
        %v335 = vld [vmem:[#allocation12 + $0x4] sm:$0xf]
        %s336 = scalar_lea.vmem [#allocation12], 8
        %v337 = vld [vmem:[%s336] sm:$0xf]
        %v338 = vld [vmem:[%s336 + $0x4] sm:$0xf]
        %s339 = scalar_lea.vmem [#allocation12], 16
        %v340 = vld [vmem:[%s339] sm:$0xf]
        %v341 = vld [vmem:[%s339 + $0x4] sm:$0xf]
        %s342 = scalar_lea.vmem [#allocation12], 24
        %v343 = vld [vmem:[%s342] sm:$0xf]
        %v344 = vld [vmem:[%s342 + $0x4] sm:$0xf]
        %s345 = scalar_lea.vmem [#allocation12], 32
        %v346 = vld [vmem:[%s345] sm:$0xf]
        %v347 = vld [vmem:[%s345 + $0x4] sm:$0xf]
        %s348 = scalar_lea.vmem [#allocation12], 40
        %v349 = vld [vmem:[%s348] sm:$0xf]
        %v350 = vld [vmem:[%s348 + $0x4] sm:$0xf]
        %p351 = scmp.eq.s32.totalorder %s32, 0
        // Predicated region
        $region61: #{tpu_custom_call.1} parent=39 // pred_check
          %p352 = pneg %p351
        $region62: #{tpu_custom_call.1} parent=39 // pred_check_branch
          %354 = sbr.rel (%p352) target = $region64
        $region63: #{tpu_custom_call.1} parent=39 // pred_region
          %v355 = vld [vmem:[#allocation6] sm:$0xff]
          %v356 = vld [vmem:[#allocation6 + $0x8] sm:$0xff]
          %v357 = vld [vmem:[#allocation6 + $0x10] sm:$0xff]
          %v358 = vld [vmem:[#allocation6 + $0x18] sm:$0xff]
          %v359 = vld [vmem:[#allocation9] sm:$0xff]
          %v360 = vld [vmem:[#allocation9 + $0x8] sm:$0xff]
          %v361 = vld [vmem:[#allocation9 + $0x10] sm:$0xff]
          %v362 = vld [vmem:[#allocation9 + $0x18] sm:$0xff]
          %v363 = vpack.c.bf16 %v356, %v355
          %v364 = vpack.c.bf16 %v358, %v357
          %v365 = vunpack.c.l.bf16 %v363
          %v366 = vunpack.c.h.bf16 %v363
          %v367 = vunpack.c.l.bf16 %v364
          %v368 = vunpack.c.h.bf16 %v364
          %v369 = vsub.f32 %v355, %v365
          %v370 = vsub.f32 %v356, %v366
          %v371 = vsub.f32 %v357, %v367
          %v372 = vsub.f32 %v358, %v368
          %v373 = vpack.c.bf16 %v370, %v369
          %v374 = vpack.c.bf16 %v372, %v371
          %v375 = vpack.c.bf16 %v360, %v359
          %v376 = vpack.c.bf16 %v362, %v361
          %v377 = vunpack.c.l.bf16 %v375
          %v378 = vunpack.c.h.bf16 %v375
          %v379 = vunpack.c.l.bf16 %v376
          %v380 = vunpack.c.h.bf16 %v376
          %v381 = vsub.f32 %v359, %v377
          %v382 = vsub.f32 %v360, %v378
          %v383 = vsub.f32 %v361, %v379
          %v384 = vsub.f32 %v362, %v380
          %v385 = vpack.c.bf16 %v382, %v381
          %v386 = vpack.c.bf16 %v384, %v383
          %v387 = vadd.f32 %v355, %v359
          %v388 = vadd.f32 %v356, %v360
          %v389 = vadd.f32 %v357, %v361
          %v390 = vadd.f32 %v358, %v362
          %v391 = vpack.c.bf16 %v388, %v387
          %v392 = vpack.c.bf16 %v390, %v389
          %v393 = vunpack.c.l.bf16 %v391
          %v394 = vunpack.c.h.bf16 %v391
          %v395 = vunpack.c.l.bf16 %v392
          %v396 = vunpack.c.h.bf16 %v392
          %v397 = vsub.f32 %v387, %v393
          %v398 = vsub.f32 %v388, %v394
          %v399 = vsub.f32 %v389, %v395
          %v400 = vsub.f32 %v390, %v396
          %v401 = vpack.c.bf16 %v398, %v397
          %v402 = vpack.c.bf16 %v400, %v399
          %v405 = vunpack.c.l.b16 %v337
          %v406 = vunpack.c.l.b16 %v338
          %v407 = vpack.c.b16 %v406, %v405
          %vm409 = vcmask 130048
          %v411 = vsel %vm409, %v363, 0
          %v414 = vsel %vm409, %v364, 0
          %416 = vmatprep.subr.bf16.mxu0 0
          %417 = vmatpush1.bf16.msra.mxu0 0
          %418 = vmatprep.subr.bf16.mxu0 0
          %419 = vmatpush1.bf16.msra.mxu0 0
          %420 = vmatprep.subr.bf16.mxu0 0
          %421 = vmatpush1.bf16.msra.mxu0 0
          %422 = vmatprep.subr.bf16.mxu0 0
          %423 = vmatpush1.bf16.msra.mxu0 0
          %424 = vmatprep.subr.bf16.mxu0 0
          %425 = vmatpush1.bf16.msra.mxu0 0
          %426 = vmatprep.subr.bf16.mxu0 0
          %427 = vmatpush1.bf16.msra.mxu0 0
          %428 = vmatprep.subr.bf16.mxu0 0
          %429 = vmatpush1.bf16.msra.mxu0 0
          %430 = vmatprep.subr.bf16.mxu0 0
          %431 = vmatpush1.bf16.msra.mxu0 %v407
          %432 = vmatprep.subr.bf16.mxu0 0
          %433 = vmatpush2.bf16.msra.mxu0 0
          %434 = vmatprep.subr.bf16.mxu0 0
          %435 = vmatpush2.bf16.msra.mxu0 0
          %436 = vmatprep.subr.bf16.mxu0 0
          %437 = vmatpush2.bf16.msra.mxu0 0
          %438 = vmatprep.subr.bf16.mxu0 0
          %439 = vmatpush2.bf16.msra.mxu0 0
          %440 = vmatprep.subr.bf16.mxu0 0
          %441 = vmatpush2.bf16.msra.mxu0 0
          %442 = vmatprep.subr.bf16.mxu0 0
          %443 = vmatpush2.bf16.msra.mxu0 0
          %444 = vmatprep.subr.bf16.mxu0 0
          %445 = vmatpush2.bf16.msra.mxu0 0
          %446 = vmatprep.subr.bf16.mxu0 0
          %447 = vmatpush2.bf16.msra.mxu0 0
          %448 = vmatprep.mubr.bf16.mxu0 0
          %449 = vmatmul.mubr.bf16.gmra.mxu0 %v411
          %v450 = vpop.f32.mrf.mxu0
          %v451 = vadd.f32 0.0, %v450
          %v452 = vpop.f32.mrf.mxu0
          %v453 = vpop.f32.mrf.mxu0
          %v454 = vadd.f32 0.0, %v453
          %v455 = vpop.f32.mrf.mxu0
          %456 = vmatprep.mubr.bf16.mxu0 0
          %457 = vmatmul.mubr.bf16.gmra.mxu0 %v414
          %v458 = vpop.f32.mrf.mxu0
          %v459 = vadd.f32 0.0, %v458
          %v460 = vpop.f32.mrf.mxu0
          %v461 = vpop.f32.mrf.mxu0
          %v462 = vadd.f32 0.0, %v461
          %v463 = vpop.f32.mrf.mxu0
          %464 = vdwg.mxu0
          %v467 = vunpack.c.l.b16 %v334
          %v468 = vunpack.c.l.b16 %v335
          %v469 = vpack.c.b16 %v468, %v467
          %471 = vmatprep.subr.bf16.mxu0 0
          %472 = vmatpush1.bf16.msra.mxu0 0
          %473 = vmatprep.subr.bf16.mxu0 0
          %474 = vmatpush1.bf16.msra.mxu0 0
          %475 = vmatprep.subr.bf16.mxu0 0
          %476 = vmatpush1.bf16.msra.mxu0 0
          %477 = vmatprep.subr.bf16.mxu0 0
          %478 = vmatpush1.bf16.msra.mxu0 0
          %479 = vmatprep.subr.bf16.mxu0 0
          %480 = vmatpush1.bf16.msra.mxu0 0
          %481 = vmatprep.subr.bf16.mxu0 0
          %482 = vmatpush1.bf16.msra.mxu0 0
          %483 = vmatprep.subr.bf16.mxu0 0
          %484 = vmatpush1.bf16.msra.mxu0 0
          %485 = vmatprep.subr.bf16.mxu0 0
          %486 = vmatpush1.bf16.msra.mxu0 %v469
          %487 = vmatprep.subr.bf16.mxu0 0
          %488 = vmatpush2.bf16.msra.mxu0 0
          %489 = vmatprep.subr.bf16.mxu0 0
          %490 = vmatpush2.bf16.msra.mxu0 0
          %491 = vmatprep.subr.bf16.mxu0 0
          %492 = vmatpush2.bf16.msra.mxu0 0
          %493 = vmatprep.subr.bf16.mxu0 0
          %494 = vmatpush2.bf16.msra.mxu0 0
          %495 = vmatprep.subr.bf16.mxu0 0
          %496 = vmatpush2.bf16.msra.mxu0 0
          %497 = vmatprep.subr.bf16.mxu0 0
          %498 = vmatpush2.bf16.msra.mxu0 0
          %499 = vmatprep.subr.bf16.mxu0 0
          %500 = vmatpush2.bf16.msra.mxu0 0
          %501 = vmatprep.subr.bf16.mxu0 0
          %502 = vmatpush2.bf16.msra.mxu0 0
          %503 = vmatprep.mubr.bf16.mxu0 0
          %504 = vmatmul.mubr.bf16.gmra.mxu0 %v411
          %v505 = vpop.f32.mrf.mxu0
          %v506 = vadd.f32 %v451, %v505
          %v507 = vpop.f32.mrf.mxu0
          %v508 = vpop.f32.mrf.mxu0
          %v509 = vadd.f32 %v454, %v508
          %v510 = vpop.f32.mrf.mxu0
          %511 = vmatprep.mubr.bf16.mxu0 0
          %512 = vmatmul.mubr.bf16.gmra.mxu0 %v414
          %v513 = vpop.f32.mrf.mxu0
          %v514 = vadd.f32 %v459, %v513
          %v515 = vpop.f32.mrf.mxu0
          %v516 = vpop.f32.mrf.mxu0
          %v517 = vadd.f32 %v462, %v516
          %v518 = vpop.f32.mrf.mxu0
          %519 = vdwg.mxu0
          %v521 = vsel %vm409, %v373, 0
          %v524 = vsel %vm409, %v374, 0
          %526 = vmatprep.subr.bf16.mxu0 0
          %527 = vmatpush1.bf16.msra.mxu0 0
          %528 = vmatprep.subr.bf16.mxu0 0
          %529 = vmatpush1.bf16.msra.mxu0 0
          %530 = vmatprep.subr.bf16.mxu0 0
          %531 = vmatpush1.bf16.msra.mxu0 0
          %532 = vmatprep.subr.bf16.mxu0 0
          %533 = vmatpush1.bf16.msra.mxu0 0
          %534 = vmatprep.subr.bf16.mxu0 0
          %535 = vmatpush1.bf16.msra.mxu0 0
          %536 = vmatprep.subr.bf16.mxu0 0
          %537 = vmatpush1.bf16.msra.mxu0 0
          %538 = vmatprep.subr.bf16.mxu0 0
          %539 = vmatpush1.bf16.msra.mxu0 0
          %540 = vmatprep.subr.bf16.mxu0 0
          %541 = vmatpush1.bf16.msra.mxu0 %v469
          %542 = vmatprep.subr.bf16.mxu0 0
          %543 = vmatpush2.bf16.msra.mxu0 0
          %544 = vmatprep.subr.bf16.mxu0 0
          %545 = vmatpush2.bf16.msra.mxu0 0
          %546 = vmatprep.subr.bf16.mxu0 0
          %547 = vmatpush2.bf16.msra.mxu0 0
          %548 = vmatprep.subr.bf16.mxu0 0
          %549 = vmatpush2.bf16.msra.mxu0 0
          %550 = vmatprep.subr.bf16.mxu0 0
          %551 = vmatpush2.bf16.msra.mxu0 0
          %552 = vmatprep.subr.bf16.mxu0 0
          %553 = vmatpush2.bf16.msra.mxu0 0
          %554 = vmatprep.subr.bf16.mxu0 0
          %555 = vmatpush2.bf16.msra.mxu0 0
          %556 = vmatprep.subr.bf16.mxu0 0
          %557 = vmatpush2.bf16.msra.mxu0 0
          %558 = vmatprep.mubr.bf16.mxu0 0
          %559 = vmatmul.mubr.bf16.gmra.mxu0 %v521
          %v560 = vpop.f32.mrf.mxu0
          %v561 = vadd.f32 0.0, %v560
          %v562 = vpop.f32.mrf.mxu0
          %v563 = vpop.f32.mrf.mxu0
          %v564 = vadd.f32 0.0, %v563
          %v565 = vpop.f32.mrf.mxu0
          %566 = vmatprep.mubr.bf16.mxu0 0
          %567 = vmatmul.mubr.bf16.gmra.mxu0 %v524
          %v568 = vpop.f32.mrf.mxu0
          %v569 = vadd.f32 0.0, %v568
          %v570 = vpop.f32.mrf.mxu0
          %v571 = vpop.f32.mrf.mxu0
          %v572 = vadd.f32 0.0, %v571
          %v573 = vpop.f32.mrf.mxu0
          %574 = vdwg.mxu0
          %v575 = vadd.f32 %v506, %v561
          %v576 = vadd.f32 %v509, %v564
          %v577 = vadd.f32 %v514, %v569
          %v578 = vadd.f32 %v517, %v572
          %v581 = vunpack.c.l.b16 %v343
          %v582 = vunpack.c.l.b16 %v344
          %v583 = vpack.c.b16 %v582, %v581
          %v586 = vsel %vm409, %v375, 0
          %v589 = vsel %vm409, %v376, 0
          %591 = vmatprep.subr.bf16.mxu0 0
          %592 = vmatpush1.bf16.msra.mxu0 0
          %593 = vmatprep.subr.bf16.mxu0 0
          %594 = vmatpush1.bf16.msra.mxu0 0
          %595 = vmatprep.subr.bf16.mxu0 0
          %596 = vmatpush1.bf16.msra.mxu0 0
          %597 = vmatprep.subr.bf16.mxu0 0
          %598 = vmatpush1.bf16.msra.mxu0 0
          %599 = vmatprep.subr.bf16.mxu0 0
          %600 = vmatpush1.bf16.msra.mxu0 0
          %601 = vmatprep.subr.bf16.mxu0 0
          %602 = vmatpush1.bf16.msra.mxu0 0
          %603 = vmatprep.subr.bf16.mxu0 0
          %604 = vmatpush1.bf16.msra.mxu0 0
          %605 = vmatprep.subr.bf16.mxu0 0
          %606 = vmatpush1.bf16.msra.mxu0 %v583
          %607 = vmatprep.subr.bf16.mxu0 0
          %608 = vmatpush2.bf16.msra.mxu0 0
          %609 = vmatprep.subr.bf16.mxu0 0
          %610 = vmatpush2.bf16.msra.mxu0 0
          %611 = vmatprep.subr.bf16.mxu0 0
          %612 = vmatpush2.bf16.msra.mxu0 0
          %613 = vmatprep.subr.bf16.mxu0 0
          %614 = vmatpush2.bf16.msra.mxu0 0
          %615 = vmatprep.subr.bf16.mxu0 0
          %616 = vmatpush2.bf16.msra.mxu0 0
          %617 = vmatprep.subr.bf16.mxu0 0
          %618 = vmatpush2.bf16.msra.mxu0 0
          %619 = vmatprep.subr.bf16.mxu0 0
          %620 = vmatpush2.bf16.msra.mxu0 0
          %621 = vmatprep.subr.bf16.mxu0 0
          %622 = vmatpush2.bf16.msra.mxu0 0
          %623 = vmatprep.mubr.bf16.mxu0 0
          %624 = vmatmul.mubr.bf16.gmra.mxu0 %v586
          %v625 = vpop.f32.mrf.mxu0
          %v626 = vadd.f32 0.0, %v625
          %v627 = vpop.f32.mrf.mxu0
          %v628 = vpop.f32.mrf.mxu0
          %v629 = vadd.f32 0.0, %v628
          %v630 = vpop.f32.mrf.mxu0
          %631 = vmatprep.mubr.bf16.mxu0 0
          %632 = vmatmul.mubr.bf16.gmra.mxu0 %v589
          %v633 = vpop.f32.mrf.mxu0
          %v634 = vadd.f32 0.0, %v633
          %v635 = vpop.f32.mrf.mxu0
          %v636 = vpop.f32.mrf.mxu0
          %v637 = vadd.f32 0.0, %v636
          %v638 = vpop.f32.mrf.mxu0
          %639 = vdwg.mxu0
          %v642 = vunpack.c.l.b16 %v340
          %v643 = vunpack.c.l.b16 %v341
          %v644 = vpack.c.b16 %v643, %v642
          %646 = vmatprep.subr.bf16.mxu0 0
          %647 = vmatpush1.bf16.msra.mxu0 0
          %648 = vmatprep.subr.bf16.mxu0 0
          %649 = vmatpush1.bf16.msra.mxu0 0
          %650 = vmatprep.subr.bf16.mxu0 0
          %651 = vmatpush1.bf16.msra.mxu0 0
          %652 = vmatprep.subr.bf16.mxu0 0
          %653 = vmatpush1.bf16.msra.mxu0 0
          %654 = vmatprep.subr.bf16.mxu0 0
          %655 = vmatpush1.bf16.msra.mxu0 0
          %656 = vmatprep.subr.bf16.mxu0 0
          %657 = vmatpush1.bf16.msra.mxu0 0
          %658 = vmatprep.subr.bf16.mxu0 0
          %659 = vmatpush1.bf16.msra.mxu0 0
          %660 = vmatprep.subr.bf16.mxu0 0
          %661 = vmatpush1.bf16.msra.mxu0 %v644
          %662 = vmatprep.subr.bf16.mxu0 0
          %663 = vmatpush2.bf16.msra.mxu0 0
          %664 = vmatprep.subr.bf16.mxu0 0
          %665 = vmatpush2.bf16.msra.mxu0 0
          %666 = vmatprep.subr.bf16.mxu0 0
          %667 = vmatpush2.bf16.msra.mxu0 0
          %668 = vmatprep.subr.bf16.mxu0 0
          %669 = vmatpush2.bf16.msra.mxu0 0
          %670 = vmatprep.subr.bf16.mxu0 0
          %671 = vmatpush2.bf16.msra.mxu0 0
          %672 = vmatprep.subr.bf16.mxu0 0
          %673 = vmatpush2.bf16.msra.mxu0 0
          %674 = vmatprep.subr.bf16.mxu0 0
          %675 = vmatpush2.bf16.msra.mxu0 0
          %676 = vmatprep.subr.bf16.mxu0 0
          %677 = vmatpush2.bf16.msra.mxu0 0
          %678 = vmatprep.mubr.bf16.mxu0 0
          %679 = vmatmul.mubr.bf16.gmra.mxu0 %v586
          %v680 = vpop.f32.mrf.mxu0
          %v681 = vadd.f32 %v626, %v680
          %v682 = vpop.f32.mrf.mxu0
          %v683 = vpop.f32.mrf.mxu0
          %v684 = vadd.f32 %v629, %v683
          %v685 = vpop.f32.mrf.mxu0
          %686 = vmatprep.mubr.bf16.mxu0 0
          %687 = vmatmul.mubr.bf16.gmra.mxu0 %v589
          %v688 = vpop.f32.mrf.mxu0
          %v689 = vadd.f32 %v634, %v688
          %v690 = vpop.f32.mrf.mxu0
          %v691 = vpop.f32.mrf.mxu0
          %v692 = vadd.f32 %v637, %v691
          %v693 = vpop.f32.mrf.mxu0
          %694 = vdwg.mxu0
          %v696 = vsel %vm409, %v385, 0
          %v699 = vsel %vm409, %v386, 0
          %701 = vmatprep.subr.bf16.mxu0 0
          %702 = vmatpush1.bf16.msra.mxu0 0
          %703 = vmatprep.subr.bf16.mxu0 0
          %704 = vmatpush1.bf16.msra.mxu0 0
          %705 = vmatprep.subr.bf16.mxu0 0
          %706 = vmatpush1.bf16.msra.mxu0 0
          %707 = vmatprep.subr.bf16.mxu0 0
          %708 = vmatpush1.bf16.msra.mxu0 0
          %709 = vmatprep.subr.bf16.mxu0 0
          %710 = vmatpush1.bf16.msra.mxu0 0
          %711 = vmatprep.subr.bf16.mxu0 0
          %712 = vmatpush1.bf16.msra.mxu0 0
          %713 = vmatprep.subr.bf16.mxu0 0
          %714 = vmatpush1.bf16.msra.mxu0 0
          %715 = vmatprep.subr.bf16.mxu0 0
          %716 = vmatpush1.bf16.msra.mxu0 %v644
          %717 = vmatprep.subr.bf16.mxu0 0
          %718 = vmatpush2.bf16.msra.mxu0 0
          %719 = vmatprep.subr.bf16.mxu0 0
          %720 = vmatpush2.bf16.msra.mxu0 0
          %721 = vmatprep.subr.bf16.mxu0 0
          %722 = vmatpush2.bf16.msra.mxu0 0
          %723 = vmatprep.subr.bf16.mxu0 0
          %724 = vmatpush2.bf16.msra.mxu0 0
          %725 = vmatprep.subr.bf16.mxu0 0
          %726 = vmatpush2.bf16.msra.mxu0 0
          %727 = vmatprep.subr.bf16.mxu0 0
          %728 = vmatpush2.bf16.msra.mxu0 0
          %729 = vmatprep.subr.bf16.mxu0 0
          %730 = vmatpush2.bf16.msra.mxu0 0
          %731 = vmatprep.subr.bf16.mxu0 0
          %732 = vmatpush2.bf16.msra.mxu0 0
          %733 = vmatprep.mubr.bf16.mxu0 0
          %734 = vmatmul.mubr.bf16.gmra.mxu0 %v696
          %v735 = vpop.f32.mrf.mxu0
          %v736 = vadd.f32 0.0, %v735
          %v737 = vpop.f32.mrf.mxu0
          %v738 = vpop.f32.mrf.mxu0
          %v739 = vadd.f32 0.0, %v738
          %v740 = vpop.f32.mrf.mxu0
          %741 = vmatprep.mubr.bf16.mxu0 0
          %742 = vmatmul.mubr.bf16.gmra.mxu0 %v699
          %v743 = vpop.f32.mrf.mxu0
          %v744 = vadd.f32 0.0, %v743
          %v745 = vpop.f32.mrf.mxu0
          %v746 = vpop.f32.mrf.mxu0
          %v747 = vadd.f32 0.0, %v746
          %v748 = vpop.f32.mrf.mxu0
          %749 = vdwg.mxu0
          %v750 = vadd.f32 %v681, %v736
          %v751 = vadd.f32 %v684, %v739
          %v752 = vadd.f32 %v689, %v744
          %v753 = vadd.f32 %v692, %v747
          %v756 = vunpack.c.l.b16 %v349
          %v757 = vunpack.c.l.b16 %v350
          %v758 = vpack.c.b16 %v757, %v756
          %v761 = vsel %vm409, %v391, 0
          %v764 = vsel %vm409, %v392, 0
          %766 = vmatprep.subr.bf16.mxu0 0
          %767 = vmatpush1.bf16.msra.mxu0 0
          %768 = vmatprep.subr.bf16.mxu0 0
          %769 = vmatpush1.bf16.msra.mxu0 0
          %770 = vmatprep.subr.bf16.mxu0 0
          %771 = vmatpush1.bf16.msra.mxu0 0
          %772 = vmatprep.subr.bf16.mxu0 0
          %773 = vmatpush1.bf16.msra.mxu0 0
          %774 = vmatprep.subr.bf16.mxu0 0
          %775 = vmatpush1.bf16.msra.mxu0 0
          %776 = vmatprep.subr.bf16.mxu0 0
          %777 = vmatpush1.bf16.msra.mxu0 0
          %778 = vmatprep.subr.bf16.mxu0 0
          %779 = vmatpush1.bf16.msra.mxu0 0
          %780 = vmatprep.subr.bf16.mxu0 0
          %781 = vmatpush1.bf16.msra.mxu0 %v758
          %782 = vmatprep.subr.bf16.mxu0 0
          %783 = vmatpush2.bf16.msra.mxu0 0
          %784 = vmatprep.subr.bf16.mxu0 0
          %785 = vmatpush2.bf16.msra.mxu0 0
          %786 = vmatprep.subr.bf16.mxu0 0
          %787 = vmatpush2.bf16.msra.mxu0 0
          %788 = vmatprep.subr.bf16.mxu0 0
          %789 = vmatpush2.bf16.msra.mxu0 0
          %790 = vmatprep.subr.bf16.mxu0 0
          %791 = vmatpush2.bf16.msra.mxu0 0
          %792 = vmatprep.subr.bf16.mxu0 0
          %793 = vmatpush2.bf16.msra.mxu0 0
          %794 = vmatprep.subr.bf16.mxu0 0
          %795 = vmatpush2.bf16.msra.mxu0 0
          %796 = vmatprep.subr.bf16.mxu0 0
          %797 = vmatpush2.bf16.msra.mxu0 0
          %798 = vmatprep.mubr.bf16.mxu0 0
          %799 = vmatmul.mubr.bf16.gmra.mxu0 %v761
          %v800 = vpop.f32.mrf.mxu0
          %v801 = vadd.f32 0.0, %v800
          %v802 = vpop.f32.mrf.mxu0
          %v803 = vpop.f32.mrf.mxu0
          %v804 = vadd.f32 0.0, %v803
          %v805 = vpop.f32.mrf.mxu0
          %806 = vmatprep.mubr.bf16.mxu0 0
          %807 = vmatmul.mubr.bf16.gmra.mxu0 %v764
          %v808 = vpop.f32.mrf.mxu0
          %v809 = vadd.f32 0.0, %v808
          %v810 = vpop.f32.mrf.mxu0
          %v811 = vpop.f32.mrf.mxu0
          %v812 = vadd.f32 0.0, %v811
          %v813 = vpop.f32.mrf.mxu0
          %814 = vdwg.mxu0
          %v817 = vunpack.c.l.b16 %v346
          %v818 = vunpack.c.l.b16 %v347
          %v819 = vpack.c.b16 %v818, %v817
          %821 = vmatprep.subr.bf16.mxu0 0
          %822 = vmatpush1.bf16.msra.mxu0 0
          %823 = vmatprep.subr.bf16.mxu0 0
          %824 = vmatpush1.bf16.msra.mxu0 0
          %825 = vmatprep.subr.bf16.mxu0 0
          %826 = vmatpush1.bf16.msra.mxu0 0
          %827 = vmatprep.subr.bf16.mxu0 0
          %828 = vmatpush1.bf16.msra.mxu0 0
          %829 = vmatprep.subr.bf16.mxu0 0
          %830 = vmatpush1.bf16.msra.mxu0 0
          %831 = vmatprep.subr.bf16.mxu0 0
          %832 = vmatpush1.bf16.msra.mxu0 0
          %833 = vmatprep.subr.bf16.mxu0 0
          %834 = vmatpush1.bf16.msra.mxu0 0
          %835 = vmatprep.subr.bf16.mxu0 0
          %836 = vmatpush1.bf16.msra.mxu0 %v819
          %837 = vmatprep.subr.bf16.mxu0 0
          %838 = vmatpush2.bf16.msra.mxu0 0
          %839 = vmatprep.subr.bf16.mxu0 0
          %840 = vmatpush2.bf16.msra.mxu0 0
          %841 = vmatprep.subr.bf16.mxu0 0
          %842 = vmatpush2.bf16.msra.mxu0 0
          %843 = vmatprep.subr.bf16.mxu0 0
          %844 = vmatpush2.bf16.msra.mxu0 0
          %845 = vmatprep.subr.bf16.mxu0 0
          %846 = vmatpush2.bf16.msra.mxu0 0
          %847 = vmatprep.subr.bf16.mxu0 0
          %848 = vmatpush2.bf16.msra.mxu0 0
          %849 = vmatprep.subr.bf16.mxu0 0
          %850 = vmatpush2.bf16.msra.mxu0 0
          %851 = vmatprep.subr.bf16.mxu0 0
          %852 = vmatpush2.bf16.msra.mxu0 0
          %853 = vmatprep.mubr.bf16.mxu0 0
          %854 = vmatmul.mubr.bf16.gmra.mxu0 %v761
          %v855 = vpop.f32.mrf.mxu0
          %v856 = vadd.f32 %v801, %v855
          %v857 = vpop.f32.mrf.mxu0
          %v858 = vpop.f32.mrf.mxu0
          %v859 = vadd.f32 %v804, %v858
          %v860 = vpop.f32.mrf.mxu0
          %861 = vmatprep.mubr.bf16.mxu0 0
          %862 = vmatmul.mubr.bf16.gmra.mxu0 %v764
          %v863 = vpop.f32.mrf.mxu0
          %v864 = vadd.f32 %v809, %v863
          %v865 = vpop.f32.mrf.mxu0
          %v866 = vpop.f32.mrf.mxu0
          %v867 = vadd.f32 %v812, %v866
          %v868 = vpop.f32.mrf.mxu0
          %869 = vdwg.mxu0
          %v871 = vsel %vm409, %v401, 0
          %v874 = vsel %vm409, %v402, 0
          %876 = vmatprep.subr.bf16.mxu0 0
          %877 = vmatpush1.bf16.msra.mxu0 0
          %878 = vmatprep.subr.bf16.mxu0 0
          %879 = vmatpush1.bf16.msra.mxu0 0
          %880 = vmatprep.subr.bf16.mxu0 0
          %881 = vmatpush1.bf16.msra.mxu0 0
          %882 = vmatprep.subr.bf16.mxu0 0
          %883 = vmatpush1.bf16.msra.mxu0 0
          %884 = vmatprep.subr.bf16.mxu0 0
          %885 = vmatpush1.bf16.msra.mxu0 0
          %886 = vmatprep.subr.bf16.mxu0 0
          %887 = vmatpush1.bf16.msra.mxu0 0
          %888 = vmatprep.subr.bf16.mxu0 0
          %889 = vmatpush1.bf16.msra.mxu0 0
          %890 = vmatprep.subr.bf16.mxu0 0
          %891 = vmatpush1.bf16.msra.mxu0 %v819
          %892 = vmatprep.subr.bf16.mxu0 0
          %893 = vmatpush2.bf16.msra.mxu0 0
          %894 = vmatprep.subr.bf16.mxu0 0
          %895 = vmatpush2.bf16.msra.mxu0 0
          %896 = vmatprep.subr.bf16.mxu0 0
          %897 = vmatpush2.bf16.msra.mxu0 0
          %898 = vmatprep.subr.bf16.mxu0 0
          %899 = vmatpush2.bf16.msra.mxu0 0
          %900 = vmatprep.subr.bf16.mxu0 0
          %901 = vmatpush2.bf16.msra.mxu0 0
          %902 = vmatprep.subr.bf16.mxu0 0
          %903 = vmatpush2.bf16.msra.mxu0 0
          %904 = vmatprep.subr.bf16.mxu0 0
          %905 = vmatpush2.bf16.msra.mxu0 0
          %906 = vmatprep.subr.bf16.mxu0 0
          %907 = vmatpush2.bf16.msra.mxu0 0
          %908 = vmatprep.mubr.bf16.mxu0 0
          %909 = vmatmul.mubr.bf16.gmra.mxu0 %v871
          %v910 = vpop.f32.mrf.mxu0
          %v911 = vadd.f32 0.0, %v910
          %v912 = vpop.f32.mrf.mxu0
          %v913 = vpop.f32.mrf.mxu0
          %v914 = vadd.f32 0.0, %v913
          %v915 = vpop.f32.mrf.mxu0
          %916 = vmatprep.mubr.bf16.mxu0 0
          %917 = vmatmul.mubr.bf16.gmra.mxu0 %v874
          %v918 = vpop.f32.mrf.mxu0
          %v919 = vadd.f32 0.0, %v918
          %v920 = vpop.f32.mrf.mxu0
          %v921 = vpop.f32.mrf.mxu0
          %v922 = vadd.f32 0.0, %v921
          %v923 = vpop.f32.mrf.mxu0
          %924 = vdwg.mxu0
          %v925 = vadd.f32 %v856, %v911
          %v926 = vadd.f32 %v859, %v914
          %v927 = vadd.f32 %v864, %v919
          %v928 = vadd.f32 %v867, %v922
          %v929 = vsub.f32 %v575, %v750
          %v930 = vsub.f32 %v576, %v751
          %v931 = vsub.f32 %v577, %v752
          %v932 = vsub.f32 %v578, %v753
          %v933 = vsub.f32 %v925, %v575
          %v934 = vsub.f32 %v926, %v576
          %v935 = vsub.f32 %v927, %v577
          %v936 = vsub.f32 %v928, %v578
          %v937 = vsub.f32 %v933, %v750
          %v938 = vsub.f32 %v934, %v751
          %v939 = vsub.f32 %v935, %v752
          %v940 = vsub.f32 %v936, %v753
          %v941 = vpack.c.bf16 %v930, %v929
          %v942 = vunpack.c.l.bf16 %v941
          %v943 = vunpack.c.h.bf16 %v941
          %v944 = vsub.f32 %v929, %v942
          %v945 = vsub.f32 %v930, %v943
          %v946 = vpack.c.bf16 %v945, %v944
          %v947 = vpack.c.bf16 %v938, %v937
          %v948 = vunpack.c.l.bf16 %v947
          %v949 = vunpack.c.h.bf16 %v947
          %v950 = vsub.f32 %v937, %v948
          %v951 = vsub.f32 %v938, %v949
          %v952 = vpack.c.bf16 %v951, %v950
          %v953 = vadd.f32 %v929, %v937
          %v954 = vadd.f32 %v930, %v938
          %v955 = vpack.c.bf16 %v954, %v953
          %v956 = vunpack.c.l.bf16 %v955
          %v957 = vunpack.c.h.bf16 %v955
          %v958 = vsub.f32 %v953, %v956
          %v959 = vsub.f32 %v954, %v957
          %v960 = vpack.c.bf16 %v959, %v958
          %v963 = vunpack.c.l.b16 %v317
          %v964 = vunpack.c.l.b16 %v318
          %v965 = vpack.c.b16 %v964, %v963
          %v967 = vsel %vm409, %v965, 0
          %969 = vmatprep.subr.bf16.mxu0 0
          %970 = vmatpush1.bf16.msra.mxu0 0
          %971 = vmatprep.subr.bf16.mxu0 0
          %972 = vmatpush1.bf16.msra.mxu0 0
          %973 = vmatprep.subr.bf16.mxu0 0
          %974 = vmatpush1.bf16.msra.mxu0 0
          %975 = vmatprep.subr.bf16.mxu0 0
          %976 = vmatpush1.bf16.msra.mxu0 0
          %977 = vmatprep.subr.bf16.mxu0 0
          %978 = vmatpush1.bf16.msra.mxu0 0
          %979 = vmatprep.subr.bf16.mxu0 0
          %980 = vmatpush1.bf16.msra.mxu0 0
          %981 = vmatprep.subr.bf16.mxu0 0
          %982 = vmatpush1.bf16.msra.mxu0 0
          %983 = vmatprep.subr.bf16.mxu0 0
          %984 = vmatpush1.bf16.msra.mxu0 %v946
          %985 = vmatprep.subr.bf16.mxu0 0
          %986 = vmatpush2.bf16.msra.mxu0 0
          %987 = vmatprep.subr.bf16.mxu0 0
          %988 = vmatpush2.bf16.msra.mxu0 0
          %989 = vmatprep.subr.bf16.mxu0 0
          %990 = vmatpush2.bf16.msra.mxu0 0
          %991 = vmatprep.subr.bf16.mxu0 0
          %992 = vmatpush2.bf16.msra.mxu0 0
          %993 = vmatprep.subr.bf16.mxu0 0
          %994 = vmatpush2.bf16.msra.mxu0 0
          %995 = vmatprep.subr.bf16.mxu0 0
          %996 = vmatpush2.bf16.msra.mxu0 0
          %997 = vmatprep.subr.bf16.mxu0 0
          %998 = vmatpush2.bf16.msra.mxu0 0
          %999 = vmatprep.subr.bf16.mxu0 0
          %1000 = vmatpush2.bf16.msra.mxu0 0
          %1001 = vmatprep.mubr.bf16.mxu0 0
          %1002 = vmatmul.mubr.bf16.gmra.mxu0 %v967
          %v1003 = vpop.f32.mrf.mxu0
          %v1004 = vadd.f32 0.0, %v1003
          %v1005 = vpop.f32.mrf.mxu0
          %v1006 = vpop.f32.mrf.mxu0
          %v1007 = vadd.f32 0.0, %v1006
          %v1008 = vpop.f32.mrf.mxu0
          %1009 = vdwg.mxu0
          %1010 = vmatprep.subr.bf16.mxu0 0
          %1011 = vmatpush1.bf16.msra.mxu0 0
          %1012 = vmatprep.subr.bf16.mxu0 0
          %1013 = vmatpush1.bf16.msra.mxu0 0
          %1014 = vmatprep.subr.bf16.mxu0 0
          %1015 = vmatpush1.bf16.msra.mxu0 0
          %1016 = vmatprep.subr.bf16.mxu0 0
          %1017 = vmatpush1.bf16.msra.mxu0 0
          %1018 = vmatprep.subr.bf16.mxu0 0
          %1019 = vmatpush1.bf16.msra.mxu0 0
          %1020 = vmatprep.subr.bf16.mxu0 0
          %1021 = vmatpush1.bf16.msra.mxu0 0
          %1022 = vmatprep.subr.bf16.mxu0 0
          %1023 = vmatpush1.bf16.msra.mxu0 0
          %1024 = vmatprep.subr.bf16.mxu0 0
          %1025 = vmatpush1.bf16.msra.mxu0 %v941
          %1026 = vmatprep.subr.bf16.mxu0 0
          %1027 = vmatpush2.bf16.msra.mxu0 0
          %1028 = vmatprep.subr.bf16.mxu0 0
          %1029 = vmatpush2.bf16.msra.mxu0 0
          %1030 = vmatprep.subr.bf16.mxu0 0
          %1031 = vmatpush2.bf16.msra.mxu0 0
          %1032 = vmatprep.subr.bf16.mxu0 0
          %1033 = vmatpush2.bf16.msra.mxu0 0
          %1034 = vmatprep.subr.bf16.mxu0 0
          %1035 = vmatpush2.bf16.msra.mxu0 0
          %1036 = vmatprep.subr.bf16.mxu0 0
          %1037 = vmatpush2.bf16.msra.mxu0 0
          %1038 = vmatprep.subr.bf16.mxu0 0
          %1039 = vmatpush2.bf16.msra.mxu0 0
          %1040 = vmatprep.subr.bf16.mxu0 0
          %1041 = vmatpush2.bf16.msra.mxu0 0
          %1042 = vmatprep.mubr.bf16.mxu0 0
          %1043 = vmatmul.mubr.bf16.gmra.mxu0 %v967
          %v1044 = vpop.f32.mrf.mxu0
          %v1045 = vadd.f32 %v1004, %v1044
          %v1046 = vpop.f32.mrf.mxu0
          %v1047 = vpop.f32.mrf.mxu0
          %v1048 = vadd.f32 %v1007, %v1047
          %v1049 = vpop.f32.mrf.mxu0
          %1050 = vdwg.mxu0
          %v1053 = vunpack.c.l.b16 %v320
          %v1054 = vunpack.c.l.b16 %v321
          %v1055 = vpack.c.b16 %v1054, %v1053
          %v1057 = vsel %vm409, %v1055, 0
          %1059 = vmatprep.subr.bf16.mxu0 0
          %1060 = vmatpush1.bf16.msra.mxu0 0
          %1061 = vmatprep.subr.bf16.mxu0 0
          %1062 = vmatpush1.bf16.msra.mxu0 0
          %1063 = vmatprep.subr.bf16.mxu0 0
          %1064 = vmatpush1.bf16.msra.mxu0 0
          %1065 = vmatprep.subr.bf16.mxu0 0
          %1066 = vmatpush1.bf16.msra.mxu0 0
          %1067 = vmatprep.subr.bf16.mxu0 0
          %1068 = vmatpush1.bf16.msra.mxu0 0
          %1069 = vmatprep.subr.bf16.mxu0 0
          %1070 = vmatpush1.bf16.msra.mxu0 0
          %1071 = vmatprep.subr.bf16.mxu0 0
          %1072 = vmatpush1.bf16.msra.mxu0 0
          %1073 = vmatprep.subr.bf16.mxu0 0
          %1074 = vmatpush1.bf16.msra.mxu0 %v941
          %1075 = vmatprep.subr.bf16.mxu0 0
          %1076 = vmatpush2.bf16.msra.mxu0 0
          %1077 = vmatprep.subr.bf16.mxu0 0
          %1078 = vmatpush2.bf16.msra.mxu0 0
          %1079 = vmatprep.subr.bf16.mxu0 0
          %1080 = vmatpush2.bf16.msra.mxu0 0
          %1081 = vmatprep.subr.bf16.mxu0 0
          %1082 = vmatpush2.bf16.msra.mxu0 0
          %1083 = vmatprep.subr.bf16.mxu0 0
          %1084 = vmatpush2.bf16.msra.mxu0 0
          %1085 = vmatprep.subr.bf16.mxu0 0
          %1086 = vmatpush2.bf16.msra.mxu0 0
          %1087 = vmatprep.subr.bf16.mxu0 0
          %1088 = vmatpush2.bf16.msra.mxu0 0
          %1089 = vmatprep.subr.bf16.mxu0 0
          %1090 = vmatpush2.bf16.msra.mxu0 0
          %1091 = vmatprep.mubr.bf16.mxu0 0
          %1092 = vmatmul.mubr.bf16.gmra.mxu0 %v1057
          %v1093 = vpop.f32.mrf.mxu0
          %v1094 = vadd.f32 0.0, %v1093
          %v1095 = vpop.f32.mrf.mxu0
          %v1096 = vpop.f32.mrf.mxu0
          %v1097 = vadd.f32 0.0, %v1096
          %v1098 = vpop.f32.mrf.mxu0
          %1099 = vdwg.mxu0
          %v1100 = vadd.f32 %v1045, %v1094
          %v1101 = vadd.f32 %v1048, %v1097
          %v1104 = vunpack.c.l.b16 %v323
          %v1105 = vunpack.c.l.b16 %v324
          %v1106 = vpack.c.b16 %v1105, %v1104
          %v1108 = vsel %vm409, %v1106, 0
          %1110 = vmatprep.subr.bf16.mxu0 0
          %1111 = vmatpush1.bf16.msra.mxu0 0
          %1112 = vmatprep.subr.bf16.mxu0 0
          %1113 = vmatpush1.bf16.msra.mxu0 0
          %1114 = vmatprep.subr.bf16.mxu0 0
          %1115 = vmatpush1.bf16.msra.mxu0 0
          %1116 = vmatprep.subr.bf16.mxu0 0
          %1117 = vmatpush1.bf16.msra.mxu0 0
          %1118 = vmatprep.subr.bf16.mxu0 0
          %1119 = vmatpush1.bf16.msra.mxu0 0
          %1120 = vmatprep.subr.bf16.mxu0 0
          %1121 = vmatpush1.bf16.msra.mxu0 0
          %1122 = vmatprep.subr.bf16.mxu0 0
          %1123 = vmatpush1.bf16.msra.mxu0 0
          %1124 = vmatprep.subr.bf16.mxu0 0
          %1125 = vmatpush1.bf16.msra.mxu0 %v952
          %1126 = vmatprep.subr.bf16.mxu0 0
          %1127 = vmatpush2.bf16.msra.mxu0 0
          %1128 = vmatprep.subr.bf16.mxu0 0
          %1129 = vmatpush2.bf16.msra.mxu0 0
          %1130 = vmatprep.subr.bf16.mxu0 0
          %1131 = vmatpush2.bf16.msra.mxu0 0
          %1132 = vmatprep.subr.bf16.mxu0 0
          %1133 = vmatpush2.bf16.msra.mxu0 0
          %1134 = vmatprep.subr.bf16.mxu0 0
          %1135 = vmatpush2.bf16.msra.mxu0 0
          %1136 = vmatprep.subr.bf16.mxu0 0
          %1137 = vmatpush2.bf16.msra.mxu0 0
          %1138 = vmatprep.subr.bf16.mxu0 0
          %1139 = vmatpush2.bf16.msra.mxu0 0
          %1140 = vmatprep.subr.bf16.mxu0 0
          %1141 = vmatpush2.bf16.msra.mxu0 0
          %1142 = vmatprep.mubr.bf16.mxu0 0
          %1143 = vmatmul.mubr.bf16.gmra.mxu0 %v1108
          %v1144 = vpop.f32.mrf.mxu0
          %v1145 = vadd.f32 0.0, %v1144
          %v1146 = vpop.f32.mrf.mxu0
          %v1147 = vpop.f32.mrf.mxu0
          %v1148 = vadd.f32 0.0, %v1147
          %v1149 = vpop.f32.mrf.mxu0
          %1150 = vdwg.mxu0
          %1151 = vmatprep.subr.bf16.mxu0 0
          %1152 = vmatpush1.bf16.msra.mxu0 0
          %1153 = vmatprep.subr.bf16.mxu0 0
          %1154 = vmatpush1.bf16.msra.mxu0 0
          %1155 = vmatprep.subr.bf16.mxu0 0
          %1156 = vmatpush1.bf16.msra.mxu0 0
          %1157 = vmatprep.subr.bf16.mxu0 0
          %1158 = vmatpush1.bf16.msra.mxu0 0
          %1159 = vmatprep.subr.bf16.mxu0 0
          %1160 = vmatpush1.bf16.msra.mxu0 0
          %1161 = vmatprep.subr.bf16.mxu0 0
          %1162 = vmatpush1.bf16.msra.mxu0 0
          %1163 = vmatprep.subr.bf16.mxu0 0
          %1164 = vmatpush1.bf16.msra.mxu0 0
          %1165 = vmatprep.subr.bf16.mxu0 0
          %1166 = vmatpush1.bf16.msra.mxu0 %v947
          %1167 = vmatprep.subr.bf16.mxu0 0
          %1168 = vmatpush2.bf16.msra.mxu0 0
          %1169 = vmatprep.subr.bf16.mxu0 0
          %1170 = vmatpush2.bf16.msra.mxu0 0
          %1171 = vmatprep.subr.bf16.mxu0 0
          %1172 = vmatpush2.bf16.msra.mxu0 0
          %1173 = vmatprep.subr.bf16.mxu0 0
          %1174 = vmatpush2.bf16.msra.mxu0 0
          %1175 = vmatprep.subr.bf16.mxu0 0
          %1176 = vmatpush2.bf16.msra.mxu0 0
          %1177 = vmatprep.subr.bf16.mxu0 0
          %1178 = vmatpush2.bf16.msra.mxu0 0
          %1179 = vmatprep.subr.bf16.mxu0 0
          %1180 = vmatpush2.bf16.msra.mxu0 0
          %1181 = vmatprep.subr.bf16.mxu0 0
          %1182 = vmatpush2.bf16.msra.mxu0 0
          %1183 = vmatprep.mubr.bf16.mxu0 0
          %1184 = vmatmul.mubr.bf16.gmra.mxu0 %v1108
          %v1185 = vpop.f32.mrf.mxu0
          %v1186 = vadd.f32 %v1145, %v1185
          %v1187 = vpop.f32.mrf.mxu0
          %v1188 = vpop.f32.mrf.mxu0
          %v1189 = vadd.f32 %v1148, %v1188
          %v1190 = vpop.f32.mrf.mxu0
          %1191 = vdwg.mxu0
          %v1194 = vunpack.c.l.b16 %v326
          %v1195 = vunpack.c.l.b16 %v327
          %v1196 = vpack.c.b16 %v1195, %v1194
          %v1198 = vsel %vm409, %v1196, 0
          %1200 = vmatprep.subr.bf16.mxu0 0
          %1201 = vmatpush1.bf16.msra.mxu0 0
          %1202 = vmatprep.subr.bf16.mxu0 0
          %1203 = vmatpush1.bf16.msra.mxu0 0
          %1204 = vmatprep.subr.bf16.mxu0 0
          %1205 = vmatpush1.bf16.msra.mxu0 0
          %1206 = vmatprep.subr.bf16.mxu0 0
          %1207 = vmatpush1.bf16.msra.mxu0 0
          %1208 = vmatprep.subr.bf16.mxu0 0
          %1209 = vmatpush1.bf16.msra.mxu0 0
          %1210 = vmatprep.subr.bf16.mxu0 0
          %1211 = vmatpush1.bf16.msra.mxu0 0
          %1212 = vmatprep.subr.bf16.mxu0 0
          %1213 = vmatpush1.bf16.msra.mxu0 0
          %1214 = vmatprep.subr.bf16.mxu0 0
          %1215 = vmatpush1.bf16.msra.mxu0 %v947
          %1216 = vmatprep.subr.bf16.mxu0 0
          %1217 = vmatpush2.bf16.msra.mxu0 0
          %1218 = vmatprep.subr.bf16.mxu0 0
          %1219 = vmatpush2.bf16.msra.mxu0 0
          %1220 = vmatprep.subr.bf16.mxu0 0
          %1221 = vmatpush2.bf16.msra.mxu0 0
          %1222 = vmatprep.subr.bf16.mxu0 0
          %1223 = vmatpush2.bf16.msra.mxu0 0
          %1224 = vmatprep.subr.bf16.mxu0 0
          %1225 = vmatpush2.bf16.msra.mxu0 0
          %1226 = vmatprep.subr.bf16.mxu0 0
          %1227 = vmatpush2.bf16.msra.mxu0 0
          %1228 = vmatprep.subr.bf16.mxu0 0
          %1229 = vmatpush2.bf16.msra.mxu0 0
          %1230 = vmatprep.subr.bf16.mxu0 0
          %1231 = vmatpush2.bf16.msra.mxu0 0
          %1232 = vmatprep.mubr.bf16.mxu0 0
          %1233 = vmatmul.mubr.bf16.gmra.mxu0 %v1198
          %v1234 = vpop.f32.mrf.mxu0
          %v1235 = vadd.f32 0.0, %v1234
          %v1236 = vpop.f32.mrf.mxu0
          %v1237 = vpop.f32.mrf.mxu0
          %v1238 = vadd.f32 0.0, %v1237
          %v1239 = vpop.f32.mrf.mxu0
          %1240 = vdwg.mxu0
          %v1241 = vadd.f32 %v1186, %v1235
          %v1242 = vadd.f32 %v1189, %v1238
          %v1245 = vunpack.c.l.b16 %v329
          %v1246 = vunpack.c.l.b16 %v330
          %v1247 = vpack.c.b16 %v1246, %v1245
          %v1249 = vsel %vm409, %v1247, 0
          %1251 = vmatprep.subr.bf16.mxu0 0
          %1252 = vmatpush1.bf16.msra.mxu0 0
          %1253 = vmatprep.subr.bf16.mxu0 0
          %1254 = vmatpush1.bf16.msra.mxu0 0
          %1255 = vmatprep.subr.bf16.mxu0 0
          %1256 = vmatpush1.bf16.msra.mxu0 0
          %1257 = vmatprep.subr.bf16.mxu0 0
          %1258 = vmatpush1.bf16.msra.mxu0 0
          %1259 = vmatprep.subr.bf16.mxu0 0
          %1260 = vmatpush1.bf16.msra.mxu0 0
          %1261 = vmatprep.subr.bf16.mxu0 0
          %1262 = vmatpush1.bf16.msra.mxu0 0
          %1263 = vmatprep.subr.bf16.mxu0 0
          %1264 = vmatpush1.bf16.msra.mxu0 0
          %1265 = vmatprep.subr.bf16.mxu0 0
          %1266 = vmatpush1.bf16.msra.mxu0 %v960
          %1267 = vmatprep.subr.bf16.mxu0 0
          %1268 = vmatpush2.bf16.msra.mxu0 0
          %1269 = vmatprep.subr.bf16.mxu0 0
          %1270 = vmatpush2.bf16.msra.mxu0 0
          %1271 = vmatprep.subr.bf16.mxu0 0
          %1272 = vmatpush2.bf16.msra.mxu0 0
          %1273 = vmatprep.subr.bf16.mxu0 0
          %1274 = vmatpush2.bf16.msra.mxu0 0
          %1275 = vmatprep.subr.bf16.mxu0 0
          %1276 = vmatpush2.bf16.msra.mxu0 0
          %1277 = vmatprep.subr.bf16.mxu0 0
          %1278 = vmatpush2.bf16.msra.mxu0 0
          %1279 = vmatprep.subr.bf16.mxu0 0
          %1280 = vmatpush2.bf16.msra.mxu0 0
          %1281 = vmatprep.subr.bf16.mxu0 0
          %1282 = vmatpush2.bf16.msra.mxu0 0
          %1283 = vmatprep.mubr.bf16.mxu0 0
          %1284 = vmatmul.mubr.bf16.gmra.mxu0 %v1249
          %v1285 = vpop.f32.mrf.mxu0
          %v1286 = vadd.f32 0.0, %v1285
          %v1287 = vpop.f32.mrf.mxu0
          %v1288 = vpop.f32.mrf.mxu0
          %v1289 = vadd.f32 0.0, %v1288
          %v1290 = vpop.f32.mrf.mxu0
          %1291 = vdwg.mxu0
          %1292 = vmatprep.subr.bf16.mxu0 0
          %1293 = vmatpush1.bf16.msra.mxu0 0
          %1294 = vmatprep.subr.bf16.mxu0 0
          %1295 = vmatpush1.bf16.msra.mxu0 0
          %1296 = vmatprep.subr.bf16.mxu0 0
          %1297 = vmatpush1.bf16.msra.mxu0 0
          %1298 = vmatprep.subr.bf16.mxu0 0
          %1299 = vmatpush1.bf16.msra.mxu0 0
          %1300 = vmatprep.subr.bf16.mxu0 0
          %1301 = vmatpush1.bf16.msra.mxu0 0
          %1302 = vmatprep.subr.bf16.mxu0 0
          %1303 = vmatpush1.bf16.msra.mxu0 0
          %1304 = vmatprep.subr.bf16.mxu0 0
          %1305 = vmatpush1.bf16.msra.mxu0 0
          %1306 = vmatprep.subr.bf16.mxu0 0
          %1307 = vmatpush1.bf16.msra.mxu0 %v955
          %1308 = vmatprep.subr.bf16.mxu0 0
          %1309 = vmatpush2.bf16.msra.mxu0 0
          %1310 = vmatprep.subr.bf16.mxu0 0
          %1311 = vmatpush2.bf16.msra.mxu0 0
          %1312 = vmatprep.subr.bf16.mxu0 0
          %1313 = vmatpush2.bf16.msra.mxu0 0
          %1314 = vmatprep.subr.bf16.mxu0 0
          %1315 = vmatpush2.bf16.msra.mxu0 0
          %1316 = vmatprep.subr.bf16.mxu0 0
          %1317 = vmatpush2.bf16.msra.mxu0 0
          %1318 = vmatprep.subr.bf16.mxu0 0
          %1319 = vmatpush2.bf16.msra.mxu0 0
          %1320 = vmatprep.subr.bf16.mxu0 0
          %1321 = vmatpush2.bf16.msra.mxu0 0
          %1322 = vmatprep.subr.bf16.mxu0 0
          %1323 = vmatpush2.bf16.msra.mxu0 0
          %1324 = vmatprep.mubr.bf16.mxu0 0
          %1325 = vmatmul.mubr.bf16.gmra.mxu0 %v1249
          %v1326 = vpop.f32.mrf.mxu0
          %v1327 = vadd.f32 %v1286, %v1326
          %v1328 = vpop.f32.mrf.mxu0
          %v1329 = vpop.f32.mrf.mxu0
          %v1330 = vadd.f32 %v1289, %v1329
          %v1331 = vpop.f32.mrf.mxu0
          %1332 = vdwg.mxu0
          %v1335 = vunpack.c.l.b16 %v332
          %v1336 = vunpack.c.l.b16 %v333
          %v1337 = vpack.c.b16 %v1336, %v1335
          %v1339 = vsel %vm409, %v1337, 0
          %1341 = vmatprep.subr.bf16.mxu0 0
          %1342 = vmatpush1.bf16.msra.mxu0 0
          %1343 = vmatprep.subr.bf16.mxu0 0
          %1344 = vmatpush1.bf16.msra.mxu0 0
          %1345 = vmatprep.subr.bf16.mxu0 0
          %1346 = vmatpush1.bf16.msra.mxu0 0
          %1347 = vmatprep.subr.bf16.mxu0 0
          %1348 = vmatpush1.bf16.msra.mxu0 0
          %1349 = vmatprep.subr.bf16.mxu0 0
          %1350 = vmatpush1.bf16.msra.mxu0 0
          %1351 = vmatprep.subr.bf16.mxu0 0
          %1352 = vmatpush1.bf16.msra.mxu0 0
          %1353 = vmatprep.subr.bf16.mxu0 0
          %1354 = vmatpush1.bf16.msra.mxu0 0
          %1355 = vmatprep.subr.bf16.mxu0 0
          %1356 = vmatpush1.bf16.msra.mxu0 %v955
          %1357 = vmatprep.subr.bf16.mxu0 0
          %1358 = vmatpush2.bf16.msra.mxu0 0
          %1359 = vmatprep.subr.bf16.mxu0 0
          %1360 = vmatpush2.bf16.msra.mxu0 0
          %1361 = vmatprep.subr.bf16.mxu0 0
          %1362 = vmatpush2.bf16.msra.mxu0 0
          %1363 = vmatprep.subr.bf16.mxu0 0
          %1364 = vmatpush2.bf16.msra.mxu0 0
          %1365 = vmatprep.subr.bf16.mxu0 0
          %1366 = vmatpush2.bf16.msra.mxu0 0
          %1367 = vmatprep.subr.bf16.mxu0 0
          %1368 = vmatpush2.bf16.msra.mxu0 0
          %1369 = vmatprep.subr.bf16.mxu0 0
          %1370 = vmatpush2.bf16.msra.mxu0 0
          %1371 = vmatprep.subr.bf16.mxu0 0
          %1372 = vmatpush2.bf16.msra.mxu0 0
          %1373 = vmatprep.mubr.bf16.mxu0 0
          %1374 = vmatmul.mubr.bf16.gmra.mxu0 %v1339
          %v1375 = vpop.f32.mrf.mxu0
          %v1376 = vadd.f32 0.0, %v1375
          %v1377 = vpop.f32.mrf.mxu0
          %v1378 = vpop.f32.mrf.mxu0
          %v1379 = vadd.f32 0.0, %v1378
          %v1380 = vpop.f32.mrf.mxu0
          %1381 = vdwg.mxu0
          %v1382 = vadd.f32 %v1327, %v1376
          %v1383 = vadd.f32 %v1330, %v1379
          %v1384 = vsub.f32 %v1100, %v1241
          %v1385 = vsub.f32 %v1101, %v1242
          %v1386 = vsub.f32 %v1382, %v1100
          %v1387 = vsub.f32 %v1383, %v1101
          %v1388 = vsub.f32 %v1386, %v1241
          %v1389 = vsub.f32 %v1387, %v1242
          %1390 = vst.msk [vmem:[#allocation2] sm:$0xff] %vm409, %v1384
          %1391 = vst.msk [vmem:[#allocation2 + $0x8] sm:$0xff] %vm409, %v1385
          %v1392 = vsub.f32 0.0, %v1388
          %v1393 = vsub.f32 0.0, %v1389
          %1394 = vst.msk [vmem:[#allocation3] sm:$0xff] %vm409, %v1392
          %1395 = vst.msk [vmem:[#allocation3 + $0x8] sm:$0xff] %vm409, %v1393
          %v1396 = vpack.c.bf16 %v932, %v931
          %v1397 = vunpack.c.l.bf16 %v1396
          %v1398 = vunpack.c.h.bf16 %v1396
          %v1399 = vsub.f32 %v931, %v1397
          %v1400 = vsub.f32 %v932, %v1398
          %v1401 = vpack.c.bf16 %v1400, %v1399
          %v1402 = vpack.c.bf16 %v940, %v939
          %v1403 = vunpack.c.l.bf16 %v1402
          %v1404 = vunpack.c.h.bf16 %v1402
          %v1405 = vsub.f32 %v939, %v1403
          %v1406 = vsub.f32 %v940, %v1404
          %v1407 = vpack.c.bf16 %v1406, %v1405
          %v1408 = vadd.f32 %v931, %v939
          %v1409 = vadd.f32 %v932, %v940
          %v1410 = vpack.c.bf16 %v1409, %v1408
          %v1411 = vunpack.c.l.bf16 %v1410
          %v1412 = vunpack.c.h.bf16 %v1410
          %v1413 = vsub.f32 %v1408, %v1411
          %v1414 = vsub.f32 %v1409, %v1412
          %v1415 = vpack.c.bf16 %v1414, %v1413
          %1416 = vmatprep.subr.bf16.mxu0 0
          %1417 = vmatpush1.bf16.msra.mxu0 0
          %1418 = vmatprep.subr.bf16.mxu0 0
          %1419 = vmatpush1.bf16.msra.mxu0 0
          %1420 = vmatprep.subr.bf16.mxu0 0
          %1421 = vmatpush1.bf16.msra.mxu0 0
          %1422 = vmatprep.subr.bf16.mxu0 0
          %1423 = vmatpush1.bf16.msra.mxu0 0
          %1424 = vmatprep.subr.bf16.mxu0 0
          %1425 = vmatpush1.bf16.msra.mxu0 0
          %1426 = vmatprep.subr.bf16.mxu0 0
          %1427 = vmatpush1.bf16.msra.mxu0 0
          %1428 = vmatprep.subr.bf16.mxu0 0
          %1429 = vmatpush1.bf16.msra.mxu0 0
          %1430 = vmatprep.subr.bf16.mxu0 0
          %1431 = vmatpush1.bf16.msra.mxu0 %v1401
          %1432 = vmatprep.subr.bf16.mxu0 0
          %1433 = vmatpush2.bf16.msra.mxu0 0
          %1434 = vmatprep.subr.bf16.mxu0 0
          %1435 = vmatpush2.bf16.msra.mxu0 0
          %1436 = vmatprep.subr.bf16.mxu0 0
          %1437 = vmatpush2.bf16.msra.mxu0 0
          %1438 = vmatprep.subr.bf16.mxu0 0
          %1439 = vmatpush2.bf16.msra.mxu0 0
          %1440 = vmatprep.subr.bf16.mxu0 0
          %1441 = vmatpush2.bf16.msra.mxu0 0
          %1442 = vmatprep.subr.bf16.mxu0 0
          %1443 = vmatpush2.bf16.msra.mxu0 0
          %1444 = vmatprep.subr.bf16.mxu0 0
          %1445 = vmatpush2.bf16.msra.mxu0 0
          %1446 = vmatprep.subr.bf16.mxu0 0
          %1447 = vmatpush2.bf16.msra.mxu0 0
          %1448 = vmatprep.mubr.bf16.mxu0 0
          %1449 = vmatmul.mubr.bf16.gmra.mxu0 %v967
          %v1450 = vpop.f32.mrf.mxu0
          %v1451 = vadd.f32 0.0, %v1450
          %v1452 = vpop.f32.mrf.mxu0
          %v1453 = vpop.f32.mrf.mxu0
          %v1454 = vadd.f32 0.0, %v1453
          %v1455 = vpop.f32.mrf.mxu0
          %1456 = vdwg.mxu0
          %1457 = vmatprep.subr.bf16.mxu0 0
          %1458 = vmatpush1.bf16.msra.mxu0 0
          %1459 = vmatprep.subr.bf16.mxu0 0
          %1460 = vmatpush1.bf16.msra.mxu0 0
          %1461 = vmatprep.subr.bf16.mxu0 0
          %1462 = vmatpush1.bf16.msra.mxu0 0
          %1463 = vmatprep.subr.bf16.mxu0 0
          %1464 = vmatpush1.bf16.msra.mxu0 0
          %1465 = vmatprep.subr.bf16.mxu0 0
          %1466 = vmatpush1.bf16.msra.mxu0 0
          %1467 = vmatprep.subr.bf16.mxu0 0
          %1468 = vmatpush1.bf16.msra.mxu0 0
          %1469 = vmatprep.subr.bf16.mxu0 0
          %1470 = vmatpush1.bf16.msra.mxu0 0
          %1471 = vmatprep.subr.bf16.mxu0 0
          %1472 = vmatpush1.bf16.msra.mxu0 %v1396
          %1473 = vmatprep.subr.bf16.mxu0 0
          %1474 = vmatpush2.bf16.msra.mxu0 0
          %1475 = vmatprep.subr.bf16.mxu0 0
          %1476 = vmatpush2.bf16.msra.mxu0 0
          %1477 = vmatprep.subr.bf16.mxu0 0
          %1478 = vmatpush2.bf16.msra.mxu0 0
          %1479 = vmatprep.subr.bf16.mxu0 0
          %1480 = vmatpush2.bf16.msra.mxu0 0
          %1481 = vmatprep.subr.bf16.mxu0 0
          %1482 = vmatpush2.bf16.msra.mxu0 0
          %1483 = vmatprep.subr.bf16.mxu0 0
          %1484 = vmatpush2.bf16.msra.mxu0 0
          %1485 = vmatprep.subr.bf16.mxu0 0
          %1486 = vmatpush2.bf16.msra.mxu0 0
          %1487 = vmatprep.subr.bf16.mxu0 0
          %1488 = vmatpush2.bf16.msra.mxu0 0
          %1489 = vmatprep.mubr.bf16.mxu0 0
          %1490 = vmatmul.mubr.bf16.gmra.mxu0 %v967
          %v1491 = vpop.f32.mrf.mxu0
          %v1492 = vadd.f32 %v1451, %v1491
          %v1493 = vpop.f32.mrf.mxu0
          %v1494 = vpop.f32.mrf.mxu0
          %v1495 = vadd.f32 %v1454, %v1494
          %v1496 = vpop.f32.mrf.mxu0
          %1497 = vdwg.mxu0
          %1498 = vmatprep.subr.bf16.mxu0 0
          %1499 = vmatpush1.bf16.msra.mxu0 0
          %1500 = vmatprep.subr.bf16.mxu0 0
          %1501 = vmatpush1.bf16.msra.mxu0 0
          %1502 = vmatprep.subr.bf16.mxu0 0
          %1503 = vmatpush1.bf16.msra.mxu0 0
          %1504 = vmatprep.subr.bf16.mxu0 0
          %1505 = vmatpush1.bf16.msra.mxu0 0
          %1506 = vmatprep.subr.bf16.mxu0 0
          %1507 = vmatpush1.bf16.msra.mxu0 0
          %1508 = vmatprep.subr.bf16.mxu0 0
          %1509 = vmatpush1.bf16.msra.mxu0 0
          %1510 = vmatprep.subr.bf16.mxu0 0
          %1511 = vmatpush1.bf16.msra.mxu0 0
          %1512 = vmatprep.subr.bf16.mxu0 0
          %1513 = vmatpush1.bf16.msra.mxu0 %v1396
          %1514 = vmatprep.subr.bf16.mxu0 0
          %1515 = vmatpush2.bf16.msra.mxu0 0
          %1516 = vmatprep.subr.bf16.mxu0 0
          %1517 = vmatpush2.bf16.msra.mxu0 0
          %1518 = vmatprep.subr.bf16.mxu0 0
          %1519 = vmatpush2.bf16.msra.mxu0 0
          %1520 = vmatprep.subr.bf16.mxu0 0
          %1521 = vmatpush2.bf16.msra.mxu0 0
          %1522 = vmatprep.subr.bf16.mxu0 0
          %1523 = vmatpush2.bf16.msra.mxu0 0
          %1524 = vmatprep.subr.bf16.mxu0 0
          %1525 = vmatpush2.bf16.msra.mxu0 0
          %1526 = vmatprep.subr.bf16.mxu0 0
          %1527 = vmatpush2.bf16.msra.mxu0 0
          %1528 = vmatprep.subr.bf16.mxu0 0
          %1529 = vmatpush2.bf16.msra.mxu0 0
          %1530 = vmatprep.mubr.bf16.mxu0 0
          %1531 = vmatmul.mubr.bf16.gmra.mxu0 %v1057
          %v1532 = vpop.f32.mrf.mxu0
          %v1533 = vadd.f32 0.0, %v1532
          %v1534 = vpop.f32.mrf.mxu0
          %v1535 = vpop.f32.mrf.mxu0
          %v1536 = vadd.f32 0.0, %v1535
          %v1537 = vpop.f32.mrf.mxu0
          %1538 = vdwg.mxu0
          %v1539 = vadd.f32 %v1492, %v1533
          %v1540 = vadd.f32 %v1495, %v1536
          %1541 = vmatprep.subr.bf16.mxu0 0
          %1542 = vmatpush1.bf16.msra.mxu0 0
          %1543 = vmatprep.subr.bf16.mxu0 0
          %1544 = vmatpush1.bf16.msra.mxu0 0
          %1545 = vmatprep.subr.bf16.mxu0 0
          %1546 = vmatpush1.bf16.msra.mxu0 0
          %1547 = vmatprep.subr.bf16.mxu0 0
          %1548 = vmatpush1.bf16.msra.mxu0 0
          %1549 = vmatprep.subr.bf16.mxu0 0
          %1550 = vmatpush1.bf16.msra.mxu0 0
          %1551 = vmatprep.subr.bf16.mxu0 0
          %1552 = vmatpush1.bf16.msra.mxu0 0
          %1553 = vmatprep.subr.bf16.mxu0 0
          %1554 = vmatpush1.bf16.msra.mxu0 0
          %1555 = vmatprep.subr.bf16.mxu0 0
          %1556 = vmatpush1.bf16.msra.mxu0 %v1407
          %1557 = vmatprep.subr.bf16.mxu0 0
          %1558 = vmatpush2.bf16.msra.mxu0 0
          %1559 = vmatprep.subr.bf16.mxu0 0
          %1560 = vmatpush2.bf16.msra.mxu0 0
          %1561 = vmatprep.subr.bf16.mxu0 0
          %1562 = vmatpush2.bf16.msra.mxu0 0
          %1563 = vmatprep.subr.bf16.mxu0 0
          %1564 = vmatpush2.bf16.msra.mxu0 0
          %1565 = vmatprep.subr.bf16.mxu0 0
          %1566 = vmatpush2.bf16.msra.mxu0 0
          %1567 = vmatprep.subr.bf16.mxu0 0
          %1568 = vmatpush2.bf16.msra.mxu0 0
          %1569 = vmatprep.subr.bf16.mxu0 0
          %1570 = vmatpush2.bf16.msra.mxu0 0
          %1571 = vmatprep.subr.bf16.mxu0 0
          %1572 = vmatpush2.bf16.msra.mxu0 0
          %1573 = vmatprep.mubr.bf16.mxu0 0
          %1574 = vmatmul.mubr.bf16.gmra.mxu0 %v1108
          %v1575 = vpop.f32.mrf.mxu0
          %v1576 = vadd.f32 0.0, %v1575
          %v1577 = vpop.f32.mrf.mxu0
          %v1578 = vpop.f32.mrf.mxu0
          %v1579 = vadd.f32 0.0, %v1578
          %v1580 = vpop.f32.mrf.mxu0
          %1581 = vdwg.mxu0
          %1582 = vmatprep.subr.bf16.mxu0 0
          %1583 = vmatpush1.bf16.msra.mxu0 0
          %1584 = vmatprep.subr.bf16.mxu0 0
          %1585 = vmatpush1.bf16.msra.mxu0 0
          %1586 = vmatprep.subr.bf16.mxu0 0
          %1587 = vmatpush1.bf16.msra.mxu0 0
          %1588 = vmatprep.subr.bf16.mxu0 0
          %1589 = vmatpush1.bf16.msra.mxu0 0
          %1590 = vmatprep.subr.bf16.mxu0 0
          %1591 = vmatpush1.bf16.msra.mxu0 0
          %1592 = vmatprep.subr.bf16.mxu0 0
          %1593 = vmatpush1.bf16.msra.mxu0 0
          %1594 = vmatprep.subr.bf16.mxu0 0
          %1595 = vmatpush1.bf16.msra.mxu0 0
          %1596 = vmatprep.subr.bf16.mxu0 0
          %1597 = vmatpush1.bf16.msra.mxu0 %v1402
          %1598 = vmatprep.subr.bf16.mxu0 0
          %1599 = vmatpush2.bf16.msra.mxu0 0
          %1600 = vmatprep.subr.bf16.mxu0 0
          %1601 = vmatpush2.bf16.msra.mxu0 0
          %1602 = vmatprep.subr.bf16.mxu0 0
          %1603 = vmatpush2.bf16.msra.mxu0 0
          %1604 = vmatprep.subr.bf16.mxu0 0
          %1605 = vmatpush2.bf16.msra.mxu0 0
          %1606 = vmatprep.subr.bf16.mxu0 0
          %1607 = vmatpush2.bf16.msra.mxu0 0
          %1608 = vmatprep.subr.bf16.mxu0 0
          %1609 = vmatpush2.bf16.msra.mxu0 0
          %1610 = vmatprep.subr.bf16.mxu0 0
          %1611 = vmatpush2.bf16.msra.mxu0 0
          %1612 = vmatprep.subr.bf16.mxu0 0
          %1613 = vmatpush2.bf16.msra.mxu0 0
          %1614 = vmatprep.mubr.bf16.mxu0 0
          %1615 = vmatmul.mubr.bf16.gmra.mxu0 %v1108
          %v1616 = vpop.f32.mrf.mxu0
          %v1617 = vadd.f32 %v1576, %v1616
          %v1618 = vpop.f32.mrf.mxu0
          %v1619 = vpop.f32.mrf.mxu0
          %v1620 = vadd.f32 %v1579, %v1619
          %v1621 = vpop.f32.mrf.mxu0
          %1622 = vdwg.mxu0
          %1623 = vmatprep.subr.bf16.mxu0 0
          %1624 = vmatpush1.bf16.msra.mxu0 0
          %1625 = vmatprep.subr.bf16.mxu0 0
          %1626 = vmatpush1.bf16.msra.mxu0 0
          %1627 = vmatprep.subr.bf16.mxu0 0
          %1628 = vmatpush1.bf16.msra.mxu0 0
          %1629 = vmatprep.subr.bf16.mxu0 0
          %1630 = vmatpush1.bf16.msra.mxu0 0
          %1631 = vmatprep.subr.bf16.mxu0 0
          %1632 = vmatpush1.bf16.msra.mxu0 0
          %1633 = vmatprep.subr.bf16.mxu0 0
          %1634 = vmatpush1.bf16.msra.mxu0 0
          %1635 = vmatprep.subr.bf16.mxu0 0
          %1636 = vmatpush1.bf16.msra.mxu0 0
          %1637 = vmatprep.subr.bf16.mxu0 0
          %1638 = vmatpush1.bf16.msra.mxu0 %v1402
          %1639 = vmatprep.subr.bf16.mxu0 0
          %1640 = vmatpush2.bf16.msra.mxu0 0
          %1641 = vmatprep.subr.bf16.mxu0 0
          %1642 = vmatpush2.bf16.msra.mxu0 0
          %1643 = vmatprep.subr.bf16.mxu0 0
          %1644 = vmatpush2.bf16.msra.mxu0 0
          %1645 = vmatprep.subr.bf16.mxu0 0
          %1646 = vmatpush2.bf16.msra.mxu0 0
          %1647 = vmatprep.subr.bf16.mxu0 0
          %1648 = vmatpush2.bf16.msra.mxu0 0
          %1649 = vmatprep.subr.bf16.mxu0 0
          %1650 = vmatpush2.bf16.msra.mxu0 0
          %1651 = vmatprep.subr.bf16.mxu0 0
          %1652 = vmatpush2.bf16.msra.mxu0 0
          %1653 = vmatprep.subr.bf16.mxu0 0
          %1654 = vmatpush2.bf16.msra.mxu0 0
          %1655 = vmatprep.mubr.bf16.mxu0 0
          %1656 = vmatmul.mubr.bf16.gmra.mxu0 %v1198
          %v1657 = vpop.f32.mrf.mxu0
          %v1658 = vadd.f32 0.0, %v1657
          %v1659 = vpop.f32.mrf.mxu0
          %v1660 = vpop.f32.mrf.mxu0
          %v1661 = vadd.f32 0.0, %v1660
          %v1662 = vpop.f32.mrf.mxu0
          %1663 = vdwg.mxu0
          %v1664 = vadd.f32 %v1617, %v1658
          %v1665 = vadd.f32 %v1620, %v1661
          %1666 = vmatprep.subr.bf16.mxu0 0
          %1667 = vmatpush1.bf16.msra.mxu0 0
          %1668 = vmatprep.subr.bf16.mxu0 0
          %1669 = vmatpush1.bf16.msra.mxu0 0
          %1670 = vmatprep.subr.bf16.mxu0 0
          %1671 = vmatpush1.bf16.msra.mxu0 0
          %1672 = vmatprep.subr.bf16.mxu0 0
          %1673 = vmatpush1.bf16.msra.mxu0 0
          %1674 = vmatprep.subr.bf16.mxu0 0
          %1675 = vmatpush1.bf16.msra.mxu0 0
          %1676 = vmatprep.subr.bf16.mxu0 0
          %1677 = vmatpush1.bf16.msra.mxu0 0
          %1678 = vmatprep.subr.bf16.mxu0 0
          %1679 = vmatpush1.bf16.msra.mxu0 0
          %1680 = vmatprep.subr.bf16.mxu0 0
          %1681 = vmatpush1.bf16.msra.mxu0 %v1415
          %1682 = vmatprep.subr.bf16.mxu0 0
          %1683 = vmatpush2.bf16.msra.mxu0 0
          %1684 = vmatprep.subr.bf16.mxu0 0
          %1685 = vmatpush2.bf16.msra.mxu0 0
          %1686 = vmatprep.subr.bf16.mxu0 0
          %1687 = vmatpush2.bf16.msra.mxu0 0
          %1688 = vmatprep.subr.bf16.mxu0 0
          %1689 = vmatpush2.bf16.msra.mxu0 0
          %1690 = vmatprep.subr.bf16.mxu0 0
          %1691 = vmatpush2.bf16.msra.mxu0 0
          %1692 = vmatprep.subr.bf16.mxu0 0
          %1693 = vmatpush2.bf16.msra.mxu0 0
          %1694 = vmatprep.subr.bf16.mxu0 0
          %1695 = vmatpush2.bf16.msra.mxu0 0
          %1696 = vmatprep.subr.bf16.mxu0 0
          %1697 = vmatpush2.bf16.msra.mxu0 0
          %1698 = vmatprep.mubr.bf16.mxu0 0
          %1699 = vmatmul.mubr.bf16.gmra.mxu0 %v1249
          %v1700 = vpop.f32.mrf.mxu0
          %v1701 = vadd.f32 0.0, %v1700
          %v1702 = vpop.f32.mrf.mxu0
          %v1703 = vpop.f32.mrf.mxu0
          %v1704 = vadd.f32 0.0, %v1703
          %v1705 = vpop.f32.mrf.mxu0
          %1706 = vdwg.mxu0
          %1707 = vmatprep.subr.bf16.mxu0 0
          %1708 = vmatpush1.bf16.msra.mxu0 0
          %1709 = vmatprep.subr.bf16.mxu0 0
          %1710 = vmatpush1.bf16.msra.mxu0 0
          %1711 = vmatprep.subr.bf16.mxu0 0
          %1712 = vmatpush1.bf16.msra.mxu0 0
          %1713 = vmatprep.subr.bf16.mxu0 0
          %1714 = vmatpush1.bf16.msra.mxu0 0
          %1715 = vmatprep.subr.bf16.mxu0 0
          %1716 = vmatpush1.bf16.msra.mxu0 0
          %1717 = vmatprep.subr.bf16.mxu0 0
          %1718 = vmatpush1.bf16.msra.mxu0 0
          %1719 = vmatprep.subr.bf16.mxu0 0
          %1720 = vmatpush1.bf16.msra.mxu0 0
          %1721 = vmatprep.subr.bf16.mxu0 0
          %1722 = vmatpush1.bf16.msra.mxu0 %v1410
          %1723 = vmatprep.subr.bf16.mxu0 0
          %1724 = vmatpush2.bf16.msra.mxu0 0
          %1725 = vmatprep.subr.bf16.mxu0 0
          %1726 = vmatpush2.bf16.msra.mxu0 0
          %1727 = vmatprep.subr.bf16.mxu0 0
          %1728 = vmatpush2.bf16.msra.mxu0 0
          %1729 = vmatprep.subr.bf16.mxu0 0
          %1730 = vmatpush2.bf16.msra.mxu0 0
          %1731 = vmatprep.subr.bf16.mxu0 0
          %1732 = vmatpush2.bf16.msra.mxu0 0
          %1733 = vmatprep.subr.bf16.mxu0 0
          %1734 = vmatpush2.bf16.msra.mxu0 0
          %1735 = vmatprep.subr.bf16.mxu0 0
          %1736 = vmatpush2.bf16.msra.mxu0 0
          %1737 = vmatprep.subr.bf16.mxu0 0
          %1738 = vmatpush2.bf16.msra.mxu0 0
          %1739 = vmatprep.mubr.bf16.mxu0 0
          %1740 = vmatmul.mubr.bf16.gmra.mxu0 %v1249
          %v1741 = vpop.f32.mrf.mxu0
          %v1742 = vadd.f32 %v1701, %v1741
          %v1743 = vpop.f32.mrf.mxu0
          %v1744 = vpop.f32.mrf.mxu0
          %v1745 = vadd.f32 %v1704, %v1744
          %v1746 = vpop.f32.mrf.mxu0
          %1747 = vdwg.mxu0
          %1748 = vmatprep.subr.bf16.mxu0 0
          %1749 = vmatpush1.bf16.msra.mxu0 0
          %1750 = vmatprep.subr.bf16.mxu0 0
          %1751 = vmatpush1.bf16.msra.mxu0 0
          %1752 = vmatprep.subr.bf16.mxu0 0
          %1753 = vmatpush1.bf16.msra.mxu0 0
          %1754 = vmatprep.subr.bf16.mxu0 0
          %1755 = vmatpush1.bf16.msra.mxu0 0
          %1756 = vmatprep.subr.bf16.mxu0 0
          %1757 = vmatpush1.bf16.msra.mxu0 0
          %1758 = vmatprep.subr.bf16.mxu0 0
          %1759 = vmatpush1.bf16.msra.mxu0 0
          %1760 = vmatprep.subr.bf16.mxu0 0
          %1761 = vmatpush1.bf16.msra.mxu0 0
          %1762 = vmatprep.subr.bf16.mxu0 0
          %1763 = vmatpush1.bf16.msra.mxu0 %v1410
          %1764 = vmatprep.subr.bf16.mxu0 0
          %1765 = vmatpush2.bf16.msra.mxu0 0
          %1766 = vmatprep.subr.bf16.mxu0 0
          %1767 = vmatpush2.bf16.msra.mxu0 0
          %1768 = vmatprep.subr.bf16.mxu0 0
          %1769 = vmatpush2.bf16.msra.mxu0 0
          %1770 = vmatprep.subr.bf16.mxu0 0
          %1771 = vmatpush2.bf16.msra.mxu0 0
          %1772 = vmatprep.subr.bf16.mxu0 0
          %1773 = vmatpush2.bf16.msra.mxu0 0
          %1774 = vmatprep.subr.bf16.mxu0 0
          %1775 = vmatpush2.bf16.msra.mxu0 0
          %1776 = vmatprep.subr.bf16.mxu0 0
          %1777 = vmatpush2.bf16.msra.mxu0 0
          %1778 = vmatprep.subr.bf16.mxu0 0
          %1779 = vmatpush2.bf16.msra.mxu0 0
          %1780 = vmatprep.mubr.bf16.mxu0 0
          %1781 = vmatmul.mubr.bf16.gmra.mxu0 %v1339
          %v1782 = vpop.f32.mrf.mxu0
          %v1783 = vadd.f32 0.0, %v1782
          %v1784 = vpop.f32.mrf.mxu0
          %v1785 = vpop.f32.mrf.mxu0
          %v1786 = vadd.f32 0.0, %v1785
          %v1787 = vpop.f32.mrf.mxu0
          %1788 = vdwg.mxu0
          %v1789 = vadd.f32 %v1742, %v1783
          %v1790 = vadd.f32 %v1745, %v1786
          %v1791 = vsub.f32 %v1539, %v1664
          %v1792 = vsub.f32 %v1540, %v1665
          %v1793 = vsub.f32 %v1789, %v1539
          %v1794 = vsub.f32 %v1790, %v1540
          %v1795 = vsub.f32 %v1793, %v1664
          %v1796 = vsub.f32 %v1794, %v1665
          %s1797 = scalar_lea.vmem [#allocation2], 16
          %1798 = vst.msk [vmem:[%s1797] sm:$0xff] %vm409, %v1791
          %1799 = vst.msk [vmem:[%s1797 + $0x8] sm:$0xff] %vm409, %v1792
          %v1800 = vsub.f32 0.0, %v1795
          %v1801 = vsub.f32 0.0, %v1796
          %s1802 = scalar_lea.vmem [#allocation3], 16
          %1803 = vst.msk [vmem:[%s1802] sm:$0xff] %vm409, %v1800
          %1804 = vst.msk [vmem:[%s1802 + $0x8] sm:$0xff] %vm409, %v1801
        $region64: #{tpu_custom_call.1} parent=39 // pred_fallthru
          _
        %s1805 = sld [smem:[#allocation5 + %s32]]
        %v1806 = vld [vmem:[#allocation14] sm:$0xff]
        %v1807 = vld [vmem:[#allocation14 + $0x8] sm:$0xff]
        %v1808 = vstv %s1805
        %v1809 = vmul.f32 %v1808, %v1806
        %v1810 = vmul.f32 %v1808, %v1807
        %v1811 = vand.u32 2147483647, %v1809
        %vm1812 = vcmp.le.f32.partialorder %v1811, 0.7853982
        %vm1813 = vcmp.lt.s32.totalorder %v1809, 0
        %v1814 = vand.u32 %v1809, 2139095040
        %v1815 = vshrl.u32 %v1814, 23
        %v1816 = vsub.s32 %v1815, 127
        %v1817 = vand.u32 2147483647, %v1809
        %v1818 = vand.u32 %v1817, 8388607
        %v1819 = vor.u32 %v1818, 8388608
        %v1820 = vsub.s32 0, %v1819
        %v1821 = vadd.s32 %v1816, 1
        %vm1822 = vcmp.gt.s32.totalorder %v1821, 0
        %v1823 = vsel %vm1822, %v1821, 0
        %v1824 = vshrl.u32 %v1823, 5
        %v1825 = vand.u32 %v1823, 31
        %v1826 = vsub.s32 32, %v1825
        %v1827 = vshrl.u32 683565275, %v1826
        %v1828 = vshll.u32 683565275, %v1825
        %v1829 = vshrl.u32 2475754826, %v1826
        %v1830 = vor.u32 %v1828, %v1829
        %v1831 = vshll.u32 2475754826, %v1825
        %v1832 = vshrl.u32 2131351028, %v1826
        %v1833 = vor.u32 %v1831, %v1832
        %v1834 = vshll.u32 2131351028, %v1825
        %v1835 = vshrl.u32 2102212464, %v1826
        %v1836 = vor.u32 %v1834, %v1835
        %v1837 = vshll.u32 2102212464, %v1825
        %v1838 = vshrl.u32 920167782, %v1826
        %v1839 = vor.u32 %v1837, %v1838
        %v1840 = vshll.u32 920167782, %v1825
        %v1841 = vshrl.u32 1326507024, %v1826
        %v1842 = vor.u32 %v1840, %v1841
        %vm1843 = vcmp.lt.s32.totalorder %v1824, 1
        %vm1844 = vcmp.lt.s32.totalorder %v1824, 2
        %vm1845 = vcmp.lt.s32.totalorder %v1824, 3
        %vm1846 = vcmp.lt.s32.totalorder %v1824, 4
        %v1847 = vsel %vm1843, %v1827, %v1830
        %v1848 = vsel %vm1846, %v1836, 2102212464
        %v1849 = vsel %vm1845, %v1833, %v1848
        %v1850 = vsel %vm1844, %v1847, %v1849
        %v1851 = vsel %vm1843, %v1830, %v1833
        %v1852 = vsel %vm1846, %v1839, 920167782
        %v1853 = vsel %vm1845, %v1836, %v1852
        %v1854 = vsel %vm1844, %v1851, %v1853
        %v1855 = vsel %vm1843, %v1833, %v1836
        %v1856 = vsel %vm1846, %v1842, 1326507024
        %v1857 = vsel %vm1845, %v1839, %v1856
        %v1858 = vsel %vm1844, %v1855, %v1857
        %v1859 = vshll.u32 %v1819, 8
        %v1860 = vmul.u32.u64.compose %v1859, %v1858
        %v1861 = vextract.low.u32 %v1860
        %v1862 = vextract.high.u32 %v1860
        %v1863 = vmul.u32.u64.compose %v1859, %v1854
        %v1864 = vextract.low.u32 %v1863
        %v1865 = vextract.high.u32 %v1863
        %v1866 = vmul.u32 %v1859, %v1850
        %v1867 = vadd.s32 %v1862, %v1864
        %vm1868 = vc.u32 %v1862, %v1864
        %v1869 = vadd.s32 %v1865, 1
        %v1870 = vsel %vm1868, %v1869, %v1865
        %v1871 = vadd.s32 %v1866, %v1870
        %v1872 = vadd.s32 %v1871, 536870912
        %v1873 = vshrl.u32 %v1872, 30
        %v1874 = vshll.u32 %v1873, 30
        %v1875 = vsub.s32 %v1871, %v1874
        %vm1876 = vcmp.lt.s32.totalorder %v1875, 0
        %v1877 = vsub.s32 0, %v1875
        %v1878 = vsel %vm1876, %v1877, %v1875
        %v1879 = vclz %v1878
        %v1880 = vsub.s32 %v1879, 2
        %vm1881 = vcmp.gt.s32.totalorder 0, %v1880
        %v1882 = vsel %vm1881, 0, %v1880
        %v1883 = vsub.s32 32, %v1882
        %v1884 = vshll.u32 %v1875, %v1882
        %v1885 = vshrl.u32 %v1867, %v1883
        %v1886 = vor.u32 %v1884, %v1885
        %v1887 = vsub.s32 4294967266, %v1882
        %v1888 = vadd.s32 %v1887, 127
        %v1889 = vshll.u32 %v1888, 23
        %v1890 = vor.u32 4788187, %v1889
        %v1891 = vand.u32 2147483647, %v1890
        %v1893 = vcvt.s32.f32 %v1886
        %v1894 = vmul.f32 %v1893, %v1891
        %v1895 = vxor.u32 %v1894, 2147483648
        %v1896 = vsel %vm1813, %v1895, %v1894
        %v1897 = vsub.s32 4, %v1873
        %v1898 = vsel %vm1813, %v1897, %v1873
        %v1899 = vsel %vm1812, %v1809, %v1896
        %v1900 = vsel %vm1812, 0, %v1898
        %v1901 = vcosq.f32.pop %v1899
        %v1902 = vsinq.f32.pop %v1899
        %vm1903 = vweird.f32 %v1809
        %v1904 = vand.u32 %v1900, 3
        %vm1905 = vcmp.lt.s32.totalorder %v1904, 2
        %vm1906 = vcmp.eq.s32.totalorder %v1904, 0
        %v1907 = vxor.u32 %v1902, 2147483648
        %v1908 = vsel %vm1906, %v1901, %v1907
        %vm1909 = vcmp.eq.s32.totalorder %v1904, 2
        %v1910 = vxor.u32 %v1901, 2147483648
        %v1911 = vsel %vm1909, %v1910, %v1902
        %v1912 = vsel %vm1905, %v1908, %v1911
        %v1913 = vsel %vm1903, nan, %v1912
        %v1914 = vand.u32 2147483647, %v1810
        %vm1915 = vcmp.le.f32.partialorder %v1914, 0.7853982
        %vm1916 = vcmp.lt.s32.totalorder %v1810, 0
        %v1917 = vand.u32 %v1810, 2139095040
        %v1918 = vshrl.u32 %v1917, 23
        %v1919 = vsub.s32 %v1918, 127
        %v1920 = vand.u32 2147483647, %v1810
        %v1921 = vand.u32 %v1920, 8388607
        %v1922 = vor.u32 %v1921, 8388608
        %v1923 = vsub.s32 0, %v1922
        %v1924 = vadd.s32 %v1919, 1
        %vm1925 = vcmp.gt.s32.totalorder %v1924, 0
        %v1926 = vsel %vm1925, %v1924, 0
        %v1927 = vshrl.u32 %v1926, 5
        %v1928 = vand.u32 %v1926, 31
        %v1929 = vsub.s32 32, %v1928
        %v1930 = vshrl.u32 683565275, %v1929
        %v1931 = vshll.u32 683565275, %v1928
        %v1932 = vshrl.u32 2475754826, %v1929
        %v1933 = vor.u32 %v1931, %v1932
        %v1934 = vshll.u32 2475754826, %v1928
        %v1935 = vshrl.u32 2131351028, %v1929
        %v1936 = vor.u32 %v1934, %v1935
        %v1937 = vshll.u32 2131351028, %v1928
        %v1938 = vshrl.u32 2102212464, %v1929
        %v1939 = vor.u32 %v1937, %v1938
        %v1940 = vshll.u32 2102212464, %v1928
        %v1941 = vshrl.u32 920167782, %v1929
        %v1942 = vor.u32 %v1940, %v1941
        %v1943 = vshll.u32 920167782, %v1928
        %v1944 = vshrl.u32 1326507024, %v1929
        %v1945 = vor.u32 %v1943, %v1944
        %vm1946 = vcmp.lt.s32.totalorder %v1927, 1
        %vm1947 = vcmp.lt.s32.totalorder %v1927, 2
        %vm1948 = vcmp.lt.s32.totalorder %v1927, 3
        %vm1949 = vcmp.lt.s32.totalorder %v1927, 4
        %v1950 = vsel %vm1946, %v1930, %v1933
        %v1951 = vsel %vm1949, %v1939, 2102212464
        %v1952 = vsel %vm1948, %v1936, %v1951
        %v1953 = vsel %vm1947, %v1950, %v1952
        %v1954 = vsel %vm1946, %v1933, %v1936
        %v1955 = vsel %vm1949, %v1942, 920167782
        %v1956 = vsel %vm1948, %v1939, %v1955
        %v1957 = vsel %vm1947, %v1954, %v1956
        %v1958 = vsel %vm1946, %v1936, %v1939
        %v1959 = vsel %vm1949, %v1945, 1326507024
        %v1960 = vsel %vm1948, %v1942, %v1959
        %v1961 = vsel %vm1947, %v1958, %v1960
        %v1962 = vshll.u32 %v1922, 8
        %v1963 = vmul.u32.u64.compose %v1962, %v1961
        %v1964 = vextract.low.u32 %v1963
        %v1965 = vextract.high.u32 %v1963
        %v1966 = vmul.u32.u64.compose %v1962, %v1957
        %v1967 = vextract.low.u32 %v1966
        %v1968 = vextract.high.u32 %v1966
        %v1969 = vmul.u32 %v1962, %v1953
        %v1970 = vadd.s32 %v1965, %v1967
        %vm1971 = vc.u32 %v1965, %v1967
        %v1972 = vadd.s32 %v1968, 1
        %v1973 = vsel %vm1971, %v1972, %v1968
        %v1974 = vadd.s32 %v1969, %v1973
        %v1975 = vadd.s32 %v1974, 536870912
        %v1976 = vshrl.u32 %v1975, 30
        %v1977 = vshll.u32 %v1976, 30
        %v1978 = vsub.s32 %v1974, %v1977
        %vm1979 = vcmp.lt.s32.totalorder %v1978, 0
        %v1980 = vsub.s32 0, %v1978
        %v1981 = vsel %vm1979, %v1980, %v1978
        %v1982 = vclz %v1981
        %v1983 = vsub.s32 %v1982, 2
        %vm1984 = vcmp.gt.s32.totalorder 0, %v1983
        %v1985 = vsel %vm1984, 0, %v1983
        %v1986 = vsub.s32 32, %v1985
        %v1987 = vshll.u32 %v1978, %v1985
        %v1988 = vshrl.u32 %v1970, %v1986
        %v1989 = vor.u32 %v1987, %v1988
        %v1990 = vsub.s32 4294967266, %v1985
        %v1991 = vadd.s32 %v1990, 127
        %v1992 = vshll.u32 %v1991, 23
        %v1993 = vor.u32 4788187, %v1992
        %v1994 = vand.u32 2147483647, %v1993
        %v1996 = vcvt.s32.f32 %v1989
        %v1997 = vmul.f32 %v1996, %v1994
        %v1998 = vxor.u32 %v1997, 2147483648
        %v1999 = vsel %vm1916, %v1998, %v1997
        %v2000 = vsub.s32 4, %v1976
        %v2001 = vsel %vm1916, %v2000, %v1976
        %v2002 = vsel %vm1915, %v1810, %v1999
        %v2003 = vsel %vm1915, 0, %v2001
        %v2004 = vcosq.f32.pop %v2002
        %v2005 = vsinq.f32.pop %v2002
        %vm2006 = vweird.f32 %v1810
        %v2007 = vand.u32 %v2003, 3
        %vm2008 = vcmp.lt.s32.totalorder %v2007, 2
        %vm2009 = vcmp.eq.s32.totalorder %v2007, 0
        %v2010 = vxor.u32 %v2005, 2147483648
        %v2011 = vsel %vm2009, %v2004, %v2010
        %vm2012 = vcmp.eq.s32.totalorder %v2007, 2
        %v2013 = vxor.u32 %v2004, 2147483648
        %v2014 = vsel %vm2012, %v2013, %v2005
        %v2015 = vsel %vm2008, %v2011, %v2014
        %v2016 = vsel %vm2006, nan, %v2015
        %v2017 = vand.u32 2147483647, %v1809
        %vm2018 = vcmp.le.f32.partialorder %v2017, 0.7853982
        %vm2019 = vcmp.lt.s32.totalorder %v1809, 0
        %v2020 = vand.u32 %v1809, 2139095040
        %v2021 = vshrl.u32 %v2020, 23
        %v2022 = vsub.s32 %v2021, 127
        %v2023 = vand.u32 2147483647, %v1809
        %v2024 = vand.u32 %v2023, 8388607
        %v2025 = vor.u32 %v2024, 8388608
        %v2026 = vsub.s32 0, %v2025
        %v2027 = vadd.s32 %v2022, 1
        %vm2028 = vcmp.gt.s32.totalorder %v2027, 0
        %v2029 = vsel %vm2028, %v2027, 0
        %v2030 = vshrl.u32 %v2029, 5
        %v2031 = vand.u32 %v2029, 31
        %v2032 = vsub.s32 32, %v2031
        %v2033 = vshrl.u32 683565275, %v2032
        %v2034 = vshll.u32 683565275, %v2031
        %v2035 = vshrl.u32 2475754826, %v2032
        %v2036 = vor.u32 %v2034, %v2035
        %v2037 = vshll.u32 2475754826, %v2031
        %v2038 = vshrl.u32 2131351028, %v2032
        %v2039 = vor.u32 %v2037, %v2038
        %v2040 = vshll.u32 2131351028, %v2031
        %v2041 = vshrl.u32 2102212464, %v2032
        %v2042 = vor.u32 %v2040, %v2041
        %v2043 = vshll.u32 2102212464, %v2031
        %v2044 = vshrl.u32 920167782, %v2032
        %v2045 = vor.u32 %v2043, %v2044
        %v2046 = vshll.u32 920167782, %v2031
        %v2047 = vshrl.u32 1326507024, %v2032
        %v2048 = vor.u32 %v2046, %v2047
        %vm2049 = vcmp.lt.s32.totalorder %v2030, 1
        %vm2050 = vcmp.lt.s32.totalorder %v2030, 2
        %vm2051 = vcmp.lt.s32.totalorder %v2030, 3
        %vm2052 = vcmp.lt.s32.totalorder %v2030, 4
        %v2053 = vsel %vm2049, %v2033, %v2036
        %v2054 = vsel %vm2052, %v2042, 2102212464
        %v2055 = vsel %vm2051, %v2039, %v2054
        %v2056 = vsel %vm2050, %v2053, %v2055
        %v2057 = vsel %vm2049, %v2036, %v2039
        %v2058 = vsel %vm2052, %v2045, 920167782
        %v2059 = vsel %vm2051, %v2042, %v2058
        %v2060 = vsel %vm2050, %v2057, %v2059
        %v2061 = vsel %vm2049, %v2039, %v2042
        %v2062 = vsel %vm2052, %v2048, 1326507024
        %v2063 = vsel %vm2051, %v2045, %v2062
        %v2064 = vsel %vm2050, %v2061, %v2063
        %v2065 = vshll.u32 %v2025, 8
        %v2066 = vmul.u32.u64.compose %v2065, %v2064
        %v2067 = vextract.low.u32 %v2066
        %v2068 = vextract.high.u32 %v2066
        %v2069 = vmul.u32.u64.compose %v2065, %v2060
        %v2070 = vextract.low.u32 %v2069
        %v2071 = vextract.high.u32 %v2069
        %v2072 = vmul.u32 %v2065, %v2056
        %v2073 = vadd.s32 %v2068, %v2070
        %vm2074 = vc.u32 %v2068, %v2070
        %v2075 = vadd.s32 %v2071, 1
        %v2076 = vsel %vm2074, %v2075, %v2071
        %v2077 = vadd.s32 %v2072, %v2076
        %v2078 = vadd.s32 %v2077, 536870912
        %v2079 = vshrl.u32 %v2078, 30
        %v2080 = vshll.u32 %v2079, 30
        %v2081 = vsub.s32 %v2077, %v2080
        %vm2082 = vcmp.lt.s32.totalorder %v2081, 0
        %v2083 = vsub.s32 0, %v2081
        %v2084 = vsel %vm2082, %v2083, %v2081
        %v2085 = vclz %v2084
        %v2086 = vsub.s32 %v2085, 2
        %vm2087 = vcmp.gt.s32.totalorder 0, %v2086
        %v2088 = vsel %vm2087, 0, %v2086
        %v2089 = vsub.s32 32, %v2088
        %v2090 = vshll.u32 %v2081, %v2088
        %v2091 = vshrl.u32 %v2073, %v2089
        %v2092 = vor.u32 %v2090, %v2091
        %v2093 = vsub.s32 4294967266, %v2088
        %v2094 = vadd.s32 %v2093, 127
        %v2095 = vshll.u32 %v2094, 23
        %v2096 = vor.u32 4788187, %v2095
        %v2097 = vand.u32 2147483647, %v2096
        %v2099 = vcvt.s32.f32 %v2092
        %v2100 = vmul.f32 %v2099, %v2097
        %v2101 = vxor.u32 %v2100, 2147483648
        %v2102 = vsel %vm2019, %v2101, %v2100
        %v2103 = vsub.s32 4, %v2079
        %v2104 = vsel %vm2019, %v2103, %v2079
        %v2105 = vsel %vm2018, %v1809, %v2102
        %v2106 = vsel %vm2018, 0, %v2104
        %v2107 = vcosq.f32.pop %v2105
        %v2108 = vsinq.f32.pop %v2105
        %vm2109 = vweird.f32 %v1809
        %v2110 = vadd.s32 %v2106, 3
        %v2111 = vand.u32 %v2110, 3
        %vm2112 = vcmp.lt.s32.totalorder %v2111, 2
        %vm2113 = vcmp.eq.s32.totalorder %v2111, 0
        %v2114 = vxor.u32 %v2108, 2147483648
        %v2115 = vsel %vm2113, %v2107, %v2114
        %vm2116 = vcmp.eq.s32.totalorder %v2111, 2
        %v2117 = vxor.u32 %v2107, 2147483648
        %v2118 = vsel %vm2116, %v2117, %v2108
        %v2119 = vsel %vm2112, %v2115, %v2118
        %v2120 = vsel %vm2109, nan, %v2119
        %v2121 = vand.u32 2147483647, %v1810
        %vm2122 = vcmp.le.f32.partialorder %v2121, 0.7853982
        %vm2123 = vcmp.lt.s32.totalorder %v1810, 0
        %v2124 = vand.u32 %v1810, 2139095040
        %v2125 = vshrl.u32 %v2124, 23
        %v2126 = vsub.s32 %v2125, 127
        %v2127 = vand.u32 2147483647, %v1810
        %v2128 = vand.u32 %v2127, 8388607
        %v2129 = vor.u32 %v2128, 8388608
        %v2130 = vsub.s32 0, %v2129
        %v2131 = vadd.s32 %v2126, 1
        %vm2132 = vcmp.gt.s32.totalorder %v2131, 0
        %v2133 = vsel %vm2132, %v2131, 0
        %v2134 = vshrl.u32 %v2133, 5
        %v2135 = vand.u32 %v2133, 31
        %v2136 = vsub.s32 32, %v2135
        %v2137 = vshrl.u32 683565275, %v2136
        %v2138 = vshll.u32 683565275, %v2135
        %v2139 = vshrl.u32 2475754826, %v2136
        %v2140 = vor.u32 %v2138, %v2139
        %v2141 = vshll.u32 2475754826, %v2135
        %v2142 = vshrl.u32 2131351028, %v2136
        %v2143 = vor.u32 %v2141, %v2142
        %v2144 = vshll.u32 2131351028, %v2135
        %v2145 = vshrl.u32 2102212464, %v2136
        %v2146 = vor.u32 %v2144, %v2145
        %v2147 = vshll.u32 2102212464, %v2135
        %v2148 = vshrl.u32 920167782, %v2136
        %v2149 = vor.u32 %v2147, %v2148
        %v2150 = vshll.u32 920167782, %v2135
        %v2151 = vshrl.u32 1326507024, %v2136
        %v2152 = vor.u32 %v2150, %v2151
        %vm2153 = vcmp.lt.s32.totalorder %v2134, 1
        %vm2154 = vcmp.lt.s32.totalorder %v2134, 2
        %vm2155 = vcmp.lt.s32.totalorder %v2134, 3
        %vm2156 = vcmp.lt.s32.totalorder %v2134, 4
        %v2157 = vsel %vm2153, %v2137, %v2140
        %v2158 = vsel %vm2156, %v2146, 2102212464
        %v2159 = vsel %vm2155, %v2143, %v2158
        %v2160 = vsel %vm2154, %v2157, %v2159
        %v2161 = vsel %vm2153, %v2140, %v2143
        %v2162 = vsel %vm2156, %v2149, 920167782
        %v2163 = vsel %vm2155, %v2146, %v2162
        %v2164 = vsel %vm2154, %v2161, %v2163
        %v2165 = vsel %vm2153, %v2143, %v2146
        %v2166 = vsel %vm2156, %v2152, 1326507024
        %v2167 = vsel %vm2155, %v2149, %v2166
        %v2168 = vsel %vm2154, %v2165, %v2167
        %v2169 = vshll.u32 %v2129, 8
        %v2170 = vmul.u32.u64.compose %v2169, %v2168
        %v2171 = vextract.low.u32 %v2170
        %v2172 = vextract.high.u32 %v2170
        %v2173 = vmul.u32.u64.compose %v2169, %v2164
        %v2174 = vextract.low.u32 %v2173
        %v2175 = vextract.high.u32 %v2173
        %v2176 = vmul.u32 %v2169, %v2160
        %v2177 = vadd.s32 %v2172, %v2174
        %vm2178 = vc.u32 %v2172, %v2174
        %v2179 = vadd.s32 %v2175, 1
        %v2180 = vsel %vm2178, %v2179, %v2175
        %v2181 = vadd.s32 %v2176, %v2180
        %v2182 = vadd.s32 %v2181, 536870912
        %v2183 = vshrl.u32 %v2182, 30
        %v2184 = vshll.u32 %v2183, 30
        %v2185 = vsub.s32 %v2181, %v2184
        %vm2186 = vcmp.lt.s32.totalorder %v2185, 0
        %v2187 = vsub.s32 0, %v2185
        %v2188 = vsel %vm2186, %v2187, %v2185
        %v2189 = vclz %v2188
        %v2190 = vsub.s32 %v2189, 2
        %vm2191 = vcmp.gt.s32.totalorder 0, %v2190
        %v2192 = vsel %vm2191, 0, %v2190
        %v2193 = vsub.s32 32, %v2192
        %v2194 = vshll.u32 %v2185, %v2192
        %v2195 = vshrl.u32 %v2177, %v2193
        %v2196 = vor.u32 %v2194, %v2195
        %v2197 = vsub.s32 4294967266, %v2192
        %v2198 = vadd.s32 %v2197, 127
        %v2199 = vshll.u32 %v2198, 23
        %v2200 = vor.u32 4788187, %v2199
        %v2201 = vand.u32 2147483647, %v2200
        %v2203 = vcvt.s32.f32 %v2196
        %v2204 = vmul.f32 %v2203, %v2201
        %v2205 = vxor.u32 %v2204, 2147483648
        %v2206 = vsel %vm2123, %v2205, %v2204
        %v2207 = vsub.s32 4, %v2183
        %v2208 = vsel %vm2123, %v2207, %v2183
        %v2209 = vsel %vm2122, %v1810, %v2206
        %v2210 = vsel %vm2122, 0, %v2208
        %v2211 = vcosq.f32.pop %v2209
        %v2212 = vsinq.f32.pop %v2209
        %vm2213 = vweird.f32 %v1810
        %v2214 = vadd.s32 %v2210, 3
        %v2215 = vand.u32 %v2214, 3
        %vm2216 = vcmp.lt.s32.totalorder %v2215, 2
        %vm2217 = vcmp.eq.s32.totalorder %v2215, 0
        %v2218 = vxor.u32 %v2212, 2147483648
        %v2219 = vsel %vm2217, %v2211, %v2218
        %vm2220 = vcmp.eq.s32.totalorder %v2215, 2
        %v2221 = vxor.u32 %v2211, 2147483648
        %v2222 = vsel %vm2220, %v2221, %v2212
        %v2223 = vsel %vm2216, %v2219, %v2222
        %v2224 = vsel %vm2213, nan, %v2223
        %v2225 = vsub.f32 0.0, %v2120
        %v2226 = vsub.f32 0.0, %v2224
        %v2227 = vld [vmem:[#allocation2] sm:$0xff]
        %v2228 = vld [vmem:[#allocation2 + $0x8] sm:$0xff]
        %v2229 = vld [vmem:[#allocation2 + $0x10] sm:$0xff]
        %v2230 = vld [vmem:[#allocation2 + $0x18] sm:$0xff]
        %v2231 = vld [vmem:[#allocation3] sm:$0xff]
        %v2232 = vld [vmem:[#allocation3 + $0x8] sm:$0xff]
        %v2233 = vld [vmem:[#allocation3 + $0x10] sm:$0xff]
        %v2234 = vld [vmem:[#allocation3 + $0x18] sm:$0xff]
        %v2235 = vmul.f32 %v2227, %v1913
        %v2236 = vmul.f32 %v2228, %v2016
        %v2237 = vmul.f32 %v2229, %v1913
        %v2238 = vmul.f32 %v2230, %v2016
        %v2239 = vmul.f32 %v2231, %v2225
        %v2240 = vmul.f32 %v2232, %v2226
        %v2241 = vmul.f32 %v2233, %v2225
        %v2242 = vmul.f32 %v2234, %v2226
        %v2243 = vsub.f32 %v2235, %v2239
        %v2244 = vsub.f32 %v2236, %v2240
        %v2245 = vsub.f32 %v2237, %v2241
        %v2246 = vsub.f32 %v2238, %v2242
        %v2247 = vmul.f32 %v2227, %v2225
        %v2248 = vmul.f32 %v2228, %v2226
        %v2249 = vmul.f32 %v2229, %v2225
        %v2250 = vmul.f32 %v2230, %v2226
        %v2251 = vmul.f32 %v2231, %v1913
        %v2252 = vmul.f32 %v2232, %v2016
        %v2253 = vmul.f32 %v2233, %v1913
        %v2254 = vmul.f32 %v2234, %v2016
        %v2255 = vadd.f32 %v2247, %v2251
        %v2256 = vadd.f32 %v2248, %v2252
        %v2257 = vadd.f32 %v2249, %v2253
        %v2258 = vadd.f32 %v2250, %v2254
        %v2259 = vpack.c.bf16 %v2244, %v2243
        %v2260 = vpack.c.bf16 %v2246, %v2245
        %v2261 = vunpack.c.l.bf16 %v2259
        %v2262 = vunpack.c.h.bf16 %v2259
        %v2263 = vunpack.c.l.bf16 %v2260
        %v2264 = vunpack.c.h.bf16 %v2260
        %v2265 = vsub.f32 %v2243, %v2261
        %v2266 = vsub.f32 %v2244, %v2262
        %v2267 = vsub.f32 %v2245, %v2263
        %v2268 = vsub.f32 %v2246, %v2264
        %v2269 = vpack.c.bf16 %v2266, %v2265
        %v2270 = vpack.c.bf16 %v2268, %v2267
        %v2271 = vpack.c.bf16 %v2256, %v2255
        %v2272 = vpack.c.bf16 %v2258, %v2257
        %v2273 = vunpack.c.l.bf16 %v2271
        %v2274 = vunpack.c.h.bf16 %v2271
        %v2275 = vunpack.c.l.bf16 %v2272
        %v2276 = vunpack.c.h.bf16 %v2272
        %v2277 = vsub.f32 %v2255, %v2273
        %v2278 = vsub.f32 %v2256, %v2274
        %v2279 = vsub.f32 %v2257, %v2275
        %v2280 = vsub.f32 %v2258, %v2276
        %v2281 = vpack.c.bf16 %v2278, %v2277
        %v2282 = vpack.c.bf16 %v2280, %v2279
        %v2283 = vadd.f32 %v2243, %v2255
        %v2284 = vadd.f32 %v2244, %v2256
        %v2285 = vadd.f32 %v2245, %v2257
        %v2286 = vadd.f32 %v2246, %v2258
        %v2287 = vpack.c.bf16 %v2284, %v2283
        %v2288 = vpack.c.bf16 %v2286, %v2285
        %v2289 = vunpack.c.l.bf16 %v2287
        %v2290 = vunpack.c.h.bf16 %v2287
        %v2291 = vunpack.c.l.bf16 %v2288
        %v2292 = vunpack.c.h.bf16 %v2288
        %v2293 = vsub.f32 %v2283, %v2289
        %v2294 = vsub.f32 %v2284, %v2290
        %v2295 = vsub.f32 %v2285, %v2291
        %v2296 = vsub.f32 %v2286, %v2292
        %v2297 = vpack.c.bf16 %v2294, %v2293
        %v2298 = vpack.c.bf16 %v2296, %v2295
        %v2301 = vunpack.c.l.b16 %v337
        %v2302 = vunpack.c.l.b16 %v338
        %v2303 = vpack.c.b16 %v2302, %v2301
        %vm2305 = vcmask 130048
        %v2307 = vsel %vm2305, %v2259, 0
        %v2310 = vsel %vm2305, %v2260, 0
        %2312 = vmatprep.subr.bf16.mxu0 0
        %2313 = vmatpush1.bf16.msra.mxu0 0
        %2314 = vmatprep.subr.bf16.mxu0 0
        %2315 = vmatpush1.bf16.msra.mxu0 0
        %2316 = vmatprep.subr.bf16.mxu0 0
        %2317 = vmatpush1.bf16.msra.mxu0 0
        %2318 = vmatprep.subr.bf16.mxu0 0
        %2319 = vmatpush1.bf16.msra.mxu0 0
        %2320 = vmatprep.subr.bf16.mxu0 0
        %2321 = vmatpush1.bf16.msra.mxu0 0
        %2322 = vmatprep.subr.bf16.mxu0 0
        %2323 = vmatpush1.bf16.msra.mxu0 0
        %2324 = vmatprep.subr.bf16.mxu0 0
        %2325 = vmatpush1.bf16.msra.mxu0 0
        %2326 = vmatprep.subr.bf16.mxu0 0
        %2327 = vmatpush1.bf16.msra.mxu0 %v2303
        %2328 = vmatprep.subr.bf16.mxu0 0
        %2329 = vmatpush2.bf16.msra.mxu0 0
        %2330 = vmatprep.subr.bf16.mxu0 0
        %2331 = vmatpush2.bf16.msra.mxu0 0
        %2332 = vmatprep.subr.bf16.mxu0 0
        %2333 = vmatpush2.bf16.msra.mxu0 0
        %2334 = vmatprep.subr.bf16.mxu0 0
        %2335 = vmatpush2.bf16.msra.mxu0 0
        %2336 = vmatprep.subr.bf16.mxu0 0
        %2337 = vmatpush2.bf16.msra.mxu0 0
        %2338 = vmatprep.subr.bf16.mxu0 0
        %2339 = vmatpush2.bf16.msra.mxu0 0
        %2340 = vmatprep.subr.bf16.mxu0 0
        %2341 = vmatpush2.bf16.msra.mxu0 0
        %2342 = vmatprep.subr.bf16.mxu0 0
        %2343 = vmatpush2.bf16.msra.mxu0 0
        %2344 = vmatprep.mubr.bf16.mxu0 0
        %2345 = vmatmul.mubr.bf16.gmra.mxu0 %v2307
        %v2346 = vpop.f32.mrf.mxu0
        %v2347 = vadd.f32 0.0, %v2346
        %v2348 = vpop.f32.mrf.mxu0
        %v2349 = vpop.f32.mrf.mxu0
        %v2350 = vadd.f32 0.0, %v2349
        %v2351 = vpop.f32.mrf.mxu0
        %2352 = vmatprep.mubr.bf16.mxu0 0
        %2353 = vmatmul.mubr.bf16.gmra.mxu0 %v2310
        %v2354 = vpop.f32.mrf.mxu0
        %v2355 = vadd.f32 0.0, %v2354
        %v2356 = vpop.f32.mrf.mxu0
        %v2357 = vpop.f32.mrf.mxu0
        %v2358 = vadd.f32 0.0, %v2357
        %v2359 = vpop.f32.mrf.mxu0
        %2360 = vdwg.mxu0
        %v2363 = vunpack.c.l.b16 %v334
        %v2364 = vunpack.c.l.b16 %v335
        %v2365 = vpack.c.b16 %v2364, %v2363
        %2367 = vmatprep.subr.bf16.mxu0 0
        %2368 = vmatpush1.bf16.msra.mxu0 0
        %2369 = vmatprep.subr.bf16.mxu0 0
        %2370 = vmatpush1.bf16.msra.mxu0 0
        %2371 = vmatprep.subr.bf16.mxu0 0
        %2372 = vmatpush1.bf16.msra.mxu0 0
        %2373 = vmatprep.subr.bf16.mxu0 0
        %2374 = vmatpush1.bf16.msra.mxu0 0
        %2375 = vmatprep.subr.bf16.mxu0 0
        %2376 = vmatpush1.bf16.msra.mxu0 0
        %2377 = vmatprep.subr.bf16.mxu0 0
        %2378 = vmatpush1.bf16.msra.mxu0 0
        %2379 = vmatprep.subr.bf16.mxu0 0
        %2380 = vmatpush1.bf16.msra.mxu0 0
        %2381 = vmatprep.subr.bf16.mxu0 0
        %2382 = vmatpush1.bf16.msra.mxu0 %v2365
        %2383 = vmatprep.subr.bf16.mxu0 0
        %2384 = vmatpush2.bf16.msra.mxu0 0
        %2385 = vmatprep.subr.bf16.mxu0 0
        %2386 = vmatpush2.bf16.msra.mxu0 0
        %2387 = vmatprep.subr.bf16.mxu0 0
        %2388 = vmatpush2.bf16.msra.mxu0 0
        %2389 = vmatprep.subr.bf16.mxu0 0
        %2390 = vmatpush2.bf16.msra.mxu0 0
        %2391 = vmatprep.subr.bf16.mxu0 0
        %2392 = vmatpush2.bf16.msra.mxu0 0
        %2393 = vmatprep.subr.bf16.mxu0 0
        %2394 = vmatpush2.bf16.msra.mxu0 0
        %2395 = vmatprep.subr.bf16.mxu0 0
        %2396 = vmatpush2.bf16.msra.mxu0 0
        %2397 = vmatprep.subr.bf16.mxu0 0
        %2398 = vmatpush2.bf16.msra.mxu0 0
        %2399 = vmatprep.mubr.bf16.mxu0 0
        %2400 = vmatmul.mubr.bf16.gmra.mxu0 %v2307
        %v2401 = vpop.f32.mrf.mxu0
        %v2402 = vadd.f32 %v2347, %v2401
        %v2403 = vpop.f32.mrf.mxu0
        %v2404 = vpop.f32.mrf.mxu0
        %v2405 = vadd.f32 %v2350, %v2404
        %v2406 = vpop.f32.mrf.mxu0
        %2407 = vmatprep.mubr.bf16.mxu0 0
        %2408 = vmatmul.mubr.bf16.gmra.mxu0 %v2310
        %v2409 = vpop.f32.mrf.mxu0
        %v2410 = vadd.f32 %v2355, %v2409
        %v2411 = vpop.f32.mrf.mxu0
        %v2412 = vpop.f32.mrf.mxu0
        %v2413 = vadd.f32 %v2358, %v2412
        %v2414 = vpop.f32.mrf.mxu0
        %2415 = vdwg.mxu0
        %v2417 = vsel %vm2305, %v2269, 0
        %v2420 = vsel %vm2305, %v2270, 0
        %2422 = vmatprep.subr.bf16.mxu0 0
        %2423 = vmatpush1.bf16.msra.mxu0 0
        %2424 = vmatprep.subr.bf16.mxu0 0
        %2425 = vmatpush1.bf16.msra.mxu0 0
        %2426 = vmatprep.subr.bf16.mxu0 0
        %2427 = vmatpush1.bf16.msra.mxu0 0
        %2428 = vmatprep.subr.bf16.mxu0 0
        %2429 = vmatpush1.bf16.msra.mxu0 0
        %2430 = vmatprep.subr.bf16.mxu0 0
        %2431 = vmatpush1.bf16.msra.mxu0 0
        %2432 = vmatprep.subr.bf16.mxu0 0
        %2433 = vmatpush1.bf16.msra.mxu0 0
        %2434 = vmatprep.subr.bf16.mxu0 0
        %2435 = vmatpush1.bf16.msra.mxu0 0
        %2436 = vmatprep.subr.bf16.mxu0 0
        %2437 = vmatpush1.bf16.msra.mxu0 %v2365
        %2438 = vmatprep.subr.bf16.mxu0 0
        %2439 = vmatpush2.bf16.msra.mxu0 0
        %2440 = vmatprep.subr.bf16.mxu0 0
        %2441 = vmatpush2.bf16.msra.mxu0 0
        %2442 = vmatprep.subr.bf16.mxu0 0
        %2443 = vmatpush2.bf16.msra.mxu0 0
        %2444 = vmatprep.subr.bf16.mxu0 0
        %2445 = vmatpush2.bf16.msra.mxu0 0
        %2446 = vmatprep.subr.bf16.mxu0 0
        %2447 = vmatpush2.bf16.msra.mxu0 0
        %2448 = vmatprep.subr.bf16.mxu0 0
        %2449 = vmatpush2.bf16.msra.mxu0 0
        %2450 = vmatprep.subr.bf16.mxu0 0
        %2451 = vmatpush2.bf16.msra.mxu0 0
        %2452 = vmatprep.subr.bf16.mxu0 0
        %2453 = vmatpush2.bf16.msra.mxu0 0
        %2454 = vmatprep.mubr.bf16.mxu0 0
        %2455 = vmatmul.mubr.bf16.gmra.mxu0 %v2417
        %v2456 = vpop.f32.mrf.mxu0
        %v2457 = vadd.f32 0.0, %v2456
        %v2458 = vpop.f32.mrf.mxu0
        %v2459 = vpop.f32.mrf.mxu0
        %v2460 = vadd.f32 0.0, %v2459
        %v2461 = vpop.f32.mrf.mxu0
        %2462 = vmatprep.mubr.bf16.mxu0 0
        %2463 = vmatmul.mubr.bf16.gmra.mxu0 %v2420
        %v2464 = vpop.f32.mrf.mxu0
        %v2465 = vadd.f32 0.0, %v2464
        %v2466 = vpop.f32.mrf.mxu0
        %v2467 = vpop.f32.mrf.mxu0
        %v2468 = vadd.f32 0.0, %v2467
        %v2469 = vpop.f32.mrf.mxu0
        %2470 = vdwg.mxu0
        %v2471 = vadd.f32 %v2402, %v2457
        %v2472 = vadd.f32 %v2405, %v2460
        %v2473 = vadd.f32 %v2410, %v2465
        %v2474 = vadd.f32 %v2413, %v2468
        %v2477 = vunpack.c.l.b16 %v343
        %v2478 = vunpack.c.l.b16 %v344
        %v2479 = vpack.c.b16 %v2478, %v2477
        %v2482 = vsel %vm2305, %v2271, 0
        %v2485 = vsel %vm2305, %v2272, 0
        %2487 = vmatprep.subr.bf16.mxu0 0
        %2488 = vmatpush1.bf16.msra.mxu0 0
        %2489 = vmatprep.subr.bf16.mxu0 0
        %2490 = vmatpush1.bf16.msra.mxu0 0
        %2491 = vmatprep.subr.bf16.mxu0 0
        %2492 = vmatpush1.bf16.msra.mxu0 0
        %2493 = vmatprep.subr.bf16.mxu0 0
        %2494 = vmatpush1.bf16.msra.mxu0 0
        %2495 = vmatprep.subr.bf16.mxu0 0
        %2496 = vmatpush1.bf16.msra.mxu0 0
        %2497 = vmatprep.subr.bf16.mxu0 0
        %2498 = vmatpush1.bf16.msra.mxu0 0
        %2499 = vmatprep.subr.bf16.mxu0 0
        %2500 = vmatpush1.bf16.msra.mxu0 0
        %2501 = vmatprep.subr.bf16.mxu0 0
        %2502 = vmatpush1.bf16.msra.mxu0 %v2479
        %2503 = vmatprep.subr.bf16.mxu0 0
        %2504 = vmatpush2.bf16.msra.mxu0 0
        %2505 = vmatprep.subr.bf16.mxu0 0
        %2506 = vmatpush2.bf16.msra.mxu0 0
        %2507 = vmatprep.subr.bf16.mxu0 0
        %2508 = vmatpush2.bf16.msra.mxu0 0
        %2509 = vmatprep.subr.bf16.mxu0 0
        %2510 = vmatpush2.bf16.msra.mxu0 0
        %2511 = vmatprep.subr.bf16.mxu0 0
        %2512 = vmatpush2.bf16.msra.mxu0 0
        %2513 = vmatprep.subr.bf16.mxu0 0
        %2514 = vmatpush2.bf16.msra.mxu0 0
        %2515 = vmatprep.subr.bf16.mxu0 0
        %2516 = vmatpush2.bf16.msra.mxu0 0
        %2517 = vmatprep.subr.bf16.mxu0 0
        %2518 = vmatpush2.bf16.msra.mxu0 0
        %2519 = vmatprep.mubr.bf16.mxu0 0
        %2520 = vmatmul.mubr.bf16.gmra.mxu0 %v2482
        %v2521 = vpop.f32.mrf.mxu0
        %v2522 = vadd.f32 0.0, %v2521
        %v2523 = vpop.f32.mrf.mxu0
        %v2524 = vpop.f32.mrf.mxu0
        %v2525 = vadd.f32 0.0, %v2524
        %v2526 = vpop.f32.mrf.mxu0
        %2527 = vmatprep.mubr.bf16.mxu0 0
        %2528 = vmatmul.mubr.bf16.gmra.mxu0 %v2485
        %v2529 = vpop.f32.mrf.mxu0
        %v2530 = vadd.f32 0.0, %v2529
        %v2531 = vpop.f32.mrf.mxu0
        %v2532 = vpop.f32.mrf.mxu0
        %v2533 = vadd.f32 0.0, %v2532
        %v2534 = vpop.f32.mrf.mxu0
        %2535 = vdwg.mxu0
        %v2538 = vunpack.c.l.b16 %v340
        %v2539 = vunpack.c.l.b16 %v341
        %v2540 = vpack.c.b16 %v2539, %v2538
        %2542 = vmatprep.subr.bf16.mxu0 0
        %2543 = vmatpush1.bf16.msra.mxu0 0
        %2544 = vmatprep.subr.bf16.mxu0 0
        %2545 = vmatpush1.bf16.msra.mxu0 0
        %2546 = vmatprep.subr.bf16.mxu0 0
        %2547 = vmatpush1.bf16.msra.mxu0 0
        %2548 = vmatprep.subr.bf16.mxu0 0
        %2549 = vmatpush1.bf16.msra.mxu0 0
        %2550 = vmatprep.subr.bf16.mxu0 0
        %2551 = vmatpush1.bf16.msra.mxu0 0
        %2552 = vmatprep.subr.bf16.mxu0 0
        %2553 = vmatpush1.bf16.msra.mxu0 0
        %2554 = vmatprep.subr.bf16.mxu0 0
        %2555 = vmatpush1.bf16.msra.mxu0 0
        %2556 = vmatprep.subr.bf16.mxu0 0
        %2557 = vmatpush1.bf16.msra.mxu0 %v2540
        %2558 = vmatprep.subr.bf16.mxu0 0
        %2559 = vmatpush2.bf16.msra.mxu0 0
        %2560 = vmatprep.subr.bf16.mxu0 0
        %2561 = vmatpush2.bf16.msra.mxu0 0
        %2562 = vmatprep.subr.bf16.mxu0 0
        %2563 = vmatpush2.bf16.msra.mxu0 0
        %2564 = vmatprep.subr.bf16.mxu0 0
        %2565 = vmatpush2.bf16.msra.mxu0 0
        %2566 = vmatprep.subr.bf16.mxu0 0
        %2567 = vmatpush2.bf16.msra.mxu0 0
        %2568 = vmatprep.subr.bf16.mxu0 0
        %2569 = vmatpush2.bf16.msra.mxu0 0
        %2570 = vmatprep.subr.bf16.mxu0 0
        %2571 = vmatpush2.bf16.msra.mxu0 0
        %2572 = vmatprep.subr.bf16.mxu0 0
        %2573 = vmatpush2.bf16.msra.mxu0 0
        %2574 = vmatprep.mubr.bf16.mxu0 0
        %2575 = vmatmul.mubr.bf16.gmra.mxu0 %v2482
        %v2576 = vpop.f32.mrf.mxu0
        %v2577 = vadd.f32 %v2522, %v2576
        %v2578 = vpop.f32.mrf.mxu0
        %v2579 = vpop.f32.mrf.mxu0
        %v2580 = vadd.f32 %v2525, %v2579
        %v2581 = vpop.f32.mrf.mxu0
        %2582 = vmatprep.mubr.bf16.mxu0 0
        %2583 = vmatmul.mubr.bf16.gmra.mxu0 %v2485
        %v2584 = vpop.f32.mrf.mxu0
        %v2585 = vadd.f32 %v2530, %v2584
        %v2586 = vpop.f32.mrf.mxu0
        %v2587 = vpop.f32.mrf.mxu0
        %v2588 = vadd.f32 %v2533, %v2587
        %v2589 = vpop.f32.mrf.mxu0
        %2590 = vdwg.mxu0
        %v2592 = vsel %vm2305, %v2281, 0
        %v2595 = vsel %vm2305, %v2282, 0
        %2597 = vmatprep.subr.bf16.mxu0 0
        %2598 = vmatpush1.bf16.msra.mxu0 0
        %2599 = vmatprep.subr.bf16.mxu0 0
        %2600 = vmatpush1.bf16.msra.mxu0 0
        %2601 = vmatprep.subr.bf16.mxu0 0
        %2602 = vmatpush1.bf16.msra.mxu0 0
        %2603 = vmatprep.subr.bf16.mxu0 0
        %2604 = vmatpush1.bf16.msra.mxu0 0
        %2605 = vmatprep.subr.bf16.mxu0 0
        %2606 = vmatpush1.bf16.msra.mxu0 0
        %2607 = vmatprep.subr.bf16.mxu0 0
        %2608 = vmatpush1.bf16.msra.mxu0 0
        %2609 = vmatprep.subr.bf16.mxu0 0
        %2610 = vmatpush1.bf16.msra.mxu0 0
        %2611 = vmatprep.subr.bf16.mxu0 0
        %2612 = vmatpush1.bf16.msra.mxu0 %v2540
        %2613 = vmatprep.subr.bf16.mxu0 0
        %2614 = vmatpush2.bf16.msra.mxu0 0
        %2615 = vmatprep.subr.bf16.mxu0 0
        %2616 = vmatpush2.bf16.msra.mxu0 0
        %2617 = vmatprep.subr.bf16.mxu0 0
        %2618 = vmatpush2.bf16.msra.mxu0 0
        %2619 = vmatprep.subr.bf16.mxu0 0
        %2620 = vmatpush2.bf16.msra.mxu0 0
        %2621 = vmatprep.subr.bf16.mxu0 0
        %2622 = vmatpush2.bf16.msra.mxu0 0
        %2623 = vmatprep.subr.bf16.mxu0 0
        %2624 = vmatpush2.bf16.msra.mxu0 0
        %2625 = vmatprep.subr.bf16.mxu0 0
        %2626 = vmatpush2.bf16.msra.mxu0 0
        %2627 = vmatprep.subr.bf16.mxu0 0
        %2628 = vmatpush2.bf16.msra.mxu0 0
        %2629 = vmatprep.mubr.bf16.mxu0 0
        %2630 = vmatmul.mubr.bf16.gmra.mxu0 %v2592
        %v2631 = vpop.f32.mrf.mxu0
        %v2632 = vadd.f32 0.0, %v2631
        %v2633 = vpop.f32.mrf.mxu0
        %v2634 = vpop.f32.mrf.mxu0
        %v2635 = vadd.f32 0.0, %v2634
        %v2636 = vpop.f32.mrf.mxu0
        %2637 = vmatprep.mubr.bf16.mxu0 0
        %2638 = vmatmul.mubr.bf16.gmra.mxu0 %v2595
        %v2639 = vpop.f32.mrf.mxu0
        %v2640 = vadd.f32 0.0, %v2639
        %v2641 = vpop.f32.mrf.mxu0
        %v2642 = vpop.f32.mrf.mxu0
        %v2643 = vadd.f32 0.0, %v2642
        %v2644 = vpop.f32.mrf.mxu0
        %2645 = vdwg.mxu0
        %v2646 = vadd.f32 %v2577, %v2632
        %v2647 = vadd.f32 %v2580, %v2635
        %v2648 = vadd.f32 %v2585, %v2640
        %v2649 = vadd.f32 %v2588, %v2643
        %v2652 = vunpack.c.l.b16 %v349
        %v2653 = vunpack.c.l.b16 %v350
        %v2654 = vpack.c.b16 %v2653, %v2652
        %v2657 = vsel %vm2305, %v2287, 0
        %v2660 = vsel %vm2305, %v2288, 0
        %2662 = vmatprep.subr.bf16.mxu0 0
        %2663 = vmatpush1.bf16.msra.mxu0 0
        %2664 = vmatprep.subr.bf16.mxu0 0
        %2665 = vmatpush1.bf16.msra.mxu0 0
        %2666 = vmatprep.subr.bf16.mxu0 0
        %2667 = vmatpush1.bf16.msra.mxu0 0
        %2668 = vmatprep.subr.bf16.mxu0 0
        %2669 = vmatpush1.bf16.msra.mxu0 0
        %2670 = vmatprep.subr.bf16.mxu0 0
        %2671 = vmatpush1.bf16.msra.mxu0 0
        %2672 = vmatprep.subr.bf16.mxu0 0
        %2673 = vmatpush1.bf16.msra.mxu0 0
        %2674 = vmatprep.subr.bf16.mxu0 0
        %2675 = vmatpush1.bf16.msra.mxu0 0
        %2676 = vmatprep.subr.bf16.mxu0 0
        %2677 = vmatpush1.bf16.msra.mxu0 %v2654
        %2678 = vmatprep.subr.bf16.mxu0 0
        %2679 = vmatpush2.bf16.msra.mxu0 0
        %2680 = vmatprep.subr.bf16.mxu0 0
        %2681 = vmatpush2.bf16.msra.mxu0 0
        %2682 = vmatprep.subr.bf16.mxu0 0
        %2683 = vmatpush2.bf16.msra.mxu0 0
        %2684 = vmatprep.subr.bf16.mxu0 0
        %2685 = vmatpush2.bf16.msra.mxu0 0
        %2686 = vmatprep.subr.bf16.mxu0 0
        %2687 = vmatpush2.bf16.msra.mxu0 0
        %2688 = vmatprep.subr.bf16.mxu0 0
        %2689 = vmatpush2.bf16.msra.mxu0 0
        %2690 = vmatprep.subr.bf16.mxu0 0
        %2691 = vmatpush2.bf16.msra.mxu0 0
        %2692 = vmatprep.subr.bf16.mxu0 0
        %2693 = vmatpush2.bf16.msra.mxu0 0
        %2694 = vmatprep.mubr.bf16.mxu0 0
        %2695 = vmatmul.mubr.bf16.gmra.mxu0 %v2657
        %v2696 = vpop.f32.mrf.mxu0
        %v2697 = vadd.f32 0.0, %v2696
        %v2698 = vpop.f32.mrf.mxu0
        %v2699 = vpop.f32.mrf.mxu0
        %v2700 = vadd.f32 0.0, %v2699
        %v2701 = vpop.f32.mrf.mxu0
        %2702 = vmatprep.mubr.bf16.mxu0 0
        %2703 = vmatmul.mubr.bf16.gmra.mxu0 %v2660
        %v2704 = vpop.f32.mrf.mxu0
        %v2705 = vadd.f32 0.0, %v2704
        %v2706 = vpop.f32.mrf.mxu0
        %v2707 = vpop.f32.mrf.mxu0
        %v2708 = vadd.f32 0.0, %v2707
        %v2709 = vpop.f32.mrf.mxu0
        %2710 = vdwg.mxu0
        %v2713 = vunpack.c.l.b16 %v346
        %v2714 = vunpack.c.l.b16 %v347
        %v2715 = vpack.c.b16 %v2714, %v2713
        %2717 = vmatprep.subr.bf16.mxu0 0
        %2718 = vmatpush1.bf16.msra.mxu0 0
        %2719 = vmatprep.subr.bf16.mxu0 0
        %2720 = vmatpush1.bf16.msra.mxu0 0
        %2721 = vmatprep.subr.bf16.mxu0 0
        %2722 = vmatpush1.bf16.msra.mxu0 0
        %2723 = vmatprep.subr.bf16.mxu0 0
        %2724 = vmatpush1.bf16.msra.mxu0 0
        %2725 = vmatprep.subr.bf16.mxu0 0
        %2726 = vmatpush1.bf16.msra.mxu0 0
        %2727 = vmatprep.subr.bf16.mxu0 0
        %2728 = vmatpush1.bf16.msra.mxu0 0
        %2729 = vmatprep.subr.bf16.mxu0 0
        %2730 = vmatpush1.bf16.msra.mxu0 0
        %2731 = vmatprep.subr.bf16.mxu0 0
        %2732 = vmatpush1.bf16.msra.mxu0 %v2715
        %2733 = vmatprep.subr.bf16.mxu0 0
        %2734 = vmatpush2.bf16.msra.mxu0 0
        %2735 = vmatprep.subr.bf16.mxu0 0
        %2736 = vmatpush2.bf16.msra.mxu0 0
        %2737 = vmatprep.subr.bf16.mxu0 0
        %2738 = vmatpush2.bf16.msra.mxu0 0
        %2739 = vmatprep.subr.bf16.mxu0 0
        %2740 = vmatpush2.bf16.msra.mxu0 0
        %2741 = vmatprep.subr.bf16.mxu0 0
        %2742 = vmatpush2.bf16.msra.mxu0 0
        %2743 = vmatprep.subr.bf16.mxu0 0
        %2744 = vmatpush2.bf16.msra.mxu0 0
        %2745 = vmatprep.subr.bf16.mxu0 0
        %2746 = vmatpush2.bf16.msra.mxu0 0
        %2747 = vmatprep.subr.bf16.mxu0 0
        %2748 = vmatpush2.bf16.msra.mxu0 0
        %2749 = vmatprep.mubr.bf16.mxu0 0
        %2750 = vmatmul.mubr.bf16.gmra.mxu0 %v2657
        %v2751 = vpop.f32.mrf.mxu0
        %v2752 = vadd.f32 %v2697, %v2751
        %v2753 = vpop.f32.mrf.mxu0
        %v2754 = vpop.f32.mrf.mxu0
        %v2755 = vadd.f32 %v2700, %v2754
        %v2756 = vpop.f32.mrf.mxu0
        %2757 = vmatprep.mubr.bf16.mxu0 0
        %2758 = vmatmul.mubr.bf16.gmra.mxu0 %v2660
        %v2759 = vpop.f32.mrf.mxu0
        %v2760 = vadd.f32 %v2705, %v2759
        %v2761 = vpop.f32.mrf.mxu0
        %v2762 = vpop.f32.mrf.mxu0
        %v2763 = vadd.f32 %v2708, %v2762
        %v2764 = vpop.f32.mrf.mxu0
        %2765 = vdwg.mxu0
        %v2767 = vsel %vm2305, %v2297, 0
        %v2770 = vsel %vm2305, %v2298, 0
        %2772 = vmatprep.subr.bf16.mxu0 0
        %2773 = vmatpush1.bf16.msra.mxu0 0
        %2774 = vmatprep.subr.bf16.mxu0 0
        %2775 = vmatpush1.bf16.msra.mxu0 0
        %2776 = vmatprep.subr.bf16.mxu0 0
        %2777 = vmatpush1.bf16.msra.mxu0 0
        %2778 = vmatprep.subr.bf16.mxu0 0
        %2779 = vmatpush1.bf16.msra.mxu0 0
        %2780 = vmatprep.subr.bf16.mxu0 0
        %2781 = vmatpush1.bf16.msra.mxu0 0
        %2782 = vmatprep.subr.bf16.mxu0 0
        %2783 = vmatpush1.bf16.msra.mxu0 0
        %2784 = vmatprep.subr.bf16.mxu0 0
        %2785 = vmatpush1.bf16.msra.mxu0 0
        %2786 = vmatprep.subr.bf16.mxu0 0
        %2787 = vmatpush1.bf16.msra.mxu0 %v2715
        %2788 = vmatprep.subr.bf16.mxu0 0
        %2789 = vmatpush2.bf16.msra.mxu0 0
        %2790 = vmatprep.subr.bf16.mxu0 0
        %2791 = vmatpush2.bf16.msra.mxu0 0
        %2792 = vmatprep.subr.bf16.mxu0 0
        %2793 = vmatpush2.bf16.msra.mxu0 0
        %2794 = vmatprep.subr.bf16.mxu0 0
        %2795 = vmatpush2.bf16.msra.mxu0 0
        %2796 = vmatprep.subr.bf16.mxu0 0
        %2797 = vmatpush2.bf16.msra.mxu0 0
        %2798 = vmatprep.subr.bf16.mxu0 0
        %2799 = vmatpush2.bf16.msra.mxu0 0
        %2800 = vmatprep.subr.bf16.mxu0 0
        %2801 = vmatpush2.bf16.msra.mxu0 0
        %2802 = vmatprep.subr.bf16.mxu0 0
        %2803 = vmatpush2.bf16.msra.mxu0 0
        %2804 = vmatprep.mubr.bf16.mxu0 0
        %2805 = vmatmul.mubr.bf16.gmra.mxu0 %v2767
        %v2806 = vpop.f32.mrf.mxu0
        %v2807 = vadd.f32 0.0, %v2806
        %v2808 = vpop.f32.mrf.mxu0
        %v2809 = vpop.f32.mrf.mxu0
        %v2810 = vadd.f32 0.0, %v2809
        %v2811 = vpop.f32.mrf.mxu0
        %2812 = vmatprep.mubr.bf16.mxu0 0
        %2813 = vmatmul.mubr.bf16.gmra.mxu0 %v2770
        %v2814 = vpop.f32.mrf.mxu0
        %v2815 = vadd.f32 0.0, %v2814
        %v2816 = vpop.f32.mrf.mxu0
        %v2817 = vpop.f32.mrf.mxu0
        %v2818 = vadd.f32 0.0, %v2817
        %v2819 = vpop.f32.mrf.mxu0
        %2820 = vdwg.mxu0
        %v2821 = vadd.f32 %v2752, %v2807
        %v2822 = vadd.f32 %v2755, %v2810
        %v2823 = vadd.f32 %v2760, %v2815
        %v2824 = vadd.f32 %v2763, %v2818
        %v2825 = vsub.f32 %v2471, %v2646
        %v2826 = vsub.f32 %v2472, %v2647
        %v2827 = vsub.f32 %v2473, %v2648
        %v2828 = vsub.f32 %v2474, %v2649
        %v2829 = vsub.f32 %v2821, %v2471
        %v2830 = vsub.f32 %v2822, %v2472
        %v2831 = vsub.f32 %v2823, %v2473
        %v2832 = vsub.f32 %v2824, %v2474
        %v2833 = vsub.f32 %v2829, %v2646
        %v2834 = vsub.f32 %v2830, %v2647
        %v2835 = vsub.f32 %v2831, %v2648
        %v2836 = vsub.f32 %v2832, %v2649
        %v2837 = vpack.c.bf16 %v2826, %v2825
        %v2838 = vunpack.c.l.bf16 %v2837
        %v2839 = vunpack.c.h.bf16 %v2837
        %v2840 = vsub.f32 %v2825, %v2838
        %v2841 = vsub.f32 %v2826, %v2839
        %v2842 = vpack.c.bf16 %v2841, %v2840
        %v2843 = vpack.c.bf16 %v2834, %v2833
        %v2844 = vunpack.c.l.bf16 %v2843
        %v2845 = vunpack.c.h.bf16 %v2843
        %v2846 = vsub.f32 %v2833, %v2844
        %v2847 = vsub.f32 %v2834, %v2845
        %v2848 = vpack.c.bf16 %v2847, %v2846
        %v2849 = vadd.f32 %v2825, %v2833
        %v2850 = vadd.f32 %v2826, %v2834
        %v2851 = vpack.c.bf16 %v2850, %v2849
        %v2852 = vunpack.c.l.bf16 %v2851
        %v2853 = vunpack.c.h.bf16 %v2851
        %v2854 = vsub.f32 %v2849, %v2852
        %v2855 = vsub.f32 %v2850, %v2853
        %v2856 = vpack.c.bf16 %v2855, %v2854
        %v2859 = vunpack.c.l.b16 %v317
        %v2860 = vunpack.c.l.b16 %v318
        %v2861 = vpack.c.b16 %v2860, %v2859
        %v2863 = vsel %vm2305, %v2861, 0
        %2865 = vmatprep.subr.bf16.mxu0 0
        %2866 = vmatpush1.bf16.msra.mxu0 0
        %2867 = vmatprep.subr.bf16.mxu0 0
        %2868 = vmatpush1.bf16.msra.mxu0 0
        %2869 = vmatprep.subr.bf16.mxu0 0
        %2870 = vmatpush1.bf16.msra.mxu0 0
        %2871 = vmatprep.subr.bf16.mxu0 0
        %2872 = vmatpush1.bf16.msra.mxu0 0
        %2873 = vmatprep.subr.bf16.mxu0 0
        %2874 = vmatpush1.bf16.msra.mxu0 0
        %2875 = vmatprep.subr.bf16.mxu0 0
        %2876 = vmatpush1.bf16.msra.mxu0 0
        %2877 = vmatprep.subr.bf16.mxu0 0
        %2878 = vmatpush1.bf16.msra.mxu0 0
        %2879 = vmatprep.subr.bf16.mxu0 0
        %2880 = vmatpush1.bf16.msra.mxu0 %v2842
        %2881 = vmatprep.subr.bf16.mxu0 0
        %2882 = vmatpush2.bf16.msra.mxu0 0
        %2883 = vmatprep.subr.bf16.mxu0 0
        %2884 = vmatpush2.bf16.msra.mxu0 0
        %2885 = vmatprep.subr.bf16.mxu0 0
        %2886 = vmatpush2.bf16.msra.mxu0 0
        %2887 = vmatprep.subr.bf16.mxu0 0
        %2888 = vmatpush2.bf16.msra.mxu0 0
        %2889 = vmatprep.subr.bf16.mxu0 0
        %2890 = vmatpush2.bf16.msra.mxu0 0
        %2891 = vmatprep.subr.bf16.mxu0 0
        %2892 = vmatpush2.bf16.msra.mxu0 0
        %2893 = vmatprep.subr.bf16.mxu0 0
        %2894 = vmatpush2.bf16.msra.mxu0 0
        %2895 = vmatprep.subr.bf16.mxu0 0
        %2896 = vmatpush2.bf16.msra.mxu0 0
        %2897 = vmatprep.mubr.bf16.mxu0 0
        %2898 = vmatmul.mubr.bf16.gmra.mxu0 %v2863
        %v2899 = vpop.f32.mrf.mxu0
        %v2900 = vadd.f32 0.0, %v2899
        %v2901 = vpop.f32.mrf.mxu0
        %v2902 = vpop.f32.mrf.mxu0
        %v2903 = vadd.f32 0.0, %v2902
        %v2904 = vpop.f32.mrf.mxu0
        %2905 = vdwg.mxu0
        %2906 = vmatprep.subr.bf16.mxu0 0
        %2907 = vmatpush1.bf16.msra.mxu0 0
        %2908 = vmatprep.subr.bf16.mxu0 0
        %2909 = vmatpush1.bf16.msra.mxu0 0
        %2910 = vmatprep.subr.bf16.mxu0 0
        %2911 = vmatpush1.bf16.msra.mxu0 0
        %2912 = vmatprep.subr.bf16.mxu0 0
        %2913 = vmatpush1.bf16.msra.mxu0 0
        %2914 = vmatprep.subr.bf16.mxu0 0
        %2915 = vmatpush1.bf16.msra.mxu0 0
        %2916 = vmatprep.subr.bf16.mxu0 0
        %2917 = vmatpush1.bf16.msra.mxu0 0
        %2918 = vmatprep.subr.bf16.mxu0 0
        %2919 = vmatpush1.bf16.msra.mxu0 0
        %2920 = vmatprep.subr.bf16.mxu0 0
        %2921 = vmatpush1.bf16.msra.mxu0 %v2837
        %2922 = vmatprep.subr.bf16.mxu0 0
        %2923 = vmatpush2.bf16.msra.mxu0 0
        %2924 = vmatprep.subr.bf16.mxu0 0
        %2925 = vmatpush2.bf16.msra.mxu0 0
        %2926 = vmatprep.subr.bf16.mxu0 0
        %2927 = vmatpush2.bf16.msra.mxu0 0
        %2928 = vmatprep.subr.bf16.mxu0 0
        %2929 = vmatpush2.bf16.msra.mxu0 0
        %2930 = vmatprep.subr.bf16.mxu0 0
        %2931 = vmatpush2.bf16.msra.mxu0 0
        %2932 = vmatprep.subr.bf16.mxu0 0
        %2933 = vmatpush2.bf16.msra.mxu0 0
        %2934 = vmatprep.subr.bf16.mxu0 0
        %2935 = vmatpush2.bf16.msra.mxu0 0
        %2936 = vmatprep.subr.bf16.mxu0 0
        %2937 = vmatpush2.bf16.msra.mxu0 0
        %2938 = vmatprep.mubr.bf16.mxu0 0
        %2939 = vmatmul.mubr.bf16.gmra.mxu0 %v2863
        %v2940 = vpop.f32.mrf.mxu0
        %v2941 = vadd.f32 %v2900, %v2940
        %v2942 = vpop.f32.mrf.mxu0
        %v2943 = vpop.f32.mrf.mxu0
        %v2944 = vadd.f32 %v2903, %v2943
        %v2945 = vpop.f32.mrf.mxu0
        %2946 = vdwg.mxu0
        %v2949 = vunpack.c.l.b16 %v320
        %v2950 = vunpack.c.l.b16 %v321
        %v2951 = vpack.c.b16 %v2950, %v2949
        %v2953 = vsel %vm2305, %v2951, 0
        %2955 = vmatprep.subr.bf16.mxu0 0
        %2956 = vmatpush1.bf16.msra.mxu0 0
        %2957 = vmatprep.subr.bf16.mxu0 0
        %2958 = vmatpush1.bf16.msra.mxu0 0
        %2959 = vmatprep.subr.bf16.mxu0 0
        %2960 = vmatpush1.bf16.msra.mxu0 0
        %2961 = vmatprep.subr.bf16.mxu0 0
        %2962 = vmatpush1.bf16.msra.mxu0 0
        %2963 = vmatprep.subr.bf16.mxu0 0
        %2964 = vmatpush1.bf16.msra.mxu0 0
        %2965 = vmatprep.subr.bf16.mxu0 0
        %2966 = vmatpush1.bf16.msra.mxu0 0
        %2967 = vmatprep.subr.bf16.mxu0 0
        %2968 = vmatpush1.bf16.msra.mxu0 0
        %2969 = vmatprep.subr.bf16.mxu0 0
        %2970 = vmatpush1.bf16.msra.mxu0 %v2837
        %2971 = vmatprep.subr.bf16.mxu0 0
        %2972 = vmatpush2.bf16.msra.mxu0 0
        %2973 = vmatprep.subr.bf16.mxu0 0
        %2974 = vmatpush2.bf16.msra.mxu0 0
        %2975 = vmatprep.subr.bf16.mxu0 0
        %2976 = vmatpush2.bf16.msra.mxu0 0
        %2977 = vmatprep.subr.bf16.mxu0 0
        %2978 = vmatpush2.bf16.msra.mxu0 0
        %2979 = vmatprep.subr.bf16.mxu0 0
        %2980 = vmatpush2.bf16.msra.mxu0 0
        %2981 = vmatprep.subr.bf16.mxu0 0
        %2982 = vmatpush2.bf16.msra.mxu0 0
        %2983 = vmatprep.subr.bf16.mxu0 0
        %2984 = vmatpush2.bf16.msra.mxu0 0
        %2985 = vmatprep.subr.bf16.mxu0 0
        %2986 = vmatpush2.bf16.msra.mxu0 0
        %2987 = vmatprep.mubr.bf16.mxu0 0
        %2988 = vmatmul.mubr.bf16.gmra.mxu0 %v2953
        %v2989 = vpop.f32.mrf.mxu0
        %v2990 = vadd.f32 0.0, %v2989
        %v2991 = vpop.f32.mrf.mxu0
        %v2992 = vpop.f32.mrf.mxu0
        %v2993 = vadd.f32 0.0, %v2992
        %v2994 = vpop.f32.mrf.mxu0
        %2995 = vdwg.mxu0
        %v2996 = vadd.f32 %v2941, %v2990
        %v2997 = vadd.f32 %v2944, %v2993
        %v3000 = vunpack.c.l.b16 %v323
        %v3001 = vunpack.c.l.b16 %v324
        %v3002 = vpack.c.b16 %v3001, %v3000
        %v3004 = vsel %vm2305, %v3002, 0
        %3006 = vmatprep.subr.bf16.mxu0 0
        %3007 = vmatpush1.bf16.msra.mxu0 0
        %3008 = vmatprep.subr.bf16.mxu0 0
        %3009 = vmatpush1.bf16.msra.mxu0 0
        %3010 = vmatprep.subr.bf16.mxu0 0
        %3011 = vmatpush1.bf16.msra.mxu0 0
        %3012 = vmatprep.subr.bf16.mxu0 0
        %3013 = vmatpush1.bf16.msra.mxu0 0
        %3014 = vmatprep.subr.bf16.mxu0 0
        %3015 = vmatpush1.bf16.msra.mxu0 0
        %3016 = vmatprep.subr.bf16.mxu0 0
        %3017 = vmatpush1.bf16.msra.mxu0 0
        %3018 = vmatprep.subr.bf16.mxu0 0
        %3019 = vmatpush1.bf16.msra.mxu0 0
        %3020 = vmatprep.subr.bf16.mxu0 0
        %3021 = vmatpush1.bf16.msra.mxu0 %v2848
        %3022 = vmatprep.subr.bf16.mxu0 0
        %3023 = vmatpush2.bf16.msra.mxu0 0
        %3024 = vmatprep.subr.bf16.mxu0 0
        %3025 = vmatpush2.bf16.msra.mxu0 0
        %3026 = vmatprep.subr.bf16.mxu0 0
        %3027 = vmatpush2.bf16.msra.mxu0 0
        %3028 = vmatprep.subr.bf16.mxu0 0
        %3029 = vmatpush2.bf16.msra.mxu0 0
        %3030 = vmatprep.subr.bf16.mxu0 0
        %3031 = vmatpush2.bf16.msra.mxu0 0
        %3032 = vmatprep.subr.bf16.mxu0 0
        %3033 = vmatpush2.bf16.msra.mxu0 0
        %3034 = vmatprep.subr.bf16.mxu0 0
        %3035 = vmatpush2.bf16.msra.mxu0 0
        %3036 = vmatprep.subr.bf16.mxu0 0
        %3037 = vmatpush2.bf16.msra.mxu0 0
        %3038 = vmatprep.mubr.bf16.mxu0 0
        %3039 = vmatmul.mubr.bf16.gmra.mxu0 %v3004
        %v3040 = vpop.f32.mrf.mxu0
        %v3041 = vadd.f32 0.0, %v3040
        %v3042 = vpop.f32.mrf.mxu0
        %v3043 = vpop.f32.mrf.mxu0
        %v3044 = vadd.f32 0.0, %v3043
        %v3045 = vpop.f32.mrf.mxu0
        %3046 = vdwg.mxu0
        %3047 = vmatprep.subr.bf16.mxu0 0
        %3048 = vmatpush1.bf16.msra.mxu0 0
        %3049 = vmatprep.subr.bf16.mxu0 0
        %3050 = vmatpush1.bf16.msra.mxu0 0
        %3051 = vmatprep.subr.bf16.mxu0 0
        %3052 = vmatpush1.bf16.msra.mxu0 0
        %3053 = vmatprep.subr.bf16.mxu0 0
        %3054 = vmatpush1.bf16.msra.mxu0 0
        %3055 = vmatprep.subr.bf16.mxu0 0
        %3056 = vmatpush1.bf16.msra.mxu0 0
        %3057 = vmatprep.subr.bf16.mxu0 0
        %3058 = vmatpush1.bf16.msra.mxu0 0
        %3059 = vmatprep.subr.bf16.mxu0 0
        %3060 = vmatpush1.bf16.msra.mxu0 0
        %3061 = vmatprep.subr.bf16.mxu0 0
        %3062 = vmatpush1.bf16.msra.mxu0 %v2843
        %3063 = vmatprep.subr.bf16.mxu0 0
        %3064 = vmatpush2.bf16.msra.mxu0 0
        %3065 = vmatprep.subr.bf16.mxu0 0
        %3066 = vmatpush2.bf16.msra.mxu0 0
        %3067 = vmatprep.subr.bf16.mxu0 0
        %3068 = vmatpush2.bf16.msra.mxu0 0
        %3069 = vmatprep.subr.bf16.mxu0 0
        %3070 = vmatpush2.bf16.msra.mxu0 0
        %3071 = vmatprep.subr.bf16.mxu0 0
        %3072 = vmatpush2.bf16.msra.mxu0 0
        %3073 = vmatprep.subr.bf16.mxu0 0
        %3074 = vmatpush2.bf16.msra.mxu0 0
        %3075 = vmatprep.subr.bf16.mxu0 0
        %3076 = vmatpush2.bf16.msra.mxu0 0
        %3077 = vmatprep.subr.bf16.mxu0 0
        %3078 = vmatpush2.bf16.msra.mxu0 0
        %3079 = vmatprep.mubr.bf16.mxu0 0
        %3080 = vmatmul.mubr.bf16.gmra.mxu0 %v3004
        %v3081 = vpop.f32.mrf.mxu0
        %v3082 = vadd.f32 %v3041, %v3081
        %v3083 = vpop.f32.mrf.mxu0
        %v3084 = vpop.f32.mrf.mxu0
        %v3085 = vadd.f32 %v3044, %v3084
        %v3086 = vpop.f32.mrf.mxu0
        %3087 = vdwg.mxu0
        %v3090 = vunpack.c.l.b16 %v326
        %v3091 = vunpack.c.l.b16 %v327
        %v3092 = vpack.c.b16 %v3091, %v3090
        %v3094 = vsel %vm2305, %v3092, 0
        %3096 = vmatprep.subr.bf16.mxu0 0
        %3097 = vmatpush1.bf16.msra.mxu0 0
        %3098 = vmatprep.subr.bf16.mxu0 0
        %3099 = vmatpush1.bf16.msra.mxu0 0
        %3100 = vmatprep.subr.bf16.mxu0 0
        %3101 = vmatpush1.bf16.msra.mxu0 0
        %3102 = vmatprep.subr.bf16.mxu0 0
        %3103 = vmatpush1.bf16.msra.mxu0 0
        %3104 = vmatprep.subr.bf16.mxu0 0
        %3105 = vmatpush1.bf16.msra.mxu0 0
        %3106 = vmatprep.subr.bf16.mxu0 0
        %3107 = vmatpush1.bf16.msra.mxu0 0
        %3108 = vmatprep.subr.bf16.mxu0 0
        %3109 = vmatpush1.bf16.msra.mxu0 0
        %3110 = vmatprep.subr.bf16.mxu0 0
        %3111 = vmatpush1.bf16.msra.mxu0 %v2843
        %3112 = vmatprep.subr.bf16.mxu0 0
        %3113 = vmatpush2.bf16.msra.mxu0 0
        %3114 = vmatprep.subr.bf16.mxu0 0
        %3115 = vmatpush2.bf16.msra.mxu0 0
        %3116 = vmatprep.subr.bf16.mxu0 0
        %3117 = vmatpush2.bf16.msra.mxu0 0
        %3118 = vmatprep.subr.bf16.mxu0 0
        %3119 = vmatpush2.bf16.msra.mxu0 0
        %3120 = vmatprep.subr.bf16.mxu0 0
        %3121 = vmatpush2.bf16.msra.mxu0 0
        %3122 = vmatprep.subr.bf16.mxu0 0
        %3123 = vmatpush2.bf16.msra.mxu0 0
        %3124 = vmatprep.subr.bf16.mxu0 0
        %3125 = vmatpush2.bf16.msra.mxu0 0
        %3126 = vmatprep.subr.bf16.mxu0 0
        %3127 = vmatpush2.bf16.msra.mxu0 0
        %3128 = vmatprep.mubr.bf16.mxu0 0
        %3129 = vmatmul.mubr.bf16.gmra.mxu0 %v3094
        %v3130 = vpop.f32.mrf.mxu0
        %v3131 = vadd.f32 0.0, %v3130
        %v3132 = vpop.f32.mrf.mxu0
        %v3133 = vpop.f32.mrf.mxu0
        %v3134 = vadd.f32 0.0, %v3133
        %v3135 = vpop.f32.mrf.mxu0
        %3136 = vdwg.mxu0
        %v3137 = vadd.f32 %v3082, %v3131
        %v3138 = vadd.f32 %v3085, %v3134
        %v3141 = vunpack.c.l.b16 %v329
        %v3142 = vunpack.c.l.b16 %v330
        %v3143 = vpack.c.b16 %v3142, %v3141
        %v3145 = vsel %vm2305, %v3143, 0
        %3147 = vmatprep.subr.bf16.mxu0 0
        %3148 = vmatpush1.bf16.msra.mxu0 0
        %3149 = vmatprep.subr.bf16.mxu0 0
        %3150 = vmatpush1.bf16.msra.mxu0 0
        %3151 = vmatprep.subr.bf16.mxu0 0
        %3152 = vmatpush1.bf16.msra.mxu0 0
        %3153 = vmatprep.subr.bf16.mxu0 0
        %3154 = vmatpush1.bf16.msra.mxu0 0
        %3155 = vmatprep.subr.bf16.mxu0 0
        %3156 = vmatpush1.bf16.msra.mxu0 0
        %3157 = vmatprep.subr.bf16.mxu0 0
        %3158 = vmatpush1.bf16.msra.mxu0 0
        %3159 = vmatprep.subr.bf16.mxu0 0
        %3160 = vmatpush1.bf16.msra.mxu0 0
        %3161 = vmatprep.subr.bf16.mxu0 0
        %3162 = vmatpush1.bf16.msra.mxu0 %v2856
        %3163 = vmatprep.subr.bf16.mxu0 0
        %3164 = vmatpush2.bf16.msra.mxu0 0
        %3165 = vmatprep.subr.bf16.mxu0 0
        %3166 = vmatpush2.bf16.msra.mxu0 0
        %3167 = vmatprep.subr.bf16.mxu0 0
        %3168 = vmatpush2.bf16.msra.mxu0 0
        %3169 = vmatprep.subr.bf16.mxu0 0
        %3170 = vmatpush2.bf16.msra.mxu0 0
        %3171 = vmatprep.subr.bf16.mxu0 0
        %3172 = vmatpush2.bf16.msra.mxu0 0
        %3173 = vmatprep.subr.bf16.mxu0 0
        %3174 = vmatpush2.bf16.msra.mxu0 0
        %3175 = vmatprep.subr.bf16.mxu0 0
        %3176 = vmatpush2.bf16.msra.mxu0 0
        %3177 = vmatprep.subr.bf16.mxu0 0
        %3178 = vmatpush2.bf16.msra.mxu0 0
        %3179 = vmatprep.mubr.bf16.mxu0 0
        %3180 = vmatmul.mubr.bf16.gmra.mxu0 %v3145
        %v3181 = vpop.f32.mrf.mxu0
        %v3182 = vadd.f32 0.0, %v3181
        %v3183 = vpop.f32.mrf.mxu0
        %v3184 = vpop.f32.mrf.mxu0
        %v3185 = vadd.f32 0.0, %v3184
        %v3186 = vpop.f32.mrf.mxu0
        %3187 = vdwg.mxu0
        %3188 = vmatprep.subr.bf16.mxu0 0
        %3189 = vmatpush1.bf16.msra.mxu0 0
        %3190 = vmatprep.subr.bf16.mxu0 0
        %3191 = vmatpush1.bf16.msra.mxu0 0
        %3192 = vmatprep.subr.bf16.mxu0 0
        %3193 = vmatpush1.bf16.msra.mxu0 0
        %3194 = vmatprep.subr.bf16.mxu0 0
        %3195 = vmatpush1.bf16.msra.mxu0 0
        %3196 = vmatprep.subr.bf16.mxu0 0
        %3197 = vmatpush1.bf16.msra.mxu0 0
        %3198 = vmatprep.subr.bf16.mxu0 0
        %3199 = vmatpush1.bf16.msra.mxu0 0
        %3200 = vmatprep.subr.bf16.mxu0 0
        %3201 = vmatpush1.bf16.msra.mxu0 0
        %3202 = vmatprep.subr.bf16.mxu0 0
        %3203 = vmatpush1.bf16.msra.mxu0 %v2851
        %3204 = vmatprep.subr.bf16.mxu0 0
        %3205 = vmatpush2.bf16.msra.mxu0 0
        %3206 = vmatprep.subr.bf16.mxu0 0
        %3207 = vmatpush2.bf16.msra.mxu0 0
        %3208 = vmatprep.subr.bf16.mxu0 0
        %3209 = vmatpush2.bf16.msra.mxu0 0
        %3210 = vmatprep.subr.bf16.mxu0 0
        %3211 = vmatpush2.bf16.msra.mxu0 0
        %3212 = vmatprep.subr.bf16.mxu0 0
        %3213 = vmatpush2.bf16.msra.mxu0 0
        %3214 = vmatprep.subr.bf16.mxu0 0
        %3215 = vmatpush2.bf16.msra.mxu0 0
        %3216 = vmatprep.subr.bf16.mxu0 0
        %3217 = vmatpush2.bf16.msra.mxu0 0
        %3218 = vmatprep.subr.bf16.mxu0 0
        %3219 = vmatpush2.bf16.msra.mxu0 0
        %3220 = vmatprep.mubr.bf16.mxu0 0
        %3221 = vmatmul.mubr.bf16.gmra.mxu0 %v3145
        %v3222 = vpop.f32.mrf.mxu0
        %v3223 = vadd.f32 %v3182, %v3222
        %v3224 = vpop.f32.mrf.mxu0
        %v3225 = vpop.f32.mrf.mxu0
        %v3226 = vadd.f32 %v3185, %v3225
        %v3227 = vpop.f32.mrf.mxu0
        %3228 = vdwg.mxu0
        %v3231 = vunpack.c.l.b16 %v332
        %v3232 = vunpack.c.l.b16 %v333
        %v3233 = vpack.c.b16 %v3232, %v3231
        %v3235 = vsel %vm2305, %v3233, 0
        %3237 = vmatprep.subr.bf16.mxu0 0
        %3238 = vmatpush1.bf16.msra.mxu0 0
        %3239 = vmatprep.subr.bf16.mxu0 0
        %3240 = vmatpush1.bf16.msra.mxu0 0
        %3241 = vmatprep.subr.bf16.mxu0 0
        %3242 = vmatpush1.bf16.msra.mxu0 0
        %3243 = vmatprep.subr.bf16.mxu0 0
        %3244 = vmatpush1.bf16.msra.mxu0 0
        %3245 = vmatprep.subr.bf16.mxu0 0
        %3246 = vmatpush1.bf16.msra.mxu0 0
        %3247 = vmatprep.subr.bf16.mxu0 0
        %3248 = vmatpush1.bf16.msra.mxu0 0
        %3249 = vmatprep.subr.bf16.mxu0 0
        %3250 = vmatpush1.bf16.msra.mxu0 0
        %3251 = vmatprep.subr.bf16.mxu0 0
        %3252 = vmatpush1.bf16.msra.mxu0 %v2851
        %3253 = vmatprep.subr.bf16.mxu0 0
        %3254 = vmatpush2.bf16.msra.mxu0 0
        %3255 = vmatprep.subr.bf16.mxu0 0
        %3256 = vmatpush2.bf16.msra.mxu0 0
        %3257 = vmatprep.subr.bf16.mxu0 0
        %3258 = vmatpush2.bf16.msra.mxu0 0
        %3259 = vmatprep.subr.bf16.mxu0 0
        %3260 = vmatpush2.bf16.msra.mxu0 0
        %3261 = vmatprep.subr.bf16.mxu0 0
        %3262 = vmatpush2.bf16.msra.mxu0 0
        %3263 = vmatprep.subr.bf16.mxu0 0
        %3264 = vmatpush2.bf16.msra.mxu0 0
        %3265 = vmatprep.subr.bf16.mxu0 0
        %3266 = vmatpush2.bf16.msra.mxu0 0
        %3267 = vmatprep.subr.bf16.mxu0 0
        %3268 = vmatpush2.bf16.msra.mxu0 0
        %3269 = vmatprep.mubr.bf16.mxu0 0
        %3270 = vmatmul.mubr.bf16.gmra.mxu0 %v3235
        %v3271 = vpop.f32.mrf.mxu0
        %v3272 = vadd.f32 0.0, %v3271
        %v3273 = vpop.f32.mrf.mxu0
        %v3274 = vpop.f32.mrf.mxu0
        %v3275 = vadd.f32 0.0, %v3274
        %v3276 = vpop.f32.mrf.mxu0
        %3277 = vdwg.mxu0
        %v3278 = vadd.f32 %v3223, %v3272
        %v3279 = vadd.f32 %v3226, %v3275
        %v3280 = vsub.f32 %v2996, %v3137
        %v3281 = vsub.f32 %v2997, %v3138
        %v3282 = vsub.f32 %v3278, %v2996
        %v3283 = vsub.f32 %v3279, %v2997
        %v3284 = vsub.f32 %v3282, %v3137
        %v3285 = vsub.f32 %v3283, %v3138
        %v3286 = vmul.f32 %v3280, %v3280
        %v3287 = vmul.f32 %v3281, %v3281
        %v3288 = vmul.f32 %v3284, %v3284
        %v3289 = vmul.f32 %v3285, %v3285
        %v3290 = vadd.f32 %v3286, %v3288
        %v3291 = vadd.f32 %v3287, %v3289
        %v3292 = vrsqrt.pop %v3290
        %v3293 = vmul.f32 %v3290, %v3292
        %vm3294 = vcmp.eq.f32.partialorder %v3290, inf
        %v3295 = vsel %vm3294, %v3290, %v3293
        %vm3296 = vcmp.eq.f32.partialorder %v3290, 0.0
        %v3297 = vand.u32 %v3290, 2147483648
        %v3298 = vsel %vm3296, %v3297, %v3295
        %v3299 = vrsqrt.pop %v3291
        %v3300 = vmul.f32 %v3291, %v3299
        %vm3301 = vcmp.eq.f32.partialorder %v3291, inf
        %v3302 = vsel %vm3301, %v3291, %v3300
        %vm3303 = vcmp.eq.f32.partialorder %v3291, 0.0
        %v3304 = vand.u32 %v3291, 2147483648
        %v3305 = vsel %vm3303, %v3304, %v3302
        %3306 = vst.msk [vmem:[%s312] sm:$0xff] %vm2305, %v3298
        %3307 = vst.msk [vmem:[%s312 + $0x8] sm:$0xff] %vm2305, %v3305
        %v3308 = vpack.c.bf16 %v2828, %v2827
        %v3309 = vunpack.c.l.bf16 %v3308
        %v3310 = vunpack.c.h.bf16 %v3308
        %v3311 = vsub.f32 %v2827, %v3309
        %v3312 = vsub.f32 %v2828, %v3310
        %v3313 = vpack.c.bf16 %v3312, %v3311
        %v3314 = vpack.c.bf16 %v2836, %v2835
        %v3315 = vunpack.c.l.bf16 %v3314
        %v3316 = vunpack.c.h.bf16 %v3314
        %v3317 = vsub.f32 %v2835, %v3315
        %v3318 = vsub.f32 %v2836, %v3316
        %v3319 = vpack.c.bf16 %v3318, %v3317
        %v3320 = vadd.f32 %v2827, %v2835
        %v3321 = vadd.f32 %v2828, %v2836
        %v3322 = vpack.c.bf16 %v3321, %v3320
        %v3323 = vunpack.c.l.bf16 %v3322
        %v3324 = vunpack.c.h.bf16 %v3322
        %v3325 = vsub.f32 %v3320, %v3323
        %v3326 = vsub.f32 %v3321, %v3324
        %v3327 = vpack.c.bf16 %v3326, %v3325
        %3328 = vmatprep.subr.bf16.mxu0 0
        %3329 = vmatpush1.bf16.msra.mxu0 0
        %3330 = vmatprep.subr.bf16.mxu0 0
        %3331 = vmatpush1.bf16.msra.mxu0 0
        %3332 = vmatprep.subr.bf16.mxu0 0
        %3333 = vmatpush1.bf16.msra.mxu0 0
        %3334 = vmatprep.subr.bf16.mxu0 0
        %3335 = vmatpush1.bf16.msra.mxu0 0
        %3336 = vmatprep.subr.bf16.mxu0 0
        %3337 = vmatpush1.bf16.msra.mxu0 0
        %3338 = vmatprep.subr.bf16.mxu0 0
        %3339 = vmatpush1.bf16.msra.mxu0 0
        %3340 = vmatprep.subr.bf16.mxu0 0
        %3341 = vmatpush1.bf16.msra.mxu0 0
        %3342 = vmatprep.subr.bf16.mxu0 0
        %3343 = vmatpush1.bf16.msra.mxu0 %v3313
        %3344 = vmatprep.subr.bf16.mxu0 0
        %3345 = vmatpush2.bf16.msra.mxu0 0
        %3346 = vmatprep.subr.bf16.mxu0 0
        %3347 = vmatpush2.bf16.msra.mxu0 0
        %3348 = vmatprep.subr.bf16.mxu0 0
        %3349 = vmatpush2.bf16.msra.mxu0 0
        %3350 = vmatprep.subr.bf16.mxu0 0
        %3351 = vmatpush2.bf16.msra.mxu0 0
        %3352 = vmatprep.subr.bf16.mxu0 0
        %3353 = vmatpush2.bf16.msra.mxu0 0
        %3354 = vmatprep.subr.bf16.mxu0 0
        %3355 = vmatpush2.bf16.msra.mxu0 0
        %3356 = vmatprep.subr.bf16.mxu0 0
        %3357 = vmatpush2.bf16.msra.mxu0 0
        %3358 = vmatprep.subr.bf16.mxu0 0
        %3359 = vmatpush2.bf16.msra.mxu0 0
        %3360 = vmatprep.mubr.bf16.mxu0 0
        %3361 = vmatmul.mubr.bf16.gmra.mxu0 %v2863
        %v3362 = vpop.f32.mrf.mxu0
        %v3363 = vadd.f32 0.0, %v3362
        %v3364 = vpop.f32.mrf.mxu0
        %v3365 = vpop.f32.mrf.mxu0
        %v3366 = vadd.f32 0.0, %v3365
        %v3367 = vpop.f32.mrf.mxu0
        %3368 = vdwg.mxu0
        %3369 = vmatprep.subr.bf16.mxu0 0
        %3370 = vmatpush1.bf16.msra.mxu0 0
        %3371 = vmatprep.subr.bf16.mxu0 0
        %3372 = vmatpush1.bf16.msra.mxu0 0
        %3373 = vmatprep.subr.bf16.mxu0 0
        %3374 = vmatpush1.bf16.msra.mxu0 0
        %3375 = vmatprep.subr.bf16.mxu0 0
        %3376 = vmatpush1.bf16.msra.mxu0 0
        %3377 = vmatprep.subr.bf16.mxu0 0
        %3378 = vmatpush1.bf16.msra.mxu0 0
        %3379 = vmatprep.subr.bf16.mxu0 0
        %3380 = vmatpush1.bf16.msra.mxu0 0
        %3381 = vmatprep.subr.bf16.mxu0 0
        %3382 = vmatpush1.bf16.msra.mxu0 0
        %3383 = vmatprep.subr.bf16.mxu0 0
        %3384 = vmatpush1.bf16.msra.mxu0 %v3308
        %3385 = vmatprep.subr.bf16.mxu0 0
        %3386 = vmatpush2.bf16.msra.mxu0 0
        %3387 = vmatprep.subr.bf16.mxu0 0
        %3388 = vmatpush2.bf16.msra.mxu0 0
        %3389 = vmatprep.subr.bf16.mxu0 0
        %3390 = vmatpush2.bf16.msra.mxu0 0
        %3391 = vmatprep.subr.bf16.mxu0 0
        %3392 = vmatpush2.bf16.msra.mxu0 0
        %3393 = vmatprep.subr.bf16.mxu0 0
        %3394 = vmatpush2.bf16.msra.mxu0 0
        %3395 = vmatprep.subr.bf16.mxu0 0
        %3396 = vmatpush2.bf16.msra.mxu0 0
        %3397 = vmatprep.subr.bf16.mxu0 0
        %3398 = vmatpush2.bf16.msra.mxu0 0
        %3399 = vmatprep.subr.bf16.mxu0 0
        %3400 = vmatpush2.bf16.msra.mxu0 0
        %3401 = vmatprep.mubr.bf16.mxu0 0
        %3402 = vmatmul.mubr.bf16.gmra.mxu0 %v2863
        %v3403 = vpop.f32.mrf.mxu0
        %v3404 = vadd.f32 %v3363, %v3403
        %v3405 = vpop.f32.mrf.mxu0
        %v3406 = vpop.f32.mrf.mxu0
        %v3407 = vadd.f32 %v3366, %v3406
        %v3408 = vpop.f32.mrf.mxu0
        %3409 = vdwg.mxu0
        %3410 = vmatprep.subr.bf16.mxu0 0
        %3411 = vmatpush1.bf16.msra.mxu0 0
        %3412 = vmatprep.subr.bf16.mxu0 0
        %3413 = vmatpush1.bf16.msra.mxu0 0
        %3414 = vmatprep.subr.bf16.mxu0 0
        %3415 = vmatpush1.bf16.msra.mxu0 0
        %3416 = vmatprep.subr.bf16.mxu0 0
        %3417 = vmatpush1.bf16.msra.mxu0 0
        %3418 = vmatprep.subr.bf16.mxu0 0
        %3419 = vmatpush1.bf16.msra.mxu0 0
        %3420 = vmatprep.subr.bf16.mxu0 0
        %3421 = vmatpush1.bf16.msra.mxu0 0
        %3422 = vmatprep.subr.bf16.mxu0 0
        %3423 = vmatpush1.bf16.msra.mxu0 0
        %3424 = vmatprep.subr.bf16.mxu0 0
        %3425 = vmatpush1.bf16.msra.mxu0 %v3308
        %3426 = vmatprep.subr.bf16.mxu0 0
        %3427 = vmatpush2.bf16.msra.mxu0 0
        %3428 = vmatprep.subr.bf16.mxu0 0
        %3429 = vmatpush2.bf16.msra.mxu0 0
        %3430 = vmatprep.subr.bf16.mxu0 0
        %3431 = vmatpush2.bf16.msra.mxu0 0
        %3432 = vmatprep.subr.bf16.mxu0 0
        %3433 = vmatpush2.bf16.msra.mxu0 0
        %3434 = vmatprep.subr.bf16.mxu0 0
        %3435 = vmatpush2.bf16.msra.mxu0 0
        %3436 = vmatprep.subr.bf16.mxu0 0
        %3437 = vmatpush2.bf16.msra.mxu0 0
        %3438 = vmatprep.subr.bf16.mxu0 0
        %3439 = vmatpush2.bf16.msra.mxu0 0
        %3440 = vmatprep.subr.bf16.mxu0 0
        %3441 = vmatpush2.bf16.msra.mxu0 0
        %3442 = vmatprep.mubr.bf16.mxu0 0
        %3443 = vmatmul.mubr.bf16.gmra.mxu0 %v2953
        %v3444 = vpop.f32.mrf.mxu0
        %v3445 = vadd.f32 0.0, %v3444
        %v3446 = vpop.f32.mrf.mxu0
        %v3447 = vpop.f32.mrf.mxu0
        %v3448 = vadd.f32 0.0, %v3447
        %v3449 = vpop.f32.mrf.mxu0
        %3450 = vdwg.mxu0
        %v3451 = vadd.f32 %v3404, %v3445
        %v3452 = vadd.f32 %v3407, %v3448
        %3453 = vmatprep.subr.bf16.mxu0 0
        %3454 = vmatpush1.bf16.msra.mxu0 0
        %3455 = vmatprep.subr.bf16.mxu0 0
        %3456 = vmatpush1.bf16.msra.mxu0 0
        %3457 = vmatprep.subr.bf16.mxu0 0
        %3458 = vmatpush1.bf16.msra.mxu0 0
        %3459 = vmatprep.subr.bf16.mxu0 0
        %3460 = vmatpush1.bf16.msra.mxu0 0
        %3461 = vmatprep.subr.bf16.mxu0 0
        %3462 = vmatpush1.bf16.msra.mxu0 0
        %3463 = vmatprep.subr.bf16.mxu0 0
        %3464 = vmatpush1.bf16.msra.mxu0 0
        %3465 = vmatprep.subr.bf16.mxu0 0
        %3466 = vmatpush1.bf16.msra.mxu0 0
        %3467 = vmatprep.subr.bf16.mxu0 0
        %3468 = vmatpush1.bf16.msra.mxu0 %v3319
        %3469 = vmatprep.subr.bf16.mxu0 0
        %3470 = vmatpush2.bf16.msra.mxu0 0
        %3471 = vmatprep.subr.bf16.mxu0 0
        %3472 = vmatpush2.bf16.msra.mxu0 0
        %3473 = vmatprep.subr.bf16.mxu0 0
        %3474 = vmatpush2.bf16.msra.mxu0 0
        %3475 = vmatprep.subr.bf16.mxu0 0
        %3476 = vmatpush2.bf16.msra.mxu0 0
        %3477 = vmatprep.subr.bf16.mxu0 0
        %3478 = vmatpush2.bf16.msra.mxu0 0
        %3479 = vmatprep.subr.bf16.mxu0 0
        %3480 = vmatpush2.bf16.msra.mxu0 0
        %3481 = vmatprep.subr.bf16.mxu0 0
        %3482 = vmatpush2.bf16.msra.mxu0 0
        %3483 = vmatprep.subr.bf16.mxu0 0
        %3484 = vmatpush2.bf16.msra.mxu0 0
        %3485 = vmatprep.mubr.bf16.mxu0 0
        %3486 = vmatmul.mubr.bf16.gmra.mxu0 %v3004
        %v3487 = vpop.f32.mrf.mxu0
        %v3488 = vadd.f32 0.0, %v3487
        %v3489 = vpop.f32.mrf.mxu0
        %v3490 = vpop.f32.mrf.mxu0
        %v3491 = vadd.f32 0.0, %v3490
        %v3492 = vpop.f32.mrf.mxu0
        %3493 = vdwg.mxu0
        %3494 = vmatprep.subr.bf16.mxu0 0
        %3495 = vmatpush1.bf16.msra.mxu0 0
        %3496 = vmatprep.subr.bf16.mxu0 0
        %3497 = vmatpush1.bf16.msra.mxu0 0
        %3498 = vmatprep.subr.bf16.mxu0 0
        %3499 = vmatpush1.bf16.msra.mxu0 0
        %3500 = vmatprep.subr.bf16.mxu0 0
        %3501 = vmatpush1.bf16.msra.mxu0 0
        %3502 = vmatprep.subr.bf16.mxu0 0
        %3503 = vmatpush1.bf16.msra.mxu0 0
        %3504 = vmatprep.subr.bf16.mxu0 0
        %3505 = vmatpush1.bf16.msra.mxu0 0
        %3506 = vmatprep.subr.bf16.mxu0 0
        %3507 = vmatpush1.bf16.msra.mxu0 0
        %3508 = vmatprep.subr.bf16.mxu0 0
        %3509 = vmatpush1.bf16.msra.mxu0 %v3314
        %3510 = vmatprep.subr.bf16.mxu0 0
        %3511 = vmatpush2.bf16.msra.mxu0 0
        %3512 = vmatprep.subr.bf16.mxu0 0
        %3513 = vmatpush2.bf16.msra.mxu0 0
        %3514 = vmatprep.subr.bf16.mxu0 0
        %3515 = vmatpush2.bf16.msra.mxu0 0
        %3516 = vmatprep.subr.bf16.mxu0 0
        %3517 = vmatpush2.bf16.msra.mxu0 0
        %3518 = vmatprep.subr.bf16.mxu0 0
        %3519 = vmatpush2.bf16.msra.mxu0 0
        %3520 = vmatprep.subr.bf16.mxu0 0
        %3521 = vmatpush2.bf16.msra.mxu0 0
        %3522 = vmatprep.subr.bf16.mxu0 0
        %3523 = vmatpush2.bf16.msra.mxu0 0
        %3524 = vmatprep.subr.bf16.mxu0 0
        %3525 = vmatpush2.bf16.msra.mxu0 0
        %3526 = vmatprep.mubr.bf16.mxu0 0
        %3527 = vmatmul.mubr.bf16.gmra.mxu0 %v3004
        %v3528 = vpop.f32.mrf.mxu0
        %v3529 = vadd.f32 %v3488, %v3528
        %v3530 = vpop.f32.mrf.mxu0
        %v3531 = vpop.f32.mrf.mxu0
        %v3532 = vadd.f32 %v3491, %v3531
        %v3533 = vpop.f32.mrf.mxu0
        %3534 = vdwg.mxu0
        %3535 = vmatprep.subr.bf16.mxu0 0
        %3536 = vmatpush1.bf16.msra.mxu0 0
        %3537 = vmatprep.subr.bf16.mxu0 0
        %3538 = vmatpush1.bf16.msra.mxu0 0
        %3539 = vmatprep.subr.bf16.mxu0 0
        %3540 = vmatpush1.bf16.msra.mxu0 0
        %3541 = vmatprep.subr.bf16.mxu0 0
        %3542 = vmatpush1.bf16.msra.mxu0 0
        %3543 = vmatprep.subr.bf16.mxu0 0
        %3544 = vmatpush1.bf16.msra.mxu0 0
        %3545 = vmatprep.subr.bf16.mxu0 0
        %3546 = vmatpush1.bf16.msra.mxu0 0
        %3547 = vmatprep.subr.bf16.mxu0 0
        %3548 = vmatpush1.bf16.msra.mxu0 0
        %3549 = vmatprep.subr.bf16.mxu0 0
        %3550 = vmatpush1.bf16.msra.mxu0 %v3314
        %3551 = vmatprep.subr.bf16.mxu0 0
        %3552 = vmatpush2.bf16.msra.mxu0 0
        %3553 = vmatprep.subr.bf16.mxu0 0
        %3554 = vmatpush2.bf16.msra.mxu0 0
        %3555 = vmatprep.subr.bf16.mxu0 0
        %3556 = vmatpush2.bf16.msra.mxu0 0
        %3557 = vmatprep.subr.bf16.mxu0 0
        %3558 = vmatpush2.bf16.msra.mxu0 0
        %3559 = vmatprep.subr.bf16.mxu0 0
        %3560 = vmatpush2.bf16.msra.mxu0 0
        %3561 = vmatprep.subr.bf16.mxu0 0
        %3562 = vmatpush2.bf16.msra.mxu0 0
        %3563 = vmatprep.subr.bf16.mxu0 0
        %3564 = vmatpush2.bf16.msra.mxu0 0
        %3565 = vmatprep.subr.bf16.mxu0 0
        %3566 = vmatpush2.bf16.msra.mxu0 0
        %3567 = vmatprep.mubr.bf16.mxu0 0
        %3568 = vmatmul.mubr.bf16.gmra.mxu0 %v3094
        %v3569 = vpop.f32.mrf.mxu0
        %v3570 = vadd.f32 0.0, %v3569
        %v3571 = vpop.f32.mrf.mxu0
        %v3572 = vpop.f32.mrf.mxu0
        %v3573 = vadd.f32 0.0, %v3572
        %v3574 = vpop.f32.mrf.mxu0
        %3575 = vdwg.mxu0
        %v3576 = vadd.f32 %v3529, %v3570
        %v3577 = vadd.f32 %v3532, %v3573
        %3578 = vmatprep.subr.bf16.mxu0 0
        %3579 = vmatpush1.bf16.msra.mxu0 0
        %3580 = vmatprep.subr.bf16.mxu0 0
        %3581 = vmatpush1.bf16.msra.mxu0 0
        %3582 = vmatprep.subr.bf16.mxu0 0
        %3583 = vmatpush1.bf16.msra.mxu0 0
        %3584 = vmatprep.subr.bf16.mxu0 0
        %3585 = vmatpush1.bf16.msra.mxu0 0
        %3586 = vmatprep.subr.bf16.mxu0 0
        %3587 = vmatpush1.bf16.msra.mxu0 0
        %3588 = vmatprep.subr.bf16.mxu0 0
        %3589 = vmatpush1.bf16.msra.mxu0 0
        %3590 = vmatprep.subr.bf16.mxu0 0
        %3591 = vmatpush1.bf16.msra.mxu0 0
        %3592 = vmatprep.subr.bf16.mxu0 0
        %3593 = vmatpush1.bf16.msra.mxu0 %v3327
        %3594 = vmatprep.subr.bf16.mxu0 0
        %3595 = vmatpush2.bf16.msra.mxu0 0
        %3596 = vmatprep.subr.bf16.mxu0 0
        %3597 = vmatpush2.bf16.msra.mxu0 0
        %3598 = vmatprep.subr.bf16.mxu0 0
        %3599 = vmatpush2.bf16.msra.mxu0 0
        %3600 = vmatprep.subr.bf16.mxu0 0
        %3601 = vmatpush2.bf16.msra.mxu0 0
        %3602 = vmatprep.subr.bf16.mxu0 0
        %3603 = vmatpush2.bf16.msra.mxu0 0
        %3604 = vmatprep.subr.bf16.mxu0 0
        %3605 = vmatpush2.bf16.msra.mxu0 0
        %3606 = vmatprep.subr.bf16.mxu0 0
        %3607 = vmatpush2.bf16.msra.mxu0 0
        %3608 = vmatprep.subr.bf16.mxu0 0
        %3609 = vmatpush2.bf16.msra.mxu0 0
        %3610 = vmatprep.mubr.bf16.mxu0 0
        %3611 = vmatmul.mubr.bf16.gmra.mxu0 %v3145
        %v3612 = vpop.f32.mrf.mxu0
        %v3613 = vadd.f32 0.0, %v3612
        %v3614 = vpop.f32.mrf.mxu0
        %v3615 = vpop.f32.mrf.mxu0
        %v3616 = vadd.f32 0.0, %v3615
        %v3617 = vpop.f32.mrf.mxu0
        %3618 = vdwg.mxu0
        %3619 = vmatprep.subr.bf16.mxu0 0
        %3620 = vmatpush1.bf16.msra.mxu0 0
        %3621 = vmatprep.subr.bf16.mxu0 0
        %3622 = vmatpush1.bf16.msra.mxu0 0
        %3623 = vmatprep.subr.bf16.mxu0 0
        %3624 = vmatpush1.bf16.msra.mxu0 0
        %3625 = vmatprep.subr.bf16.mxu0 0
        %3626 = vmatpush1.bf16.msra.mxu0 0
        %3627 = vmatprep.subr.bf16.mxu0 0
        %3628 = vmatpush1.bf16.msra.mxu0 0
        %3629 = vmatprep.subr.bf16.mxu0 0
        %3630 = vmatpush1.bf16.msra.mxu0 0
        %3631 = vmatprep.subr.bf16.mxu0 0
        %3632 = vmatpush1.bf16.msra.mxu0 0
        %3633 = vmatprep.subr.bf16.mxu0 0
        %3634 = vmatpush1.bf16.msra.mxu0 %v3322
        %3635 = vmatprep.subr.bf16.mxu0 0
        %3636 = vmatpush2.bf16.msra.mxu0 0
        %3637 = vmatprep.subr.bf16.mxu0 0
        %3638 = vmatpush2.bf16.msra.mxu0 0
        %3639 = vmatprep.subr.bf16.mxu0 0
        %3640 = vmatpush2.bf16.msra.mxu0 0
        %3641 = vmatprep.subr.bf16.mxu0 0
        %3642 = vmatpush2.bf16.msra.mxu0 0
        %3643 = vmatprep.subr.bf16.mxu0 0
        %3644 = vmatpush2.bf16.msra.mxu0 0
        %3645 = vmatprep.subr.bf16.mxu0 0
        %3646 = vmatpush2.bf16.msra.mxu0 0
        %3647 = vmatprep.subr.bf16.mxu0 0
        %3648 = vmatpush2.bf16.msra.mxu0 0
        %3649 = vmatprep.subr.bf16.mxu0 0
        %3650 = vmatpush2.bf16.msra.mxu0 0
        %3651 = vmatprep.mubr.bf16.mxu0 0
        %3652 = vmatmul.mubr.bf16.gmra.mxu0 %v3145
        %v3653 = vpop.f32.mrf.mxu0
        %v3654 = vadd.f32 %v3613, %v3653
        %v3655 = vpop.f32.mrf.mxu0
        %v3656 = vpop.f32.mrf.mxu0
        %v3657 = vadd.f32 %v3616, %v3656
        %v3658 = vpop.f32.mrf.mxu0
        %3659 = vdwg.mxu0
        %3660 = vmatprep.subr.bf16.mxu0 0
        %3661 = vmatpush1.bf16.msra.mxu0 0
        %3662 = vmatprep.subr.bf16.mxu0 0
        %3663 = vmatpush1.bf16.msra.mxu0 0
        %3664 = vmatprep.subr.bf16.mxu0 0
        %3665 = vmatpush1.bf16.msra.mxu0 0
        %3666 = vmatprep.subr.bf16.mxu0 0
        %3667 = vmatpush1.bf16.msra.mxu0 0
        %3668 = vmatprep.subr.bf16.mxu0 0
        %3669 = vmatpush1.bf16.msra.mxu0 0
        %3670 = vmatprep.subr.bf16.mxu0 0
        %3671 = vmatpush1.bf16.msra.mxu0 0
        %3672 = vmatprep.subr.bf16.mxu0 0
        %3673 = vmatpush1.bf16.msra.mxu0 0
        %3674 = vmatprep.subr.bf16.mxu0 0
        %3675 = vmatpush1.bf16.msra.mxu0 %v3322
        %3676 = vmatprep.subr.bf16.mxu0 0
        %3677 = vmatpush2.bf16.msra.mxu0 0
        %3678 = vmatprep.subr.bf16.mxu0 0
        %3679 = vmatpush2.bf16.msra.mxu0 0
        %3680 = vmatprep.subr.bf16.mxu0 0
        %3681 = vmatpush2.bf16.msra.mxu0 0
        %3682 = vmatprep.subr.bf16.mxu0 0
        %3683 = vmatpush2.bf16.msra.mxu0 0
        %3684 = vmatprep.subr.bf16.mxu0 0
        %3685 = vmatpush2.bf16.msra.mxu0 0
        %3686 = vmatprep.subr.bf16.mxu0 0
        %3687 = vmatpush2.bf16.msra.mxu0 0
        %3688 = vmatprep.subr.bf16.mxu0 0
        %3689 = vmatpush2.bf16.msra.mxu0 0
        %3690 = vmatprep.subr.bf16.mxu0 0
        %3691 = vmatpush2.bf16.msra.mxu0 0
        %3692 = vmatprep.mubr.bf16.mxu0 0
        %3693 = vmatmul.mubr.bf16.gmra.mxu0 %v3235
        %v3694 = vpop.f32.mrf.mxu0
        %v3695 = vadd.f32 0.0, %v3694
        %v3696 = vpop.f32.mrf.mxu0
        %v3697 = vpop.f32.mrf.mxu0
        %v3698 = vadd.f32 0.0, %v3697
        %v3699 = vpop.f32.mrf.mxu0
        %3700 = vdwg.mxu0
        %v3701 = vadd.f32 %v3654, %v3695
        %v3702 = vadd.f32 %v3657, %v3698
        %v3703 = vsub.f32 %v3451, %v3576
        %v3704 = vsub.f32 %v3452, %v3577
        %v3705 = vsub.f32 %v3701, %v3451
        %v3706 = vsub.f32 %v3702, %v3452
        %v3707 = vsub.f32 %v3705, %v3576
        %v3708 = vsub.f32 %v3706, %v3577
        %v3709 = vmul.f32 %v3703, %v3703
        %v3710 = vmul.f32 %v3704, %v3704
        %v3711 = vmul.f32 %v3707, %v3707
        %v3712 = vmul.f32 %v3708, %v3708
        %v3713 = vadd.f32 %v3709, %v3711
        %v3714 = vadd.f32 %v3710, %v3712
        %v3715 = vrsqrt.pop %v3713
        %v3716 = vmul.f32 %v3713, %v3715
        %vm3717 = vcmp.eq.f32.partialorder %v3713, inf
        %v3718 = vsel %vm3717, %v3713, %v3716
        %vm3719 = vcmp.eq.f32.partialorder %v3713, 0.0
        %v3720 = vand.u32 %v3713, 2147483648
        %v3721 = vsel %vm3719, %v3720, %v3718
        %v3722 = vrsqrt.pop %v3714
        %v3723 = vmul.f32 %v3714, %v3722
        %vm3724 = vcmp.eq.f32.partialorder %v3714, inf
        %v3725 = vsel %vm3724, %v3714, %v3723
        %vm3726 = vcmp.eq.f32.partialorder %v3714, 0.0
        %v3727 = vand.u32 %v3714, 2147483648
        %v3728 = vsel %vm3726, %v3727, %v3725
        %s3729 = scalar_lea.vmem %s312, 16 [#allocation15]
        %3730 = vst.msk [vmem:[%s3729] sm:$0xff] %vm2305, %v3721
        %3731 = vst.msk [vmem:[%s3729 + $0x8] sm:$0xff] %vm2305, %v3728
        %s3732 = sand.u32 %s164, 1
        %s3733 = scalar_lea.sflag [#allocation8], %s3732
        %s3734 = sand.u32 %s164, 1
        %s3735 = smul.addr %s3734, 32
        %s3736 = scalar_lea.vmem [#allocation15], %s3735
        // Predicated region
        $region65: #{tpu_custom_call.1} parent=39 // pred_check
          %p3737 = pneg %p174
        $region66: #{tpu_custom_call.1} parent=39 // pred_check_branch
          %3739 = sbr.rel (%p3737) target = $region68
        $region67: #{tpu_custom_call.1} parent=39 // pred_region
          #allocation17 [shape = 'u32[6]{0}', space=smem, size = 0x18, scoped, tag = 'DMA stride descriptor']
          %s3740 = smul.u32 2, %s31
          %s3742 = ssub.s32 512, 512
          %3743 = vsyncadd %s3733, %s3742
          %s3744 = smul.addr %s32, 2
          %s3745 = smul.addr %s3740, 6
          %s3746 = sadd.s32 %s3744, %s3745
          %s3747 = smul.addr %s3746, 128
          %s3748 = scalar_lea.hbm %s6, %s3747
          %s3750 = sshll.u32 1, 14
          %s3751 = sxor.u32 4294967295, %s3750
          %s3754 = sshll.u32 7, 18
          %s3755 = sxor.u32 4294967295, %s3754
          %s3756 = sand.u32 0, %s3755
          %s3758 = sor.u32 %s3756, 0
          %s3759 = sshll.u32 %s3736, 4
          %s3760 = int_to_ptr.vmem [resolvable:$true] %s3759
          %3766 = sst [smem:[#allocation17]] 256
          %s3767 = scalar_lea.smem [#allocation17], 1
          %3768 = sst [smem:[%s3767]] 768
          %s3769 = scalar_lea.smem [#allocation17], 2
          %3770 = sst [smem:[%s3769]] 2
          %s3771 = scalar_lea.smem [#allocation17], 3
          %3772 = sst [smem:[%s3771]] 128
          %s3773 = scalar_lea.smem [#allocation17], 4
          %3774 = sst [smem:[%s3773]] 128
          %s3775 = scalar_lea.smem [#allocation17], 5
          %3776 = sst [smem:[%s3775]] 8
          %3778 = dma.general %s3760, 512, %s3748, %s3733, 131072, [#allocation17], %s3758, 0
        $region68: #{tpu_custom_call.1} parent=39 // pred_fallthru
          _
      $region40: #{tpu_custom_call.1} parent=5 // pred_fallthru
        _
      %p3779 = scmp.le.s32.totalorder 2, %s22
      // Predicated region
      $region69: #{tpu_custom_call.1} parent=5 // pred_check
        %p3780 = pneg %p3779
      $region70: #{tpu_custom_call.1} parent=5 // pred_check_branch
        %3782 = sbr.rel (%p3780) target = $region72
      $region71: #{tpu_custom_call.1} parent=5 // pred_region
        %s3783 = ssub.s32 %s22, 2
        // Predicated region
        $region73: #{tpu_custom_call.1} parent=71 // pred_check
          %p3784 = pneg %p180
        $region74: #{tpu_custom_call.1} parent=71 // pred_check_branch
          %3786 = sbr.rel (%p3784) target = $region76
        $region75: #{tpu_custom_call.1} parent=71 // pred_region
          %s3787 = sand.u32 %s165, 1
          %s3788 = scalar_lea.sflag [#allocation8], %s3787
          %s3789 = sand.u32 %s165, 1
          %s3790 = smul.addr %s3789, 32
          %s3791 = scalar_lea.vmem [#allocation15], %s3790
          %3792 = dma.done %s3788, 512
        $region76: #{tpu_custom_call.1} parent=71 // pred_fallthru
          _
      $region72: #{tpu_custom_call.1} parent=5 // pred_fallthru
        _
    $region6: #{tpu_custom_call.1} parent=1 // loop_footer
      %s26 = sadd.s32 1, %s22
    $region7: #{tpu_custom_call.1} parent=1 // loop_footer_branch
      %21 = sbr.rel target = $region3
    $region8: #{tpu_custom_call.1} parent=1 // loop_exit
      _
    %3793 = vsyncpa [#allocation7], 1
    %s3794 = scalar_lea.sflag [#allocation7], 1
    %3795 = vsyncpa %s3794, 1
    %3796 = vsyncpa [#allocation10], 1
    %3797 = vsyncpa [#allocation13], 1
    %3798 = vsyncpa [#allocation8], 1
    %s3799 = scalar_lea.sflag [#allocation8], 1
    %3800 = vsyncpa %s3799, 1

</llo_original>
